<compile_context>
chip_gen: v6e
topology: v6e:2x2x1
jax: 0.10.0
libtpu: 0.0.40
codegen_flags: <defaults>
</compile_context>

<pallas_src>
import functools
from typing import NamedTuple

import jax
import jax.numpy as jnp
from jax import lax
from jax.experimental import pallas as pl
from jax.experimental.pallas import tpu as pltpu

LANE = 128
BN_EPS = 1e-5
KCHUNK = 256          # MXU contraction chunk (K >= 256 fills v6e/v7x MXU)


def _cpad(c):
    return ((c + LANE - 1) // LANE) * LANE


def _wr(w):
    """Right W halo so the stored width (1 + w + wr) is a multiple of 8."""
    r = (-(1 + w)) % 8
    return r if r else 8


def _nb(shape, dtype):
    n = 1
    for s in shape:
        n *= int(s)
    return n * jnp.dtype(dtype).itemsize


def _cp(nbytes, grid_rank=1):
    lim = int(min(max(2 * nbytes + (2 << 20), 4 << 20), 100 << 20))
    sem = ("parallel",) * grid_rank if grid_rank else None
    return pltpu.CompilerParams(dimension_semantics=sem, vmem_limit_bytes=lim)


class Act(NamedTuple):
    """Stored activation: [N, 1 + h + 1, 1 + w + wr, 128] bf16, zero halo."""
    data: jax.Array
    h: int     # true spatial height
    w: int     # true spatial width
    c: int     # true channel count (lanes c..127 are zero)
    oh: int    # interior row offset
    ow: int    # interior col offset


# ----------------------------------------------------------------------------
# Pallas kernels
# ----------------------------------------------------------------------------
def conv_stats_kernel(x_ref, w_ref, b_ref, y_ref, stats_ref, *buf,
                      taps, h, w, cin, coutp, off_h, off_w, pad, direct):
    """Pass 1: conv + bias as K-packed im2col matmuls.

    The kh*kw taps are packed along the MXU contraction dimension via a small
    VMEM staging buffer, so the tap reduction happens inside the MXU instead
    of as per-tap full-tile VPU adds.  Also emits per-image sum / sum-of-
    squares for the two-pass training-mode BatchNorm (grid stays parallel)."""
    ktot = len(taps) * cin
    if not direct:
        buf_ref = buf[0]
        for t, (di, dj) in enumerate(taps):
            r0 = off_h - pad + di
            c0 = off_w - pad + dj
            buf_ref[:, :, t * cin:(t + 1) * cin] = \
                x_ref[0, r0:r0 + h, c0:c0 + w, :cin]
    acc = jnp.zeros((h * w, coutp), jnp.float32)
    for k0 in range(0, ktot, KCHUNK):
        kc = min(KCHUNK, ktot - k0)
        if direct:
            lhs = x_ref[0, :, :, k0:k0 + kc]
        else:
            lhs = buf_ref[:, :, k0:k0 + kc]
        acc = acc + jnp.dot(lhs.reshape(h * w, kc), w_ref[k0:k0 + kc, :],
                            preferred_element_type=jnp.float32)
    acc = acc + b_ref[...]
    y_ref[0] = acc.reshape(h, w, coutp).astype(y_ref.dtype)
    s1 = jnp.sum(acc, axis=0, keepdims=True)
    s2 = jnp.sum(acc * acc, axis=0, keepdims=True)
    stats_ref[0] = jnp.concatenate([s1, s2], axis=0)


def _bn_scale_shift(stats_ref, g_ref, be_ref, count):
    st = jnp.sum(stats_ref[...], axis=0)           # reduce per-image partials
    inv = 1.0 / count
    mean = st[0:1, :] * inv
    var = st[1:2, :] * inv - mean * mean            # biased variance
    scale = g_ref[...] * lax.rsqrt(var + BN_EPS)
    shift = be_ref[...] - mean * scale
    return scale, shift


def _halo_pad(val, wr):
    """[h, w, c] -> [h+2, 1+w+wr, c] zero halo, built in registers so the
    whole output block is written once (single lane-dense store)."""
    h, w, c = val.shape
    row = jnp.concatenate([jnp.zeros((h, 1, c), val.dtype), val,
                           jnp.zeros((h, wr, c), val.dtype)], axis=1)
    z = jnp.zeros((1, 1 + w + wr, c), val.dtype)
    return jnp.concatenate([z, row, z], axis=0)


def bn_relu_kernel(y_ref, stats_ref, g_ref, be_ref, o_ref, *, count, wr):
    scale, shift = _bn_scale_shift(stats_ref, g_ref, be_ref, count)
    val = jnp.maximum(y_ref[0].astype(jnp.float32) * scale + shift, 0.0)
    o_ref[0] = _halo_pad(val.astype(o_ref.dtype), wr)


def bn_add_relu_kernel(y_ref, stats_ref, g_ref, be_ref, x_ref, o_ref, *,
                       count, wr, h, w, xo_h, xo_w):
    """BN + identity residual add + ReLU (padded lanes of x are zero)."""
    scale, shift = _bn_scale_shift(stats_ref, g_ref, be_ref, count)
    val = y_ref[0].astype(jnp.float32) * scale + shift
    res = x_ref[0, xo_h:xo_h + h, xo_w:xo_w + w, :].astype(jnp.float32)
    o_ref[0] = _halo_pad(jnp.maximum(val + res, 0.0).astype(o_ref.dtype), wr)


def bn_proj_add_relu_kernel(y_ref, stats_ref, g_ref, be_ref, x_ref, w3_ref,
                            b3_ref, o_ref, *, count, wr, h, w, xo_h, xo_w,
                            cinx, coutp):
    """BN + folded 1x1 shortcut conv + residual add + ReLU in one kernel."""
    scale, shift = _bn_scale_shift(stats_ref, g_ref, be_ref, count)
    val = y_ref[0].astype(jnp.float32) * scale + shift
    xi = x_ref[0, xo_h:xo_h + h, xo_w:xo_w + w, :cinx]
    sc = jnp.dot(xi.reshape(h * w, cinx), w3_ref[...],
                 preferred_element_type=jnp.float32) + b3_ref[...]
    val = jnp.maximum(val + sc.reshape(h, w, coutp), 0.0)
    o_ref[0] = _halo_pad(val.astype(o_ref.dtype), wr)


def stem_post_kernel(y_ref, stats_ref, g_ref, be_ref, o_ref, *,
                     count, hq, wq, wr):
    """Fused stem epilogue: BN + ReLU + 3x3/stride-2/pad-1 max pool.

    The stem conv output is stored phase-major (plane p,q holds conv pixels
    (2u+p, 2v+q)), so every pool tap is a plain static slice of one plane."""
    scale, shift = _bn_scale_shift(stats_ref, g_ref, be_ref, count)
    a = jnp.maximum(y_ref[0].astype(jnp.float32) * scale + shift, 0.0)
    c = a.shape[-1]
    zrow = jnp.zeros((1, wq, c), a.dtype)
    zcol = jnp.zeros((hq, 1, c), a.dtype)
    m = None
    for di in range(3):
        for dj in range(3):
            p, q = (di + 1) % 2, (dj + 1) % 2
            ph_idx = 2 * p + q
            t = a[ph_idx * hq:(ph_idx + 1) * hq]
            if di == 0:                          # needs the top zero halo row
                t = jnp.concatenate([zrow, t[:hq - 1]], axis=0)
            if dj == 0:                          # needs the left zero halo col
                t = jnp.concatenate([zcol, t[:, :wq - 1]], axis=1)
            m = t if m is None else jnp.maximum(m, t)
    o_ref[0] = _halo_pad(m.astype(o_ref.dtype), wr)


def head_kernel(a_ref, w_ref, b_ref, o_ref, *, h, w, oh, ow):
    """Fused global average pool + Linear."""
    a = a_ref[:, oh:oh + h, ow:ow + w, :].astype(jnp.float32)
    n, cp = a.shape[0], a.shape[-1]
    feat = jnp.mean(a.reshape(n, h * w, cp), axis=1)
    o_ref[...] = jnp.dot(feat.astype(jnp.bfloat16), w_ref[...],
                         preferred_element_type=jnp.float32) + b_ref[...]


# ----------------------------------------------------------------------------
# XLA-side packing helpers (weights / one-time stem im2col)
# ----------------------------------------------------------------------------
def _prep_vec(v, coutp):
    return jnp.pad(v, (0, coutp - v.shape[0])).reshape(1, coutp).astype(
        jnp.float32)


def _prep_conv_w(w, b, coutp, kpad=None):
    """[cout, cin, kh, kw] -> [kh*kw*cin (tap-major, channel-minor), coutp]."""
    cout, cin, kh, kw = w.shape
    ktot = kh * kw * cin
    kpad = ktot if kpad is None else kpad
    wt = jnp.transpose(w, (2, 3, 1, 0)).reshape(ktot, cout)
    wt = jnp.pad(wt, ((0, kpad - ktot), (0, coutp - cout)))
    bp = jnp.pad(b, (0, coutp - cout)).reshape(1, coutp).astype(jnp.float32)
    return wt.astype(jnp.bfloat16), bp


def _prep_proj_w(w, b, coutp):
    cout, cin = w.shape[0], w.shape[1]
    wt = jnp.pad(w.reshape(cout, cin).T, ((0, 0), (0, coutp - cout)))
    bp = jnp.pad(b, (0, coutp - cout)).reshape(1, coutp).astype(jnp.float32)
    return wt.astype(jnp.bfloat16), bp


def _stem_patches_folded(x, hq, wq, kh=7, kw=7, stride=2, pad=3, kp=256):
    """One-time XLA im2col of the 3-channel input for the 7x7/stride-2 stem:
    packs the 147 real K values into a lane-dense K=256 operand, with output
    pixels in (row-phase, col-phase)-major order for the fused pool kernel."""
    n, _, _, c = x.shape
    ho, wo = 2 * hq, 2 * wq
    xp = jnp.pad(x, ((0, 0), (pad, pad), (pad, pad), (0, 0)))
    cols = []
    for di in range(kh):
        for dj in range(kw):
            cols.append(lax.slice(
                xp, (0, di, dj, 0),
                (n, di + stride * (ho - 1) + 1, dj + stride * (wo - 1) + 1, c),
                (1, stride, stride, 1)))
    pt = jnp.concatenate(cols, axis=-1)                      # [n, ho, wo, 147]
    pt = jnp.pad(pt, ((0, 0), (0, 0), (0, 0), (0, kp - kh * kw * c)))
    subs = [pt[:, p::2, q::2, :] for p in (0, 1) for q in (0, 1)]
    return jnp.stack(subs, axis=1).reshape(n, 4 * hq, wq, kp).astype(
        jnp.bfloat16)


# ----------------------------------------------------------------------------
# layer wrappers around pallas_call
# ----------------------------------------------------------------------------
def conv_pass1(x, wp, bp, *, h, w, cin, coutp, taps, off_h, off_w, pad,
               direct):
    n, ht, wt, cs = x.shape
    ktot = len(taps) * cin
    kern = functools.partial(conv_stats_kernel, taps=taps, h=h, w=w, cin=cin,
                             coutp=coutp, off_h=off_h, off_w=off_w, pad=pad,
                             direct=direct)
    scratch = [] if direct else [pltpu.VMEM((h, w, ktot), jnp.bfloat16)]
    nbytes = (_nb((ht, wt, cs), jnp.bfloat16) + _nb(wp.shape, jnp.bfloat16)
              + _nb((1, coutp), jnp.float32) + _nb((h, w, coutp), jnp.bfloat16)
              + _nb((2, coutp), jnp.float32)
              + (0 if direct else _nb((h, w, ktot), jnp.bfloat16)))
    return pl.pallas_call(
        kern,
        grid=(n,),
        in_specs=[pl.BlockSpec((1, ht, wt, cs), lambda i: (i, 0, 0, 0)),
                  pl.BlockSpec(wp.shape, lambda i: (0, 0)),
                  pl.BlockSpec((1, coutp), lambda i: (0, 0))],
        out_specs=(pl.BlockSpec((1, h, w, coutp), lambda i: (i, 0, 0, 0)),
                   pl.BlockSpec((1, 2, coutp), lambda i: (i, 0, 0))),
        out_shape=(jax.ShapeDtypeStruct((n, h, w, coutp), jnp.bfloat16),
                   jax.ShapeDtypeStruct((n, 2, coutp), jnp.float32)),
        scratch_shapes=scratch,
        compiler_params=_cp(nbytes),
    )(x, wp, bp)


def conv3x3_pass1(act, w, b):
    cout, cin, kh, kw = w.shape
    assert cin == act.c and kh == 3 and kw == 3
    coutp = _cpad(cout)
    taps = tuple((i, j) for i in range(kh) for j in range(kw))
    wp, bp = _prep_conv_w(w, b, coutp)
    y, stats = conv_pass1(act.data, wp, bp, h=act.h, w=act.w, cin=cin,
                          coutp=coutp, taps=taps, off_h=act.oh, off_w=act.ow,
                          pad=1, direct=False)
    return y, stats, cout


def bn_relu_layer(y, stats, gamma, beta, *, h, w, cout):
    n, coutp = y.shape[0], y.shape[-1]
    wr = _wr(w)
    g, be = _prep_vec(gamma, coutp), _prep_vec(beta, coutp)
    osh = (n, h + 2, 1 + w + wr, coutp)
    nbytes = (_nb((h, w, coutp), jnp.bfloat16) + _nb(stats.shape, jnp.float32)
              + 2 * _nb((1, coutp), jnp.float32) + _nb(osh[1:], jnp.bfloat16))
    out = pl.pallas_call(
        functools.partial(bn_relu_kernel, count=float(n * h * w), wr=wr),
        grid=(n,),
        in_specs=[pl.BlockSpec((1, h, w, coutp), lambda i: (i, 0, 0, 0)),
                  pl.BlockSpec(stats.shape, lambda i: (0, 0, 0)),
                  pl.BlockSpec((1, coutp), lambda i: (0, 0)),
                  pl.BlockSpec((1, coutp), lambda i: (0, 0))],
        out_specs=pl.BlockSpec((1,) + osh[1:], lambda i: (i, 0, 0, 0)),
        out_shape=jax.ShapeDtypeStruct(osh, jnp.bfloat16),
        compiler_params=_cp(nbytes),
    )(y, stats, g, be)
    return Act(out, h, w, cout, 1, 1)


def bn_residual_layer(y, stats, gamma, beta, x_act, w3, b3, *, h, w, cout):
    n, coutp = y.shape[0], y.shape[-1]
    wr = _wr(w)
    g, be = _prep_vec(gamma, coutp), _prep_vec(beta, coutp)
    osh = (n, h + 2, 1 + w + wr, coutp)
    xsh = x_act.data.shape
    in_specs = [pl.BlockSpec((1, h, w, coutp), lambda i: (i, 0, 0, 0)),
                pl.BlockSpec(stats.shape, lambda i: (0, 0, 0)),
                pl.BlockSpec((1, coutp), lambda i: (0, 0)),
                pl.BlockSpec((1, coutp), lambda i: (0, 0)),
                pl.BlockSpec((1,) + xsh[1:], lambda i: (i, 0, 0, 0))]
    args = [y, stats, g, be, x_act.data]
    nbytes = (_nb((h, w, coutp), jnp.bfloat16) + _nb(stats.shape, jnp.float32)
              + 2 * _nb((1, coutp), jnp.float32) + _nb(xsh[1:], jnp.bfloat16)
              + _nb(osh[1:], jnp.bfloat16))
    if w3 is not None:
        w3p, b3p = _prep_proj_w(w3, b3, coutp)
        in_specs += [pl.BlockSpec(w3p.shape, lambda i: (0, 0)),
                     pl.BlockSpec((1, coutp), lambda i: (0, 0))]
        args += [w3p, b3p]
        nbytes += _nb(w3p.shape, jnp.bfloat16) + _nb((1, coutp), jnp.float32)
        kern = functools.partial(
            bn_proj_add_relu_kernel, count=float(n * h * w), wr=wr, h=h, w=w,
            xo_h=x_act.oh, xo_w=x_act.ow, cinx=x_act.c, coutp=coutp)
    else:
        assert x_act.c == cout
        kern = functools.partial(
            bn_add_relu_kernel, count=float(n * h * w), wr=wr, h=h, w=w,
            xo_h=x_act.oh, xo_w=x_act.ow)
    out = pl.pallas_call(
        kern, grid=(n,), in_specs=in_specs,
        out_specs=pl.BlockSpec((1,) + osh[1:], lambda i: (i, 0, 0, 0)),
        out_shape=jax.ShapeDtypeStruct(osh, jnp.bfloat16),
        compiler_params=_cp(nbytes),
    )(*args)
    return Act(out, h, w, cout, 1, 1)


def stem_layer(x_nhwc, p):
    n, hh, ww, _ = x_nhwc.shape
    ho = (hh + 2 * 3 - 7) // 2 + 1
    wo = (ww + 2 * 3 - 7) // 2 + 1
    # TODO(synk): odd stem-conv output sizes would need a masked phase fold.
    assert ho % 2 == 0 and wo % 2 == 0
    hq, wq = ho // 2, wo // 2
    cout = p['w'].shape[0]
    coutp = _cpad(cout)

    patches = _stem_patches_folded(x_nhwc, hq, wq, kp=256)
    wp, bp = _prep_conv_w(p['w'], p['b'], coutp, kpad=256)
    y, stats = conv_pass1(patches, wp, bp, h=4 * hq, w=wq, cin=256,
                          coutp=coutp, taps=((0, 0),), off_h=0, off_w=0,
                          pad=0, direct=True)

    wr = _wr(wq)
    g, be = _prep_vec(p['gamma'], coutp), _prep_vec(p['beta'], coutp)
    osh = (n, hq + 2, 1 + wq + wr, coutp)
    nbytes = (_nb((4 * hq, wq, coutp), jnp.bfloat16)
              + _nb(stats.shape, jnp.float32)
              + 2 * _nb((1, coutp), jnp.float32) + _nb(osh[1:], jnp.bfloat16))
    out = pl.pallas_call(
        functools.partial(stem_post_kernel, count=float(n * ho * wo),
                          hq=hq, wq=wq, wr=wr),
        grid=(n,),
        in_specs=[pl.BlockSpec((1, 4 * hq, wq, coutp), lambda i: (i, 0, 0, 0)),
                  pl.BlockSpec(stats.shape, lambda i: (0, 0, 0)),
                  pl.BlockSpec((1, coutp), lambda i: (0, 0)),
                  pl.BlockSpec((1, coutp), lambda i: (0, 0))],
        out_specs=pl.BlockSpec((1,) + osh[1:], lambda i: (i, 0, 0, 0)),
        out_shape=jax.ShapeDtypeStruct(osh, jnp.bfloat16),
        compiler_params=_cp(nbytes),
    )(y, stats, g, be)
    return Act(out, hq, wq, cout, 1, 1)


def head_layer(act, w, b):
    n, _, _, cp = act.data.shape
    nc = w.shape[0]
    ncp = _cpad(nc)
    wp = jnp.pad(w.T, ((0, cp - w.shape[1]), (0, ncp - nc))).astype(
        jnp.bfloat16)
    bp = _prep_vec(b, ncp)
    nbytes = (_nb(act.data.shape, jnp.bfloat16) + _nb(wp.shape, jnp.bfloat16)
              + _nb((1, ncp), jnp.float32) + _nb((n, ncp), jnp.float32))
    vmem = pl.BlockSpec(memory_space=pltpu.MemorySpace.VMEM)
    out = pl.pallas_call(
        functools.partial(head_kernel, h=act.h, w=act.w, oh=act.oh, ow=act.ow),
        out_shape=jax.ShapeDtypeStruct((n, ncp), jnp.float32),
        in_specs=[vmem, vmem, vmem],
        out_specs=vmem,
        compiler_params=_cp(nbytes, grid_rank=0),
    )(act.data, wp, bp)
    return out[:, :nc]


# ----------------------------------------------------------------------------
# ResNet forward (Pallas)
# ----------------------------------------------------------------------------
def residual_block(x_act, p):
    y1, s1, c1 = conv3x3_pass1(x_act, p['w1'], p['b1'])
    a = bn_relu_layer(y1, s1, p['g1'], p['be1'], h=x_act.h, w=x_act.w, cout=c1)
    y2, s2, c2 = conv3x3_pass1(a, p['w2'], p['b2'])
    return bn_residual_layer(y2, s2, p['g2'], p['be2'], x_act,
                             p['w3'], p['b3'], h=x_act.h, w=x_act.w, cout=c2)


def resnet_forward(x_nhwc, params):
    act = stem_layer(x_nhwc, params['b1'])
    for bp in params['blocks']:
        act = residual_block(act, bp)
    hd = params['head']
    return head_layer(act, hd['w'], hd['b'])


# ----------------------------------------------------------------------------
# pure-JAX reference (for correctness check)
# ----------------------------------------------------------------------------
def _ref_conv(x, w, b, stride, pad):
    y = lax.conv_general_dilated(
        x, jnp.transpose(w, (2, 3, 1, 0)), (stride, stride),
        ((pad, pad), (pad, pad)),
        dimension_numbers=('NHWC', 'HWIO', 'NHWC'))
    return y + b


def _ref_bn(y, gamma, beta, eps=BN_EPS):
    mean = jnp.mean(y, axis=(0, 1, 2), keepdims=True)
    var = jnp.mean((y - mean) ** 2, axis=(0, 1, 2), keepdims=True)
    return gamma * (y - mean) * lax.rsqrt(var + eps) + beta


def _ref_residual(x, p):
    y = jax.nn.relu(_ref_bn(_ref_conv(x, p['w1'], p['b1'], 1, 1),
                            p['g1'], p['be1']))
    y = _ref_bn(_ref_conv(y, p['w2'], p['b2'], 1, 1), p['g2'], p['be2'])
    sc = x if p['w3'] is None else _ref_conv(x, p['w3'], p['b3'], 1, 0)
    return jax.nn.relu(y + sc)


def ref_forward(x_nhwc, params):
    p = params['b1']
    y = jax.nn.relu(_ref_bn(_ref_conv(x_nhwc, p['w'], p['b'], 2, 3),
                            p['gamma'], p['beta']))
    y = lax.reduce_window(y, -jnp.inf, lax.max, (1, 3, 3, 1), (1, 2, 2, 1),
                          ((0, 0), (1, 1), (1, 1), (0, 0)))
    for bp in params['blocks']:
        y = _ref_residual(y, bp)
    feat = jnp.mean(y, axis=(1, 2))
    h = params['head']
    return feat @ h['w'].T + h['b']


# ----------------------------------------------------------------------------
# deterministic parameter init
# ----------------------------------------------------------------------------
def init_params(key, in_ch=3, arch=((2, 16), (1, 32)), num_classes=10):
    keys = jax.random.split(key, 128)
    it = iter(range(128))

    def nk():
        return keys[next(it)]

    def conv(cout, cin, k):
        fan = cin * k * k
        w = jax.random.normal(nk(), (cout, cin, k, k), jnp.float32) / jnp.sqrt(fan)
        b = 0.1 * jax.random.normal(nk(), (cout,), jnp.float32)
        return w, b

    def bn(c):
        gamma = 1.0 + 0.1 * jax.random.normal(nk(), (c,), jnp.float32)
        beta = 0.1 * jax.random.normal(nk(), (c,), jnp.float32)
        return gamma, beta

    params = {}
    w, b = conv(64, in_ch, 7)
    g, be = bn(64)
    params['b1'] = dict(w=w, b=b, gamma=g, beta=be)

    blocks = []
    c_in = 64
    for num_res, c in arch:
        for i in range(num_res):
            w1, b1 = conv(c, c_in, 3)
            g1, be1 = bn(c)
            w2, b2 = conv(c, c, 3)
            g2, be2 = bn(c)
            bp = dict(w1=w1, b1=b1, g1=g1, be1=be1,
                      w2=w2, b2=b2, g2=g2, be2=be2, w3=None, b3=None)
            if i == 0:
                w3, b3 = conv(c, c_in, 1)
                bp['w3'], bp['b3'] = w3, b3
            blocks.append(bp)
            c_in = c
    params['blocks'] = blocks

    wl = jax.random.normal(nk(), (num_classes, c_in), jnp.float32) / jnp.sqrt(c_in)
    bl = 0.1 * jax.random.normal(nk(), (num_classes,), jnp.float32)
    params['head'] = dict(w=wl, b=bl)
    return params


# ----------------------------------------------------------------------------
if __name__ == "__main__":
    key = jax.random.PRNGKey(0)
    k_x, k_p = jax.random.split(key)

    # small input, PyTorch-style NCHW, converted once to NHWC for the kernels
    x_nchw = jax.random.uniform(k_x, (2, 3, 16, 16), jnp.float32)
    x_nhwc = jnp.transpose(x_nchw, (0, 2, 3, 1))

    params = init_params(k_p, in_ch=3, arch=((2, 16), (1, 32)), num_classes=10)

    forward = jax.jit(resnet_forward)
    out = jax.block_until_ready(forward(x_nhwc, params))

    assert out.shape == (2, 10), out.shape
    assert bool(jnp.all(jnp.isfinite(out)))

    ref = jax.block_until_ready(ref_forward(x_nhwc, params))
    # bf16 activation / pass-1 storage and bf16 MXU operands vs the f32 ref.
    max_err = float(jnp.max(jnp.abs(out - ref)))
    assert max_err < 2e-1, f"mismatch vs reference: {max_err}"

    print("KERNEL_OK")
</pallas_src>

<mosaic_0001>
module attributes {stable_mosaic.version = 11 : i64} {
  func.func @conv_stats_kernel(%arg0: i32, %arg1: memref<1x16x4x256xbf16, #tpu.memory_space<vmem>>, %arg2: memref<256x128xbf16, #tpu.memory_space<vmem>>, %arg3: memref<1x128xf32, #tpu.memory_space<vmem>>, %arg4: memref<1x16x4x128xbf16, #tpu.memory_space<vmem>>, %arg5: memref<1x2x128xf32, #tpu.memory_space<vmem>>) attributes {dimension_semantics = [#tpu.dimension_semantics<parallel>], iteration_bounds = array<i64: 2>, scalar_prefetch = 0 : i64, scratch_operands = 0 : i64, tpu.core_type = #tpu.core_type<tc>, window_params = [{transform_indices = @transform_0, window_bounds = array<i64: 1, 16, 4, 256>}, {pipeline_mode = #tpu.pipeline_mode<synchronous>, transform_indices = @transform_1, window_bounds = array<i64: 256, 128>}, {pipeline_mode = #tpu.pipeline_mode<synchronous>, transform_indices = @transform_2, window_bounds = array<i64: 1, 128>}, {transform_indices = @transform_3, window_bounds = array<i64: 1, 16, 4, 128>}, {transform_indices = @transform_4, window_bounds = array<i64: 1, 2, 128>}]} {
    %cst = arith.constant 0.000000e+00 : f32
    %0 = vector.broadcast %cst : f32 to vector<64x128xf32>
    %c0 = arith.constant 0 : index
    %c0_0 = arith.constant 0 : index
    %c0_1 = arith.constant 0 : index
    %c0_2 = arith.constant 0 : index
    %1 = vector.load %arg1[%c0, %c0_0, %c0_1, %c0_2] : memref<1x16x4x256xbf16, #tpu.memory_space<vmem>>, vector<1x16x4x256xbf16>
    %2 = vector.shape_cast %1 : vector<1x16x4x256xbf16> to vector<16x4x256xbf16>
    %3 = vector.shape_cast %2 : vector<16x4x256xbf16> to vector<64x256xbf16>
    %c0_3 = arith.constant 0 : index
    %c0_4 = arith.constant 0 : index
    %4 = vector.load %arg2[%c0_3, %c0_4] : memref<256x128xbf16, #tpu.memory_space<vmem>>, vector<256x128xbf16>
    %cst_5 = arith.constant dense<0.000000e+00> : vector<64x128xf32>
    %5 = tpu.matmul %3, %4, %cst_5 {dimension_numbers = #tpu.dot_dimension_numbers<[1], [0], [0], [1], [0, 0, 1, 1], [], []>} : vector<64x256xbf16>, vector<256x128xbf16>, vector<64x128xf32> -> vector<64x128xf32>
    %6 = arith.addf %0, %5 : vector<64x128xf32>
    %c0_6 = arith.constant 0 : index
    %c0_7 = arith.constant 0 : index
    %7 = vector.load %arg3[%c0_6, %c0_7] : memref<1x128xf32, #tpu.memory_space<vmem>>, vector<1x128xf32>
    %8 = vector.broadcast %7 : vector<1x128xf32> to vector<64x128xf32>
    %9 = arith.addf %6, %8 : vector<64x128xf32>
    %10 = vector.shape_cast %9 : vector<64x128xf32> to vector<16x4x128xf32>
    %11 = arith.truncf %10 : vector<16x4x128xf32> to vector<16x4x128xbf16>
    %c0_8 = arith.constant 0 : index
    %c0_9 = arith.constant 0 : index
    %c0_10 = arith.constant 0 : index
    %c0_11 = arith.constant 0 : index
    %12 = vector.load %arg4[%c0_8, %c0_9, %c0_10, %c0_11] : memref<1x16x4x128xbf16, #tpu.memory_space<vmem>>, vector<1x16x4x128xbf16>
    %13 = vector.shape_cast %12 : vector<1x16x4x128xbf16> to vector<16x4x128xbf16>
    %14 = vector.shape_cast %11 : vector<16x4x128xbf16> to vector<1x16x4x128xbf16>
    tpu.vector_store %arg4[%c0_8, %c0_9, %c0_10, %c0_11], %14 {strides = array<i32>} : memref<1x16x4x128xbf16, #tpu.memory_space<vmem>>, vector<1x16x4x128xbf16>,
    %cst_12 = arith.constant dense<0.000000e+00> : vector<128xf32>
    %15 = vector.multi_reduction <add>, %9, %cst_12 [0] : vector<64x128xf32> to vector<128xf32>
    %16 = vector.shape_cast %15 : vector<128xf32> to vector<1x128xf32>
    %17 = arith.mulf %9, %9 : vector<64x128xf32>
    %cst_13 = arith.constant dense<0.000000e+00> : vector<128xf32>
    %18 = vector.multi_reduction <add>, %17, %cst_13 [0] : vector<64x128xf32> to vector<128xf32>
    %19 = vector.shape_cast %18 : vector<128xf32> to vector<1x128xf32>
    %20 = tpu.concatenate %16, %19 in 0 : vector<1x128xf32>, vector<1x128xf32> -> vector<2x128xf32>
    %c0_14 = arith.constant 0 : index
    %c0_15 = arith.constant 0 : index
    %c0_16 = arith.constant 0 : index
    %21 = vector.load %arg5[%c0_14, %c0_15, %c0_16] : memref<1x2x128xf32, #tpu.memory_space<vmem>>, vector<1x2x128xf32>
    %22 = vector.shape_cast %21 : vector<1x2x128xf32> to vector<2x128xf32>
    %23 = vector.shape_cast %20 : vector<2x128xf32> to vector<1x2x128xf32>
    tpu.vector_store %arg5[%c0_14, %c0_15, %c0_16], %23 {strides = array<i32>} : memref<1x2x128xf32, #tpu.memory_space<vmem>>, vector<1x2x128xf32>,
    return
  }
  func.func @transform_0(%arg0: i32) -> (i32, i32, i32, i32) {
    %c0_i32 = arith.constant 0 : i32
    %c0_i32_0 = arith.constant 0 : i32
    %c0_i32_1 = arith.constant 0 : i32
    %c0_i32_2 = arith.constant 0 : i32
    return %arg0, %c0_i32, %c0_i32_0, %c0_i32_1 : i32, i32, i32, i32
  }
  func.func @transform_1(%arg0: i32) -> (i32, i32) {
    %c0_i32 = arith.constant 0 : i32
    %c0_i32_0 = arith.constant 0 : i32
    %c0_i32_1 = arith.constant 0 : i32
    return %c0_i32, %c0_i32_0 : i32, i32
  }
  func.func @transform_2(%arg0: i32) -> (i32, i32) {
    %c0_i32 = arith.constant 0 : i32
    %c0_i32_0 = arith.constant 0 : i32
    %c0_i32_1 = arith.constant 0 : i32
    return %c0_i32, %c0_i32_0 : i32, i32
  }
  func.func @transform_3(%arg0: i32) -> (i32, i32, i32, i32) {
    %c0_i32 = arith.constant 0 : i32
    %c0_i32_0 = arith.constant 0 : i32
    %c0_i32_1 = arith.constant 0 : i32
    %c0_i32_2 = arith.constant 0 : i32
    return %arg0, %c0_i32, %c0_i32_0, %c0_i32_1 : i32, i32, i32, i32
  }
  func.func @transform_4(%arg0: i32) -> (i32, i32, i32) {
    %c0_i32 = arith.constant 0 : i32
    %c0_i32_0 = arith.constant 0 : i32
    %c0_i32_1 = arith.constant 0 : i32
    return %arg0, %c0_i32, %c0_i32_0 : i32, i32, i32
  }
}

module attributes {stable_mosaic.version = 11 : i64} {
  func.func @stem_post_kernel(%arg0: i32, %arg1: memref<1x16x4x128xbf16, #tpu.memory_space<vmem>>, %arg2: memref<2x2x128xf32, #tpu.memory_space<vmem>>, %arg3: memref<1x128xf32, #tpu.memory_space<vmem>>, %arg4: memref<1x128xf32, #tpu.memory_space<vmem>>, %arg5: memref<1x6x8x128xbf16, #tpu.memory_space<vmem>>) attributes {dimension_semantics = [#tpu.dimension_semantics<parallel>], iteration_bounds = array<i64: 2>, scalar_prefetch = 0 : i64, scratch_operands = 0 : i64, tpu.core_type = #tpu.core_type<tc>, window_params = [{transform_indices = @transform_0, window_bounds = array<i64: 1, 16, 4, 128>}, {pipeline_mode = #tpu.pipeline_mode<synchronous>, transform_indices = @transform_1, window_bounds = array<i64: 2, 2, 128>}, {pipeline_mode = #tpu.pipeline_mode<synchronous>, transform_indices = @transform_2, window_bounds = array<i64: 1, 128>}, {pipeline_mode = #tpu.pipeline_mode<synchronous>, transform_indices = @transform_3, window_bounds = array<i64: 1, 128>}, {transform_indices = @transform_4, window_bounds = array<i64: 1, 6, 8, 128>}]} {
    %c0 = arith.constant 0 : index
    %c0_0 = arith.constant 0 : index
    %c0_1 = arith.constant 0 : index
    %0 = vector.load %arg2[%c0, %c0_0, %c0_1] : memref<2x2x128xf32, #tpu.memory_space<vmem>>, vector<2x2x128xf32>
    %cst = arith.constant dense<0.000000e+00> : vector<2x128xf32>
    %1 = vector.multi_reduction <add>, %0, %cst [0] : vector<2x2x128xf32> to vector<2x128xf32>
    %2 = vector.extract_strided_slice %1 {offsets = [0, 0], sizes = [1, 128], strides = [1, 1]} : vector<2x128xf32> to vector<1x128xf32>
    %cst_2 = arith.constant 7.812500e-03 : f32
    %3 = vector.broadcast %cst_2 : f32 to vector<1x128xf32>
    %4 = arith.mulf %2, %3 : vector<1x128xf32>
    %5 = vector.extract_strided_slice %1 {offsets = [1, 0], sizes = [1, 128], strides = [1, 1]} : vector<2x128xf32> to vector<1x128xf32>
    %cst_3 = arith.constant 7.812500e-03 : f32
    %6 = vector.broadcast %cst_3 : f32 to vector<1x128xf32>
    %7 = arith.mulf %5, %6 : vector<1x128xf32>
    %8 = arith.mulf %4, %4 : vector<1x128xf32>
    %9 = arith.subf %7, %8 : vector<1x128xf32>
    %c0_4 = arith.constant 0 : index
    %c0_5 = arith.constant 0 : index
    %10 = vector.load %arg3[%c0_4, %c0_5] : memref<1x128xf32, #tpu.memory_space<vmem>>, vector<1x128xf32>
    %cst_6 = arith.constant 9.99999974E-6 : f32
    %11 = vector.broadcast %cst_6 : f32 to vector<1x128xf32>
    %12 = arith.addf %9, %11 : vector<1x128xf32>
    %13 = math.rsqrt %12 : vector<1x128xf32>
    %14 = arith.mulf %10, %13 : vector<1x128xf32>
    %c0_7 = arith.constant 0 : index
    %c0_8 = arith.constant 0 : index
    %15 = vector.load %arg4[%c0_7, %c0_8] : memref<1x128xf32, #tpu.memory_space<vmem>>, vector<1x128xf32>
    %16 = arith.mulf %4, %14 : vector<1x128xf32>
    %17 = arith.subf %15, %16 : vector<1x128xf32>
    %c0_9 = arith.constant 0 : index
    %c0_10 = arith.constant 0 : index
    %c0_11 = arith.constant 0 : index
    %c0_12 = arith.constant 0 : index
    %18 = vector.load %arg1[%c0_9, %c0_10, %c0_11, %c0_12] : memref<1x16x4x128xbf16, #tpu.memory_space<vmem>>, vector<1x16x4x128xbf16>
    %19 = vector.shape_cast %18 : vector<1x16x4x128xbf16> to vector<16x4x128xbf16>
    %20 = arith.extf %19 : vector<16x4x128xbf16> to vector<16x4x128xf32>
    %21 = vector.shape_cast %14 : vector<1x128xf32> to vector<1x1x128xf32>
    %22 = vector.broadcast %21 : vector<1x1x128xf32> to vector<16x4x128xf32>
    %23 = arith.mulf %20, %22 : vector<16x4x128xf32>
    %24 = vector.shape_cast %17 : vector<1x128xf32> to vector<1x1x128xf32>
    %25 = vector.broadcast %24 : vector<1x1x128xf32> to vector<16x4x128xf32>
    %26 = arith.addf %23, %25 : vector<16x4x128xf32>
    %cst_13 = arith.constant 0.000000e+00 : f32
    %27 = vector.broadcast %cst_13 : f32 to vector<16x4x128xf32>
    %28 = arith.maximumf %26, %27 : vector<16x4x128xf32>
    %cst_14 = arith.constant 0.000000e+00 : f32
    %29 = vector.broadcast %cst_14 : f32 to vector<1x4x128xf32>
    %cst_15 = arith.constant 0.000000e+00 : f32
    %30 = vector.broadcast %cst_15 : f32 to vector<4x1x128xf32>
    %31 = vector.extract_strided_slice %28 {offsets = [12, 0, 0], sizes = [4, 4, 128], strides = [1, 1, 1]} : vector<16x4x128xf32> to vector<4x4x128xf32>
    %32 = vector.extract_strided_slice %31 {offsets = [0, 0, 0], sizes = [3, 4, 128], strides = [1, 1, 1]} : vector<4x4x128xf32> to vector<3x4x128xf32>
    %33 = tpu.concatenate %29, %32 in 0 : vector<1x4x128xf32>, vector<3x4x128xf32> -> vector<4x4x128xf32>
    %34 = vector.extract_strided_slice %33 {offsets = [0, 0, 0], sizes = [4, 3, 128], strides = [1, 1, 1]} : vector<4x4x128xf32> to vector<4x3x128xf32>
    %35 = tpu.concatenate %30, %34 in 1 : vector<4x1x128xf32>, vector<4x3x128xf32> -> vector<4x4x128xf32>
    %36 = vector.extract_strided_slice %28 {offsets = [8, 0, 0], sizes = [4, 4, 128], strides = [1, 1, 1]} : vector<16x4x128xf32> to vector<4x4x128xf32>
    %37 = vector.extract_strided_slice %36 {offsets = [0, 0, 0], sizes = [3, 4, 128], strides = [1, 1, 1]} : vector<4x4x128xf32> to vector<3x4x128xf32>
    %38 = tpu.concatenate %29, %37 in 0 : vector<1x4x128xf32>, vector<3x4x128xf32> -> vector<4x4x128xf32>
    %39 = arith.maximumf %35, %38 : vector<4x4x128xf32>
    %40 = vector.extract_strided_slice %28 {offsets = [12, 0, 0], sizes = [4, 4, 128], strides = [1, 1, 1]} : vector<16x4x128xf32> to vector<4x4x128xf32>
    %41 = vector.extract_strided_slice %40 {offsets = [0, 0, 0], sizes = [3, 4, 128], strides = [1, 1, 1]} : vector<4x4x128xf32> to vector<3x4x128xf32>
    %42 = tpu.concatenate %29, %41 in 0 : vector<1x4x128xf32>, vector<3x4x128xf32> -> vector<4x4x128xf32>
    %43 = arith.maximumf %39, %42 : vector<4x4x128xf32>
    %44 = vector.extract_strided_slice %28 {offsets = [4, 0, 0], sizes = [4, 4, 128], strides = [1, 1, 1]} : vector<16x4x128xf32> to vector<4x4x128xf32>
    %45 = vector.extract_strided_slice %44 {offsets = [0, 0, 0], sizes = [4, 3, 128], strides = [1, 1, 1]} : vector<4x4x128xf32> to vector<4x3x128xf32>
    %46 = tpu.concatenate %30, %45 in 1 : vector<4x1x128xf32>, vector<4x3x128xf32> -> vector<4x4x128xf32>
    %47 = arith.maximumf %43, %46 : vector<4x4x128xf32>
    %48 = vector.extract_strided_slice %28 {offsets = [0, 0, 0], sizes = [4, 4, 128], strides = [1, 1, 1]} : vector<16x4x128xf32> to vector<4x4x128xf32>
    %49 = arith.maximumf %47, %48 : vector<4x4x128xf32>
    %50 = vector.extract_strided_slice %28 {offsets = [4, 0, 0], sizes = [4, 4, 128], strides = [1, 1, 1]} : vector<16x4x128xf32> to vector<4x4x128xf32>
    %51 = arith.maximumf %49, %50 : vector<4x4x128xf32>
    %52 = vector.extract_strided_slice %28 {offsets = [12, 0, 0], sizes = [4, 4, 128], strides = [1, 1, 1]} : vector<16x4x128xf32> to vector<4x4x128xf32>
    %53 = vector.extract_strided_slice %52 {offsets = [0, 0, 0], sizes = [4, 3, 128], strides = [1, 1, 1]} : vector<4x4x128xf32> to vector<4x3x128xf32>
    %54 = tpu.concatenate %30, %53 in 1 : vector<4x1x128xf32>, vector<4x3x128xf32> -> vector<4x4x128xf32>
    %55 = arith.maximumf %51, %54 : vector<4x4x128xf32>
    %56 = vector.extract_strided_slice %28 {offsets = [8, 0, 0], sizes = [4, 4, 128], strides = [1, 1, 1]} : vector<16x4x128xf32> to vector<4x4x128xf32>
    %57 = arith.maximumf %55, %56 : vector<4x4x128xf32>
    %58 = vector.extract_strided_slice %28 {offsets = [12, 0, 0], sizes = [4, 4, 128], strides = [1, 1, 1]} : vector<16x4x128xf32> to vector<4x4x128xf32>
    %59 = arith.maximumf %57, %58 : vector<4x4x128xf32>
    %60 = arith.truncf %59 : vector<4x4x128xf32> to vector<4x4x128xbf16>
    %cst_16 = arith.constant 0.000000e+00 : bf16
    %61 = vector.broadcast %cst_16 : bf16 to vector<4x1x128xbf16>
    %cst_17 = arith.constant 0.000000e+00 : bf16
    %62 = vector.broadcast %cst_17 : bf16 to vector<4x3x128xbf16>
    %63 = tpu.concatenate %61, %60, %62 in 1 : vector<4x1x128xbf16>, vector<4x4x128xbf16>, vector<4x3x128xbf16> -> vector<4x8x128xbf16>
    %cst_18 = arith.constant 0.000000e+00 : bf16
    %64 = vector.broadcast %cst_18 : bf16 to vector<1x8x128xbf16>
    %65 = tpu.concatenate %64, %63, %64 in 0 : vector<1x8x128xbf16>, vector<4x8x128xbf16>, vector<1x8x128xbf16> -> vector<6x8x128xbf16>
    %c0_19 = arith.constant 0 : index
    %c0_20 = arith.constant 0 : index
    %c0_21 = arith.constant 0 : index
    %c0_22 = arith.constant 0 : index
    %66 = vector.load %arg5[%c0_19, %c0_20, %c0_21, %c0_22] : memref<1x6x8x128xbf16, #tpu.memory_space<vmem>>, vector<1x6x8x128xbf16>
    %67 = vector.shape_cast %66 : vector<1x6x8x128xbf16> to vector<6x8x128xbf16>
    %68 = vector.shape_cast %65 : vector<6x8x128xbf16> to vector<1x6x8x128xbf16>
    tpu.vector_store %arg5[%c0_19, %c0_20, %c0_21, %c0_22], %68 {strides = array<i32>} : memref<1x6x8x128xbf16, #tpu.memory_space<vmem>>, vector<1x6x8x128xbf16>,
    return
  }
  func.func @transform_0(%arg0: i32) -> (i32, i32, i32, i32) {
    %c0_i32 = arith.constant 0 : i32
    %c0_i32_0 = arith.constant 0 : i32
    %c0_i32_1 = arith.constant 0 : i32
    %c0_i32_2 = arith.constant 0 : i32
    return %arg0, %c0_i32, %c0_i32_0, %c0_i32_1 : i32, i32, i32, i32
  }
  func.func @transform_1(%arg0: i32) -> (i32, i32, i32) {
    %c0_i32 = arith.constant 0 : i32
    %c0_i32_0 = arith.constant 0 : i32
    %c0_i32_1 = arith.constant 0 : i32
    %c0_i32_2 = arith.constant 0 : i32
    return %c0_i32, %c0_i32_0, %c0_i32_1 : i32, i32, i32
  }
  func.func @transform_2(%arg0: i32) -> (i32, i32) {
    %c0_i32 = arith.constant 0 : i32
    %c0_i32_0 = arith.constant 0 : i32
    %c0_i32_1 = arith.constant 0 : i32
    return %c0_i32, %c0_i32_0 : i32, i32
  }
  func.func @transform_3(%arg0: i32) -> (i32, i32) {
    %c0_i32 = arith.constant 0 : i32
    %c0_i32_0 = arith.constant 0 : i32
    %c0_i32_1 = arith.constant 0 : i32
    return %c0_i32, %c0_i32_0 : i32, i32
  }
  func.func @transform_4(%arg0: i32) -> (i32, i32, i32, i32) {
    %c0_i32 = arith.constant 0 : i32
    %c0_i32_0 = arith.constant 0 : i32
    %c0_i32_1 = arith.constant 0 : i32
    %c0_i32_2 = arith.constant 0 : i32
    return %arg0, %c0_i32, %c0_i32_0, %c0_i32_1 : i32, i32, i32, i32
  }
}

module attributes {stable_mosaic.version = 11 : i64} {
  func.func @conv_stats_kernel(%arg0: i32, %arg1: memref<1x6x8x128xbf16, #tpu.memory_space<vmem>>, %arg2: memref<576x128xbf16, #tpu.memory_space<vmem>>, %arg3: memref<1x128xf32, #tpu.memory_space<vmem>>, %arg4: memref<1x4x4x128xbf16, #tpu.memory_space<vmem>>, %arg5: memref<1x2x128xf32, #tpu.memory_space<vmem>>, %arg6: memref<4x4x576xbf16, #tpu.memory_space<vmem>>) attributes {dimension_semantics = [#tpu.dimension_semantics<parallel>], iteration_bounds = array<i64: 2>, scalar_prefetch = 0 : i64, scratch_operands = 1 : i64, tpu.core_type = #tpu.core_type<tc>, window_params = [{transform_indices = @transform_0, window_bounds = array<i64: 1, 6, 8, 128>}, {pipeline_mode = #tpu.pipeline_mode<synchronous>, transform_indices = @transform_1, window_bounds = array<i64: 576, 128>}, {pipeline_mode = #tpu.pipeline_mode<synchronous>, transform_indices = @transform_2, window_bounds = array<i64: 1, 128>}, {transform_indices = @transform_3, window_bounds = array<i64: 1, 4, 4, 128>}, {transform_indices = @transform_4, window_bounds = array<i64: 1, 2, 128>}]} {
    %c0 = arith.constant 0 : index
    %c0_0 = arith.constant 0 : index
    %c0_1 = arith.constant 0 : index
    %c0_2 = arith.constant 0 : index
    %0 = vector.load %arg1[%c0, %c0_0, %c0_1, %c0_2] : memref<1x6x8x128xbf16, #tpu.memory_space<vmem>>, vector<1x4x4x64xbf16>
    %1 = vector.shape_cast %0 : vector<1x4x4x64xbf16> to vector<4x4x64xbf16>
    %c0_3 = arith.constant 0 : index
    %c0_4 = arith.constant 0 : index
    %c0_5 = arith.constant 0 : index
    %2 = vector.load %arg6[%c0_3, %c0_4, %c0_5] : memref<4x4x576xbf16, #tpu.memory_space<vmem>>, vector<4x4x64xbf16>
    tpu.vector_store %arg6[%c0_3, %c0_4, %c0_5], %1 {strides = array<i32>} : memref<4x4x576xbf16, #tpu.memory_space<vmem>>, vector<4x4x64xbf16>,
    %c0_6 = arith.constant 0 : index
    %c0_7 = arith.constant 0 : index
    %c1 = arith.constant 1 : index
    %c0_8 = arith.constant 0 : index
    %3 = vector.load %arg1[%c0_6, %c0_7, %c1, %c0_8] : memref<1x6x8x128xbf16, #tpu.memory_space<vmem>>, vector<1x4x4x64xbf16>
    %4 = vector.shape_cast %3 : vector<1x4x4x64xbf16> to vector<4x4x64xbf16>
    %c0_9 = arith.constant 0 : index
    %c0_10 = arith.constant 0 : index
    %c64 = arith.constant 64 : index
    %5 = vector.load %arg6[%c0_9, %c0_10, %c64] : memref<4x4x576xbf16, #tpu.memory_space<vmem>>, vector<4x4x64xbf16>
    tpu.vector_store %arg6[%c0_9, %c0_10, %c64], %4 {strides = array<i32>} : memref<4x4x576xbf16, #tpu.memory_space<vmem>>, vector<4x4x64xbf16>,
    %c0_11 = arith.constant 0 : index
    %c0_12 = arith.constant 0 : index
    %c2 = arith.constant 2 : index
    %c0_13 = arith.constant 0 : index
    %6 = vector.load %arg1[%c0_11, %c0_12, %c2, %c0_13] : memref<1x6x8x128xbf16, #tpu.memory_space<vmem>>, vector<1x4x4x64xbf16>
    %7 = vector.shape_cast %6 : vector<1x4x4x64xbf16> to vector<4x4x64xbf16>
    %c0_14 = arith.constant 0 : index
    %c0_15 = arith.constant 0 : index
    %c128 = arith.constant 128 : index
    %8 = vector.load %arg6[%c0_14, %c0_15, %c128] : memref<4x4x576xbf16, #tpu.memory_space<vmem>>, vector<4x4x64xbf16>
    tpu.vector_store %arg6[%c0_14, %c0_15, %c128], %7 {strides = array<i32>} : memref<4x4x576xbf16, #tpu.memory_space<vmem>>, vector<4x4x64xbf16>,
    %c0_16 = arith.constant 0 : index
    %c1_17 = arith.constant 1 : index
    %c0_18 = arith.constant 0 : index
    %c0_19 = arith.constant 0 : index
    %9 = vector.load %arg1[%c0_16, %c1_17, %c0_18, %c0_19] : memref<1x6x8x128xbf16, #tpu.memory_space<vmem>>, vector<1x4x4x64xbf16>
    %10 = vector.shape_cast %9 : vector<1x4x4x64xbf16> to vector<4x4x64xbf16>
    %c0_20 = arith.constant 0 : index
    %c0_21 = arith.constant 0 : index
    %c192 = arith.constant 192 : index
    %11 = vector.load %arg6[%c0_20, %c0_21, %c192] : memref<4x4x576xbf16, #tpu.memory_space<vmem>>, vector<4x4x64xbf16>
    tpu.vector_store %arg6[%c0_20, %c0_21, %c192], %10 {strides = array<i32>} : memref<4x4x576xbf16, #tpu.memory_space<vmem>>, vector<4x4x64xbf16>,
    %c0_22 = arith.constant 0 : index
    %c1_23 = arith.constant 1 : index
    %c1_24 = arith.constant 1 : index
    %c0_25 = arith.constant 0 : index
    %12 = vector.load %arg1[%c0_22, %c1_23, %c1_24, %c0_25] : memref<1x6x8x128xbf16, #tpu.memory_space<vmem>>, vector<1x4x4x64xbf16>
    %13 = vector.shape_cast %12 : vector<1x4x4x64xbf16> to vector<4x4x64xbf16>
    %c0_26 = arith.constant 0 : index
    %c0_27 = arith.constant 0 : index
    %c256 = arith.constant 256 : index
    %14 = vector.load %arg6[%c0_26, %c0_27, %c256] : memref<4x4x576xbf16, #tpu.memory_space<vmem>>, vector<4x4x64xbf16>
    tpu.vector_store %arg6[%c0_26, %c0_27, %c256], %13 {strides = array<i32>} : memref<4x4x576xbf16, #tpu.memory_space<vmem>>, vector<4x4x64xbf16>,
    %c0_28 = arith.constant 0 : index
    %c1_29 = arith.constant 1 : index
    %c2_30 = arith.constant 2 : index
    %c0_31 = arith.constant 0 : index
    %15 = vector.load %arg1[%c0_28, %c1_29, %c2_30, %c0_31] : memref<1x6x8x128xbf16, #tpu.memory_space<vmem>>, vector<1x4x4x64xbf16>
    %16 = vector.shape_cast %15 : vector<1x4x4x64xbf16> to vector<4x4x64xbf16>
    %c0_32 = arith.constant 0 : index
    %c0_33 = arith.constant 0 : index
    %c320 = arith.constant 320 : index
    %17 = vector.load %arg6[%c0_32, %c0_33, %c320] : memref<4x4x576xbf16, #tpu.memory_space<vmem>>, vector<4x4x64xbf16>
    tpu.vector_store %arg6[%c0_32, %c0_33, %c320], %16 {strides = array<i32>} : memref<4x4x576xbf16, #tpu.memory_space<vmem>>, vector<4x4x64xbf16>,
    %c0_34 = arith.constant 0 : index
    %c2_35 = arith.constant 2 : index
    %c0_36 = arith.constant 0 : index
    %c0_37 = arith.constant 0 : index
    %18 = vector.load %arg1[%c0_34, %c2_35, %c0_36, %c0_37] : memref<1x6x8x128xbf16, #tpu.memory_space<vmem>>, vector<1x4x4x64xbf16>
    %19 = vector.shape_cast %18 : vector<1x4x4x64xbf16> to vector<4x4x64xbf16>
    %c0_38 = arith.constant 0 : index
    %c0_39 = arith.constant 0 : index
    %c384 = arith.constant 384 : index
    %20 = vector.load %arg6[%c0_38, %c0_39, %c384] : memref<4x4x576xbf16, #tpu.memory_space<vmem>>, vector<4x4x64xbf16>
    tpu.vector_store %arg6[%c0_38, %c0_39, %c384], %19 {strides = array<i32>} : memref<4x4x576xbf16, #tpu.memory_space<vmem>>, vector<4x4x64xbf16>,
    %c0_40 = arith.constant 0 : index
    %c2_41 = arith.constant 2 : index
    %c1_42 = arith.constant 1 : index
    %c0_43 = arith.constant 0 : index
    %21 = vector.load %arg1[%c0_40, %c2_41, %c1_42, %c0_43] : memref<1x6x8x128xbf16, #tpu.memory_space<vmem>>, vector<1x4x4x64xbf16>
    %22 = vector.shape_cast %21 : vector<1x4x4x64xbf16> to vector<4x4x64xbf16>
    %c0_44 = arith.constant 0 : index
    %c0_45 = arith.constant 0 : index
    %c448 = arith.constant 448 : index
    %23 = vector.load %arg6[%c0_44, %c0_45, %c448] : memref<4x4x576xbf16, #tpu.memory_space<vmem>>, vector<4x4x64xbf16>
    tpu.vector_store %arg6[%c0_44, %c0_45, %c448], %22 {strides = array<i32>} : memref<4x4x576xbf16, #tpu.memory_space<vmem>>, vector<4x4x64xbf16>,
    %c0_46 = arith.constant 0 : index
    %c2_47 = arith.constant 2 : index
    %c2_48 = arith.constant 2 : index
    %c0_49 = arith.constant 0 : index
    %24 = vector.load %arg1[%c0_46, %c2_47, %c2_48, %c0_49] : memref<1x6x8x128xbf16, #tpu.memory_space<vmem>>, vector<1x4x4x64xbf16>
    %25 = vector.shape_cast %24 : vector<1x4x4x64xbf16> to vector<4x4x64xbf16>
    %c0_50 = arith.constant 0 : index
    %c0_51 = arith.constant 0 : index
    %c512 = arith.constant 512 : index
    %26 = vector.load %arg6[%c0_50, %c0_51, %c512] : memref<4x4x576xbf16, #tpu.memory_space<vmem>>, vector<4x4x64xbf16>
    tpu.vector_store %arg6[%c0_50, %c0_51, %c512], %25 {strides = array<i32>} : memref<4x4x576xbf16, #tpu.memory_space<vmem>>, vector<4x4x64xbf16>,
    %cst = arith.constant 0.000000e+00 : f32
    %27 = vector.broadcast %cst : f32 to vector<16x128xf32>
    %c0_52 = arith.constant 0 : index
    %c0_53 = arith.constant 0 : index
    %c0_54 = arith.constant 0 : index
    %28 = vector.load %arg6[%c0_52, %c0_53, %c0_54] : memref<4x4x576xbf16, #tpu.memory_space<vmem>>, vector<4x4x256xbf16>
    %29 = vector.shape_cast %28 : vector<4x4x256xbf16> to vector<16x256xbf16>
    %c0_55 = arith.constant 0 : index
    %c0_56 = arith.constant 0 : index
    %30 = vector.load %arg2[%c0_55, %c0_56] : memref<576x128xbf16, #tpu.memory_space<vmem>>, vector<256x128xbf16>
    %cst_57 = arith.constant dense<0.000000e+00> : vector<16x128xf32>
    %31 = tpu.matmul %29, %30, %cst_57 {dimension_numbers = #tpu.dot_dimension_numbers<[1], [0], [0], [1], [0, 0, 1, 1], [], []>} : vector<16x256xbf16>, vector<256x128xbf16>, vector<16x128xf32> -> vector<16x128xf32>
    %32 = arith.addf %27, %31 : vector<16x128xf32>
    %c0_58 = arith.constant 0 : index
    %c0_59 = arith.constant 0 : index
    %c256_60 = arith.constant 256 : index
    %33 = vector.load %arg6[%c0_58, %c0_59, %c256_60] : memref<4x4x576xbf16, #tpu.memory_space<vmem>>, vector<4x4x256xbf16>
    %34 = vector.shape_cast %33 : vector<4x4x256xbf16> to vector<16x256xbf16>
    %c256_61 = arith.constant 256 : index
    %c0_62 = arith.constant 0 : index
    %35 = vector.load %arg2[%c256_61, %c0_62] : memref<576x128xbf16, #tpu.memory_space<vmem>>, vector<256x128xbf16>
    %cst_63 = arith.constant dense<0.000000e+00> : vector<16x128xf32>
    %36 = tpu.matmul %34, %35, %cst_63 {dimension_numbers = #tpu.dot_dimension_numbers<[1], [0], [0], [1], [0, 0, 1, 1], [], []>} : vector<16x256xbf16>, vector<256x128xbf16>, vector<16x128xf32> -> vector<16x128xf32>
    %37 = arith.addf %32, %36 : vector<16x128xf32>
    %c0_64 = arith.constant 0 : index
    %c0_65 = arith.constant 0 : index
    %c512_66 = arith.constant 512 : index
    %38 = vector.load %arg6[%c0_64, %c0_65, %c512_66] : memref<4x4x576xbf16, #tpu.memory_space<vmem>>, vector<4x4x64xbf16>
    %39 = vector.shape_cast %38 : vector<4x4x64xbf16> to vector<16x64xbf16>
    %c512_67 = arith.constant 512 : index
    %c0_68 = arith.constant 0 : index
    %40 = vector.load %arg2[%c512_67, %c0_68] : memref<576x128xbf16, #tpu.memory_space<vmem>>, vector<64x128xbf16>
    %cst_69 = arith.constant dense<0.000000e+00> : vector<16x128xf32>
    %41 = tpu.matmul %39, %40, %cst_69 {dimension_numbers = #tpu.dot_dimension_numbers<[1], [0], [0], [1], [0, 0, 1, 1], [], []>} : vector<16x64xbf16>, vector<64x128xbf16>, vector<16x128xf32> -> vector<16x128xf32>
    %42 = arith.addf %37, %41 : vector<16x128xf32>
    %c0_70 = arith.constant 0 : index
    %c0_71 = arith.constant 0 : index
    %43 = vector.load %arg3[%c0_70, %c0_71] : memref<1x128xf32, #tpu.memory_space<vmem>>, vector<1x128xf32>
    %44 = vector.broadcast %43 : vector<1x128xf32> to vector<16x128xf32>
    %45 = arith.addf %42, %44 : vector<16x128xf32>
    %46 = vector.shape_cast %45 : vector<16x128xf32> to vector<4x4x128xf32>
    %47 = arith.truncf %46 : vector<4x4x128xf32> to vector<4x4x128xbf16>
    %c0_72 = arith.constant 0 : index
    %c0_73 = arith.constant 0 : index
    %c0_74 = arith.constant 0 : index
    %c0_75 = arith.constant 0 : index
    %48 = vector.load %arg4[%c0_72, %c0_73, %c0_74, %c0_75] : memref<1x4x4x128xbf16, #tpu.memory_space<vmem>>, vector<1x4x4x128xbf16>
    %49 = vector.shape_cast %48 : vector<1x4x4x128xbf16> to vector<4x4x128xbf16>
    %50 = vector.shape_cast %47 : vector<4x4x128xbf16> to vector<1x4x4x128xbf16>
    tpu.vector_store %arg4[%c0_72, %c0_73, %c0_74, %c0_75], %50 {strides = array<i32>} : memref<1x4x4x128xbf16, #tpu.memory_space<vmem>>, vector<1x4x4x128xbf16>,
    %cst_76 = arith.constant dense<0.000000e+00> : vector<128xf32>
    %51 = vector.multi_reduction <add>, %45, %cst_76 [0] : vector<16x128xf32> to vector<128xf32>
    %52 = vector.shape_cast %51 : vector<128xf32> to vector<1x128xf32>
    %53 = arith.mulf %45, %45 : vector<16x128xf32>
    %cst_77 = arith.constant dense<0.000000e+00> : vector<128xf32>
    %54 = vector.multi_reduction <add>, %53, %cst_77 [0] : vector<16x128xf32> to vector<128xf32>
    %55 = vector.shape_cast %54 : vector<128xf32> to vector<1x128xf32>
    %56 = tpu.concatenate %52, %55 in 0 : vector<1x128xf32>, vector<1x128xf32> -> vector<2x128xf32>
    %c0_78 = arith.constant 0 : index
    %c0_79 = arith.constant 0 : index
    %c0_80 = arith.constant 0 : index
    %57 = vector.load %arg5[%c0_78, %c0_79, %c0_80] : memref<1x2x128xf32, #tpu.memory_space<vmem>>, vector<1x2x128xf32>
    %58 = vector.shape_cast %57 : vector<1x2x128xf32> to vector<2x128xf32>
    %59 = vector.shape_cast %56 : vector<2x128xf32> to vector<1x2x128xf32>
    tpu.vector_store %arg5[%c0_78, %c0_79, %c0_80], %59 {strides = array<i32>} : memref<1x2x128xf32, #tpu.memory_space<vmem>>, vector<1x2x128xf32>,
    return
  }
  func.func @transform_0(%arg0: i32) -> (i32, i32, i32, i32) {
    %c0_i32 = arith.constant 0 : i32
    %c0_i32_0 = arith.constant 0 : i32
    %c0_i32_1 = arith.constant 0 : i32
    %c0_i32_2 = arith.constant 0 : i32
    return %arg0, %c0_i32, %c0_i32_0, %c0_i32_1 : i32, i32, i32, i32
  }
  func.func @transform_1(%arg0: i32) -> (i32, i32) {
    %c0_i32 = arith.constant 0 : i32
    %c0_i32_0 = arith.constant 0 : i32
    %c0_i32_1 = arith.constant 0 : i32
    return %c0_i32, %c0_i32_0 : i32, i32
  }
  func.func @transform_2(%arg0: i32) -> (i32, i32) {
    %c0_i32 = arith.constant 0 : i32
    %c0_i32_0 = arith.constant 0 : i32
    %c0_i32_1 = arith.constant 0 : i32
    return %c0_i32, %c0_i32_0 : i32, i32
  }
  func.func @transform_3(%arg0: i32) -> (i32, i32, i32, i32) {
    %c0_i32 = arith.constant 0 : i32
    %c0_i32_0 = arith.constant 0 : i32
    %c0_i32_1 = arith.constant 0 : i32
    %c0_i32_2 = arith.constant 0 : i32
    return %arg0, %c0_i32, %c0_i32_0, %c0_i32_1 : i32, i32, i32, i32
  }
  func.func @transform_4(%arg0: i32) -> (i32, i32, i32) {
    %c0_i32 = arith.constant 0 : i32
    %c0_i32_0 = arith.constant 0 : i32
    %c0_i32_1 = arith.constant 0 : i32
    return %arg0, %c0_i32, %c0_i32_0 : i32, i32, i32
  }
}

module attributes {stable_mosaic.version = 11 : i64} {
  func.func @bn_relu_kernel(%arg0: i32, %arg1: memref<1x4x4x128xbf16, #tpu.memory_space<vmem>>, %arg2: memref<2x2x128xf32, #tpu.memory_space<vmem>>, %arg3: memref<1x128xf32, #tpu.memory_space<vmem>>, %arg4: memref<1x128xf32, #tpu.memory_space<vmem>>, %arg5: memref<1x6x8x128xbf16, #tpu.memory_space<vmem>>) attributes {dimension_semantics = [#tpu.dimension_semantics<parallel>], iteration_bounds = array<i64: 2>, scalar_prefetch = 0 : i64, scratch_operands = 0 : i64, tpu.core_type = #tpu.core_type<tc>, window_params = [{transform_indices = @transform_0, window_bounds = array<i64: 1, 4, 4, 128>}, {pipeline_mode = #tpu.pipeline_mode<synchronous>, transform_indices = @transform_1, window_bounds = array<i64: 2, 2, 128>}, {pipeline_mode = #tpu.pipeline_mode<synchronous>, transform_indices = @transform_2, window_bounds = array<i64: 1, 128>}, {pipeline_mode = #tpu.pipeline_mode<synchronous>, transform_indices = @transform_3, window_bounds = array<i64: 1, 128>}, {transform_indices = @transform_4, window_bounds = array<i64: 1, 6, 8, 128>}]} {
    %c0 = arith.constant 0 : index
    %c0_0 = arith.constant 0 : index
    %c0_1 = arith.constant 0 : index
    %0 = vector.load %arg2[%c0, %c0_0, %c0_1] : memref<2x2x128xf32, #tpu.memory_space<vmem>>, vector<2x2x128xf32>
    %cst = arith.constant dense<0.000000e+00> : vector<2x128xf32>
    %1 = vector.multi_reduction <add>, %0, %cst [0] : vector<2x2x128xf32> to vector<2x128xf32>
    %2 = vector.extract_strided_slice %1 {offsets = [0, 0], sizes = [1, 128], strides = [1, 1]} : vector<2x128xf32> to vector<1x128xf32>
    %cst_2 = arith.constant 3.125000e-02 : f32
    %3 = vector.broadcast %cst_2 : f32 to vector<1x128xf32>
    %4 = arith.mulf %2, %3 : vector<1x128xf32>
    %5 = vector.extract_strided_slice %1 {offsets = [1, 0], sizes = [1, 128], strides = [1, 1]} : vector<2x128xf32> to vector<1x128xf32>
    %cst_3 = arith.constant 3.125000e-02 : f32
    %6 = vector.broadcast %cst_3 : f32 to vector<1x128xf32>
    %7 = arith.mulf %5, %6 : vector<1x128xf32>
    %8 = arith.mulf %4, %4 : vector<1x128xf32>
    %9 = arith.subf %7, %8 : vector<1x128xf32>
    %c0_4 = arith.constant 0 : index
    %c0_5 = arith.constant 0 : index
    %10 = vector.load %arg3[%c0_4, %c0_5] : memref<1x128xf32, #tpu.memory_space<vmem>>, vector<1x128xf32>
    %cst_6 = arith.constant 9.99999974E-6 : f32
    %11 = vector.broadcast %cst_6 : f32 to vector<1x128xf32>
    %12 = arith.addf %9, %11 : vector<1x128xf32>
    %13 = math.rsqrt %12 : vector<1x128xf32>
    %14 = arith.mulf %10, %13 : vector<1x128xf32>
    %c0_7 = arith.constant 0 : index
    %c0_8 = arith.constant 0 : index
    %15 = vector.load %arg4[%c0_7, %c0_8] : memref<1x128xf32, #tpu.memory_space<vmem>>, vector<1x128xf32>
    %16 = arith.mulf %4, %14 : vector<1x128xf32>
    %17 = arith.subf %15, %16 : vector<1x128xf32>
    %c0_9 = arith.constant 0 : index
    %c0_10 = arith.constant 0 : index
    %c0_11 = arith.constant 0 : index
    %c0_12 = arith.constant 0 : index
    %18 = vector.load %arg1[%c0_9, %c0_10, %c0_11, %c0_12] : memref<1x4x4x128xbf16, #tpu.memory_space<vmem>>, vector<1x4x4x128xbf16>
    %19 = vector.shape_cast %18 : vector<1x4x4x128xbf16> to vector<4x4x128xbf16>
    %20 = arith.extf %19 : vector<4x4x128xbf16> to vector<4x4x128xf32>
    %21 = vector.shape_cast %14 : vector<1x128xf32> to vector<1x1x128xf32>
    %22 = vector.broadcast %21 : vector<1x1x128xf32> to vector<4x4x128xf32>
    %23 = arith.mulf %20, %22 : vector<4x4x128xf32>
    %24 = vector.shape_cast %17 : vector<1x128xf32> to vector<1x1x128xf32>
    %25 = vector.broadcast %24 : vector<1x1x128xf32> to vector<4x4x128xf32>
    %26 = arith.addf %23, %25 : vector<4x4x128xf32>
    %cst_13 = arith.constant 0.000000e+00 : f32
    %27 = vector.broadcast %cst_13 : f32 to vector<4x4x128xf32>
    %28 = arith.maximumf %26, %27 : vector<4x4x128xf32>
    %29 = arith.truncf %28 : vector<4x4x128xf32> to vector<4x4x128xbf16>
    %cst_14 = arith.constant 0.000000e+00 : bf16
    %30 = vector.broadcast %cst_14 : bf16 to vector<4x1x128xbf16>
    %cst_15 = arith.constant 0.000000e+00 : bf16
    %31 = vector.broadcast %cst_15 : bf16 to vector<4x3x128xbf16>
    %32 = tpu.concatenate %30, %29, %31 in 1 : vector<4x1x128xbf16>, vector<4x4x128xbf16>, vector<4x3x128xbf16> -> vector<4x8x128xbf16>
    %cst_16 = arith.constant 0.000000e+00 : bf16
    %33 = vector.broadcast %cst_16 : bf16 to vector<1x8x128xbf16>
    %34 = tpu.concatenate %33, %32, %33 in 0 : vector<1x8x128xbf16>, vector<4x8x128xbf16>, vector<1x8x128xbf16> -> vector<6x8x128xbf16>
    %c0_17 = arith.constant 0 : index
    %c0_18 = arith.constant 0 : index
    %c0_19 = arith.constant 0 : index
    %c0_20 = arith.constant 0 : index
    %35 = vector.load %arg5[%c0_17, %c0_18, %c0_19, %c0_20] : memref<1x6x8x128xbf16, #tpu.memory_space<vmem>>, vector<1x6x8x128xbf16>
    %36 = vector.shape_cast %35 : vector<1x6x8x128xbf16> to vector<6x8x128xbf16>
    %37 = vector.shape_cast %34 : vector<6x8x128xbf16> to vector<1x6x8x128xbf16>
    tpu.vector_store %arg5[%c0_17, %c0_18, %c0_19, %c0_20], %37 {strides = array<i32>} : memref<1x6x8x128xbf16, #tpu.memory_space<vmem>>, vector<1x6x8x128xbf16>,
    return
  }
  func.func @transform_0(%arg0: i32) -> (i32, i32, i32, i32) {
    %c0_i32 = arith.constant 0 : i32
    %c0_i32_0 = arith.constant 0 : i32
    %c0_i32_1 = arith.constant 0 : i32
    %c0_i32_2 = arith.constant 0 : i32
    return %arg0, %c0_i32, %c0_i32_0, %c0_i32_1 : i32, i32, i32, i32
  }
  func.func @transform_1(%arg0: i32) -> (i32, i32, i32) {
    %c0_i32 = arith.constant 0 : i32
    %c0_i32_0 = arith.constant 0 : i32
    %c0_i32_1 = arith.constant 0 : i32
    %c0_i32_2 = arith.constant 0 : i32
    return %c0_i32, %c0_i32_0, %c0_i32_1 : i32, i32, i32
  }
  func.func @transform_2(%arg0: i32) -> (i32, i32) {
    %c0_i32 = arith.constant 0 : i32
    %c0_i32_0 = arith.constant 0 : i32
    %c0_i32_1 = arith.constant 0 : i32
    return %c0_i32, %c0_i32_0 : i32, i32
  }
  func.func @transform_3(%arg0: i32) -> (i32, i32) {
    %c0_i32 = arith.constant 0 : i32
    %c0_i32_0 = arith.constant 0 : i32
    %c0_i32_1 = arith.constant 0 : i32
    return %c0_i32, %c0_i32_0 : i32, i32
  }
  func.func @transform_4(%arg0: i32) -> (i32, i32, i32, i32) {
    %c0_i32 = arith.constant 0 : i32
    %c0_i32_0 = arith.constant 0 : i32
    %c0_i32_1 = arith.constant 0 : i32
    %c0_i32_2 = arith.constant 0 : i32
    return %arg0, %c0_i32, %c0_i32_0, %c0_i32_1 : i32, i32, i32, i32
  }
}

module attributes {stable_mosaic.version = 11 : i64} {
  func.func @conv_stats_kernel(%arg0: i32, %arg1: memref<1x6x8x128xbf16, #tpu.memory_space<vmem>>, %arg2: memref<144x128xbf16, #tpu.memory_space<vmem>>, %arg3: memref<1x128xf32, #tpu.memory_space<vmem>>, %arg4: memref<1x4x4x128xbf16, #tpu.memory_space<vmem>>, %arg5: memref<1x2x128xf32, #tpu.memory_space<vmem>>, %arg6: memref<4x4x144xbf16, #tpu.memory_space<vmem>>) attributes {dimension_semantics = [#tpu.dimension_semantics<parallel>], iteration_bounds = array<i64: 2>, scalar_prefetch = 0 : i64, scratch_operands = 1 : i64, tpu.core_type = #tpu.core_type<tc>, window_params = [{transform_indices = @transform_0, window_bounds = array<i64: 1, 6, 8, 128>}, {pipeline_mode = #tpu.pipeline_mode<synchronous>, transform_indices = @transform_1, window_bounds = array<i64: 144, 128>}, {pipeline_mode = #tpu.pipeline_mode<synchronous>, transform_indices = @transform_2, window_bounds = array<i64: 1, 128>}, {transform_indices = @transform_3, window_bounds = array<i64: 1, 4, 4, 128>}, {transform_indices = @transform_4, window_bounds = array<i64: 1, 2, 128>}]} {
    %c0 = arith.constant 0 : index
    %c0_0 = arith.constant 0 : index
    %c0_1 = arith.constant 0 : index
    %c0_2 = arith.constant 0 : index
    %0 = vector.load %arg1[%c0, %c0_0, %c0_1, %c0_2] : memref<1x6x8x128xbf16, #tpu.memory_space<vmem>>, vector<1x4x4x16xbf16>
    %1 = vector.shape_cast %0 : vector<1x4x4x16xbf16> to vector<4x4x16xbf16>
    %c0_3 = arith.constant 0 : index
    %c0_4 = arith.constant 0 : index
    %c0_5 = arith.constant 0 : index
    %2 = vector.load %arg6[%c0_3, %c0_4, %c0_5] : memref<4x4x144xbf16, #tpu.memory_space<vmem>>, vector<4x4x16xbf16>
    tpu.vector_store %arg6[%c0_3, %c0_4, %c0_5], %1 {strides = array<i32>} : memref<4x4x144xbf16, #tpu.memory_space<vmem>>, vector<4x4x16xbf16>,
    %c0_6 = arith.constant 0 : index
    %c0_7 = arith.constant 0 : index
    %c1 = arith.constant 1 : index
    %c0_8 = arith.constant 0 : index
    %3 = vector.load %arg1[%c0_6, %c0_7, %c1, %c0_8] : memref<1x6x8x128xbf16, #tpu.memory_space<vmem>>, vector<1x4x4x16xbf16>
    %4 = vector.shape_cast %3 : vector<1x4x4x16xbf16> to vector<4x4x16xbf16>
    %c0_9 = arith.constant 0 : index
    %c0_10 = arith.constant 0 : index
    %c16 = arith.constant 16 : index
    %5 = vector.load %arg6[%c0_9, %c0_10, %c16] : memref<4x4x144xbf16, #tpu.memory_space<vmem>>, vector<4x4x16xbf16>
    tpu.vector_store %arg6[%c0_9, %c0_10, %c16], %4 {strides = array<i32>} : memref<4x4x144xbf16, #tpu.memory_space<vmem>>, vector<4x4x16xbf16>,
    %c0_11 = arith.constant 0 : index
    %c0_12 = arith.constant 0 : index
    %c2 = arith.constant 2 : index
    %c0_13 = arith.constant 0 : index
    %6 = vector.load %arg1[%c0_11, %c0_12, %c2, %c0_13] : memref<1x6x8x128xbf16, #tpu.memory_space<vmem>>, vector<1x4x4x16xbf16>
    %7 = vector.shape_cast %6 : vector<1x4x4x16xbf16> to vector<4x4x16xbf16>
    %c0_14 = arith.constant 0 : index
    %c0_15 = arith.constant 0 : index
    %c32 = arith.constant 32 : index
    %8 = vector.load %arg6[%c0_14, %c0_15, %c32] : memref<4x4x144xbf16, #tpu.memory_space<vmem>>, vector<4x4x16xbf16>
    tpu.vector_store %arg6[%c0_14, %c0_15, %c32], %7 {strides = array<i32>} : memref<4x4x144xbf16, #tpu.memory_space<vmem>>, vector<4x4x16xbf16>,
    %c0_16 = arith.constant 0 : index
    %c1_17 = arith.constant 1 : index
    %c0_18 = arith.constant 0 : index
    %c0_19 = arith.constant 0 : index
    %9 = vector.load %arg1[%c0_16, %c1_17, %c0_18, %c0_19] : memref<1x6x8x128xbf16, #tpu.memory_space<vmem>>, vector<1x4x4x16xbf16>
    %10 = vector.shape_cast %9 : vector<1x4x4x16xbf16> to vector<4x4x16xbf16>
    %c0_20 = arith.constant 0 : index
    %c0_21 = arith.constant 0 : index
    %c48 = arith.constant 48 : index
    %11 = vector.load %arg6[%c0_20, %c0_21, %c48] : memref<4x4x144xbf16, #tpu.memory_space<vmem>>, vector<4x4x16xbf16>
    tpu.vector_store %arg6[%c0_20, %c0_21, %c48], %10 {strides = array<i32>} : memref<4x4x144xbf16, #tpu.memory_space<vmem>>, vector<4x4x16xbf16>,
    %c0_22 = arith.constant 0 : index
    %c1_23 = arith.constant 1 : index
    %c1_24 = arith.constant 1 : index
    %c0_25 = arith.constant 0 : index
    %12 = vector.load %arg1[%c0_22, %c1_23, %c1_24, %c0_25] : memref<1x6x8x128xbf16, #tpu.memory_space<vmem>>, vector<1x4x4x16xbf16>
    %13 = vector.shape_cast %12 : vector<1x4x4x16xbf16> to vector<4x4x16xbf16>
    %c0_26 = arith.constant 0 : index
    %c0_27 = arith.constant 0 : index
    %c64 = arith.constant 64 : index
    %14 = vector.load %arg6[%c0_26, %c0_27, %c64] : memref<4x4x144xbf16, #tpu.memory_space<vmem>>, vector<4x4x16xbf16>
    tpu.vector_store %arg6[%c0_26, %c0_27, %c64], %13 {strides = array<i32>} : memref<4x4x144xbf16, #tpu.memory_space<vmem>>, vector<4x4x16xbf16>,
    %c0_28 = arith.constant 0 : index
    %c1_29 = arith.constant 1 : index
    %c2_30 = arith.constant 2 : index
    %c0_31 = arith.constant 0 : index
    %15 = vector.load %arg1[%c0_28, %c1_29, %c2_30, %c0_31] : memref<1x6x8x128xbf16, #tpu.memory_space<vmem>>, vector<1x4x4x16xbf16>
    %16 = vector.shape_cast %15 : vector<1x4x4x16xbf16> to vector<4x4x16xbf16>
    %c0_32 = arith.constant 0 : index
    %c0_33 = arith.constant 0 : index
    %c80 = arith.constant 80 : index
    %17 = vector.load %arg6[%c0_32, %c0_33, %c80] : memref<4x4x144xbf16, #tpu.memory_space<vmem>>, vector<4x4x16xbf16>
    tpu.vector_store %arg6[%c0_32, %c0_33, %c80], %16 {strides = array<i32>} : memref<4x4x144xbf16, #tpu.memory_space<vmem>>, vector<4x4x16xbf16>,
    %c0_34 = arith.constant 0 : index
    %c2_35 = arith.constant 2 : index
    %c0_36 = arith.constant 0 : index
    %c0_37 = arith.constant 0 : index
    %18 = vector.load %arg1[%c0_34, %c2_35, %c0_36, %c0_37] : memref<1x6x8x128xbf16, #tpu.memory_space<vmem>>, vector<1x4x4x16xbf16>
    %19 = vector.shape_cast %18 : vector<1x4x4x16xbf16> to vector<4x4x16xbf16>
    %c0_38 = arith.constant 0 : index
    %c0_39 = arith.constant 0 : index
    %c96 = arith.constant 96 : index
    %20 = vector.load %arg6[%c0_38, %c0_39, %c96] : memref<4x4x144xbf16, #tpu.memory_space<vmem>>, vector<4x4x16xbf16>
    tpu.vector_store %arg6[%c0_38, %c0_39, %c96], %19 {strides = array<i32>} : memref<4x4x144xbf16, #tpu.memory_space<vmem>>, vector<4x4x16xbf16>,
    %c0_40 = arith.constant 0 : index
    %c2_41 = arith.constant 2 : index
    %c1_42 = arith.constant 1 : index
    %c0_43 = arith.constant 0 : index
    %21 = vector.load %arg1[%c0_40, %c2_41, %c1_42, %c0_43] : memref<1x6x8x128xbf16, #tpu.memory_space<vmem>>, vector<1x4x4x16xbf16>
    %22 = vector.shape_cast %21 : vector<1x4x4x16xbf16> to vector<4x4x16xbf16>
    %c0_44 = arith.constant 0 : index
    %c0_45 = arith.constant 0 : index
    %c112 = arith.constant 112 : index
    %23 = vector.load %arg6[%c0_44, %c0_45, %c112] : memref<4x4x144xbf16, #tpu.memory_space<vmem>>, vector<4x4x16xbf16>
    tpu.vector_store %arg6[%c0_44, %c0_45, %c112], %22 {strides = array<i32>} : memref<4x4x144xbf16, #tpu.memory_space<vmem>>, vector<4x4x16xbf16>,
    %c0_46 = arith.constant 0 : index
    %c2_47 = arith.constant 2 : index
    %c2_48 = arith.constant 2 : index
    %c0_49 = arith.constant 0 : index
    %24 = vector.load %arg1[%c0_46, %c2_47, %c2_48, %c0_49] : memref<1x6x8x128xbf16, #tpu.memory_space<vmem>>, vector<1x4x4x16xbf16>
    %25 = vector.shape_cast %24 : vector<1x4x4x16xbf16> to vector<4x4x16xbf16>
    %c0_50 = arith.constant 0 : index
    %c0_51 = arith.constant 0 : index
    %c128 = arith.constant 128 : index
    %26 = vector.load %arg6[%c0_50, %c0_51, %c128] : memref<4x4x144xbf16, #tpu.memory_space<vmem>>, vector<4x4x16xbf16>
    tpu.vector_store %arg6[%c0_50, %c0_51, %c128], %25 {strides = array<i32>} : memref<4x4x144xbf16, #tpu.memory_space<vmem>>, vector<4x4x16xbf16>,
    %cst = arith.constant 0.000000e+00 : f32
    %27 = vector.broadcast %cst : f32 to vector<16x128xf32>
    %c0_52 = arith.constant 0 : index
    %c0_53 = arith.constant 0 : index
    %c0_54 = arith.constant 0 : index
    %28 = vector.load %arg6[%c0_52, %c0_53, %c0_54] : memref<4x4x144xbf16, #tpu.memory_space<vmem>>, vector<4x4x144xbf16>
    %29 = vector.shape_cast %28 : vector<4x4x144xbf16> to vector<16x144xbf16>
    %c0_55 = arith.constant 0 : index
    %c0_56 = arith.constant 0 : index
    %30 = vector.load %arg2[%c0_55, %c0_56] : memref<144x128xbf16, #tpu.memory_space<vmem>>, vector<144x128xbf16>
    %cst_57 = arith.constant dense<0.000000e+00> : vector<16x128xf32>
    %31 = tpu.matmul %29, %30, %cst_57 {dimension_numbers = #tpu.dot_dimension_numbers<[1], [0], [0], [1], [0, 0, 1, 1], [], []>} : vector<16x144xbf16>, vector<144x128xbf16>, vector<16x128xf32> -> vector<16x128xf32>
    %32 = arith.addf %27, %31 : vector<16x128xf32>
    %c0_58 = arith.constant 0 : index
    %c0_59 = arith.constant 0 : index
    %33 = vector.load %arg3[%c0_58, %c0_59] : memref<1x128xf32, #tpu.memory_space<vmem>>, vector<1x128xf32>
    %34 = vector.broadcast %33 : vector<1x128xf32> to vector<16x128xf32>
    %35 = arith.addf %32, %34 : vector<16x128xf32>
    %36 = vector.shape_cast %35 : vector<16x128xf32> to vector<4x4x128xf32>
    %37 = arith.truncf %36 : vector<4x4x128xf32> to vector<4x4x128xbf16>
    %c0_60 = arith.constant 0 : index
    %c0_61 = arith.constant 0 : index
    %c0_62 = arith.constant 0 : index
    %c0_63 = arith.constant 0 : index
    %38 = vector.load %arg4[%c0_60, %c0_61, %c0_62, %c0_63] : memref<1x4x4x128xbf16, #tpu.memory_space<vmem>>, vector<1x4x4x128xbf16>
    %39 = vector.shape_cast %38 : vector<1x4x4x128xbf16> to vector<4x4x128xbf16>
    %40 = vector.shape_cast %37 : vector<4x4x128xbf16> to vector<1x4x4x128xbf16>
    tpu.vector_store %arg4[%c0_60, %c0_61, %c0_62, %c0_63], %40 {strides = array<i32>} : memref<1x4x4x128xbf16, #tpu.memory_space<vmem>>, vector<1x4x4x128xbf16>,
    %cst_64 = arith.constant dense<0.000000e+00> : vector<128xf32>
    %41 = vector.multi_reduction <add>, %35, %cst_64 [0] : vector<16x128xf32> to vector<128xf32>
    %42 = vector.shape_cast %41 : vector<128xf32> to vector<1x128xf32>
    %43 = arith.mulf %35, %35 : vector<16x128xf32>
    %cst_65 = arith.constant dense<0.000000e+00> : vector<128xf32>
    %44 = vector.multi_reduction <add>, %43, %cst_65 [0] : vector<16x128xf32> to vector<128xf32>
    %45 = vector.shape_cast %44 : vector<128xf32> to vector<1x128xf32>
    %46 = tpu.concatenate %42, %45 in 0 : vector<1x128xf32>, vector<1x128xf32> -> vector<2x128xf32>
    %c0_66 = arith.constant 0 : index
    %c0_67 = arith.constant 0 : index
    %c0_68 = arith.constant 0 : index
    %47 = vector.load %arg5[%c0_66, %c0_67, %c0_68] : memref<1x2x128xf32, #tpu.memory_space<vmem>>, vector<1x2x128xf32>
    %48 = vector.shape_cast %47 : vector<1x2x128xf32> to vector<2x128xf32>
    %49 = vector.shape_cast %46 : vector<2x128xf32> to vector<1x2x128xf32>
    tpu.vector_store %arg5[%c0_66, %c0_67, %c0_68], %49 {strides = array<i32>} : memref<1x2x128xf32, #tpu.memory_space<vmem>>, vector<1x2x128xf32>,
    return
  }
  func.func @transform_0(%arg0: i32) -> (i32, i32, i32, i32) {
    %c0_i32 = arith.constant 0 : i32
    %c0_i32_0 = arith.constant 0 : i32
    %c0_i32_1 = arith.constant 0 : i32
    %c0_i32_2 = arith.constant 0 : i32
    return %arg0, %c0_i32, %c0_i32_0, %c0_i32_1 : i32, i32, i32, i32
  }
  func.func @transform_1(%arg0: i32) -> (i32, i32) {
    %c0_i32 = arith.constant 0 : i32
    %c0_i32_0 = arith.constant 0 : i32
    %c0_i32_1 = arith.constant 0 : i32
    return %c0_i32, %c0_i32_0 : i32, i32
  }
  func.func @transform_2(%arg0: i32) -> (i32, i32) {
    %c0_i32 = arith.constant 0 : i32
    %c0_i32_0 = arith.constant 0 : i32
    %c0_i32_1 = arith.constant 0 : i32
    return %c0_i32, %c0_i32_0 : i32, i32
  }
  func.func @transform_3(%arg0: i32) -> (i32, i32, i32, i32) {
    %c0_i32 = arith.constant 0 : i32
    %c0_i32_0 = arith.constant 0 : i32
    %c0_i32_1 = arith.constant 0 : i32
    %c0_i32_2 = arith.constant 0 : i32
    return %arg0, %c0_i32, %c0_i32_0, %c0_i32_1 : i32, i32, i32, i32
  }
  func.func @transform_4(%arg0: i32) -> (i32, i32, i32) {
    %c0_i32 = arith.constant 0 : i32
    %c0_i32_0 = arith.constant 0 : i32
    %c0_i32_1 = arith.constant 0 : i32
    return %arg0, %c0_i32, %c0_i32_0 : i32, i32, i32
  }
}

module attributes {stable_mosaic.version = 11 : i64} {
  func.func @bn_add_relu_kernel(%arg0: i32, %arg1: memref<1x4x4x128xbf16, #tpu.memory_space<vmem>>, %arg2: memref<2x2x128xf32, #tpu.memory_space<vmem>>, %arg3: memref<1x128xf32, #tpu.memory_space<vmem>>, %arg4: memref<1x128xf32, #tpu.memory_space<vmem>>, %arg5: memref<1x6x8x128xbf16, #tpu.memory_space<vmem>>, %arg6: memref<1x6x8x128xbf16, #tpu.memory_space<vmem>>) attributes {dimension_semantics = [#tpu.dimension_semantics<parallel>], iteration_bounds = array<i64: 2>, scalar_prefetch = 0 : i64, scratch_operands = 0 : i64, tpu.core_type = #tpu.core_type<tc>, window_params = [{transform_indices = @transform_0, window_bounds = array<i64: 1, 4, 4, 128>}, {pipeline_mode = #tpu.pipeline_mode<synchronous>, transform_indices = @transform_1, window_bounds = array<i64: 2, 2, 128>}, {pipeline_mode = #tpu.pipeline_mode<synchronous>, transform_indices = @transform_2, window_bounds = array<i64: 1, 128>}, {pipeline_mode = #tpu.pipeline_mode<synchronous>, transform_indices = @transform_3, window_bounds = array<i64: 1, 128>}, {transform_indices = @transform_4, window_bounds = array<i64: 1, 6, 8, 128>}, {transform_indices = @transform_5, window_bounds = array<i64: 1, 6, 8, 128>}]} {
    %c0 = arith.constant 0 : index
    %c0_0 = arith.constant 0 : index
    %c0_1 = arith.constant 0 : index
    %0 = vector.load %arg2[%c0, %c0_0, %c0_1] : memref<2x2x128xf32, #tpu.memory_space<vmem>>, vector<2x2x128xf32>
    %cst = arith.constant dense<0.000000e+00> : vector<2x128xf32>
    %1 = vector.multi_reduction <add>, %0, %cst [0] : vector<2x2x128xf32> to vector<2x128xf32>
    %2 = vector.extract_strided_slice %1 {offsets = [0, 0], sizes = [1, 128], strides = [1, 1]} : vector<2x128xf32> to vector<1x128xf32>
    %cst_2 = arith.constant 3.125000e-02 : f32
    %3 = vector.broadcast %cst_2 : f32 to vector<1x128xf32>
    %4 = arith.mulf %2, %3 : vector<1x128xf32>
    %5 = vector.extract_strided_slice %1 {offsets = [1, 0], sizes = [1, 128], strides = [1, 1]} : vector<2x128xf32> to vector<1x128xf32>
    %cst_3 = arith.constant 3.125000e-02 : f32
    %6 = vector.broadcast %cst_3 : f32 to vector<1x128xf32>
    %7 = arith.mulf %5, %6 : vector<1x128xf32>
    %8 = arith.mulf %4, %4 : vector<1x128xf32>
    %9 = arith.subf %7, %8 : vector<1x128xf32>
    %c0_4 = arith.constant 0 : index
    %c0_5 = arith.constant 0 : index
    %10 = vector.load %arg3[%c0_4, %c0_5] : memref<1x128xf32, #tpu.memory_space<vmem>>, vector<1x128xf32>
    %cst_6 = arith.constant 9.99999974E-6 : f32
    %11 = vector.broadcast %cst_6 : f32 to vector<1x128xf32>
    %12 = arith.addf %9, %11 : vector<1x128xf32>
    %13 = math.rsqrt %12 : vector<1x128xf32>
    %14 = arith.mulf %10, %13 : vector<1x128xf32>
    %c0_7 = arith.constant 0 : index
    %c0_8 = arith.constant 0 : index
    %15 = vector.load %arg4[%c0_7, %c0_8] : memref<1x128xf32, #tpu.memory_space<vmem>>, vector<1x128xf32>
    %16 = arith.mulf %4, %14 : vector<1x128xf32>
    %17 = arith.subf %15, %16 : vector<1x128xf32>
    %c0_9 = arith.constant 0 : index
    %c0_10 = arith.constant 0 : index
    %c0_11 = arith.constant 0 : index
    %c0_12 = arith.constant 0 : index
    %18 = vector.load %arg1[%c0_9, %c0_10, %c0_11, %c0_12] : memref<1x4x4x128xbf16, #tpu.memory_space<vmem>>, vector<1x4x4x128xbf16>
    %19 = vector.shape_cast %18 : vector<1x4x4x128xbf16> to vector<4x4x128xbf16>
    %20 = arith.extf %19 : vector<4x4x128xbf16> to vector<4x4x128xf32>
    %21 = vector.shape_cast %14 : vector<1x128xf32> to vector<1x1x128xf32>
    %22 = vector.broadcast %21 : vector<1x1x128xf32> to vector<4x4x128xf32>
    %23 = arith.mulf %20, %22 : vector<4x4x128xf32>
    %24 = vector.shape_cast %17 : vector<1x128xf32> to vector<1x1x128xf32>
    %25 = vector.broadcast %24 : vector<1x1x128xf32> to vector<4x4x128xf32>
    %26 = arith.addf %23, %25 : vector<4x4x128xf32>
    %c0_13 = arith.constant 0 : index
    %c1 = arith.constant 1 : index
    %c1_14 = arith.constant 1 : index
    %c0_15 = arith.constant 0 : index
    %27 = vector.load %arg5[%c0_13, %c1, %c1_14, %c0_15] : memref<1x6x8x128xbf16, #tpu.memory_space<vmem>>, vector<1x4x4x128xbf16>
    %28 = vector.shape_cast %27 : vector<1x4x4x128xbf16> to vector<4x4x128xbf16>
    %29 = arith.extf %28 : vector<4x4x128xbf16> to vector<4x4x128xf32>
    %30 = arith.addf %26, %29 : vector<4x4x128xf32>
    %cst_16 = arith.constant 0.000000e+00 : f32
    %31 = vector.broadcast %cst_16 : f32 to vector<4x4x128xf32>
    %32 = arith.maximumf %30, %31 : vector<4x4x128xf32>
    %33 = arith.truncf %32 : vector<4x4x128xf32> to vector<4x4x128xbf16>
    %cst_17 = arith.constant 0.000000e+00 : bf16
    %34 = vector.broadcast %cst_17 : bf16 to vector<4x1x128xbf16>
    %cst_18 = arith.constant 0.000000e+00 : bf16
    %35 = vector.broadcast %cst_18 : bf16 to vector<4x3x128xbf16>
    %36 = tpu.concatenate %34, %33, %35 in 1 : vector<4x1x128xbf16>, vector<4x4x128xbf16>, vector<4x3x128xbf16> -> vector<4x8x128xbf16>
    %cst_19 = arith.constant 0.000000e+00 : bf16
    %37 = vector.broadcast %cst_19 : bf16 to vector<1x8x128xbf16>
    %38 = tpu.concatenate %37, %36, %37 in 0 : vector<1x8x128xbf16>, vector<4x8x128xbf16>, vector<1x8x128xbf16> -> vector<6x8x128xbf16>
    %c0_20 = arith.constant 0 : index
    %c0_21 = arith.constant 0 : index
    %c0_22 = arith.constant 0 : index
    %c0_23 = arith.constant 0 : index
    %39 = vector.load %arg6[%c0_20, %c0_21, %c0_22, %c0_23] : memref<1x6x8x128xbf16, #tpu.memory_space<vmem>>, vector<1x6x8x128xbf16>
    %40 = vector.shape_cast %39 : vector<1x6x8x128xbf16> to vector<6x8x128xbf16>
    %41 = vector.shape_cast %38 : vector<6x8x128xbf16> to vector<1x6x8x128xbf16>
    tpu.vector_store %arg6[%c0_20, %c0_21, %c0_22, %c0_23], %41 {strides = array<i32>} : memref<1x6x8x128xbf16, #tpu.memory_space<vmem>>, vector<1x6x8x128xbf16>,
    return
  }
  func.func @transform_0(%arg0: i32) -> (i32, i32, i32, i32) {
    %c0_i32 = arith.constant 0 : i32
    %c0_i32_0 = arith.constant 0 : i32
    %c0_i32_1 = arith.constant 0 : i32
    %c0_i32_2 = arith.constant 0 : i32
    return %arg0, %c0_i32, %c0_i32_0, %c0_i32_1 : i32, i32, i32, i32
  }
  func.func @transform_1(%arg0: i32) -> (i32, i32, i32) {
    %c0_i32 = arith.constant 0 : i32
    %c0_i32_0 = arith.constant 0 : i32
    %c0_i32_1 = arith.constant 0 : i32
    %c0_i32_2 = arith.constant 0 : i32
    return %c0_i32, %c0_i32_0, %c0_i32_1 : i32, i32, i32
  }
  func.func @transform_2(%arg0: i32) -> (i32, i32) {
    %c0_i32 = arith.constant 0 : i32
    %c0_i32_0 = arith.constant 0 : i32
    %c0_i32_1 = arith.constant 0 : i32
    return %c0_i32, %c0_i32_0 : i32, i32
  }
  func.func @transform_3(%arg0: i32) -> (i32, i32) {
    %c0_i32 = arith.constant 0 : i32
    %c0_i32_0 = arith.constant 0 : i32
    %c0_i32_1 = arith.constant 0 : i32
    return %c0_i32, %c0_i32_0 : i32, i32
  }
  func.func @transform_4(%arg0: i32) -> (i32, i32, i32, i32) {
    %c0_i32 = arith.constant 0 : i32
    %c0_i32_0 = arith.constant 0 : i32
    %c0_i32_1 = arith.constant 0 : i32
    %c0_i32_2 = arith.constant 0 : i32
    return %arg0, %c0_i32, %c0_i32_0, %c0_i32_1 : i32, i32, i32, i32
  }
  func.func @transform_5(%arg0: i32) -> (i32, i32, i32, i32) {
    %c0_i32 = arith.constant 0 : i32
    %c0_i32_0 = arith.constant 0 : i32
    %c0_i32_1 = arith.constant 0 : i32
    %c0_i32_2 = arith.constant 0 : i32
    return %arg0, %c0_i32, %c0_i32_0, %c0_i32_1 : i32, i32, i32, i32
  }
}

module attributes {stable_mosaic.version = 11 : i64} {
  func.func @bn_proj_add_relu_kernel(%arg0: i32, %arg1: memref<1x4x4x128xbf16, #tpu.memory_space<vmem>>, %arg2: memref<2x2x128xf32, #tpu.memory_space<vmem>>, %arg3: memref<1x128xf32, #tpu.memory_space<vmem>>, %arg4: memref<1x128xf32, #tpu.memory_space<vmem>>, %arg5: memref<1x6x8x128xbf16, #tpu.memory_space<vmem>>, %arg6: memref<64x128xbf16, #tpu.memory_space<vmem>>, %arg7: memref<1x128xf32, #tpu.memory_space<vmem>>, %arg8: memref<1x6x8x128xbf16, #tpu.memory_space<vmem>>) attributes {dimension_semantics = [#tpu.dimension_semantics<parallel>], iteration_bounds = array<i64: 2>, scalar_prefetch = 0 : i64, scratch_operands = 0 : i64, tpu.core_type = #tpu.core_type<tc>, window_params = [{transform_indices = @transform_0, window_bounds = array<i64: 1, 4, 4, 128>}, {pipeline_mode = #tpu.pipeline_mode<synchronous>, transform_indices = @transform_1, window_bounds = array<i64: 2, 2, 128>}, {pipeline_mode = #tpu.pipeline_mode<synchronous>, transform_indices = @transform_2, window_bounds = array<i64: 1, 128>}, {pipeline_mode = #tpu.pipeline_mode<synchronous>, transform_indices = @transform_3, window_bounds = array<i64: 1, 128>}, {transform_indices = @transform_4, window_bounds = array<i64: 1, 6, 8, 128>}, {pipeline_mode = #tpu.pipeline_mode<synchronous>, transform_indices = @transform_5, window_bounds = array<i64: 64, 128>}, {pipeline_mode = #tpu.pipeline_mode<synchronous>, transform_indices = @transform_6, window_bounds = array<i64: 1, 128>}, {transform_indices = @transform_7, window_bounds = array<i64: 1, 6, 8, 128>}]} {
    %c0 = arith.constant 0 : index
    %c0_0 = arith.constant 0 : index
    %c0_1 = arith.constant 0 : index
    %0 = vector.load %arg2[%c0, %c0_0, %c0_1] : memref<2x2x128xf32, #tpu.memory_space<vmem>>, vector<2x2x128xf32>
    %cst = arith.constant dense<0.000000e+00> : vector<2x128xf32>
    %1 = vector.multi_reduction <add>, %0, %cst [0] : vector<2x2x128xf32> to vector<2x128xf32>
    %2 = vector.extract_strided_slice %1 {offsets = [0, 0], sizes = [1, 128], strides = [1, 1]} : vector<2x128xf32> to vector<1x128xf32>
    %cst_2 = arith.constant 3.125000e-02 : f32
    %3 = vector.broadcast %cst_2 : f32 to vector<1x128xf32>
    %4 = arith.mulf %2, %3 : vector<1x128xf32>
    %5 = vector.extract_strided_slice %1 {offsets = [1, 0], sizes = [1, 128], strides = [1, 1]} : vector<2x128xf32> to vector<1x128xf32>
    %cst_3 = arith.constant 3.125000e-02 : f32
    %6 = vector.broadcast %cst_3 : f32 to vector<1x128xf32>
    %7 = arith.mulf %5, %6 : vector<1x128xf32>
    %8 = arith.mulf %4, %4 : vector<1x128xf32>
    %9 = arith.subf %7, %8 : vector<1x128xf32>
    %c0_4 = arith.constant 0 : index
    %c0_5 = arith.constant 0 : index
    %10 = vector.load %arg3[%c0_4, %c0_5] : memref<1x128xf32, #tpu.memory_space<vmem>>, vector<1x128xf32>
    %cst_6 = arith.constant 9.99999974E-6 : f32
    %11 = vector.broadcast %cst_6 : f32 to vector<1x128xf32>
    %12 = arith.addf %9, %11 : vector<1x128xf32>
    %13 = math.rsqrt %12 : vector<1x128xf32>
    %14 = arith.mulf %10, %13 : vector<1x128xf32>
    %c0_7 = arith.constant 0 : index
    %c0_8 = arith.constant 0 : index
    %15 = vector.load %arg4[%c0_7, %c0_8] : memref<1x128xf32, #tpu.memory_space<vmem>>, vector<1x128xf32>
    %16 = arith.mulf %4, %14 : vector<1x128xf32>
    %17 = arith.subf %15, %16 : vector<1x128xf32>
    %c0_9 = arith.constant 0 : index
    %c0_10 = arith.constant 0 : index
    %c0_11 = arith.constant 0 : index
    %c0_12 = arith.constant 0 : index
    %18 = vector.load %arg1[%c0_9, %c0_10, %c0_11, %c0_12] : memref<1x4x4x128xbf16, #tpu.memory_space<vmem>>, vector<1x4x4x128xbf16>
    %19 = vector.shape_cast %18 : vector<1x4x4x128xbf16> to vector<4x4x128xbf16>
    %20 = arith.extf %19 : vector<4x4x128xbf16> to vector<4x4x128xf32>
    %21 = vector.shape_cast %14 : vector<1x128xf32> to vector<1x1x128xf32>
    %22 = vector.broadcast %21 : vector<1x1x128xf32> to vector<4x4x128xf32>
    %23 = arith.mulf %20, %22 : vector<4x4x128xf32>
    %24 = vector.shape_cast %17 : vector<1x128xf32> to vector<1x1x128xf32>
    %25 = vector.broadcast %24 : vector<1x1x128xf32> to vector<4x4x128xf32>
    %26 = arith.addf %23, %25 : vector<4x4x128xf32>
    %c0_13 = arith.constant 0 : index
    %c1 = arith.constant 1 : index
    %c1_14 = arith.constant 1 : index
    %c0_15 = arith.constant 0 : index
    %27 = vector.load %arg5[%c0_13, %c1, %c1_14, %c0_15] : memref<1x6x8x128xbf16, #tpu.memory_space<vmem>>, vector<1x4x4x64xbf16>
    %28 = vector.shape_cast %27 : vector<1x4x4x64xbf16> to vector<4x4x64xbf16>
    %29 = vector.shape_cast %28 : vector<4x4x64xbf16> to vector<16x64xbf16>
    %c0_16 = arith.constant 0 : index
    %c0_17 = arith.constant 0 : index
    %30 = vector.load %arg6[%c0_16, %c0_17] : memref<64x128xbf16, #tpu.memory_space<vmem>>, vector<64x128xbf16>
    %cst_18 = arith.constant dense<0.000000e+00> : vector<16x128xf32>
    %31 = tpu.matmul %29, %30, %cst_18 {dimension_numbers = #tpu.dot_dimension_numbers<[1], [0], [0], [1], [0, 0, 1, 1], [], []>} : vector<16x64xbf16>, vector<64x128xbf16>, vector<16x128xf32> -> vector<16x128xf32>
    %c0_19 = arith.constant 0 : index
    %c0_20 = arith.constant 0 : index
    %32 = vector.load %arg7[%c0_19, %c0_20] : memref<1x128xf32, #tpu.memory_space<vmem>>, vector<1x128xf32>
    %33 = vector.broadcast %32 : vector<1x128xf32> to vector<16x128xf32>
    %34 = arith.addf %31, %33 : vector<16x128xf32>
    %35 = vector.shape_cast %34 : vector<16x128xf32> to vector<4x4x128xf32>
    %36 = arith.addf %26, %35 : vector<4x4x128xf32>
    %cst_21 = arith.constant 0.000000e+00 : f32
    %37 = vector.broadcast %cst_21 : f32 to vector<4x4x128xf32>
    %38 = arith.maximumf %36, %37 : vector<4x4x128xf32>
    %39 = arith.truncf %38 : vector<4x4x128xf32> to vector<4x4x128xbf16>
    %cst_22 = arith.constant 0.000000e+00 : bf16
    %40 = vector.broadcast %cst_22 : bf16 to vector<4x1x128xbf16>
    %cst_23 = arith.constant 0.000000e+00 : bf16
    %41 = vector.broadcast %cst_23 : bf16 to vector<4x3x128xbf16>
    %42 = tpu.concatenate %40, %39, %41 in 1 : vector<4x1x128xbf16>, vector<4x4x128xbf16>, vector<4x3x128xbf16> -> vector<4x8x128xbf16>
    %cst_24 = arith.constant 0.000000e+00 : bf16
    %43 = vector.broadcast %cst_24 : bf16 to vector<1x8x128xbf16>
    %44 = tpu.concatenate %43, %42, %43 in 0 : vector<1x8x128xbf16>, vector<4x8x128xbf16>, vector<1x8x128xbf16> -> vector<6x8x128xbf16>
    %c0_25 = arith.constant 0 : index
    %c0_26 = arith.constant 0 : index
    %c0_27 = arith.constant 0 : index
    %c0_28 = arith.constant 0 : index
    %45 = vector.load %arg8[%c0_25, %c0_26, %c0_27, %c0_28] : memref<1x6x8x128xbf16, #tpu.memory_space<vmem>>, vector<1x6x8x128xbf16>
    %46 = vector.shape_cast %45 : vector<1x6x8x128xbf16> to vector<6x8x128xbf16>
    %47 = vector.shape_cast %44 : vector<6x8x128xbf16> to vector<1x6x8x128xbf16>
    tpu.vector_store %arg8[%c0_25, %c0_26, %c0_27, %c0_28], %47 {strides = array<i32>} : memref<1x6x8x128xbf16, #tpu.memory_space<vmem>>, vector<1x6x8x128xbf16>,
    return
  }
  func.func @transform_0(%arg0: i32) -> (i32, i32, i32, i32) {
    %c0_i32 = arith.constant 0 : i32
    %c0_i32_0 = arith.constant 0 : i32
    %c0_i32_1 = arith.constant 0 : i32
    %c0_i32_2 = arith.constant 0 : i32
    return %arg0, %c0_i32, %c0_i32_0, %c0_i32_1 : i32, i32, i32, i32
  }
  func.func @transform_1(%arg0: i32) -> (i32, i32, i32) {
    %c0_i32 = arith.constant 0 : i32
    %c0_i32_0 = arith.constant 0 : i32
    %c0_i32_1 = arith.constant 0 : i32
    %c0_i32_2 = arith.constant 0 : i32
    return %c0_i32, %c0_i32_0, %c0_i32_1 : i32, i32, i32
  }
  func.func @transform_2(%arg0: i32) -> (i32, i32) {
    %c0_i32 = arith.constant 0 : i32
    %c0_i32_0 = arith.constant 0 : i32
    %c0_i32_1 = arith.constant 0 : i32
    return %c0_i32, %c0_i32_0 : i32, i32
  }
  func.func @transform_3(%arg0: i32) -> (i32, i32) {
    %c0_i32 = arith.constant 0 : i32
    %c0_i32_0 = arith.constant 0 : i32
    %c0_i32_1 = arith.constant 0 : i32
    return %c0_i32, %c0_i32_0 : i32, i32
  }
  func.func @transform_4(%arg0: i32) -> (i32, i32, i32, i32) {
    %c0_i32 = arith.constant 0 : i32
    %c0_i32_0 = arith.constant 0 : i32
    %c0_i32_1 = arith.constant 0 : i32
    %c0_i32_2 = arith.constant 0 : i32
    return %arg0, %c0_i32, %c0_i32_0, %c0_i32_1 : i32, i32, i32, i32
  }
  func.func @transform_5(%arg0: i32) -> (i32, i32) {
    %c0_i32 = arith.constant 0 : i32
    %c0_i32_0 = arith.constant 0 : i32
    %c0_i32_1 = arith.constant 0 : i32
    return %c0_i32, %c0_i32_0 : i32, i32
  }
  func.func @transform_6(%arg0: i32) -> (i32, i32) {
    %c0_i32 = arith.constant 0 : i32
    %c0_i32_0 = arith.constant 0 : i32
    %c0_i32_1 = arith.constant 0 : i32
    return %c0_i32, %c0_i32_0 : i32, i32
  }
  func.func @transform_7(%arg0: i32) -> (i32, i32, i32, i32) {
    %c0_i32 = arith.constant 0 : i32
    %c0_i32_0 = arith.constant 0 : i32
    %c0_i32_1 = arith.constant 0 : i32
    %c0_i32_2 = arith.constant 0 : i32
    return %arg0, %c0_i32, %c0_i32_0, %c0_i32_1 : i32, i32, i32, i32
  }
}

module attributes {stable_mosaic.version = 11 : i64} {
  func.func @bn_proj_add_relu_kernel(%arg0: i32, %arg1: memref<1x4x4x128xbf16, #tpu.memory_space<vmem>>, %arg2: memref<2x2x128xf32, #tpu.memory_space<vmem>>, %arg3: memref<1x128xf32, #tpu.memory_space<vmem>>, %arg4: memref<1x128xf32, #tpu.memory_space<vmem>>, %arg5: memref<1x6x8x128xbf16, #tpu.memory_space<vmem>>, %arg6: memref<16x128xbf16, #tpu.memory_space<vmem>>, %arg7: memref<1x128xf32, #tpu.memory_space<vmem>>, %arg8: memref<1x6x8x128xbf16, #tpu.memory_space<vmem>>) attributes {dimension_semantics = [#tpu.dimension_semantics<parallel>], iteration_bounds = array<i64: 2>, scalar_prefetch = 0 : i64, scratch_operands = 0 : i64, tpu.core_type = #tpu.core_type<tc>, window_params = [{transform_indices = @transform_0, window_bounds = array<i64: 1, 4, 4, 128>}, {pipeline_mode = #tpu.pipeline_mode<synchronous>, transform_indices = @transform_1, window_bounds = array<i64: 2, 2, 128>}, {pipeline_mode = #tpu.pipeline_mode<synchronous>, transform_indices = @transform_2, window_bounds = array<i64: 1, 128>}, {pipeline_mode = #tpu.pipeline_mode<synchronous>, transform_indices = @transform_3, window_bounds = array<i64: 1, 128>}, {transform_indices = @transform_4, window_bounds = array<i64: 1, 6, 8, 128>}, {pipeline_mode = #tpu.pipeline_mode<synchronous>, transform_indices = @transform_5, window_bounds = array<i64: 16, 128>}, {pipeline_mode = #tpu.pipeline_mode<synchronous>, transform_indices = @transform_6, window_bounds = array<i64: 1, 128>}, {transform_indices = @transform_7, window_bounds = array<i64: 1, 6, 8, 128>}]} {
    %c0 = arith.constant 0 : index
    %c0_0 = arith.constant 0 : index
    %c0_1 = arith.constant 0 : index
    %0 = vector.load %arg2[%c0, %c0_0, %c0_1] : memref<2x2x128xf32, #tpu.memory_space<vmem>>, vector<2x2x128xf32>
    %cst = arith.constant dense<0.000000e+00> : vector<2x128xf32>
    %1 = vector.multi_reduction <add>, %0, %cst [0] : vector<2x2x128xf32> to vector<2x128xf32>
    %2 = vector.extract_strided_slice %1 {offsets = [0, 0], sizes = [1, 128], strides = [1, 1]} : vector<2x128xf32> to vector<1x128xf32>
    %cst_2 = arith.constant 3.125000e-02 : f32
    %3 = vector.broadcast %cst_2 : f32 to vector<1x128xf32>
    %4 = arith.mulf %2, %3 : vector<1x128xf32>
    %5 = vector.extract_strided_slice %1 {offsets = [1, 0], sizes = [1, 128], strides = [1, 1]} : vector<2x128xf32> to vector<1x128xf32>
    %cst_3 = arith.constant 3.125000e-02 : f32
    %6 = vector.broadcast %cst_3 : f32 to vector<1x128xf32>
    %7 = arith.mulf %5, %6 : vector<1x128xf32>
    %8 = arith.mulf %4, %4 : vector<1x128xf32>
    %9 = arith.subf %7, %8 : vector<1x128xf32>
    %c0_4 = arith.constant 0 : index
    %c0_5 = arith.constant 0 : index
    %10 = vector.load %arg3[%c0_4, %c0_5] : memref<1x128xf32, #tpu.memory_space<vmem>>, vector<1x128xf32>
    %cst_6 = arith.constant 9.99999974E-6 : f32
    %11 = vector.broadcast %cst_6 : f32 to vector<1x128xf32>
    %12 = arith.addf %9, %11 : vector<1x128xf32>
    %13 = math.rsqrt %12 : vector<1x128xf32>
    %14 = arith.mulf %10, %13 : vector<1x128xf32>
    %c0_7 = arith.constant 0 : index
    %c0_8 = arith.constant 0 : index
    %15 = vector.load %arg4[%c0_7, %c0_8] : memref<1x128xf32, #tpu.memory_space<vmem>>, vector<1x128xf32>
    %16 = arith.mulf %4, %14 : vector<1x128xf32>
    %17 = arith.subf %15, %16 : vector<1x128xf32>
    %c0_9 = arith.constant 0 : index
    %c0_10 = arith.constant 0 : index
    %c0_11 = arith.constant 0 : index
    %c0_12 = arith.constant 0 : index
    %18 = vector.load %arg1[%c0_9, %c0_10, %c0_11, %c0_12] : memref<1x4x4x128xbf16, #tpu.memory_space<vmem>>, vector<1x4x4x128xbf16>
    %19 = vector.shape_cast %18 : vector<1x4x4x128xbf16> to vector<4x4x128xbf16>
    %20 = arith.extf %19 : vector<4x4x128xbf16> to vector<4x4x128xf32>
    %21 = vector.shape_cast %14 : vector<1x128xf32> to vector<1x1x128xf32>
    %22 = vector.broadcast %21 : vector<1x1x128xf32> to vector<4x4x128xf32>
    %23 = arith.mulf %20, %22 : vector<4x4x128xf32>
    %24 = vector.shape_cast %17 : vector<1x128xf32> to vector<1x1x128xf32>
    %25 = vector.broadcast %24 : vector<1x1x128xf32> to vector<4x4x128xf32>
    %26 = arith.addf %23, %25 : vector<4x4x128xf32>
    %c0_13 = arith.constant 0 : index
    %c1 = arith.constant 1 : index
    %c1_14 = arith.constant 1 : index
    %c0_15 = arith.constant 0 : index
    %27 = vector.load %arg5[%c0_13, %c1, %c1_14, %c0_15] : memref<1x6x8x128xbf16, #tpu.memory_space<vmem>>, vector<1x4x4x16xbf16>
    %28 = vector.shape_cast %27 : vector<1x4x4x16xbf16> to vector<4x4x16xbf16>
    %29 = vector.shape_cast %28 : vector<4x4x16xbf16> to vector<16x16xbf16>
    %c0_16 = arith.constant 0 : index
    %c0_17 = arith.constant 0 : index
    %30 = vector.load %arg6[%c0_16, %c0_17] : memref<16x128xbf16, #tpu.memory_space<vmem>>, vector<16x128xbf16>
    %cst_18 = arith.constant dense<0.000000e+00> : vector<16x128xf32>
    %31 = tpu.matmul %29, %30, %cst_18 {dimension_numbers = #tpu.dot_dimension_numbers<[1], [0], [0], [1], [0, 0, 1, 1], [], []>} : vector<16x16xbf16>, vector<16x128xbf16>, vector<16x128xf32> -> vector<16x128xf32>
    %c0_19 = arith.constant 0 : index
    %c0_20 = arith.constant 0 : index
    %32 = vector.load %arg7[%c0_19, %c0_20] : memref<1x128xf32, #tpu.memory_space<vmem>>, vector<1x128xf32>
    %33 = vector.broadcast %32 : vector<1x128xf32> to vector<16x128xf32>
    %34 = arith.addf %31, %33 : vector<16x128xf32>
    %35 = vector.shape_cast %34 : vector<16x128xf32> to vector<4x4x128xf32>
    %36 = arith.addf %26, %35 : vector<4x4x128xf32>
    %cst_21 = arith.constant 0.000000e+00 : f32
    %37 = vector.broadcast %cst_21 : f32 to vector<4x4x128xf32>
    %38 = arith.maximumf %36, %37 : vector<4x4x128xf32>
    %39 = arith.truncf %38 : vector<4x4x128xf32> to vector<4x4x128xbf16>
    %cst_22 = arith.constant 0.000000e+00 : bf16
    %40 = vector.broadcast %cst_22 : bf16 to vector<4x1x128xbf16>
    %cst_23 = arith.constant 0.000000e+00 : bf16
    %41 = vector.broadcast %cst_23 : bf16 to vector<4x3x128xbf16>
    %42 = tpu.concatenate %40, %39, %41 in 1 : vector<4x1x128xbf16>, vector<4x4x128xbf16>, vector<4x3x128xbf16> -> vector<4x8x128xbf16>
    %cst_24 = arith.constant 0.000000e+00 : bf16
    %43 = vector.broadcast %cst_24 : bf16 to vector<1x8x128xbf16>
    %44 = tpu.concatenate %43, %42, %43 in 0 : vector<1x8x128xbf16>, vector<4x8x128xbf16>, vector<1x8x128xbf16> -> vector<6x8x128xbf16>
    %c0_25 = arith.constant 0 : index
    %c0_26 = arith.constant 0 : index
    %c0_27 = arith.constant 0 : index
    %c0_28 = arith.constant 0 : index
    %45 = vector.load %arg8[%c0_25, %c0_26, %c0_27, %c0_28] : memref<1x6x8x128xbf16, #tpu.memory_space<vmem>>, vector<1x6x8x128xbf16>
    %46 = vector.shape_cast %45 : vector<1x6x8x128xbf16> to vector<6x8x128xbf16>
    %47 = vector.shape_cast %44 : vector<6x8x128xbf16> to vector<1x6x8x128xbf16>
    tpu.vector_store %arg8[%c0_25, %c0_26, %c0_27, %c0_28], %47 {strides = array<i32>} : memref<1x6x8x128xbf16, #tpu.memory_space<vmem>>, vector<1x6x8x128xbf16>,
    return
  }
  func.func @transform_0(%arg0: i32) -> (i32, i32, i32, i32) {
    %c0_i32 = arith.constant 0 : i32
    %c0_i32_0 = arith.constant 0 : i32
    %c0_i32_1 = arith.constant 0 : i32
    %c0_i32_2 = arith.constant 0 : i32
    return %arg0, %c0_i32, %c0_i32_0, %c0_i32_1 : i32, i32, i32, i32
  }
  func.func @transform_1(%arg0: i32) -> (i32, i32, i32) {
    %c0_i32 = arith.constant 0 : i32
    %c0_i32_0 = arith.constant 0 : i32
    %c0_i32_1 = arith.constant 0 : i32
    %c0_i32_2 = arith.constant 0 : i32
    return %c0_i32, %c0_i32_0, %c0_i32_1 : i32, i32, i32
  }
  func.func @transform_2(%arg0: i32) -> (i32, i32) {
    %c0_i32 = arith.constant 0 : i32
    %c0_i32_0 = arith.constant 0 : i32
    %c0_i32_1 = arith.constant 0 : i32
    return %c0_i32, %c0_i32_0 : i32, i32
  }
  func.func @transform_3(%arg0: i32) -> (i32, i32) {
    %c0_i32 = arith.constant 0 : i32
    %c0_i32_0 = arith.constant 0 : i32
    %c0_i32_1 = arith.constant 0 : i32
    return %c0_i32, %c0_i32_0 : i32, i32
  }
  func.func @transform_4(%arg0: i32) -> (i32, i32, i32, i32) {
    %c0_i32 = arith.constant 0 : i32
    %c0_i32_0 = arith.constant 0 : i32
    %c0_i32_1 = arith.constant 0 : i32
    %c0_i32_2 = arith.constant 0 : i32
    return %arg0, %c0_i32, %c0_i32_0, %c0_i32_1 : i32, i32, i32, i32
  }
  func.func @transform_5(%arg0: i32) -> (i32, i32) {
    %c0_i32 = arith.constant 0 : i32
    %c0_i32_0 = arith.constant 0 : i32
    %c0_i32_1 = arith.constant 0 : i32
    return %c0_i32, %c0_i32_0 : i32, i32
  }
  func.func @transform_6(%arg0: i32) -> (i32, i32) {
    %c0_i32 = arith.constant 0 : i32
    %c0_i32_0 = arith.constant 0 : i32
    %c0_i32_1 = arith.constant 0 : i32
    return %c0_i32, %c0_i32_0 : i32, i32
  }
  func.func @transform_7(%arg0: i32) -> (i32, i32, i32, i32) {
    %c0_i32 = arith.constant 0 : i32
    %c0_i32_0 = arith.constant 0 : i32
    %c0_i32_1 = arith.constant 0 : i32
    %c0_i32_2 = arith.constant 0 : i32
    return %arg0, %c0_i32, %c0_i32_0, %c0_i32_1 : i32, i32, i32, i32
  }
}

module attributes {stable_mosaic.version = 11 : i64} {
  func.func @head_kernel(%arg0: memref<2x6x8x128xbf16, #tpu.memory_space<vmem>>, %arg1: memref<128x128xbf16, #tpu.memory_space<vmem>>, %arg2: memref<1x128xf32, #tpu.memory_space<vmem>>, %arg3: memref<2x128xf32, #tpu.memory_space<vmem>>) attributes {dimension_semantics = [], scalar_prefetch = 0 : i64, scratch_operands = 0 : i64, tpu.core_type = #tpu.core_type<tc>} {
    %c0 = arith.constant 0 : index
    %c1 = arith.constant 1 : index
    %c1_0 = arith.constant 1 : index
    %c0_1 = arith.constant 0 : index
    %0 = vector.load %arg0[%c0, %c1, %c1_0, %c0_1] : memref<2x6x8x128xbf16, #tpu.memory_space<vmem>>, vector<2x4x4x128xbf16>
    %1 = arith.extf %0 : vector<2x4x4x128xbf16> to vector<2x4x4x128xf32>
    %2 = vector.shape_cast %1 : vector<2x4x4x128xf32> to vector<2x16x128xf32>
    %cst = arith.constant dense<0.000000e+00> : vector<2x128xf32>
    %3 = vector.multi_reduction <add>, %2, %cst [1] : vector<2x16x128xf32> to vector<2x128xf32>
    %cst_2 = arith.constant 1.600000e+01 : f32
    %4 = vector.broadcast %cst_2 : f32 to vector<2x128xf32>
    %5 = arith.divf %3, %4 : vector<2x128xf32>
    %6 = arith.truncf %5 : vector<2x128xf32> to vector<2x128xbf16>
    %c0_3 = arith.constant 0 : index
    %c0_4 = arith.constant 0 : index
    %7 = vector.load %arg1[%c0_3, %c0_4] : memref<128x128xbf16, #tpu.memory_space<vmem>>, vector<128x128xbf16>
    %cst_5 = arith.constant dense<0.000000e+00> : vector<2x128xf32>
    %8 = tpu.matmul %6, %7, %cst_5 {dimension_numbers = #tpu.dot_dimension_numbers<[1], [0], [0], [1], [0, 0, 1, 1], [], []>} : vector<2x128xbf16>, vector<128x128xbf16>, vector<2x128xf32> -> vector<2x128xf32>
    %c0_6 = arith.constant 0 : index
    %c0_7 = arith.constant 0 : index
    %9 = vector.load %arg2[%c0_6, %c0_7] : memref<1x128xf32, #tpu.memory_space<vmem>>, vector<1x128xf32>
    %10 = vector.broadcast %9 : vector<1x128xf32> to vector<2x128xf32>
    %11 = arith.addf %8, %10 : vector<2x128xf32>
    %c0_8 = arith.constant 0 : index
    %c0_9 = arith.constant 0 : index
    %12 = vector.load %arg3[%c0_8, %c0_9] : memref<2x128xf32, #tpu.memory_space<vmem>>, vector<2x128xf32>
    tpu.vector_store %arg3[%c0_8, %c0_9], %11 {strides = array<i32>} : memref<2x128xf32, #tpu.memory_space<vmem>>, vector<2x128xf32>,
    return
  }
}

module attributes {stable_mosaic.version = 11 : i64} {
  func.func @conv_stats_kernel(%arg0: i32, %arg1: memref<1x6x8x128xbf16, #tpu.memory_space<vmem>>, %arg2: memref<288x128xbf16, #tpu.memory_space<vmem>>, %arg3: memref<1x128xf32, #tpu.memory_space<vmem>>, %arg4: memref<1x4x4x128xbf16, #tpu.memory_space<vmem>>, %arg5: memref<1x2x128xf32, #tpu.memory_space<vmem>>, %arg6: memref<4x4x288xbf16, #tpu.memory_space<vmem>>) attributes {dimension_semantics = [#tpu.dimension_semantics<parallel>], iteration_bounds = array<i64: 2>, scalar_prefetch = 0 : i64, scratch_operands = 1 : i64, tpu.core_type = #tpu.core_type<tc>, window_params = [{transform_indices = @transform_0, window_bounds = array<i64: 1, 6, 8, 128>}, {pipeline_mode = #tpu.pipeline_mode<synchronous>, transform_indices = @transform_1, window_bounds = array<i64: 288, 128>}, {pipeline_mode = #tpu.pipeline_mode<synchronous>, transform_indices = @transform_2, window_bounds = array<i64: 1, 128>}, {transform_indices = @transform_3, window_bounds = array<i64: 1, 4, 4, 128>}, {transform_indices = @transform_4, window_bounds = array<i64: 1, 2, 128>}]} {
    %c0 = arith.constant 0 : index
    %c0_0 = arith.constant 0 : index
    %c0_1 = arith.constant 0 : index
    %c0_2 = arith.constant 0 : index
    %0 = vector.load %arg1[%c0, %c0_0, %c0_1, %c0_2] : memref<1x6x8x128xbf16, #tpu.memory_space<vmem>>, vector<1x4x4x32xbf16>
    %1 = vector.shape_cast %0 : vector<1x4x4x32xbf16> to vector<4x4x32xbf16>
    %c0_3 = arith.constant 0 : index
    %c0_4 = arith.constant 0 : index
    %c0_5 = arith.constant 0 : index
    %2 = vector.load %arg6[%c0_3, %c0_4, %c0_5] : memref<4x4x288xbf16, #tpu.memory_space<vmem>>, vector<4x4x32xbf16>
    tpu.vector_store %arg6[%c0_3, %c0_4, %c0_5], %1 {strides = array<i32>} : memref<4x4x288xbf16, #tpu.memory_space<vmem>>, vector<4x4x32xbf16>,
    %c0_6 = arith.constant 0 : index
    %c0_7 = arith.constant 0 : index
    %c1 = arith.constant 1 : index
    %c0_8 = arith.constant 0 : index
    %3 = vector.load %arg1[%c0_6, %c0_7, %c1, %c0_8] : memref<1x6x8x128xbf16, #tpu.memory_space<vmem>>, vector<1x4x4x32xbf16>
    %4 = vector.shape_cast %3 : vector<1x4x4x32xbf16> to vector<4x4x32xbf16>
    %c0_9 = arith.constant 0 : index
    %c0_10 = arith.constant 0 : index
    %c32 = arith.constant 32 : index
    %5 = vector.load %arg6[%c0_9, %c0_10, %c32] : memref<4x4x288xbf16, #tpu.memory_space<vmem>>, vector<4x4x32xbf16>
    tpu.vector_store %arg6[%c0_9, %c0_10, %c32], %4 {strides = array<i32>} : memref<4x4x288xbf16, #tpu.memory_space<vmem>>, vector<4x4x32xbf16>,
    %c0_11 = arith.constant 0 : index
    %c0_12 = arith.constant 0 : index
    %c2 = arith.constant 2 : index
    %c0_13 = arith.constant 0 : index
    %6 = vector.load %arg1[%c0_11, %c0_12, %c2, %c0_13] : memref<1x6x8x128xbf16, #tpu.memory_space<vmem>>, vector<1x4x4x32xbf16>
    %7 = vector.shape_cast %6 : vector<1x4x4x32xbf16> to vector<4x4x32xbf16>
    %c0_14 = arith.constant 0 : index
    %c0_15 = arith.constant 0 : index
    %c64 = arith.constant 64 : index
    %8 = vector.load %arg6[%c0_14, %c0_15, %c64] : memref<4x4x288xbf16, #tpu.memory_space<vmem>>, vector<4x4x32xbf16>
    tpu.vector_store %arg6[%c0_14, %c0_15, %c64], %7 {strides = array<i32>} : memref<4x4x288xbf16, #tpu.memory_space<vmem>>, vector<4x4x32xbf16>,
    %c0_16 = arith.constant 0 : index
    %c1_17 = arith.constant 1 : index
    %c0_18 = arith.constant 0 : index
    %c0_19 = arith.constant 0 : index
    %9 = vector.load %arg1[%c0_16, %c1_17, %c0_18, %c0_19] : memref<1x6x8x128xbf16, #tpu.memory_space<vmem>>, vector<1x4x4x32xbf16>
    %10 = vector.shape_cast %9 : vector<1x4x4x32xbf16> to vector<4x4x32xbf16>
    %c0_20 = arith.constant 0 : index
    %c0_21 = arith.constant 0 : index
    %c96 = arith.constant 96 : index
    %11 = vector.load %arg6[%c0_20, %c0_21, %c96] : memref<4x4x288xbf16, #tpu.memory_space<vmem>>, vector<4x4x32xbf16>
    tpu.vector_store %arg6[%c0_20, %c0_21, %c96], %10 {strides = array<i32>} : memref<4x4x288xbf16, #tpu.memory_space<vmem>>, vector<4x4x32xbf16>,
    %c0_22 = arith.constant 0 : index
    %c1_23 = arith.constant 1 : index
    %c1_24 = arith.constant 1 : index
    %c0_25 = arith.constant 0 : index
    %12 = vector.load %arg1[%c0_22, %c1_23, %c1_24, %c0_25] : memref<1x6x8x128xbf16, #tpu.memory_space<vmem>>, vector<1x4x4x32xbf16>
    %13 = vector.shape_cast %12 : vector<1x4x4x32xbf16> to vector<4x4x32xbf16>
    %c0_26 = arith.constant 0 : index
    %c0_27 = arith.constant 0 : index
    %c128 = arith.constant 128 : index
    %14 = vector.load %arg6[%c0_26, %c0_27, %c128] : memref<4x4x288xbf16, #tpu.memory_space<vmem>>, vector<4x4x32xbf16>
    tpu.vector_store %arg6[%c0_26, %c0_27, %c128], %13 {strides = array<i32>} : memref<4x4x288xbf16, #tpu.memory_space<vmem>>, vector<4x4x32xbf16>,
    %c0_28 = arith.constant 0 : index
    %c1_29 = arith.constant 1 : index
    %c2_30 = arith.constant 2 : index
    %c0_31 = arith.constant 0 : index
    %15 = vector.load %arg1[%c0_28, %c1_29, %c2_30, %c0_31] : memref<1x6x8x128xbf16, #tpu.memory_space<vmem>>, vector<1x4x4x32xbf16>
    %16 = vector.shape_cast %15 : vector<1x4x4x32xbf16> to vector<4x4x32xbf16>
    %c0_32 = arith.constant 0 : index
    %c0_33 = arith.constant 0 : index
    %c160 = arith.constant 160 : index
    %17 = vector.load %arg6[%c0_32, %c0_33, %c160] : memref<4x4x288xbf16, #tpu.memory_space<vmem>>, vector<4x4x32xbf16>
    tpu.vector_store %arg6[%c0_32, %c0_33, %c160], %16 {strides = array<i32>} : memref<4x4x288xbf16, #tpu.memory_space<vmem>>, vector<4x4x32xbf16>,
    %c0_34 = arith.constant 0 : index
    %c2_35 = arith.constant 2 : index
    %c0_36 = arith.constant 0 : index
    %c0_37 = arith.constant 0 : index
    %18 = vector.load %arg1[%c0_34, %c2_35, %c0_36, %c0_37] : memref<1x6x8x128xbf16, #tpu.memory_space<vmem>>, vector<1x4x4x32xbf16>
    %19 = vector.shape_cast %18 : vector<1x4x4x32xbf16> to vector<4x4x32xbf16>
    %c0_38 = arith.constant 0 : index
    %c0_39 = arith.constant 0 : index
    %c192 = arith.constant 192 : index
    %20 = vector.load %arg6[%c0_38, %c0_39, %c192] : memref<4x4x288xbf16, #tpu.memory_space<vmem>>, vector<4x4x32xbf16>
    tpu.vector_store %arg6[%c0_38, %c0_39, %c192], %19 {strides = array<i32>} : memref<4x4x288xbf16, #tpu.memory_space<vmem>>, vector<4x4x32xbf16>,
    %c0_40 = arith.constant 0 : index
    %c2_41 = arith.constant 2 : index
    %c1_42 = arith.constant 1 : index
    %c0_43 = arith.constant 0 : index
    %21 = vector.load %arg1[%c0_40, %c2_41, %c1_42, %c0_43] : memref<1x6x8x128xbf16, #tpu.memory_space<vmem>>, vector<1x4x4x32xbf16>
    %22 = vector.shape_cast %21 : vector<1x4x4x32xbf16> to vector<4x4x32xbf16>
    %c0_44 = arith.constant 0 : index
    %c0_45 = arith.constant 0 : index
    %c224 = arith.constant 224 : index
    %23 = vector.load %arg6[%c0_44, %c0_45, %c224] : memref<4x4x288xbf16, #tpu.memory_space<vmem>>, vector<4x4x32xbf16>
    tpu.vector_store %arg6[%c0_44, %c0_45, %c224], %22 {strides = array<i32>} : memref<4x4x288xbf16, #tpu.memory_space<vmem>>, vector<4x4x32xbf16>,
    %c0_46 = arith.constant 0 : index
    %c2_47 = arith.constant 2 : index
    %c2_48 = arith.constant 2 : index
    %c0_49 = arith.constant 0 : index
    %24 = vector.load %arg1[%c0_46, %c2_47, %c2_48, %c0_49] : memref<1x6x8x128xbf16, #tpu.memory_space<vmem>>, vector<1x4x4x32xbf16>
    %25 = vector.shape_cast %24 : vector<1x4x4x32xbf16> to vector<4x4x32xbf16>
    %c0_50 = arith.constant 0 : index
    %c0_51 = arith.constant 0 : index
    %c256 = arith.constant 256 : index
    %26 = vector.load %arg6[%c0_50, %c0_51, %c256] : memref<4x4x288xbf16, #tpu.memory_space<vmem>>, vector<4x4x32xbf16>
    tpu.vector_store %arg6[%c0_50, %c0_51, %c256], %25 {strides = array<i32>} : memref<4x4x288xbf16, #tpu.memory_space<vmem>>, vector<4x4x32xbf16>,
    %cst = arith.constant 0.000000e+00 : f32
    %27 = vector.broadcast %cst : f32 to vector<16x128xf32>
    %c0_52 = arith.constant 0 : index
    %c0_53 = arith.constant 0 : index
    %c0_54 = arith.constant 0 : index
    %28 = vector.load %arg6[%c0_52, %c0_53, %c0_54] : memref<4x4x288xbf16, #tpu.memory_space<vmem>>, vector<4x4x256xbf16>
    %29 = vector.shape_cast %28 : vector<4x4x256xbf16> to vector<16x256xbf16>
    %c0_55 = arith.constant 0 : index
    %c0_56 = arith.constant 0 : index
    %30 = vector.load %arg2[%c0_55, %c0_56] : memref<288x128xbf16, #tpu.memory_space<vmem>>, vector<256x128xbf16>
    %cst_57 = arith.constant dense<0.000000e+00> : vector<16x128xf32>
    %31 = tpu.matmul %29, %30, %cst_57 {dimension_numbers = #tpu.dot_dimension_numbers<[1], [0], [0], [1], [0, 0, 1, 1], [], []>} : vector<16x256xbf16>, vector<256x128xbf16>, vector<16x128xf32> -> vector<16x128xf32>
    %32 = arith.addf %27, %31 : vector<16x128xf32>
    %c0_58 = arith.constant 0 : index
    %c0_59 = arith.constant 0 : index
    %c256_60 = arith.constant 256 : index
    %33 = vector.load %arg6[%c0_58, %c0_59, %c256_60] : memref<4x4x288xbf16, #tpu.memory_space<vmem>>, vector<4x4x32xbf16>
    %34 = vector.shape_cast %33 : vector<4x4x32xbf16> to vector<16x32xbf16>
    %c256_61 = arith.constant 256 : index
    %c0_62 = arith.constant 0 : index
    %35 = vector.load %arg2[%c256_61, %c0_62] : memref<288x128xbf16, #tpu.memory_space<vmem>>, vector<32x128xbf16>
    %cst_63 = arith.constant dense<0.000000e+00> : vector<16x128xf32>
    %36 = tpu.matmul %34, %35, %cst_63 {dimension_numbers = #tpu.dot_dimension_numbers<[1], [0], [0], [1], [0, 0, 1, 1], [], []>} : vector<16x32xbf16>, vector<32x128xbf16>, vector<16x128xf32> -> vector<16x128xf32>
    %37 = arith.addf %32, %36 : vector<16x128xf32>
    %c0_64 = arith.constant 0 : index
    %c0_65 = arith.constant 0 : index
    %38 = vector.load %arg3[%c0_64, %c0_65] : memref<1x128xf32, #tpu.memory_space<vmem>>, vector<1x128xf32>
    %39 = vector.broadcast %38 : vector<1x128xf32> to vector<16x128xf32>
    %40 = arith.addf %37, %39 : vector<16x128xf32>
    %41 = vector.shape_cast %40 : vector<16x128xf32> to vector<4x4x128xf32>
    %42 = arith.truncf %41 : vector<4x4x128xf32> to vector<4x4x128xbf16>
    %c0_66 = arith.constant 0 : index
    %c0_67 = arith.constant 0 : index
    %c0_68 = arith.constant 0 : index
    %c0_69 = arith.constant 0 : index
    %43 = vector.load %arg4[%c0_66, %c0_67, %c0_68, %c0_69] : memref<1x4x4x128xbf16, #tpu.memory_space<vmem>>, vector<1x4x4x128xbf16>
    %44 = vector.shape_cast %43 : vector<1x4x4x128xbf16> to vector<4x4x128xbf16>
    %45 = vector.shape_cast %42 : vector<4x4x128xbf16> to vector<1x4x4x128xbf16>
    tpu.vector_store %arg4[%c0_66, %c0_67, %c0_68, %c0_69], %45 {strides = array<i32>} : memref<1x4x4x128xbf16, #tpu.memory_space<vmem>>, vector<1x4x4x128xbf16>,
    %cst_70 = arith.constant dense<0.000000e+00> : vector<128xf32>
    %46 = vector.multi_reduction <add>, %40, %cst_70 [0] : vector<16x128xf32> to vector<128xf32>
    %47 = vector.shape_cast %46 : vector<128xf32> to vector<1x128xf32>
    %48 = arith.mulf %40, %40 : vector<16x128xf32>
    %cst_71 = arith.constant dense<0.000000e+00> : vector<128xf32>
    %49 = vector.multi_reduction <add>, %48, %cst_71 [0] : vector<16x128xf32> to vector<128xf32>
    %50 = vector.shape_cast %49 : vector<128xf32> to vector<1x128xf32>
    %51 = tpu.concatenate %47, %50 in 0 : vector<1x128xf32>, vector<1x128xf32> -> vector<2x128xf32>
    %c0_72 = arith.constant 0 : index
    %c0_73 = arith.constant 0 : index
    %c0_74 = arith.constant 0 : index
    %52 = vector.load %arg5[%c0_72, %c0_73, %c0_74] : memref<1x2x128xf32, #tpu.memory_space<vmem>>, vector<1x2x128xf32>
    %53 = vector.shape_cast %52 : vector<1x2x128xf32> to vector<2x128xf32>
    %54 = vector.shape_cast %51 : vector<2x128xf32> to vector<1x2x128xf32>
    tpu.vector_store %arg5[%c0_72, %c0_73, %c0_74], %54 {strides = array<i32>} : memref<1x2x128xf32, #tpu.memory_space<vmem>>, vector<1x2x128xf32>,
    return
  }
  func.func @transform_0(%arg0: i32) -> (i32, i32, i32, i32) {
    %c0_i32 = arith.constant 0 : i32
    %c0_i32_0 = arith.constant 0 : i32
    %c0_i32_1 = arith.constant 0 : i32
    %c0_i32_2 = arith.constant 0 : i32
    return %arg0, %c0_i32, %c0_i32_0, %c0_i32_1 : i32, i32, i32, i32
  }
  func.func @transform_1(%arg0: i32) -> (i32, i32) {
    %c0_i32 = arith.constant 0 : i32
    %c0_i32_0 = arith.constant 0 : i32
    %c0_i32_1 = arith.constant 0 : i32
    return %c0_i32, %c0_i32_0 : i32, i32
  }
  func.func @transform_2(%arg0: i32) -> (i32, i32) {
    %c0_i32 = arith.constant 0 : i32
    %c0_i32_0 = arith.constant 0 : i32
    %c0_i32_1 = arith.constant 0 : i32
    return %c0_i32, %c0_i32_0 : i32, i32
  }
  func.func @transform_3(%arg0: i32) -> (i32, i32, i32, i32) {
    %c0_i32 = arith.constant 0 : i32
    %c0_i32_0 = arith.constant 0 : i32
    %c0_i32_1 = arith.constant 0 : i32
    %c0_i32_2 = arith.constant 0 : i32
    return %arg0, %c0_i32, %c0_i32_0, %c0_i32_1 : i32, i32, i32, i32
  }
  func.func @transform_4(%arg0: i32) -> (i32, i32, i32) {
    %c0_i32 = arith.constant 0 : i32
    %c0_i32_0 = arith.constant 0 : i32
    %c0_i32_1 = arith.constant 0 : i32
    return %arg0, %c0_i32, %c0_i32_0 : i32, i32, i32
  }
}

</mosaic_0001>

<llo_original>
// kernel: resnet_forward.16
$region0: #{resnet_forward.16}
  #allocation0 [shape = 'u32[]', space=smem, size = 0x4, offset = 0x4, fixed_abs, tag = 'smem constant byte address 0x4 - core index']
  #allocation1 [shape = 'u32[144,128]{1,0:T(1,128)}', space=vmem, size = 0x12000, scoped, tag = 'internal scratch']
  %s0 = inlined_call_operand.vmem [shape: bf16[2,16,4,128], index: 0, kind: input, shape index: {}]
  %s1 = inlined_call_operand.vmem [shape: f32[2,2,128], index: 1, kind: input, shape index: {}]
  %s2 = inlined_call_operand.vmem [shape: f32[1,128], index: 2, kind: input, shape index: {}]
  %s3 = inlined_call_operand.vmem [shape: f32[1,128], index: 3, kind: input, shape index: {}]
  %s4 = inlined_call_operand.vmem [shape: bf16[2,6,8,128], index: 4, kind: output, shape index: {}]
  %s5 = sld [smem:[#allocation0]]
  $region49: #{resnet_forward.16} parent=0
    _
  %s7 = ssub.s32 1, %s5
  %s8 = scalar_select 0, %s7, %s5
  loop: start=0, step=1, limit=4
  $region2: #{resnet_forward.16} parent=0 // loop_pre_header
    _
  $region3: #{resnet_forward.16} parent=0 // loop_header
    %s10 = sphi 0, %s14
    %p11 = scmp.ge.s32.totalorder %s10, 4
    %s20 = sphi 0, %s22
    %s23 = sphi 0, %s20
    %s24 = sphi 0, %s23
    %s40 = sphi 0, %s24
    %s44 = sphi 0, %s44
    %s46 = sphi 0, %s44
    %s47 = sphi 0, %s46
    %s61 = sphi 0, %s47
    %s65 = sphi 0, %s65
    %s67 = sphi 0, %s65
    %s68 = sphi 0, %s67
    %s82 = sphi 0, %s68
    %s86 = sphi 0, %s86
    %s88 = sphi 0, %s86
    %s89 = sphi 0, %s88
    %s103 = sphi 0, %s89
    %s109 = sphi 0, %s111
    %s112 = sphi 0, %s109
    %s113 = sphi 0, %s112
    %s129 = sphi 0, %s113
  $region4: #{resnet_forward.16} parent=0 // loop_header_branch
    %13 = sbr.rel (%p11) target = $region8
  $region5: #{resnet_forward.16} parent=0 // loop_body
    %s15 = ssub.s32 %s10, 1
    %s16 = ssub.s32 %s10, 2
    %s17 = sadd.s32 %s10, 1
    %s18 = ssub.s32 %s10, %s17
    %p19 = scmp.eq.s32.totalorder %s18, 0
    %s21 = sadd.s32 %s20, 1
    %s22 = scalar_select %p19, %s20, %s21
    %p25 = pneg %p19
    %p26 = scmp.eq.s32.totalorder %s10, 1
    %p27 = por %p25, %p26
    %p28 = scmp.ne.s32.totalorder %s20, %s23
    %p29 = scmp.eq.s32.totalorder %s10, 0
    %p30 = por %p28, %p29
    %p31 = scmp.ne.s32.totalorder %s20, %s23
    %p32 = scmp.eq.s32.totalorder %s15, 1
    %p33 = por %p31, %p32
    %p34 = scmp.ne.s32.totalorder %s23, %s24
    %p35 = scmp.eq.s32.totalorder %s15, 0
    %p36 = por %p34, %p35
    %p37 = scmp.ne.s32.totalorder %s23, %s24
    %p38 = scmp.eq.s32.totalorder %s16, 1
    %p39 = por %p37, %p38
    %p41 = scmp.ne.s32.totalorder %s24, %s40
    %p42 = scmp.eq.s32.totalorder %s16, 0
    %p43 = por %p41, %p42
    %s45 = sadd.s32 %s44, 1
    %p48 = scmp.eq.s32.totalorder %s10, 1
    %p49 = scmp.ne.s32.totalorder %s44, %s46
    %p50 = scmp.eq.s32.totalorder %s10, 0
    %p51 = por %p49, %p50
    %p52 = scmp.ne.s32.totalorder %s44, %s46
    %p53 = scmp.eq.s32.totalorder %s15, 1
    %p54 = por %p52, %p53
    %p55 = scmp.ne.s32.totalorder %s46, %s47
    %p56 = scmp.eq.s32.totalorder %s15, 0
    %p57 = por %p55, %p56
    %p58 = scmp.ne.s32.totalorder %s46, %s47
    %p59 = scmp.eq.s32.totalorder %s16, 1
    %p60 = por %p58, %p59
    %p62 = scmp.ne.s32.totalorder %s47, %s61
    %p63 = scmp.eq.s32.totalorder %s16, 0
    %p64 = por %p62, %p63
    %s66 = sadd.s32 %s65, 1
    %p69 = scmp.eq.s32.totalorder %s10, 1
    %p70 = scmp.ne.s32.totalorder %s65, %s67
    %p71 = scmp.eq.s32.totalorder %s10, 0
    %p72 = por %p70, %p71
    %p73 = scmp.ne.s32.totalorder %s65, %s67
    %p74 = scmp.eq.s32.totalorder %s15, 1
    %p75 = por %p73, %p74
    %p76 = scmp.ne.s32.totalorder %s67, %s68
    %p77 = scmp.eq.s32.totalorder %s15, 0
    %p78 = por %p76, %p77
    %p79 = scmp.ne.s32.totalorder %s67, %s68
    %p80 = scmp.eq.s32.totalorder %s16, 1
    %p81 = por %p79, %p80
    %p83 = scmp.ne.s32.totalorder %s68, %s82
    %p84 = scmp.eq.s32.totalorder %s16, 0
    %p85 = por %p83, %p84
    %s87 = sadd.s32 %s86, 1
    %p90 = scmp.eq.s32.totalorder %s10, 1
    %p91 = scmp.ne.s32.totalorder %s86, %s88
    %p92 = scmp.eq.s32.totalorder %s10, 0
    %p93 = por %p91, %p92
    %p94 = scmp.ne.s32.totalorder %s86, %s88
    %p95 = scmp.eq.s32.totalorder %s15, 1
    %p96 = por %p94, %p95
    %p97 = scmp.ne.s32.totalorder %s88, %s89
    %p98 = scmp.eq.s32.totalorder %s15, 0
    %p99 = por %p97, %p98
    %p100 = scmp.ne.s32.totalorder %s88, %s89
    %p101 = scmp.eq.s32.totalorder %s16, 1
    %p102 = por %p100, %p101
    %p104 = scmp.ne.s32.totalorder %s89, %s103
    %p105 = scmp.eq.s32.totalorder %s16, 0
    %p106 = por %p104, %p105
    %s107 = ssub.s32 %s10, %s17
    %p108 = scmp.eq.s32.totalorder %s107, 0
    %s110 = sadd.s32 %s109, 1
    %s111 = scalar_select %p108, %s109, %s110
    %p114 = pneg %p108
    %p115 = scmp.eq.s32.totalorder %s10, 1
    %p116 = por %p114, %p115
    %p117 = scmp.ne.s32.totalorder %s109, %s112
    %p118 = scmp.eq.s32.totalorder %s10, 0
    %p119 = por %p117, %p118
    %p120 = scmp.ne.s32.totalorder %s109, %s112
    %p121 = scmp.eq.s32.totalorder %s15, 1
    %p122 = por %p120, %p121
    %p123 = scmp.ne.s32.totalorder %s112, %s113
    %p124 = scmp.eq.s32.totalorder %s15, 0
    %p125 = por %p123, %p124
    %p126 = scmp.ne.s32.totalorder %s112, %s113
    %p127 = scmp.eq.s32.totalorder %s16, 1
    %p128 = por %p126, %p127
    %p130 = scmp.ne.s32.totalorder %s113, %s129
    %p131 = scmp.eq.s32.totalorder %s16, 0
    %p132 = por %p130, %p131
    %p133 = scmp.le.s32.totalorder 1, %s10
    %p134 = scmp.lt.s32.totalorder %s10, 3
    %p135 = pnand %p133, %p134
    %p136 = pneg %p135
    // Predicated region
    $region9: #{resnet_forward.16} parent=5 // pred_check
      _
    $region10: #{resnet_forward.16} parent=5 // pred_check_branch
      %138 = sbr.rel (%p135) target = $region12
    $region11: #{resnet_forward.16} parent=5 // pred_region
      %s139 = ssub.s32 %s10, 1
      // Predicated region
      $region13: #{resnet_forward.16} parent=11 // pred_check
        %p140 = pneg %p57
      $region14: #{resnet_forward.16} parent=11 // pred_check_branch
        %142 = sbr.rel (%p140) target = $region16
      $region15: #{resnet_forward.16} parent=11 // pred_region
        _
      $region16: #{resnet_forward.16} parent=11 // pred_fallthru
        _
      // Predicated region
      $region17: #{resnet_forward.16} parent=11 // pred_check
        %p143 = pneg %p78
      $region18: #{resnet_forward.16} parent=11 // pred_check_branch
        %145 = sbr.rel (%p143) target = $region20
      $region19: #{resnet_forward.16} parent=11 // pred_region
        _
      $region20: #{resnet_forward.16} parent=11 // pred_fallthru
        _
      // Predicated region
      $region21: #{resnet_forward.16} parent=11 // pred_check
        %p146 = pneg %p99
      $region22: #{resnet_forward.16} parent=11 // pred_check_branch
        %148 = sbr.rel (%p146) target = $region24
      $region23: #{resnet_forward.16} parent=11 // pred_region
        _
      $region24: #{resnet_forward.16} parent=11 // pred_fallthru
        _
    $region12: #{resnet_forward.16} parent=5 // pred_fallthru
      _
    %p149 = scmp.lt.s32.totalorder %s10, 2
    // Predicated region
    $region25: #{resnet_forward.16} parent=5 // pred_check
      %p150 = pneg %p149
    $region26: #{resnet_forward.16} parent=5 // pred_check_branch
      %152 = sbr.rel (%p150) target = $region28
    $region27: #{resnet_forward.16} parent=5 // pred_region
      // Predicated region
      $region29: #{resnet_forward.16} parent=27 // pred_check
        %p153 = pneg %p30
      $region30: #{resnet_forward.16} parent=27 // pred_check_branch
        %155 = sbr.rel (%p153) target = $region32
      $region31: #{resnet_forward.16} parent=27 // pred_region
        %p156 = scmp.lt.s32.totalorder %s10, 1
        %s157 = scalar_select %p156, %s10, 1
        %s158 = smul.addr %s157, 16
        %s159 = smul.addr %s158, 2
        %s160 = scalar_lea.vmem %s0, %s159
      $region32: #{resnet_forward.16} parent=27 // pred_fallthru
        _
    $region28: #{resnet_forward.16} parent=5 // pred_fallthru
      _
    %p161 = scmp.le.s32.totalorder 1, %s10
    %p162 = scmp.lt.s32.totalorder %s10, 3
    %p163 = pnand %p161, %p162
    %p164 = pneg %p163
    // Predicated region
    $region33: #{resnet_forward.16} parent=5 // pred_check
      _
    $region34: #{resnet_forward.16} parent=5 // pred_check_branch
      %166 = sbr.rel (%p163) target = $region36
    $region35: #{resnet_forward.16} parent=5 // pred_region
      %s167 = ssub.s32 %s10, 1
      %p168 = scmp.lt.s32.totalorder %s15, 1
      %s169 = scalar_select %p168, %s15, 1
      %s170 = smul.addr %s169, 16
      %s171 = smul.addr %s170, 2
      %s172 = scalar_lea.vmem %s0, %s171
      %p173 = pneg %p36
      %p174 = pneg %p33
      %p175 = pneg %p57
      %p176 = pneg %p54
      %p177 = pneg %p78
      %p178 = pneg %p75
      %p179 = pneg %p99
      %p180 = pneg %p96
      %p181 = pneg %p125
      %p182 = pneg %p122
      %p183 = scmp.lt.s32.totalorder %s15, 1
      %s184 = scalar_select %p183, %s15, 1
      %s185 = smul.addr %s184, 6
      %s186 = smul.addr %s185, 4
      %s187 = scalar_lea.vmem %s4, %s186
      %p188 = scmp.lt.s32.totalorder %s15, 1
      %s189 = scalar_select %p188, %s15, 1
      %s190 = smul.addr %s189, 16
      %s191 = smul.addr %s190, 2
      %s192 = scalar_lea.vmem %s0, %s191
      %p193 = scmp.lt.s32.totalorder %s15, 1
      %s194 = scalar_select %p193, %s15, 1
      %s195 = smul.addr %s194, 6
      %s196 = smul.addr %s195, 4
      %s197 = scalar_lea.vmem %s4, %s196
      %v199 = vld [vmem:[%s1] sm:$0x3]
      %v200 = vld [vmem:[%s1 + $0x2] sm:$0x3]
      %vm201 = vcmask 1041408
      %v202 = vsel %vm201, %v199, 0.0
      %v203 = vsel %vm201, %v200, 0.0
      %v204 = vadd.f32 %v202, %v203
      %v205 = vmul.f32 %v204, 0.0078125
      %v206 = vmul.f32 %v205, %v205
      %v208 = vrot.slane %v206, 7
      %v210 = vsub.f32 %v205, %v208
      %v211 = vld [vmem:[%s2] sm:$0x1]
      %v212 = vadd.f32 %v210, 1e-05
      %v213 = vrsqrt.pop %v212
      %v216 = vunpack.c.l.s4 1966171168
      %v217 = vunpack.c.0.s8 %v216
      %v218 = vlaneseq
      %v219 = vshrl.u32 %v218, 7
      %v220 = vsub.s32 %v217, %v219
      %v221 = vrot.slane %v213, %v220
      %v222 = vcombine.high %v221, %v221
      %v224 = vunpack.c.l.s4 1966171168
      %v225 = vunpack.c.0.s8 %v224
      %v226 = vlaneseq
      %v227 = vshrl.u32 %v226, 7
      %v228 = vsub.s32 %v225, %v227
      %v229 = vrot.slane %v222, %v228
      %v231 = vmul.f32 %v211, %v229
      %v232 = vld [vmem:[%s3] sm:$0x1]
      %v233 = vmul.f32 %v205, %v231
      %v234 = vsub.f32 %v232, %v233
      %v235 = vld [vmem:[%s192] sm:$0x3]
      %v236 = vld [vmem:[%s192 + $0x2] sm:$0x3]
      %v237 = vld [vmem:[%s192 + $0x4] sm:$0x3]
      %v238 = vld [vmem:[%s192 + $0x6] sm:$0x3]
      %v239 = vld [vmem:[%s192 + $0x8] sm:$0x3]
      %v240 = vld [vmem:[%s192 + $0xa] sm:$0x3]
      %v241 = vld [vmem:[%s192 + $0xc] sm:$0x3]
      %v242 = vld [vmem:[%s192 + $0xe] sm:$0x3]
      %v243 = vld [vmem:[%s192 + $0x10] sm:$0x3]
      %v244 = vld [vmem:[%s192 + $0x12] sm:$0x3]
      %v245 = vld [vmem:[%s192 + $0x14] sm:$0x3]
      %v246 = vld [vmem:[%s192 + $0x16] sm:$0x3]
      %v247 = vld [vmem:[%s192 + $0x18] sm:$0x3]
      %v248 = vld [vmem:[%s192 + $0x1a] sm:$0x3]
      %v249 = vld [vmem:[%s192 + $0x1c] sm:$0x3]
      %v250 = vld [vmem:[%s192 + $0x1e] sm:$0x3]
      %v251 = vunpack.c.l.bf16 %v235
      %v252 = vunpack.c.l.bf16 %v236
      %v253 = vunpack.c.l.bf16 %v237
      %v254 = vunpack.c.l.bf16 %v238
      %v255 = vunpack.c.l.bf16 %v239
      %v256 = vunpack.c.l.bf16 %v240
      %v257 = vunpack.c.l.bf16 %v241
      %v258 = vunpack.c.l.bf16 %v242
      %v259 = vunpack.c.l.bf16 %v243
      %v260 = vunpack.c.l.bf16 %v244
      %v261 = vunpack.c.l.bf16 %v245
      %v262 = vunpack.c.l.bf16 %v246
      %v263 = vunpack.c.l.bf16 %v247
      %v264 = vunpack.c.l.bf16 %v248
      %v265 = vunpack.c.l.bf16 %v249
      %v266 = vunpack.c.l.bf16 %v250
      %v268 = vlaneseq
      %v269 = vshrl.u32 %v268, 7
      %v270 = vsub.s32 0, %v269
      %v271 = vrot.slane %v231, %v270
      %v273 = vmul.f32 %v251, %v271
      %v274 = vmul.f32 %v252, %v271
      %v275 = vmul.f32 %v253, %v271
      %v276 = vmul.f32 %v254, %v271
      %v277 = vmul.f32 %v255, %v271
      %v278 = vmul.f32 %v256, %v271
      %v279 = vmul.f32 %v257, %v271
      %v280 = vmul.f32 %v258, %v271
      %v281 = vmul.f32 %v259, %v271
      %v282 = vmul.f32 %v260, %v271
      %v283 = vmul.f32 %v261, %v271
      %v284 = vmul.f32 %v262, %v271
      %v285 = vmul.f32 %v263, %v271
      %v286 = vmul.f32 %v264, %v271
      %v287 = vmul.f32 %v265, %v271
      %v288 = vmul.f32 %v266, %v271
      %v290 = vlaneseq
      %v291 = vshrl.u32 %v290, 7
      %v292 = vsub.s32 0, %v291
      %v293 = vrot.slane %v234, %v292
      %v295 = vadd.f32 %v273, %v293
      %v296 = vadd.f32 %v274, %v293
      %v297 = vadd.f32 %v275, %v293
      %v298 = vadd.f32 %v276, %v293
      %v299 = vadd.f32 %v277, %v293
      %v300 = vadd.f32 %v278, %v293
      %v301 = vadd.f32 %v279, %v293
      %v302 = vadd.f32 %v280, %v293
      %v303 = vadd.f32 %v281, %v293
      %v304 = vadd.f32 %v282, %v293
      %v305 = vadd.f32 %v283, %v293
      %v306 = vadd.f32 %v284, %v293
      %v307 = vadd.f32 %v285, %v293
      %v308 = vadd.f32 %v286, %v293
      %v309 = vadd.f32 %v287, %v293
      %v310 = vadd.f32 %v288, %v293
      %v311 = vmax.f32 %v295, 0.0
      %v312 = vmax.f32 %v296, 0.0
      %v313 = vmax.f32 %v297, 0.0
      %v314 = vmax.f32 %v298, 0.0
      %v315 = vmax.f32 %v299, 0.0
      %v316 = vmax.f32 %v300, 0.0
      %v317 = vmax.f32 %v301, 0.0
      %v318 = vmax.f32 %v302, 0.0
      %v319 = vmax.f32 %v303, 0.0
      %v320 = vmax.f32 %v304, 0.0
      %v321 = vmax.f32 %v305, 0.0
      %v322 = vmax.f32 %v306, 0.0
      %v323 = vmax.f32 %v307, 0.0
      %v324 = vmax.f32 %v308, 0.0
      %v325 = vmax.f32 %v309, 0.0
      %v326 = vmax.f32 %v310, 0.0
      %v331 = vrot.slane 0.0, 7
      %v332 = vrot.slane %v323, 7
      %v333 = vrot.slane %v324, 7
      %v334 = vrot.slane %v325, 7
      %vm339 = vcmask 1040384
      %v340 = vsel %vm339, 0.0, %v331
      %v341 = vsel %vm339, 0.0, %v332
      %v342 = vsel %vm339, 0.0, %v333
      %v343 = vsel %vm339, 0.0, %v334
      %v344 = vmax.f32 %v340, 0.0
      %v345 = vmax.f32 %v341, %v319
      %v346 = vmax.f32 %v342, %v320
      %v347 = vmax.f32 %v343, %v321
      %v348 = vmax.f32 %v344, 0.0
      %v349 = vmax.f32 %v345, %v323
      %v350 = vmax.f32 %v346, %v324
      %v351 = vmax.f32 %v347, %v325
      %v356 = vrot.slane %v315, 7
      %v357 = vrot.slane %v316, 7
      %v358 = vrot.slane %v317, 7
      %v359 = vrot.slane %v318, 7
      %v364 = vsel %vm339, 0.0, %v356
      %v365 = vsel %vm339, 0.0, %v357
      %v366 = vsel %vm339, 0.0, %v358
      %v367 = vsel %vm339, 0.0, %v359
      %v368 = vmax.f32 %v348, %v364
      %v369 = vmax.f32 %v349, %v365
      %v370 = vmax.f32 %v350, %v366
      %v371 = vmax.f32 %v351, %v367
      %v372 = vmax.f32 %v368, %v311
      %v373 = vmax.f32 %v369, %v312
      %v374 = vmax.f32 %v370, %v313
      %v375 = vmax.f32 %v371, %v314
      %v376 = vmax.f32 %v372, %v315
      %v377 = vmax.f32 %v373, %v316
      %v378 = vmax.f32 %v374, %v317
      %v379 = vmax.f32 %v375, %v318
      %v381 = vrot.slane %v326, 7
      %v383 = vsel %vm339, 0.0, %v381
      %v384 = vmax.f32 %v376, %v341
      %v385 = vmax.f32 %v377, %v342
      %v386 = vmax.f32 %v378, %v343
      %v387 = vmax.f32 %v379, %v383
      %v388 = vmax.f32 %v384, %v319
      %v389 = vmax.f32 %v385, %v320
      %v390 = vmax.f32 %v386, %v321
      %v391 = vmax.f32 %v387, %v322
      %v392 = vmax.f32 %v388, %v323
      %v393 = vmax.f32 %v389, %v324
      %v394 = vmax.f32 %v390, %v325
      %v395 = vmax.f32 %v391, %v326
      %v396 = vpack.c.bf16 %v392, %v392
      %v397 = vpack.c.bf16 %v393, %v393
      %v398 = vpack.c.bf16 %v394, %v394
      %v399 = vpack.c.bf16 %v395, %v395
      %v401 = vshrl.u32 %v396, 16
      %v403 = vrot.slane %v401, 7
      %v404 = vshll.u32 %v396, 16
      %v406 = vor.u32 %v403, %v404
      %v408 = vshrl.u32 %v397, 16
      %v410 = vrot.slane %v408, 7
      %v411 = vshll.u32 %v397, 16
      %v413 = vor.u32 %v410, %v411
      %v415 = vshrl.u32 %v398, 16
      %v417 = vrot.slane %v415, 7
      %v418 = vshll.u32 %v398, 16
      %v420 = vor.u32 %v417, %v418
      %v422 = vshrl.u32 %v399, 16
      %v424 = vrot.slane %v422, 7
      %v425 = vshll.u32 %v399, 16
      %v427 = vor.u32 %v424, %v425
      %vm432 = vcmask 1040384
      %vm433 = vsmask.f32 256
      %vm434 = vmand %vm432, %vm433
      %v435 = vsel %vm434, 0, %v406
      %v436 = vsel %vm434, 0, %v413
      %v437 = vsel %vm434, 0, %v420
      %v438 = vsel %vm434, 0, %v427
      %vm439 = vcmask 1042432
      %vm440 = vsmask.f32 2304
      %vm441 = vmand %vm439, %vm440
      %v442 = vsel %vm441, %v435, 0
      %v443 = vsel %vm441, %v436, 0
      %v444 = vsel %vm441, %v437, 0
      %v445 = vsel %vm441, %v438, 0
      %446 = vst [vmem:[%s197] sm:$0xf] 0
      %447 = vst [vmem:[%s197 + $0x4] sm:$0xf] %v442
      %448 = vst [vmem:[%s197 + $0x8] sm:$0xf] %v443
      %449 = vst [vmem:[%s197 + $0xc] sm:$0xf] %v444
      %450 = vst [vmem:[%s197 + $0x10] sm:$0xf] %v445
      %451 = vst [vmem:[%s197 + $0x14] sm:$0xf] 0
      %p452 = scmp.lt.s32.totalorder %s15, 1
      %s453 = scalar_select %p452, %s15, 1
      %s454 = smul.addr %s453, 6
      %s455 = smul.addr %s454, 4
      %s456 = scalar_lea.vmem %s4, %s455
      // Predicated region
      $region37: #{resnet_forward.16} parent=35 // pred_check
        %p457 = pneg %p122
      $region38: #{resnet_forward.16} parent=35 // pred_check_branch
        %459 = sbr.rel (%p457) target = $region40
      $region39: #{resnet_forward.16} parent=35 // pred_region
        _
      $region40: #{resnet_forward.16} parent=35 // pred_fallthru
        _
    $region36: #{resnet_forward.16} parent=5 // pred_fallthru
      _
    %p460 = scmp.le.s32.totalorder 2, %s10
    // Predicated region
    $region41: #{resnet_forward.16} parent=5 // pred_check
      %p461 = pneg %p460
    $region42: #{resnet_forward.16} parent=5 // pred_check_branch
      %463 = sbr.rel (%p461) target = $region44
    $region43: #{resnet_forward.16} parent=5 // pred_region
      %s464 = ssub.s32 %s10, 2
      // Predicated region
      $region45: #{resnet_forward.16} parent=43 // pred_check
        %p465 = pneg %p128
      $region46: #{resnet_forward.16} parent=43 // pred_check_branch
        %467 = sbr.rel (%p465) target = $region48
      $region47: #{resnet_forward.16} parent=43 // pred_region
        %p468 = scmp.lt.s32.totalorder %s16, 1
        %s469 = scalar_select %p468, %s16, 1
        %s470 = smul.addr %s469, 6
        %s471 = smul.addr %s470, 4
        %s472 = scalar_lea.vmem %s4, %s471
      $region48: #{resnet_forward.16} parent=43 // pred_fallthru
        _
    $region44: #{resnet_forward.16} parent=5 // pred_fallthru
      _
  $region6: #{resnet_forward.16} parent=0 // loop_footer
    %s14 = sadd.s32 1, %s10
  $region7: #{resnet_forward.16} parent=0 // loop_footer_branch
    %9 = sbr.rel target = $region3
  $region8: #{resnet_forward.16} parent=0 // loop_exit
    _

// kernel: resnet_forward.15
$region0: #{resnet_forward.15}
  #allocation0 [shape = 'u32[]', space=smem, size = 0x4, offset = 0x4, fixed_abs, tag = 'smem constant byte address 0x4 - core index']
  #allocation1 [shape = 'u32[144,128]{1,0:T(1,128)}', space=vmem, size = 0x12000, scoped, tag = 'internal scratch']
  %s0 = inlined_call_operand.vmem [shape: bf16[2,16,4,256], index: 0, kind: input, shape index: {}]
  %s1 = inlined_call_operand.vmem [shape: bf16[256,128], index: 1, kind: input, shape index: {}]
  %s2 = inlined_call_operand.vmem [shape: f32[1,128], index: 2, kind: input, shape index: {}]
  %s3 = inlined_call_operand.vmem [shape: bf16[2,16,4,128], index: 3, kind: output, shape index: {0}]
  %s4 = inlined_call_operand.vmem [shape: f32[2,2,128], index: 4, kind: output, shape index: {1}]
  %5 = xla_tuple %s3, %s4
  %s6 = sld [smem:[#allocation0]]
  $region53: #{resnet_forward.15} parent=0
    _
  %s8 = ssub.s32 1, %s6
  %s9 = scalar_select 0, %s8, %s6
  loop: start=0, step=1, limit=4
  $region2: #{resnet_forward.15} parent=0 // loop_pre_header
    _
  $region3: #{resnet_forward.15} parent=0 // loop_header
    %s11 = sphi 0, %s15
    %p12 = scmp.ge.s32.totalorder %s11, 4
    %s21 = sphi 0, %s23
    %s24 = sphi 0, %s21
    %s25 = sphi 0, %s24
    %s41 = sphi 0, %s25
    %s45 = sphi 0, %s45
    %s47 = sphi 0, %s45
    %s48 = sphi 0, %s47
    %s62 = sphi 0, %s48
    %s66 = sphi 0, %s66
    %s68 = sphi 0, %s66
    %s69 = sphi 0, %s68
    %s83 = sphi 0, %s69
    %s89 = sphi 0, %s91
    %s92 = sphi 0, %s89
    %s93 = sphi 0, %s92
    %s109 = sphi 0, %s93
    %s115 = sphi 0, %s117
    %s118 = sphi 0, %s115
    %s119 = sphi 0, %s118
    %s135 = sphi 0, %s119
  $region4: #{resnet_forward.15} parent=0 // loop_header_branch
    %14 = sbr.rel (%p12) target = $region8
  $region5: #{resnet_forward.15} parent=0 // loop_body
    %s16 = ssub.s32 %s11, 1
    %s17 = ssub.s32 %s11, 2
    %s18 = sadd.s32 %s11, 1
    %s19 = ssub.s32 %s11, %s18
    %p20 = scmp.eq.s32.totalorder %s19, 0
    %s22 = sadd.s32 %s21, 1
    %s23 = scalar_select %p20, %s21, %s22
    %p26 = pneg %p20
    %p27 = scmp.eq.s32.totalorder %s11, 1
    %p28 = por %p26, %p27
    %p29 = scmp.ne.s32.totalorder %s21, %s24
    %p30 = scmp.eq.s32.totalorder %s11, 0
    %p31 = por %p29, %p30
    %p32 = scmp.ne.s32.totalorder %s21, %s24
    %p33 = scmp.eq.s32.totalorder %s16, 1
    %p34 = por %p32, %p33
    %p35 = scmp.ne.s32.totalorder %s24, %s25
    %p36 = scmp.eq.s32.totalorder %s16, 0
    %p37 = por %p35, %p36
    %p38 = scmp.ne.s32.totalorder %s24, %s25
    %p39 = scmp.eq.s32.totalorder %s17, 1
    %p40 = por %p38, %p39
    %p42 = scmp.ne.s32.totalorder %s25, %s41
    %p43 = scmp.eq.s32.totalorder %s17, 0
    %p44 = por %p42, %p43
    %s46 = sadd.s32 %s45, 1
    %p49 = scmp.eq.s32.totalorder %s11, 1
    %p50 = scmp.ne.s32.totalorder %s45, %s47
    %p51 = scmp.eq.s32.totalorder %s11, 0
    %p52 = por %p50, %p51
    %p53 = scmp.ne.s32.totalorder %s45, %s47
    %p54 = scmp.eq.s32.totalorder %s16, 1
    %p55 = por %p53, %p54
    %p56 = scmp.ne.s32.totalorder %s47, %s48
    %p57 = scmp.eq.s32.totalorder %s16, 0
    %p58 = por %p56, %p57
    %p59 = scmp.ne.s32.totalorder %s47, %s48
    %p60 = scmp.eq.s32.totalorder %s17, 1
    %p61 = por %p59, %p60
    %p63 = scmp.ne.s32.totalorder %s48, %s62
    %p64 = scmp.eq.s32.totalorder %s17, 0
    %p65 = por %p63, %p64
    %s67 = sadd.s32 %s66, 1
    %p70 = scmp.eq.s32.totalorder %s11, 1
    %p71 = scmp.ne.s32.totalorder %s66, %s68
    %p72 = scmp.eq.s32.totalorder %s11, 0
    %p73 = por %p71, %p72
    %p74 = scmp.ne.s32.totalorder %s66, %s68
    %p75 = scmp.eq.s32.totalorder %s16, 1
    %p76 = por %p74, %p75
    %p77 = scmp.ne.s32.totalorder %s68, %s69
    %p78 = scmp.eq.s32.totalorder %s16, 0
    %p79 = por %p77, %p78
    %p80 = scmp.ne.s32.totalorder %s68, %s69
    %p81 = scmp.eq.s32.totalorder %s17, 1
    %p82 = por %p80, %p81
    %p84 = scmp.ne.s32.totalorder %s69, %s83
    %p85 = scmp.eq.s32.totalorder %s17, 0
    %p86 = por %p84, %p85
    %s87 = ssub.s32 %s11, %s18
    %p88 = scmp.eq.s32.totalorder %s87, 0
    %s90 = sadd.s32 %s89, 1
    %s91 = scalar_select %p88, %s89, %s90
    %p94 = pneg %p88
    %p95 = scmp.eq.s32.totalorder %s11, 1
    %p96 = por %p94, %p95
    %p97 = scmp.ne.s32.totalorder %s89, %s92
    %p98 = scmp.eq.s32.totalorder %s11, 0
    %p99 = por %p97, %p98
    %p100 = scmp.ne.s32.totalorder %s89, %s92
    %p101 = scmp.eq.s32.totalorder %s16, 1
    %p102 = por %p100, %p101
    %p103 = scmp.ne.s32.totalorder %s92, %s93
    %p104 = scmp.eq.s32.totalorder %s16, 0
    %p105 = por %p103, %p104
    %p106 = scmp.ne.s32.totalorder %s92, %s93
    %p107 = scmp.eq.s32.totalorder %s17, 1
    %p108 = por %p106, %p107
    %p110 = scmp.ne.s32.totalorder %s93, %s109
    %p111 = scmp.eq.s32.totalorder %s17, 0
    %p112 = por %p110, %p111
    %s113 = ssub.s32 %s11, %s18
    %p114 = scmp.eq.s32.totalorder %s113, 0
    %s116 = sadd.s32 %s115, 1
    %s117 = scalar_select %p114, %s115, %s116
    %p120 = pneg %p114
    %p121 = scmp.eq.s32.totalorder %s11, 1
    %p122 = por %p120, %p121
    %p123 = scmp.ne.s32.totalorder %s115, %s118
    %p124 = scmp.eq.s32.totalorder %s11, 0
    %p125 = por %p123, %p124
    %p126 = scmp.ne.s32.totalorder %s115, %s118
    %p127 = scmp.eq.s32.totalorder %s16, 1
    %p128 = por %p126, %p127
    %p129 = scmp.ne.s32.totalorder %s118, %s119
    %p130 = scmp.eq.s32.totalorder %s16, 0
    %p131 = por %p129, %p130
    %p132 = scmp.ne.s32.totalorder %s118, %s119
    %p133 = scmp.eq.s32.totalorder %s17, 1
    %p134 = por %p132, %p133
    %p136 = scmp.ne.s32.totalorder %s119, %s135
    %p137 = scmp.eq.s32.totalorder %s17, 0
    %p138 = por %p136, %p137
    %p139 = scmp.le.s32.totalorder 1, %s11
    %p140 = scmp.lt.s32.totalorder %s11, 3
    %p141 = pnand %p139, %p140
    %p142 = pneg %p141
    // Predicated region
    $region9: #{resnet_forward.15} parent=5 // pred_check
      _
    $region10: #{resnet_forward.15} parent=5 // pred_check_branch
      %144 = sbr.rel (%p141) target = $region12
    $region11: #{resnet_forward.15} parent=5 // pred_region
      %s145 = ssub.s32 %s11, 1
      // Predicated region
      $region13: #{resnet_forward.15} parent=11 // pred_check
        %p146 = pneg %p58
      $region14: #{resnet_forward.15} parent=11 // pred_check_branch
        %148 = sbr.rel (%p146) target = $region16
      $region15: #{resnet_forward.15} parent=11 // pred_region
        _
      $region16: #{resnet_forward.15} parent=11 // pred_fallthru
        _
      // Predicated region
      $region17: #{resnet_forward.15} parent=11 // pred_check
        %p149 = pneg %p79
      $region18: #{resnet_forward.15} parent=11 // pred_check_branch
        %151 = sbr.rel (%p149) target = $region20
      $region19: #{resnet_forward.15} parent=11 // pred_region
        _
      $region20: #{resnet_forward.15} parent=11 // pred_fallthru
        _
    $region12: #{resnet_forward.15} parent=5 // pred_fallthru
      _
    %p152 = scmp.lt.s32.totalorder %s11, 2
    // Predicated region
    $region21: #{resnet_forward.15} parent=5 // pred_check
      %p153 = pneg %p152
    $region22: #{resnet_forward.15} parent=5 // pred_check_branch
      %155 = sbr.rel (%p153) target = $region24
    $region23: #{resnet_forward.15} parent=5 // pred_region
      // Predicated region
      $region25: #{resnet_forward.15} parent=23 // pred_check
        %p156 = pneg %p31
      $region26: #{resnet_forward.15} parent=23 // pred_check_branch
        %158 = sbr.rel (%p156) target = $region28
      $region27: #{resnet_forward.15} parent=23 // pred_region
        %p159 = scmp.lt.s32.totalorder %s11, 1
        %s160 = scalar_select %p159, %s11, 1
        %s161 = smul.addr %s160, 32
        %s162 = smul.addr %s161, 2
        %s163 = scalar_lea.vmem %s0, %s162
      $region28: #{resnet_forward.15} parent=23 // pred_fallthru
        _
    $region24: #{resnet_forward.15} parent=5 // pred_fallthru
      _
    %p164 = scmp.le.s32.totalorder 1, %s11
    %p165 = scmp.lt.s32.totalorder %s11, 3
    %p166 = pnand %p164, %p165
    %p167 = pneg %p166
    // Predicated region
    $region29: #{resnet_forward.15} parent=5 // pred_check
      _
    $region30: #{resnet_forward.15} parent=5 // pred_check_branch
      %169 = sbr.rel (%p166) target = $region32
    $region31: #{resnet_forward.15} parent=5 // pred_region
      %s170 = ssub.s32 %s11, 1
      %p171 = scmp.lt.s32.totalorder %s16, 1
      %s172 = scalar_select %p171, %s16, 1
      %s173 = smul.addr %s172, 32
      %s174 = smul.addr %s173, 2
      %s175 = scalar_lea.vmem %s0, %s174
      %p176 = pneg %p37
      %p177 = pneg %p34
      %p178 = pneg %p58
      %p179 = pneg %p55
      %p180 = pneg %p79
      %p181 = pneg %p76
      %p182 = pneg %p105
      %p183 = pneg %p102
      %p184 = scmp.lt.s32.totalorder %s16, 1
      %s185 = scalar_select %p184, %s16, 1
      %s186 = smul.addr %s185, 16
      %s187 = smul.addr %s186, 2
      %s188 = scalar_lea.vmem %s3, %s187
      %p189 = pneg %p131
      %p190 = pneg %p128
      %p191 = scmp.lt.s32.totalorder %s16, 1
      %s192 = scalar_select %p191, %s16, 1
      %s193 = smul.addr %s192, 2
      %s194 = scalar_lea.vmem %s4, %s193
      %p195 = scmp.lt.s32.totalorder %s16, 1
      %s196 = scalar_select %p195, %s16, 1
      %s197 = smul.addr %s196, 32
      %s198 = smul.addr %s197, 2
      %s199 = scalar_lea.vmem %s0, %s198
      %p200 = scmp.lt.s32.totalorder %s16, 1
      %s201 = scalar_select %p200, %s16, 1
      %s202 = smul.addr %s201, 16
      %s203 = smul.addr %s202, 2
      %s204 = scalar_lea.vmem %s3, %s203
      %p205 = scmp.lt.s32.totalorder %s16, 1
      %s206 = scalar_select %p205, %s16, 1
      %s207 = smul.addr %s206, 2
      %s208 = scalar_lea.vmem %s4, %s207
      %v210 = vld [vmem:[%s199] sm:$0xf]
      %v211 = vld [vmem:[%s199 + $0x4] sm:$0xf]
      %v212 = vld [vmem:[%s199 + $0x8] sm:$0xf]
      %v213 = vld [vmem:[%s199 + $0xc] sm:$0xf]
      %v214 = vld [vmem:[%s199 + $0x10] sm:$0xf]
      %v215 = vld [vmem:[%s199 + $0x14] sm:$0xf]
      %v216 = vld [vmem:[%s199 + $0x18] sm:$0xf]
      %v217 = vld [vmem:[%s199 + $0x1c] sm:$0xf]
      %v218 = vld [vmem:[%s199 + $0x20] sm:$0xf]
      %v219 = vld [vmem:[%s199 + $0x24] sm:$0xf]
      %v220 = vld [vmem:[%s199 + $0x28] sm:$0xf]
      %v221 = vld [vmem:[%s199 + $0x2c] sm:$0xf]
      %v222 = vld [vmem:[%s199 + $0x30] sm:$0xf]
      %v223 = vld [vmem:[%s199 + $0x34] sm:$0xf]
      %v224 = vld [vmem:[%s199 + $0x38] sm:$0xf]
      %v225 = vld [vmem:[%s199 + $0x3c] sm:$0xf]
      %v226 = vld [vmem:[%s1] sm:$0xf]
      %v227 = vld [vmem:[%s1 + $0x4] sm:$0xf]
      %v228 = vld [vmem:[%s1 + $0x8] sm:$0xf]
      %v229 = vld [vmem:[%s1 + $0xc] sm:$0xf]
      %v230 = vld [vmem:[%s1 + $0x10] sm:$0xf]
      %v231 = vld [vmem:[%s1 + $0x14] sm:$0xf]
      %v232 = vld [vmem:[%s1 + $0x18] sm:$0xf]
      %v233 = vld [vmem:[%s1 + $0x1c] sm:$0xf]
      %v234 = vld [vmem:[%s1 + $0x20] sm:$0xf]
      %v235 = vld [vmem:[%s1 + $0x24] sm:$0xf]
      %v236 = vld [vmem:[%s1 + $0x28] sm:$0xf]
      %v237 = vld [vmem:[%s1 + $0x2c] sm:$0xf]
      %v238 = vld [vmem:[%s1 + $0x30] sm:$0xf]
      %v239 = vld [vmem:[%s1 + $0x34] sm:$0xf]
      %v240 = vld [vmem:[%s1 + $0x38] sm:$0xf]
      %v241 = vld [vmem:[%s1 + $0x3c] sm:$0xf]
      %v242 = vld [vmem:[%s1 + $0x40] sm:$0xf]
      %v243 = vld [vmem:[%s1 + $0x44] sm:$0xf]
      %v244 = vld [vmem:[%s1 + $0x48] sm:$0xf]
      %v245 = vld [vmem:[%s1 + $0x4c] sm:$0xf]
      %v246 = vld [vmem:[%s1 + $0x50] sm:$0xf]
      %v247 = vld [vmem:[%s1 + $0x54] sm:$0xf]
      %v248 = vld [vmem:[%s1 + $0x58] sm:$0xf]
      %v249 = vld [vmem:[%s1 + $0x5c] sm:$0xf]
      %v250 = vld [vmem:[%s1 + $0x60] sm:$0xf]
      %v251 = vld [vmem:[%s1 + $0x64] sm:$0xf]
      %v252 = vld [vmem:[%s1 + $0x68] sm:$0xf]
      %v253 = vld [vmem:[%s1 + $0x6c] sm:$0xf]
      %v254 = vld [vmem:[%s1 + $0x70] sm:$0xf]
      %v255 = vld [vmem:[%s1 + $0x74] sm:$0xf]
      %v256 = vld [vmem:[%s1 + $0x78] sm:$0xf]
      %v257 = vld [vmem:[%s1 + $0x7c] sm:$0xf]
      %v258 = vld [vmem:[%s2] sm:$0x1]
      %v260 = vlaneseq
      %v261 = vshrl.u32 %v260, 7
      %v262 = vsub.s32 0, %v261
      %v263 = vrot.slane %v258, %v262
      %v281 = vcombine.low %v210, %v211
      %v282 = vcombine.low %v212, %v213
      %v284 = vunpack.c.l.s4 1983009808
      %v285 = vunpack.c.0.s8 %v284
      %v286 = vlaneseq
      %v287 = vshrl.u32 %v286, 7
      %v288 = vsub.s32 %v285, %v287
      %v289 = vrot.slane %v281, %v288
      %v291 = vunpack.c.l.s4 1983009808
      %v292 = vunpack.c.0.s8 %v291
      %v293 = vlaneseq
      %v294 = vshrl.u32 %v293, 7
      %v295 = vsub.s32 %v292, %v294
      %v296 = vrot.slane %v282, %v295
      %v297 = vcombine.low %v289, %v296
      %v298 = vcombine.high %v289, %v296
      %v299 = vcombine.low %v214, %v215
      %v300 = vcombine.low %v216, %v217
      %v302 = vunpack.c.l.s4 1983009808
      %v303 = vunpack.c.0.s8 %v302
      %v304 = vlaneseq
      %v305 = vshrl.u32 %v304, 7
      %v306 = vsub.s32 %v303, %v305
      %v307 = vrot.slane %v299, %v306
      %v309 = vunpack.c.l.s4 1983009808
      %v310 = vunpack.c.0.s8 %v309
      %v311 = vlaneseq
      %v312 = vshrl.u32 %v311, 7
      %v313 = vsub.s32 %v310, %v312
      %v314 = vrot.slane %v300, %v313
      %v315 = vcombine.low %v307, %v314
      %v316 = vcombine.high %v307, %v314
      %v317 = vcombine.low %v218, %v219
      %v318 = vcombine.low %v220, %v221
      %v320 = vunpack.c.l.s4 1983009808
      %v321 = vunpack.c.0.s8 %v320
      %v322 = vlaneseq
      %v323 = vshrl.u32 %v322, 7
      %v324 = vsub.s32 %v321, %v323
      %v325 = vrot.slane %v317, %v324
      %v327 = vunpack.c.l.s4 1983009808
      %v328 = vunpack.c.0.s8 %v327
      %v329 = vlaneseq
      %v330 = vshrl.u32 %v329, 7
      %v331 = vsub.s32 %v328, %v330
      %v332 = vrot.slane %v318, %v331
      %v333 = vcombine.low %v325, %v332
      %v334 = vcombine.high %v325, %v332
      %v335 = vcombine.low %v222, %v223
      %v336 = vcombine.low %v224, %v225
      %v338 = vunpack.c.l.s4 1983009808
      %v339 = vunpack.c.0.s8 %v338
      %v340 = vlaneseq
      %v341 = vshrl.u32 %v340, 7
      %v342 = vsub.s32 %v339, %v341
      %v343 = vrot.slane %v335, %v342
      %v345 = vunpack.c.l.s4 1983009808
      %v346 = vunpack.c.0.s8 %v345
      %v347 = vlaneseq
      %v348 = vshrl.u32 %v347, 7
      %v349 = vsub.s32 %v346, %v348
      %v350 = vrot.slane %v336, %v349
      %v351 = vcombine.low %v343, %v350
      %v352 = vcombine.high %v343, %v350
      %v393 = vunpack.c.l.b16 %v226
      %v394 = vunpack.c.l.b16 %v227
      %v395 = vunpack.c.l.b16 %v228
      %v396 = vunpack.c.l.b16 %v229
      %v397 = vunpack.c.l.b16 %v230
      %v398 = vunpack.c.l.b16 %v231
      %v399 = vunpack.c.l.b16 %v232
      %v400 = vunpack.c.l.b16 %v233
      %v401 = vunpack.c.l.b16 %v234
      %v402 = vunpack.c.l.b16 %v235
      %v403 = vunpack.c.l.b16 %v236
      %v404 = vunpack.c.l.b16 %v237
      %v405 = vunpack.c.l.b16 %v238
      %v406 = vunpack.c.l.b16 %v239
      %v407 = vunpack.c.l.b16 %v240
      %v408 = vunpack.c.l.b16 %v241
      %v409 = vunpack.c.l.b16 %v242
      %v410 = vunpack.c.l.b16 %v243
      %v411 = vunpack.c.l.b16 %v244
      %v412 = vunpack.c.l.b16 %v245
      %v413 = vunpack.c.l.b16 %v246
      %v414 = vunpack.c.l.b16 %v247
      %v415 = vunpack.c.l.b16 %v248
      %v416 = vunpack.c.l.b16 %v249
      %v417 = vunpack.c.l.b16 %v250
      %v418 = vunpack.c.l.b16 %v251
      %v419 = vunpack.c.l.b16 %v252
      %v420 = vunpack.c.l.b16 %v253
      %v421 = vunpack.c.l.b16 %v254
      %v422 = vunpack.c.l.b16 %v255
      %v423 = vunpack.c.l.b16 %v256
      %v424 = vunpack.c.l.b16 %v257
      %v425 = vpack.c.b16 %v394, %v393
      %v426 = vpack.c.b16 %v396, %v395
      %v427 = vpack.c.b16 %v398, %v397
      %v428 = vpack.c.b16 %v400, %v399
      %v429 = vpack.c.b16 %v402, %v401
      %v430 = vpack.c.b16 %v404, %v403
      %v431 = vpack.c.b16 %v406, %v405
      %v432 = vpack.c.b16 %v408, %v407
      %v433 = vpack.c.b16 %v410, %v409
      %v434 = vpack.c.b16 %v412, %v411
      %v435 = vpack.c.b16 %v414, %v413
      %v436 = vpack.c.b16 %v416, %v415
      %v437 = vpack.c.b16 %v418, %v417
      %v438 = vpack.c.b16 %v420, %v419
      %v439 = vpack.c.b16 %v422, %v421
      %v440 = vpack.c.b16 %v424, %v423
      %457 = vmatprep.subr.bf16.mxu0 0
      %458 = vmatpush1.bf16.msra.mxu0 %v432
      %459 = vmatprep.subr.bf16.mxu0 0
      %460 = vmatpush1.bf16.msra.mxu0 %v431
      %461 = vmatprep.subr.bf16.mxu0 0
      %462 = vmatpush1.bf16.msra.mxu0 %v430
      %463 = vmatprep.subr.bf16.mxu0 0
      %464 = vmatpush1.bf16.msra.mxu0 %v429
      %465 = vmatprep.subr.bf16.mxu0 0
      %466 = vmatpush1.bf16.msra.mxu0 %v428
      %467 = vmatprep.subr.bf16.mxu0 0
      %468 = vmatpush1.bf16.msra.mxu0 %v427
      %469 = vmatprep.subr.bf16.mxu0 0
      %470 = vmatpush1.bf16.msra.mxu0 %v426
      %471 = vmatprep.subr.bf16.mxu0 0
      %472 = vmatpush1.bf16.msra.mxu0 %v425
      %473 = vmatprep.subr.bf16.mxu0 0
      %474 = vmatpush2.bf16.msra.mxu0 %v440
      %475 = vmatprep.subr.bf16.mxu0 0
      %476 = vmatpush2.bf16.msra.mxu0 %v439
      %477 = vmatprep.subr.bf16.mxu0 0
      %478 = vmatpush2.bf16.msra.mxu0 %v438
      %479 = vmatprep.subr.bf16.mxu0 0
      %480 = vmatpush2.bf16.msra.mxu0 %v437
      %481 = vmatprep.subr.bf16.mxu0 0
      %482 = vmatpush2.bf16.msra.mxu0 %v436
      %483 = vmatprep.subr.bf16.mxu0 0
      %484 = vmatpush2.bf16.msra.mxu0 %v435
      %485 = vmatprep.subr.bf16.mxu0 0
      %486 = vmatpush2.bf16.msra.mxu0 %v434
      %487 = vmatprep.subr.bf16.mxu0 0
      %488 = vmatpush2.bf16.msra.mxu0 %v433
      %489 = vmatprep.mubr.bf16.mxu0 %v298
      %490 = vmatmul.mubr.bf16.gmra.mxu0 %v297
      %v491 = vpop.f32.mrf.mxu0
      %v492 = vadd.f32 %v263, %v491
      %v493 = vpop.f32.mrf.mxu0
      %v494 = vpop.f32.mrf.mxu0
      %v495 = vadd.f32 %v263, %v494
      %v496 = vpop.f32.mrf.mxu0
      %497 = vmatprep.mubr.bf16.mxu0 %v316
      %498 = vmatmul.mubr.bf16.gmra.mxu0 %v315
      %v499 = vpop.f32.mrf.mxu0
      %v500 = vadd.f32 %v263, %v499
      %v501 = vpop.f32.mrf.mxu0
      %v502 = vpop.f32.mrf.mxu0
      %v503 = vadd.f32 %v263, %v502
      %v504 = vpop.f32.mrf.mxu0
      %505 = vmatprep.mubr.bf16.mxu0 %v334
      %506 = vmatmul.mubr.bf16.gmra.mxu0 %v333
      %v507 = vpop.f32.mrf.mxu0
      %v508 = vadd.f32 %v263, %v507
      %v509 = vpop.f32.mrf.mxu0
      %v510 = vpop.f32.mrf.mxu0
      %v511 = vadd.f32 %v263, %v510
      %v512 = vpop.f32.mrf.mxu0
      %513 = vmatprep.mubr.bf16.mxu0 %v352
      %514 = vmatmul.mubr.bf16.gmra.mxu0 %v351
      %v515 = vpop.f32.mrf.mxu0
      %v516 = vadd.f32 %v263, %v515
      %v517 = vpop.f32.mrf.mxu0
      %v518 = vpop.f32.mrf.mxu0
      %v519 = vadd.f32 %v263, %v518
      %v520 = vpop.f32.mrf.mxu0
      %521 = vdwg.mxu0
      %v530 = vcombine.high %v492, %v492
      %v531 = vcombine.high %v495, %v495
      %v532 = vcombine.high %v500, %v500
      %v533 = vcombine.high %v503, %v503
      %v534 = vcombine.high %v508, %v508
      %v535 = vcombine.high %v511, %v511
      %v536 = vcombine.high %v516, %v516
      %v537 = vcombine.high %v519, %v519
      %v546 = vpack.c.bf16 %v492, %v492
      %v547 = vpack.c.bf16 %v530, %v530
      %v548 = vpack.c.bf16 %v495, %v495
      %v549 = vpack.c.bf16 %v531, %v531
      %v550 = vpack.c.bf16 %v500, %v500
      %v551 = vpack.c.bf16 %v532, %v532
      %v552 = vpack.c.bf16 %v503, %v503
      %v553 = vpack.c.bf16 %v533, %v533
      %v554 = vpack.c.bf16 %v508, %v508
      %v555 = vpack.c.bf16 %v534, %v534
      %v556 = vpack.c.bf16 %v511, %v511
      %v557 = vpack.c.bf16 %v535, %v535
      %v558 = vpack.c.bf16 %v516, %v516
      %v559 = vpack.c.bf16 %v536, %v536
      %v560 = vpack.c.bf16 %v519, %v519
      %v561 = vpack.c.bf16 %v537, %v537
      %562 = vst [vmem:[%s204] sm:$0x3] %v546
      %563 = vst [vmem:[%s204 + $0x2] sm:$0x3] %v547
      %564 = vst [vmem:[%s204 + $0x4] sm:$0x3] %v548
      %565 = vst [vmem:[%s204 + $0x6] sm:$0x3] %v549
      %566 = vst [vmem:[%s204 + $0x8] sm:$0x3] %v550
      %567 = vst [vmem:[%s204 + $0xa] sm:$0x3] %v551
      %568 = vst [vmem:[%s204 + $0xc] sm:$0x3] %v552
      %569 = vst [vmem:[%s204 + $0xe] sm:$0x3] %v553
      %570 = vst [vmem:[%s204 + $0x10] sm:$0x3] %v554
      %571 = vst [vmem:[%s204 + $0x12] sm:$0x3] %v555
      %572 = vst [vmem:[%s204 + $0x14] sm:$0x3] %v556
      %573 = vst [vmem:[%s204 + $0x16] sm:$0x3] %v557
      %574 = vst [vmem:[%s204 + $0x18] sm:$0x3] %v558
      %575 = vst [vmem:[%s204 + $0x1a] sm:$0x3] %v559
      %576 = vst [vmem:[%s204 + $0x1c] sm:$0x3] %v560
      %577 = vst [vmem:[%s204 + $0x1e] sm:$0x3] %v561
      %v578 = vadd.f32 %v492, %v495
      %v579 = vadd.f32 %v578, %v500
      %v580 = vadd.f32 %v579, %v503
      %v581 = vadd.f32 %v580, %v508
      %v582 = vadd.f32 %v581, %v511
      %v583 = vadd.f32 %v582, %v516
      %v584 = vadd.f32 %v583, %v519
      %v585 = vrot.slane %v584, 4
      %v586 = vadd.f32 %v584, %v585
      %v587 = vrot.slane %v586, 2
      %v588 = vadd.f32 %v586, %v587
      %v589 = vrot.slane %v588, 1
      %v590 = vadd.f32 %v588, %v589
      %v591 = vmul.f32 %v492, %v492
      %v592 = vmul.f32 %v495, %v495
      %v593 = vmul.f32 %v500, %v500
      %v594 = vmul.f32 %v503, %v503
      %v595 = vmul.f32 %v508, %v508
      %v596 = vmul.f32 %v511, %v511
      %v597 = vmul.f32 %v516, %v516
      %v598 = vmul.f32 %v519, %v519
      %v599 = vadd.f32 %v591, %v592
      %v600 = vadd.f32 %v599, %v593
      %v601 = vadd.f32 %v600, %v594
      %v602 = vadd.f32 %v601, %v595
      %v603 = vadd.f32 %v602, %v596
      %v604 = vadd.f32 %v603, %v597
      %v605 = vadd.f32 %v604, %v598
      %v606 = vrot.slane %v605, 4
      %v607 = vadd.f32 %v605, %v606
      %v608 = vrot.slane %v607, 2
      %v609 = vadd.f32 %v607, %v608
      %v610 = vrot.slane %v609, 1
      %v611 = vadd.f32 %v609, %v610
      %vm612 = vcmask 1040384
      %v613 = vsel %vm612, %v590, %v611
      %614 = vst [vmem:[%s208] sm:$0x3] %v613
      %p615 = scmp.lt.s32.totalorder %s16, 1
      %s616 = scalar_select %p615, %s16, 1
      %s617 = smul.addr %s616, 16
      %s618 = smul.addr %s617, 2
      %s619 = scalar_lea.vmem %s3, %s618
      %p620 = scmp.lt.s32.totalorder %s16, 1
      %s621 = scalar_select %p620, %s16, 1
      %s622 = smul.addr %s621, 2
      %s623 = scalar_lea.vmem %s4, %s622
      // Predicated region
      $region33: #{resnet_forward.15} parent=31 // pred_check
        %p624 = pneg %p102
      $region34: #{resnet_forward.15} parent=31 // pred_check_branch
        %626 = sbr.rel (%p624) target = $region36
      $region35: #{resnet_forward.15} parent=31 // pred_region
        _
      $region36: #{resnet_forward.15} parent=31 // pred_fallthru
        _
      // Predicated region
      $region37: #{resnet_forward.15} parent=31 // pred_check
        %p627 = pneg %p128
      $region38: #{resnet_forward.15} parent=31 // pred_check_branch
        %629 = sbr.rel (%p627) target = $region40
      $region39: #{resnet_forward.15} parent=31 // pred_region
        _
      $region40: #{resnet_forward.15} parent=31 // pred_fallthru
        _
    $region32: #{resnet_forward.15} parent=5 // pred_fallthru
      _
    %p630 = scmp.le.s32.totalorder 2, %s11
    // Predicated region
    $region41: #{resnet_forward.15} parent=5 // pred_check
      %p631 = pneg %p630
    $region42: #{resnet_forward.15} parent=5 // pred_check_branch
      %633 = sbr.rel (%p631) target = $region44
    $region43: #{resnet_forward.15} parent=5 // pred_region
      %s634 = ssub.s32 %s11, 2
      // Predicated region
      $region45: #{resnet_forward.15} parent=43 // pred_check
        %p635 = pneg %p108
      $region46: #{resnet_forward.15} parent=43 // pred_check_branch
        %637 = sbr.rel (%p635) target = $region48
      $region47: #{resnet_forward.15} parent=43 // pred_region
        %p638 = scmp.lt.s32.totalorder %s17, 1
        %s639 = scalar_select %p638, %s17, 1
        %s640 = smul.addr %s639, 16
        %s641 = smul.addr %s640, 2
        %s642 = scalar_lea.vmem %s3, %s641
      $region48: #{resnet_forward.15} parent=43 // pred_fallthru
        _
      // Predicated region
      $region49: #{resnet_forward.15} parent=43 // pred_check
        %p643 = pneg %p134
      $region50: #{resnet_forward.15} parent=43 // pred_check_branch
        %645 = sbr.rel (%p643) target = $region52
      $region51: #{resnet_forward.15} parent=43 // pred_region
        %p646 = scmp.lt.s32.totalorder %s17, 1
        %s647 = scalar_select %p646, %s17, 1
        %s648 = smul.addr %s647, 2
        %s649 = scalar_lea.vmem %s4, %s648
      $region52: #{resnet_forward.15} parent=43 // pred_fallthru
        _
    $region44: #{resnet_forward.15} parent=5 // pred_fallthru
      _
  $region6: #{resnet_forward.15} parent=0 // loop_footer
    %s15 = sadd.s32 1, %s11
  $region7: #{resnet_forward.15} parent=0 // loop_footer_branch
    %10 = sbr.rel target = $region3
  $region8: #{resnet_forward.15} parent=0 // loop_exit
    _

// kernel: resnet_forward.18
$region0: #{resnet_forward.18}
  #allocation0 [shape = 'u32[]', space=smem, size = 0x4, offset = 0x4, fixed_abs, tag = 'smem constant byte address 0x4 - core index']
  #allocation1 [shape = 'u32[144,128]{1,0:T(1,128)}', space=vmem, size = 0x12000, scoped, tag = 'internal scratch']
  %s0 = inlined_call_operand.vmem [shape: bf16[2,4,4,128], index: 0, kind: input, shape index: {}]
  %s1 = inlined_call_operand.vmem [shape: f32[2,2,128], index: 1, kind: input, shape index: {}]
  %s2 = inlined_call_operand.vmem [shape: f32[1,128], index: 2, kind: input, shape index: {}]
  %s3 = inlined_call_operand.vmem [shape: f32[1,128], index: 3, kind: input, shape index: {}]
  %s4 = inlined_call_operand.vmem [shape: bf16[2,6,8,128], index: 4, kind: output, shape index: {}]
  %s5 = sld [smem:[#allocation0]]
  $region49: #{resnet_forward.18} parent=0
    _
  %s7 = ssub.s32 1, %s5
  %s8 = scalar_select 0, %s7, %s5
  loop: start=0, step=1, limit=4
  $region2: #{resnet_forward.18} parent=0 // loop_pre_header
    _
  $region3: #{resnet_forward.18} parent=0 // loop_header
    %s10 = sphi 0, %s14
    %p11 = scmp.ge.s32.totalorder %s10, 4
    %s20 = sphi 0, %s22
    %s23 = sphi 0, %s20
    %s24 = sphi 0, %s23
    %s40 = sphi 0, %s24
    %s44 = sphi 0, %s44
    %s46 = sphi 0, %s44
    %s47 = sphi 0, %s46
    %s61 = sphi 0, %s47
    %s65 = sphi 0, %s65
    %s67 = sphi 0, %s65
    %s68 = sphi 0, %s67
    %s82 = sphi 0, %s68
    %s86 = sphi 0, %s86
    %s88 = sphi 0, %s86
    %s89 = sphi 0, %s88
    %s103 = sphi 0, %s89
    %s109 = sphi 0, %s111
    %s112 = sphi 0, %s109
    %s113 = sphi 0, %s112
    %s129 = sphi 0, %s113
  $region4: #{resnet_forward.18} parent=0 // loop_header_branch
    %13 = sbr.rel (%p11) target = $region8
  $region5: #{resnet_forward.18} parent=0 // loop_body
    %s15 = ssub.s32 %s10, 1
    %s16 = ssub.s32 %s10, 2
    %s17 = sadd.s32 %s10, 1
    %s18 = ssub.s32 %s10, %s17
    %p19 = scmp.eq.s32.totalorder %s18, 0
    %s21 = sadd.s32 %s20, 1
    %s22 = scalar_select %p19, %s20, %s21
    %p25 = pneg %p19
    %p26 = scmp.eq.s32.totalorder %s10, 1
    %p27 = por %p25, %p26
    %p28 = scmp.ne.s32.totalorder %s20, %s23
    %p29 = scmp.eq.s32.totalorder %s10, 0
    %p30 = por %p28, %p29
    %p31 = scmp.ne.s32.totalorder %s20, %s23
    %p32 = scmp.eq.s32.totalorder %s15, 1
    %p33 = por %p31, %p32
    %p34 = scmp.ne.s32.totalorder %s23, %s24
    %p35 = scmp.eq.s32.totalorder %s15, 0
    %p36 = por %p34, %p35
    %p37 = scmp.ne.s32.totalorder %s23, %s24
    %p38 = scmp.eq.s32.totalorder %s16, 1
    %p39 = por %p37, %p38
    %p41 = scmp.ne.s32.totalorder %s24, %s40
    %p42 = scmp.eq.s32.totalorder %s16, 0
    %p43 = por %p41, %p42
    %s45 = sadd.s32 %s44, 1
    %p48 = scmp.eq.s32.totalorder %s10, 1
    %p49 = scmp.ne.s32.totalorder %s44, %s46
    %p50 = scmp.eq.s32.totalorder %s10, 0
    %p51 = por %p49, %p50
    %p52 = scmp.ne.s32.totalorder %s44, %s46
    %p53 = scmp.eq.s32.totalorder %s15, 1
    %p54 = por %p52, %p53
    %p55 = scmp.ne.s32.totalorder %s46, %s47
    %p56 = scmp.eq.s32.totalorder %s15, 0
    %p57 = por %p55, %p56
    %p58 = scmp.ne.s32.totalorder %s46, %s47
    %p59 = scmp.eq.s32.totalorder %s16, 1
    %p60 = por %p58, %p59
    %p62 = scmp.ne.s32.totalorder %s47, %s61
    %p63 = scmp.eq.s32.totalorder %s16, 0
    %p64 = por %p62, %p63
    %s66 = sadd.s32 %s65, 1
    %p69 = scmp.eq.s32.totalorder %s10, 1
    %p70 = scmp.ne.s32.totalorder %s65, %s67
    %p71 = scmp.eq.s32.totalorder %s10, 0
    %p72 = por %p70, %p71
    %p73 = scmp.ne.s32.totalorder %s65, %s67
    %p74 = scmp.eq.s32.totalorder %s15, 1
    %p75 = por %p73, %p74
    %p76 = scmp.ne.s32.totalorder %s67, %s68
    %p77 = scmp.eq.s32.totalorder %s15, 0
    %p78 = por %p76, %p77
    %p79 = scmp.ne.s32.totalorder %s67, %s68
    %p80 = scmp.eq.s32.totalorder %s16, 1
    %p81 = por %p79, %p80
    %p83 = scmp.ne.s32.totalorder %s68, %s82
    %p84 = scmp.eq.s32.totalorder %s16, 0
    %p85 = por %p83, %p84
    %s87 = sadd.s32 %s86, 1
    %p90 = scmp.eq.s32.totalorder %s10, 1
    %p91 = scmp.ne.s32.totalorder %s86, %s88
    %p92 = scmp.eq.s32.totalorder %s10, 0
    %p93 = por %p91, %p92
    %p94 = scmp.ne.s32.totalorder %s86, %s88
    %p95 = scmp.eq.s32.totalorder %s15, 1
    %p96 = por %p94, %p95
    %p97 = scmp.ne.s32.totalorder %s88, %s89
    %p98 = scmp.eq.s32.totalorder %s15, 0
    %p99 = por %p97, %p98
    %p100 = scmp.ne.s32.totalorder %s88, %s89
    %p101 = scmp.eq.s32.totalorder %s16, 1
    %p102 = por %p100, %p101
    %p104 = scmp.ne.s32.totalorder %s89, %s103
    %p105 = scmp.eq.s32.totalorder %s16, 0
    %p106 = por %p104, %p105
    %s107 = ssub.s32 %s10, %s17
    %p108 = scmp.eq.s32.totalorder %s107, 0
    %s110 = sadd.s32 %s109, 1
    %s111 = scalar_select %p108, %s109, %s110
    %p114 = pneg %p108
    %p115 = scmp.eq.s32.totalorder %s10, 1
    %p116 = por %p114, %p115
    %p117 = scmp.ne.s32.totalorder %s109, %s112
    %p118 = scmp.eq.s32.totalorder %s10, 0
    %p119 = por %p117, %p118
    %p120 = scmp.ne.s32.totalorder %s109, %s112
    %p121 = scmp.eq.s32.totalorder %s15, 1
    %p122 = por %p120, %p121
    %p123 = scmp.ne.s32.totalorder %s112, %s113
    %p124 = scmp.eq.s32.totalorder %s15, 0
    %p125 = por %p123, %p124
    %p126 = scmp.ne.s32.totalorder %s112, %s113
    %p127 = scmp.eq.s32.totalorder %s16, 1
    %p128 = por %p126, %p127
    %p130 = scmp.ne.s32.totalorder %s113, %s129
    %p131 = scmp.eq.s32.totalorder %s16, 0
    %p132 = por %p130, %p131
    %p133 = scmp.le.s32.totalorder 1, %s10
    %p134 = scmp.lt.s32.totalorder %s10, 3
    %p135 = pnand %p133, %p134
    %p136 = pneg %p135
    // Predicated region
    $region9: #{resnet_forward.18} parent=5 // pred_check
      _
    $region10: #{resnet_forward.18} parent=5 // pred_check_branch
      %138 = sbr.rel (%p135) target = $region12
    $region11: #{resnet_forward.18} parent=5 // pred_region
      %s139 = ssub.s32 %s10, 1
      // Predicated region
      $region13: #{resnet_forward.18} parent=11 // pred_check
        %p140 = pneg %p57
      $region14: #{resnet_forward.18} parent=11 // pred_check_branch
        %142 = sbr.rel (%p140) target = $region16
      $region15: #{resnet_forward.18} parent=11 // pred_region
        _
      $region16: #{resnet_forward.18} parent=11 // pred_fallthru
        _
      // Predicated region
      $region17: #{resnet_forward.18} parent=11 // pred_check
        %p143 = pneg %p78
      $region18: #{resnet_forward.18} parent=11 // pred_check_branch
        %145 = sbr.rel (%p143) target = $region20
      $region19: #{resnet_forward.18} parent=11 // pred_region
        _
      $region20: #{resnet_forward.18} parent=11 // pred_fallthru
        _
      // Predicated region
      $region21: #{resnet_forward.18} parent=11 // pred_check
        %p146 = pneg %p99
      $region22: #{resnet_forward.18} parent=11 // pred_check_branch
        %148 = sbr.rel (%p146) target = $region24
      $region23: #{resnet_forward.18} parent=11 // pred_region
        _
      $region24: #{resnet_forward.18} parent=11 // pred_fallthru
        _
    $region12: #{resnet_forward.18} parent=5 // pred_fallthru
      _
    %p149 = scmp.lt.s32.totalorder %s10, 2
    // Predicated region
    $region25: #{resnet_forward.18} parent=5 // pred_check
      %p150 = pneg %p149
    $region26: #{resnet_forward.18} parent=5 // pred_check_branch
      %152 = sbr.rel (%p150) target = $region28
    $region27: #{resnet_forward.18} parent=5 // pred_region
      // Predicated region
      $region29: #{resnet_forward.18} parent=27 // pred_check
        %p153 = pneg %p30
      $region30: #{resnet_forward.18} parent=27 // pred_check_branch
        %155 = sbr.rel (%p153) target = $region32
      $region31: #{resnet_forward.18} parent=27 // pred_region
        %p156 = scmp.lt.s32.totalorder %s10, 1
        %s157 = scalar_select %p156, %s10, 1
        %s158 = smul.addr %s157, 4
        %s159 = smul.addr %s158, 2
        %s160 = scalar_lea.vmem %s0, %s159
      $region32: #{resnet_forward.18} parent=27 // pred_fallthru
        _
    $region28: #{resnet_forward.18} parent=5 // pred_fallthru
      _
    %p161 = scmp.le.s32.totalorder 1, %s10
    %p162 = scmp.lt.s32.totalorder %s10, 3
    %p163 = pnand %p161, %p162
    %p164 = pneg %p163
    // Predicated region
    $region33: #{resnet_forward.18} parent=5 // pred_check
      _
    $region34: #{resnet_forward.18} parent=5 // pred_check_branch
      %166 = sbr.rel (%p163) target = $region36
    $region35: #{resnet_forward.18} parent=5 // pred_region
      %s167 = ssub.s32 %s10, 1
      %p168 = scmp.lt.s32.totalorder %s15, 1
      %s169 = scalar_select %p168, %s15, 1
      %s170 = smul.addr %s169, 4
      %s171 = smul.addr %s170, 2
      %s172 = scalar_lea.vmem %s0, %s171
      %p173 = pneg %p36
      %p174 = pneg %p33
      %p175 = pneg %p57
      %p176 = pneg %p54
      %p177 = pneg %p78
      %p178 = pneg %p75
      %p179 = pneg %p99
      %p180 = pneg %p96
      %p181 = pneg %p125
      %p182 = pneg %p122
      %p183 = scmp.lt.s32.totalorder %s15, 1
      %s184 = scalar_select %p183, %s15, 1
      %s185 = smul.addr %s184, 6
      %s186 = smul.addr %s185, 4
      %s187 = scalar_lea.vmem %s4, %s186
      %p188 = scmp.lt.s32.totalorder %s15, 1
      %s189 = scalar_select %p188, %s15, 1
      %s190 = smul.addr %s189, 4
      %s191 = smul.addr %s190, 2
      %s192 = scalar_lea.vmem %s0, %s191
      %p193 = scmp.lt.s32.totalorder %s15, 1
      %s194 = scalar_select %p193, %s15, 1
      %s195 = smul.addr %s194, 6
      %s196 = smul.addr %s195, 4
      %s197 = scalar_lea.vmem %s4, %s196
      %v199 = vld [vmem:[%s1] sm:$0x3]
      %v200 = vld [vmem:[%s1 + $0x2] sm:$0x3]
      %vm201 = vcmask 1041408
      %v202 = vsel %vm201, %v199, 0.0
      %v203 = vsel %vm201, %v200, 0.0
      %v204 = vadd.f32 %v202, %v203
      %v205 = vmul.f32 %v204, 0.03125
      %v206 = vmul.f32 %v205, %v205
      %v208 = vrot.slane %v206, 7
      %v210 = vsub.f32 %v205, %v208
      %v211 = vld [vmem:[%s2] sm:$0x1]
      %v212 = vadd.f32 %v210, 1e-05
      %v213 = vrsqrt.pop %v212
      %v216 = vunpack.c.l.s4 1966171168
      %v217 = vunpack.c.0.s8 %v216
      %v218 = vlaneseq
      %v219 = vshrl.u32 %v218, 7
      %v220 = vsub.s32 %v217, %v219
      %v221 = vrot.slane %v213, %v220
      %v222 = vcombine.high %v221, %v221
      %v224 = vunpack.c.l.s4 1966171168
      %v225 = vunpack.c.0.s8 %v224
      %v226 = vlaneseq
      %v227 = vshrl.u32 %v226, 7
      %v228 = vsub.s32 %v225, %v227
      %v229 = vrot.slane %v222, %v228
      %v231 = vmul.f32 %v211, %v229
      %v232 = vld [vmem:[%s3] sm:$0x1]
      %v233 = vmul.f32 %v205, %v231
      %v234 = vsub.f32 %v232, %v233
      %v235 = vld [vmem:[%s192] sm:$0x3]
      %v236 = vld [vmem:[%s192 + $0x2] sm:$0x3]
      %v237 = vld [vmem:[%s192 + $0x4] sm:$0x3]
      %v238 = vld [vmem:[%s192 + $0x6] sm:$0x3]
      %v239 = vunpack.c.l.bf16 %v235
      %v240 = vunpack.c.l.bf16 %v236
      %v241 = vunpack.c.l.bf16 %v237
      %v242 = vunpack.c.l.bf16 %v238
      %v244 = vlaneseq
      %v245 = vshrl.u32 %v244, 7
      %v246 = vsub.s32 0, %v245
      %v247 = vrot.slane %v231, %v246
      %v249 = vmul.f32 %v239, %v247
      %v250 = vmul.f32 %v240, %v247
      %v251 = vmul.f32 %v241, %v247
      %v252 = vmul.f32 %v242, %v247
      %v254 = vlaneseq
      %v255 = vshrl.u32 %v254, 7
      %v256 = vsub.s32 0, %v255
      %v257 = vrot.slane %v234, %v256
      %v259 = vadd.f32 %v249, %v257
      %v260 = vadd.f32 %v250, %v257
      %v261 = vadd.f32 %v251, %v257
      %v262 = vadd.f32 %v252, %v257
      %v263 = vmax.f32 %v259, 0.0
      %v264 = vmax.f32 %v260, 0.0
      %v265 = vmax.f32 %v261, 0.0
      %v266 = vmax.f32 %v262, 0.0
      %v267 = vpack.c.bf16 %v263, %v263
      %v268 = vpack.c.bf16 %v264, %v264
      %v269 = vpack.c.bf16 %v265, %v265
      %v270 = vpack.c.bf16 %v266, %v266
      %v272 = vshrl.u32 %v267, 16
      %v274 = vrot.slane %v272, 7
      %v275 = vshll.u32 %v267, 16
      %v277 = vor.u32 %v274, %v275
      %v279 = vshrl.u32 %v268, 16
      %v281 = vrot.slane %v279, 7
      %v282 = vshll.u32 %v268, 16
      %v284 = vor.u32 %v281, %v282
      %v286 = vshrl.u32 %v269, 16
      %v288 = vrot.slane %v286, 7
      %v289 = vshll.u32 %v269, 16
      %v291 = vor.u32 %v288, %v289
      %v293 = vshrl.u32 %v270, 16
      %v295 = vrot.slane %v293, 7
      %v296 = vshll.u32 %v270, 16
      %v298 = vor.u32 %v295, %v296
      %vm303 = vcmask 1040384
      %vm304 = vsmask.f32 256
      %vm305 = vmand %vm303, %vm304
      %v306 = vsel %vm305, 0, %v277
      %v307 = vsel %vm305, 0, %v284
      %v308 = vsel %vm305, 0, %v291
      %v309 = vsel %vm305, 0, %v298
      %vm310 = vcmask 1042432
      %vm311 = vsmask.f32 2304
      %vm312 = vmand %vm310, %vm311
      %v313 = vsel %vm312, %v306, 0
      %v314 = vsel %vm312, %v307, 0
      %v315 = vsel %vm312, %v308, 0
      %v316 = vsel %vm312, %v309, 0
      %317 = vst [vmem:[%s197] sm:$0xf] 0
      %318 = vst [vmem:[%s197 + $0x4] sm:$0xf] %v313
      %319 = vst [vmem:[%s197 + $0x8] sm:$0xf] %v314
      %320 = vst [vmem:[%s197 + $0xc] sm:$0xf] %v315
      %321 = vst [vmem:[%s197 + $0x10] sm:$0xf] %v316
      %322 = vst [vmem:[%s197 + $0x14] sm:$0xf] 0
      %p323 = scmp.lt.s32.totalorder %s15, 1
      %s324 = scalar_select %p323, %s15, 1
      %s325 = smul.addr %s324, 6
      %s326 = smul.addr %s325, 4
      %s327 = scalar_lea.vmem %s4, %s326
      // Predicated region
      $region37: #{resnet_forward.18} parent=35 // pred_check
        %p328 = pneg %p122
      $region38: #{resnet_forward.18} parent=35 // pred_check_branch
        %330 = sbr.rel (%p328) target = $region40
      $region39: #{resnet_forward.18} parent=35 // pred_region
        _
      $region40: #{resnet_forward.18} parent=35 // pred_fallthru
        _
    $region36: #{resnet_forward.18} parent=5 // pred_fallthru
      _
    %p331 = scmp.le.s32.totalorder 2, %s10
    // Predicated region
    $region41: #{resnet_forward.18} parent=5 // pred_check
      %p332 = pneg %p331
    $region42: #{resnet_forward.18} parent=5 // pred_check_branch
      %334 = sbr.rel (%p332) target = $region44
    $region43: #{resnet_forward.18} parent=5 // pred_region
      %s335 = ssub.s32 %s10, 2
      // Predicated region
      $region45: #{resnet_forward.18} parent=43 // pred_check
        %p336 = pneg %p128
      $region46: #{resnet_forward.18} parent=43 // pred_check_branch
        %338 = sbr.rel (%p336) target = $region48
      $region47: #{resnet_forward.18} parent=43 // pred_region
        %p339 = scmp.lt.s32.totalorder %s16, 1
        %s340 = scalar_select %p339, %s16, 1
        %s341 = smul.addr %s340, 6
        %s342 = smul.addr %s341, 4
        %s343 = scalar_lea.vmem %s4, %s342
      $region48: #{resnet_forward.18} parent=43 // pred_fallthru
        _
    $region44: #{resnet_forward.18} parent=5 // pred_fallthru
      _
  $region6: #{resnet_forward.18} parent=0 // loop_footer
    %s14 = sadd.s32 1, %s10
  $region7: #{resnet_forward.18} parent=0 // loop_footer_branch
    %9 = sbr.rel target = $region3
  $region8: #{resnet_forward.18} parent=0 // loop_exit
    _

// kernel: resnet_forward.17
$region0: #{resnet_forward.17}
  #allocation0 [shape = 'u32[]', space=smem, size = 0x4, offset = 0x4, fixed_abs, tag = 'smem constant byte address 0x4 - core index']
  #allocation1 [shape = 'u32[144,128]{1,0:T(1,128)}', space=vmem, size = 0x12000, scoped, tag = 'internal scratch']
  #allocation2 [shape = 'bf16[4,4,576]{2,1,0:T(4,128)(2,1)}', space=vmem, size = 0x5000, scoped, tag = 'scratch operand']
  %s0 = inlined_call_operand.vmem [shape: bf16[2,6,8,128], index: 0, kind: input, shape index: {}]
  %s1 = inlined_call_operand.vmem [shape: bf16[576,128], index: 1, kind: input, shape index: {}]
  %s2 = inlined_call_operand.vmem [shape: f32[1,128], index: 2, kind: input, shape index: {}]
  %s3 = inlined_call_operand.vmem [shape: bf16[2,4,4,128], index: 3, kind: output, shape index: {0}]
  %s4 = inlined_call_operand.vmem [shape: f32[2,2,128], index: 4, kind: output, shape index: {1}]
  %5 = xla_tuple %s3, %s4
  %s6 = sld [smem:[#allocation0]]
  $region53: #{resnet_forward.17} parent=0
    _
  %s8 = ssub.s32 1, %s6
  %s9 = scalar_select 0, %s8, %s6
  loop: start=0, step=1, limit=4
  $region2: #{resnet_forward.17} parent=0 // loop_pre_header
    _
  $region3: #{resnet_forward.17} parent=0 // loop_header
    %s11 = sphi 0, %s15
    %p12 = scmp.ge.s32.totalorder %s11, 4
    %s21 = sphi 0, %s23
    %s24 = sphi 0, %s21
    %s25 = sphi 0, %s24
    %s41 = sphi 0, %s25
    %s45 = sphi 0, %s45
    %s47 = sphi 0, %s45
    %s48 = sphi 0, %s47
    %s62 = sphi 0, %s48
    %s66 = sphi 0, %s66
    %s68 = sphi 0, %s66
    %s69 = sphi 0, %s68
    %s83 = sphi 0, %s69
    %s89 = sphi 0, %s91
    %s92 = sphi 0, %s89
    %s93 = sphi 0, %s92
    %s109 = sphi 0, %s93
    %s115 = sphi 0, %s117
    %s118 = sphi 0, %s115
    %s119 = sphi 0, %s118
    %s135 = sphi 0, %s119
  $region4: #{resnet_forward.17} parent=0 // loop_header_branch
    %14 = sbr.rel (%p12) target = $region8
  $region5: #{resnet_forward.17} parent=0 // loop_body
    %s16 = ssub.s32 %s11, 1
    %s17 = ssub.s32 %s11, 2
    %s18 = sadd.s32 %s11, 1
    %s19 = ssub.s32 %s11, %s18
    %p20 = scmp.eq.s32.totalorder %s19, 0
    %s22 = sadd.s32 %s21, 1
    %s23 = scalar_select %p20, %s21, %s22
    %p26 = pneg %p20
    %p27 = scmp.eq.s32.totalorder %s11, 1
    %p28 = por %p26, %p27
    %p29 = scmp.ne.s32.totalorder %s21, %s24
    %p30 = scmp.eq.s32.totalorder %s11, 0
    %p31 = por %p29, %p30
    %p32 = scmp.ne.s32.totalorder %s21, %s24
    %p33 = scmp.eq.s32.totalorder %s16, 1
    %p34 = por %p32, %p33
    %p35 = scmp.ne.s32.totalorder %s24, %s25
    %p36 = scmp.eq.s32.totalorder %s16, 0
    %p37 = por %p35, %p36
    %p38 = scmp.ne.s32.totalorder %s24, %s25
    %p39 = scmp.eq.s32.totalorder %s17, 1
    %p40 = por %p38, %p39
    %p42 = scmp.ne.s32.totalorder %s25, %s41
    %p43 = scmp.eq.s32.totalorder %s17, 0
    %p44 = por %p42, %p43
    %s46 = sadd.s32 %s45, 1
    %p49 = scmp.eq.s32.totalorder %s11, 1
    %p50 = scmp.ne.s32.totalorder %s45, %s47
    %p51 = scmp.eq.s32.totalorder %s11, 0
    %p52 = por %p50, %p51
    %p53 = scmp.ne.s32.totalorder %s45, %s47
    %p54 = scmp.eq.s32.totalorder %s16, 1
    %p55 = por %p53, %p54
    %p56 = scmp.ne.s32.totalorder %s47, %s48
    %p57 = scmp.eq.s32.totalorder %s16, 0
    %p58 = por %p56, %p57
    %p59 = scmp.ne.s32.totalorder %s47, %s48
    %p60 = scmp.eq.s32.totalorder %s17, 1
    %p61 = por %p59, %p60
    %p63 = scmp.ne.s32.totalorder %s48, %s62
    %p64 = scmp.eq.s32.totalorder %s17, 0
    %p65 = por %p63, %p64
    %s67 = sadd.s32 %s66, 1
    %p70 = scmp.eq.s32.totalorder %s11, 1
    %p71 = scmp.ne.s32.totalorder %s66, %s68
    %p72 = scmp.eq.s32.totalorder %s11, 0
    %p73 = por %p71, %p72
    %p74 = scmp.ne.s32.totalorder %s66, %s68
    %p75 = scmp.eq.s32.totalorder %s16, 1
    %p76 = por %p74, %p75
    %p77 = scmp.ne.s32.totalorder %s68, %s69
    %p78 = scmp.eq.s32.totalorder %s16, 0
    %p79 = por %p77, %p78
    %p80 = scmp.ne.s32.totalorder %s68, %s69
    %p81 = scmp.eq.s32.totalorder %s17, 1
    %p82 = por %p80, %p81
    %p84 = scmp.ne.s32.totalorder %s69, %s83
    %p85 = scmp.eq.s32.totalorder %s17, 0
    %p86 = por %p84, %p85
    %s87 = ssub.s32 %s11, %s18
    %p88 = scmp.eq.s32.totalorder %s87, 0
    %s90 = sadd.s32 %s89, 1
    %s91 = scalar_select %p88, %s89, %s90
    %p94 = pneg %p88
    %p95 = scmp.eq.s32.totalorder %s11, 1
    %p96 = por %p94, %p95
    %p97 = scmp.ne.s32.totalorder %s89, %s92
    %p98 = scmp.eq.s32.totalorder %s11, 0
    %p99 = por %p97, %p98
    %p100 = scmp.ne.s32.totalorder %s89, %s92
    %p101 = scmp.eq.s32.totalorder %s16, 1
    %p102 = por %p100, %p101
    %p103 = scmp.ne.s32.totalorder %s92, %s93
    %p104 = scmp.eq.s32.totalorder %s16, 0
    %p105 = por %p103, %p104
    %p106 = scmp.ne.s32.totalorder %s92, %s93
    %p107 = scmp.eq.s32.totalorder %s17, 1
    %p108 = por %p106, %p107
    %p110 = scmp.ne.s32.totalorder %s93, %s109
    %p111 = scmp.eq.s32.totalorder %s17, 0
    %p112 = por %p110, %p111
    %s113 = ssub.s32 %s11, %s18
    %p114 = scmp.eq.s32.totalorder %s113, 0
    %s116 = sadd.s32 %s115, 1
    %s117 = scalar_select %p114, %s115, %s116
    %p120 = pneg %p114
    %p121 = scmp.eq.s32.totalorder %s11, 1
    %p122 = por %p120, %p121
    %p123 = scmp.ne.s32.totalorder %s115, %s118
    %p124 = scmp.eq.s32.totalorder %s11, 0
    %p125 = por %p123, %p124
    %p126 = scmp.ne.s32.totalorder %s115, %s118
    %p127 = scmp.eq.s32.totalorder %s16, 1
    %p128 = por %p126, %p127
    %p129 = scmp.ne.s32.totalorder %s118, %s119
    %p130 = scmp.eq.s32.totalorder %s16, 0
    %p131 = por %p129, %p130
    %p132 = scmp.ne.s32.totalorder %s118, %s119
    %p133 = scmp.eq.s32.totalorder %s17, 1
    %p134 = por %p132, %p133
    %p136 = scmp.ne.s32.totalorder %s119, %s135
    %p137 = scmp.eq.s32.totalorder %s17, 0
    %p138 = por %p136, %p137
    %p139 = scmp.le.s32.totalorder 1, %s11
    %p140 = scmp.lt.s32.totalorder %s11, 3
    %p141 = pnand %p139, %p140
    %p142 = pneg %p141
    // Predicated region
    $region9: #{resnet_forward.17} parent=5 // pred_check
      _
    $region10: #{resnet_forward.17} parent=5 // pred_check_branch
      %144 = sbr.rel (%p141) target = $region12
    $region11: #{resnet_forward.17} parent=5 // pred_region
      %s145 = ssub.s32 %s11, 1
      // Predicated region
      $region13: #{resnet_forward.17} parent=11 // pred_check
        %p146 = pneg %p58
      $region14: #{resnet_forward.17} parent=11 // pred_check_branch
        %148 = sbr.rel (%p146) target = $region16
      $region15: #{resnet_forward.17} parent=11 // pred_region
        _
      $region16: #{resnet_forward.17} parent=11 // pred_fallthru
        _
      // Predicated region
      $region17: #{resnet_forward.17} parent=11 // pred_check
        %p149 = pneg %p79
      $region18: #{resnet_forward.17} parent=11 // pred_check_branch
        %151 = sbr.rel (%p149) target = $region20
      $region19: #{resnet_forward.17} parent=11 // pred_region
        _
      $region20: #{resnet_forward.17} parent=11 // pred_fallthru
        _
    $region12: #{resnet_forward.17} parent=5 // pred_fallthru
      _
    %p152 = scmp.lt.s32.totalorder %s11, 2
    // Predicated region
    $region21: #{resnet_forward.17} parent=5 // pred_check
      %p153 = pneg %p152
    $region22: #{resnet_forward.17} parent=5 // pred_check_branch
      %155 = sbr.rel (%p153) target = $region24
    $region23: #{resnet_forward.17} parent=5 // pred_region
      // Predicated region
      $region25: #{resnet_forward.17} parent=23 // pred_check
        %p156 = pneg %p31
      $region26: #{resnet_forward.17} parent=23 // pred_check_branch
        %158 = sbr.rel (%p156) target = $region28
      $region27: #{resnet_forward.17} parent=23 // pred_region
        %p159 = scmp.lt.s32.totalorder %s11, 1
        %s160 = scalar_select %p159, %s11, 1
        %s161 = smul.addr %s160, 6
        %s162 = smul.addr %s161, 4
        %s163 = scalar_lea.vmem %s0, %s162
      $region28: #{resnet_forward.17} parent=23 // pred_fallthru
        _
    $region24: #{resnet_forward.17} parent=5 // pred_fallthru
      _
    %p164 = scmp.le.s32.totalorder 1, %s11
    %p165 = scmp.lt.s32.totalorder %s11, 3
    %p166 = pnand %p164, %p165
    %p167 = pneg %p166
    // Predicated region
    $region29: #{resnet_forward.17} parent=5 // pred_check
      _
    $region30: #{resnet_forward.17} parent=5 // pred_check_branch
      %169 = sbr.rel (%p166) target = $region32
    $region31: #{resnet_forward.17} parent=5 // pred_region
      %s170 = ssub.s32 %s11, 1
      %p171 = scmp.lt.s32.totalorder %s16, 1
      %s172 = scalar_select %p171, %s16, 1
      %s173 = smul.addr %s172, 6
      %s174 = smul.addr %s173, 4
      %s175 = scalar_lea.vmem %s0, %s174
      %p176 = pneg %p37
      %p177 = pneg %p34
      %p178 = pneg %p58
      %p179 = pneg %p55
      %p180 = pneg %p79
      %p181 = pneg %p76
      %p182 = pneg %p105
      %p183 = pneg %p102
      %p184 = scmp.lt.s32.totalorder %s16, 1
      %s185 = scalar_select %p184, %s16, 1
      %s186 = smul.addr %s185, 4
      %s187 = smul.addr %s186, 2
      %s188 = scalar_lea.vmem %s3, %s187
      %p189 = pneg %p131
      %p190 = pneg %p128
      %p191 = scmp.lt.s32.totalorder %s16, 1
      %s192 = scalar_select %p191, %s16, 1
      %s193 = smul.addr %s192, 2
      %s194 = scalar_lea.vmem %s4, %s193
      %p195 = scmp.lt.s32.totalorder %s16, 1
      %s196 = scalar_select %p195, %s16, 1
      %s197 = smul.addr %s196, 6
      %s198 = smul.addr %s197, 4
      %s199 = scalar_lea.vmem %s0, %s198
      %p200 = scmp.lt.s32.totalorder %s16, 1
      %s201 = scalar_select %p200, %s16, 1
      %s202 = smul.addr %s201, 4
      %s203 = smul.addr %s202, 2
      %s204 = scalar_lea.vmem %s3, %s203
      %p205 = scmp.lt.s32.totalorder %s16, 1
      %s206 = scalar_select %p205, %s16, 1
      %s207 = smul.addr %s206, 2
      %s208 = scalar_lea.vmem %s4, %s207
      %v210 = vld [vmem:[%s199] sm:$0x3]
      %v211 = vld [vmem:[%s199 + $0x4] sm:$0x3]
      %v212 = vld [vmem:[%s199 + $0x8] sm:$0x3]
      %v213 = vld [vmem:[%s199 + $0xc] sm:$0x3]
      %vm214 = vcmask 517120
      %215 = vst.msk [vmem:[#allocation2] sm:$0x3] %vm214, %v210
      %216 = vst.msk [vmem:[#allocation2 + $0xa] sm:$0x3] %vm214, %v211
      %217 = vst.msk [vmem:[#allocation2 + $0x14] sm:$0x3] %vm214, %v212
      %218 = vst.msk [vmem:[#allocation2 + $0x1e] sm:$0x3] %vm214, %v213
      %v219 = vld [vmem:[%s199] sm:$0x7]
      %v220 = vld [vmem:[%s199 + $0x4] sm:$0x7]
      %v221 = vld [vmem:[%s199 + $0x8] sm:$0x7]
      %v222 = vld [vmem:[%s199 + $0xc] sm:$0x7]
      %v228 = vunpack.c.l.s4 1983009808
      %v229 = vunpack.c.0.s8 %v228
      %v230 = vlaneseq
      %v231 = vshrl.u32 %v230, 7
      %v232 = vsub.s32 %v229, %v231
      %v233 = vrot.slane %v219, %v232
      %v234 = vcombine.high %v233, %v233
      %v236 = vunpack.c.l.s4 1983009808
      %v237 = vunpack.c.0.s8 %v236
      %v238 = vlaneseq
      %v239 = vshrl.u32 %v238, 7
      %v240 = vsub.s32 %v237, %v239
      %v241 = vrot.slane %v220, %v240
      %v242 = vcombine.high %v241, %v241
      %v244 = vunpack.c.l.s4 1983009808
      %v245 = vunpack.c.0.s8 %v244
      %v246 = vlaneseq
      %v247 = vshrl.u32 %v246, 7
      %v248 = vsub.s32 %v245, %v247
      %v249 = vrot.slane %v221, %v248
      %v250 = vcombine.high %v249, %v249
      %v252 = vunpack.c.l.s4 1983009808
      %v253 = vunpack.c.0.s8 %v252
      %v254 = vlaneseq
      %v255 = vshrl.u32 %v254, 7
      %v256 = vsub.s32 %v253, %v255
      %v257 = vrot.slane %v222, %v256
      %v258 = vcombine.high %v257, %v257
      %vm259 = vsmask.f32 1280
      %vm260 = vsmask.f32 3336
      %vm261 = vmor %vm259, %vm260
      %vm262 = vsmask.f32 5392
      %vm263 = vmor %vm261, %vm262
      %vm264 = vsmask.f32 7448
      %vm265 = vmor %vm263, %vm264
      %v267 = vshrl.u32 %v233, 16
      %v269 = vrot.slane %v267, 6
      %v270 = vshll.u32 %v233, 16
      %v272 = vrot.slane %v270, 7
      %v273 = vor.u32 %v269, %v272
      %v274 = vrot.slane %v273, 2
      %v276 = vshll.u32 %v234, 16
      %v278 = vrot.slane %v276, 7
      %v279 = vsel %vm265, %v274, %v278
      %v281 = vshrl.u32 %v241, 16
      %v283 = vrot.slane %v281, 6
      %v284 = vshll.u32 %v241, 16
      %v286 = vrot.slane %v284, 7
      %v287 = vor.u32 %v283, %v286
      %v288 = vrot.slane %v287, 2
      %v290 = vshll.u32 %v242, 16
      %v292 = vrot.slane %v290, 7
      %v293 = vsel %vm265, %v288, %v292
      %v295 = vshrl.u32 %v249, 16
      %v297 = vrot.slane %v295, 6
      %v298 = vshll.u32 %v249, 16
      %v300 = vrot.slane %v298, 7
      %v301 = vor.u32 %v297, %v300
      %v302 = vrot.slane %v301, 2
      %v304 = vshll.u32 %v250, 16
      %v306 = vrot.slane %v304, 7
      %v307 = vsel %vm265, %v302, %v306
      %v309 = vshrl.u32 %v257, 16
      %v311 = vrot.slane %v309, 6
      %v312 = vshll.u32 %v257, 16
      %v314 = vrot.slane %v312, 7
      %v315 = vor.u32 %v311, %v314
      %v316 = vrot.slane %v315, 2
      %v318 = vshll.u32 %v258, 16
      %v320 = vrot.slane %v318, 7
      %v321 = vsel %vm265, %v316, %v320
      %322 = vrot.lane.b32.xlu0 %v279, 64
      %v323 = vpop.permute.xlu0 %322
      %324 = vrot.lane.b32.xlu0 %v293, 64
      %v325 = vpop.permute.xlu0 %324
      %326 = vrot.lane.b32.xlu0 %v307, 64
      %v327 = vpop.permute.xlu0 %326
      %328 = vrot.lane.b32.xlu0 %v321, 64
      %v329 = vpop.permute.xlu0 %328
      %vm334 = vcmask 1041920
      %335 = vst.msk [vmem:[#allocation2] sm:$0x3] %vm334, %v323
      %336 = vst.msk [vmem:[#allocation2 + $0xa] sm:$0x3] %vm334, %v325
      %337 = vst.msk [vmem:[#allocation2 + $0x14] sm:$0x3] %vm334, %v327
      %338 = vst.msk [vmem:[#allocation2 + $0x1e] sm:$0x3] %vm334, %v329
      %v339 = vld [vmem:[%s199] sm:$0x6]
      %v340 = vld [vmem:[%s199 + $0x4] sm:$0x6]
      %v341 = vld [vmem:[%s199 + $0x8] sm:$0x6]
      %v342 = vld [vmem:[%s199 + $0xc] sm:$0x6]
      %v348 = vunpack.c.l.s4 1983009808
      %v349 = vunpack.c.0.s8 %v348
      %v350 = vlaneseq
      %v351 = vshrl.u32 %v350, 7
      %v352 = vsub.s32 %v349, %v351
      %v353 = vrot.slane %v339, %v352
      %v354 = vcombine.high %v353, %v353
      %v356 = vunpack.c.l.s4 1983009808
      %v357 = vunpack.c.0.s8 %v356
      %v358 = vlaneseq
      %v359 = vshrl.u32 %v358, 7
      %v360 = vsub.s32 %v357, %v359
      %v361 = vrot.slane %v340, %v360
      %v362 = vcombine.high %v361, %v361
      %v364 = vunpack.c.l.s4 1983009808
      %v365 = vunpack.c.0.s8 %v364
      %v366 = vlaneseq
      %v367 = vshrl.u32 %v366, 7
      %v368 = vsub.s32 %v365, %v367
      %v369 = vrot.slane %v341, %v368
      %v370 = vcombine.high %v369, %v369
      %v372 = vunpack.c.l.s4 1983009808
      %v373 = vunpack.c.0.s8 %v372
      %v374 = vlaneseq
      %v375 = vshrl.u32 %v374, 7
      %v376 = vsub.s32 %v373, %v375
      %v377 = vrot.slane %v342, %v376
      %v378 = vcombine.high %v377, %v377
      %vm379 = vcmask 1040384
      %vm380 = vcmask 1042434
      %vm381 = vmor %vm379, %vm380
      %vm382 = vcmask 1044484
      %vm383 = vmor %vm381, %vm382
      %vm384 = vcmask 1046534
      %vm385 = vmor %vm383, %vm384
      %v386 = vrot.slane %v353, 7
      %v387 = vrot.slane %v386, 2
      %v388 = vrot.slane %v354, 7
      %v389 = vsel %vm385, %v387, %v388
      %v390 = vrot.slane %v361, 7
      %v391 = vrot.slane %v390, 2
      %v392 = vrot.slane %v362, 7
      %v393 = vsel %vm385, %v391, %v392
      %v394 = vrot.slane %v369, 7
      %v395 = vrot.slane %v394, 2
      %v396 = vrot.slane %v370, 7
      %v397 = vsel %vm385, %v395, %v396
      %v398 = vrot.slane %v377, 7
      %v399 = vrot.slane %v398, 2
      %v400 = vrot.slane %v378, 7
      %v401 = vsel %vm385, %v399, %v400
      %406 = vst.msk [vmem:[#allocation2 + $0x2] sm:$0x3] %vm214, %v389
      %407 = vst.msk [vmem:[#allocation2 + $0xc] sm:$0x3] %vm214, %v393
      %408 = vst.msk [vmem:[#allocation2 + $0x16] sm:$0x3] %vm214, %v397
      %409 = vst.msk [vmem:[#allocation2 + $0x20] sm:$0x3] %vm214, %v401
      %s410 = scalar_lea.vmem %s199, 4
      %v411 = vld [vmem:[%s410] sm:$0x3]
      %v412 = vld [vmem:[%s410 + $0x4] sm:$0x3]
      %v413 = vld [vmem:[%s410 + $0x8] sm:$0x3]
      %v414 = vld [vmem:[%s410 + $0xc] sm:$0x3]
      %v420 = vunpack.c.l.s4 1983009808
      %v421 = vunpack.c.0.s8 %v420
      %v422 = vlaneseq
      %v423 = vshrl.u32 %v422, 7
      %v424 = vsub.s32 %v421, %v423
      %v425 = vrot.slane %v411, %v424
      %v427 = vunpack.c.l.s4 1983009808
      %v428 = vunpack.c.0.s8 %v427
      %v429 = vlaneseq
      %v430 = vshrl.u32 %v429, 7
      %v431 = vsub.s32 %v428, %v430
      %v432 = vrot.slane %v412, %v431
      %v434 = vunpack.c.l.s4 1983009808
      %v435 = vunpack.c.0.s8 %v434
      %v436 = vlaneseq
      %v437 = vshrl.u32 %v436, 7
      %v438 = vsub.s32 %v435, %v437
      %v439 = vrot.slane %v413, %v438
      %v441 = vunpack.c.l.s4 1983009808
      %v442 = vunpack.c.0.s8 %v441
      %v443 = vlaneseq
      %v444 = vshrl.u32 %v443, 7
      %v445 = vsub.s32 %v442, %v444
      %v446 = vrot.slane %v414, %v445
      %447 = vrot.lane.b32.xlu0 %v425, 64
      %v448 = vpop.permute.xlu0 %447
      %449 = vrot.lane.b32.xlu0 %v432, 64
      %v450 = vpop.permute.xlu0 %449
      %451 = vrot.lane.b32.xlu0 %v439, 64
      %v452 = vpop.permute.xlu0 %451
      %453 = vrot.lane.b32.xlu0 %v446, 64
      %v454 = vpop.permute.xlu0 %453
      %459 = vst.msk [vmem:[#allocation2 + $0x2] sm:$0x3] %vm334, %v448
      %460 = vst.msk [vmem:[#allocation2 + $0xc] sm:$0x3] %vm334, %v450
      %461 = vst.msk [vmem:[#allocation2 + $0x16] sm:$0x3] %vm334, %v452
      %462 = vst.msk [vmem:[#allocation2 + $0x20] sm:$0x3] %vm334, %v454
      %v463 = vld [vmem:[%s410] sm:$0x7]
      %v464 = vld [vmem:[%s410 + $0x4] sm:$0x7]
      %v465 = vld [vmem:[%s410 + $0x8] sm:$0x7]
      %v466 = vld [vmem:[%s410 + $0xc] sm:$0x7]
      %v472 = vunpack.c.l.s4 1983009808
      %v473 = vunpack.c.0.s8 %v472
      %v474 = vlaneseq
      %v475 = vshrl.u32 %v474, 7
      %v476 = vsub.s32 %v473, %v475
      %v477 = vrot.slane %v463, %v476
      %v478 = vcombine.high %v477, %v477
      %v480 = vunpack.c.l.s4 1983009808
      %v481 = vunpack.c.0.s8 %v480
      %v482 = vlaneseq
      %v483 = vshrl.u32 %v482, 7
      %v484 = vsub.s32 %v481, %v483
      %v485 = vrot.slane %v464, %v484
      %v486 = vcombine.high %v485, %v485
      %v488 = vunpack.c.l.s4 1983009808
      %v489 = vunpack.c.0.s8 %v488
      %v490 = vlaneseq
      %v491 = vshrl.u32 %v490, 7
      %v492 = vsub.s32 %v489, %v491
      %v493 = vrot.slane %v465, %v492
      %v494 = vcombine.high %v493, %v493
      %v496 = vunpack.c.l.s4 1983009808
      %v497 = vunpack.c.0.s8 %v496
      %v498 = vlaneseq
      %v499 = vshrl.u32 %v498, 7
      %v500 = vsub.s32 %v497, %v499
      %v501 = vrot.slane %v466, %v500
      %v502 = vcombine.high %v501, %v501
      %v504 = vshrl.u32 %v477, 16
      %v506 = vrot.slane %v504, 6
      %v507 = vshll.u32 %v477, 16
      %v509 = vrot.slane %v507, 7
      %v510 = vor.u32 %v506, %v509
      %v511 = vrot.slane %v510, 2
      %v513 = vshll.u32 %v478, 16
      %v515 = vrot.slane %v513, 7
      %v516 = vsel %vm265, %v511, %v515
      %v518 = vshrl.u32 %v485, 16
      %v520 = vrot.slane %v518, 6
      %v521 = vshll.u32 %v485, 16
      %v523 = vrot.slane %v521, 7
      %v524 = vor.u32 %v520, %v523
      %v525 = vrot.slane %v524, 2
      %v527 = vshll.u32 %v486, 16
      %v529 = vrot.slane %v527, 7
      %v530 = vsel %vm265, %v525, %v529
      %v532 = vshrl.u32 %v493, 16
      %v534 = vrot.slane %v532, 6
      %v535 = vshll.u32 %v493, 16
      %v537 = vrot.slane %v535, 7
      %v538 = vor.u32 %v534, %v537
      %v539 = vrot.slane %v538, 2
      %v541 = vshll.u32 %v494, 16
      %v543 = vrot.slane %v541, 7
      %v544 = vsel %vm265, %v539, %v543
      %v546 = vshrl.u32 %v501, 16
      %v548 = vrot.slane %v546, 6
      %v549 = vshll.u32 %v501, 16
      %v551 = vrot.slane %v549, 7
      %v552 = vor.u32 %v548, %v551
      %v553 = vrot.slane %v552, 2
      %v555 = vshll.u32 %v502, 16
      %v557 = vrot.slane %v555, 7
      %v558 = vsel %vm265, %v553, %v557
      %563 = vst.msk [vmem:[#allocation2 + $0x4] sm:$0x3] %vm214, %v516
      %564 = vst.msk [vmem:[#allocation2 + $0xe] sm:$0x3] %vm214, %v530
      %565 = vst.msk [vmem:[#allocation2 + $0x18] sm:$0x3] %vm214, %v544
      %566 = vst.msk [vmem:[#allocation2 + $0x22] sm:$0x3] %vm214, %v558
      %v567 = vld [vmem:[%s410] sm:$0x6]
      %v568 = vld [vmem:[%s410 + $0x4] sm:$0x6]
      %v569 = vld [vmem:[%s410 + $0x8] sm:$0x6]
      %v570 = vld [vmem:[%s410 + $0xc] sm:$0x6]
      %v576 = vunpack.c.l.s4 1983009808
      %v577 = vunpack.c.0.s8 %v576
      %v578 = vlaneseq
      %v579 = vshrl.u32 %v578, 7
      %v580 = vsub.s32 %v577, %v579
      %v581 = vrot.slane %v567, %v580
      %v582 = vcombine.high %v581, %v581
      %v584 = vunpack.c.l.s4 1983009808
      %v585 = vunpack.c.0.s8 %v584
      %v586 = vlaneseq
      %v587 = vshrl.u32 %v586, 7
      %v588 = vsub.s32 %v585, %v587
      %v589 = vrot.slane %v568, %v588
      %v590 = vcombine.high %v589, %v589
      %v592 = vunpack.c.l.s4 1983009808
      %v593 = vunpack.c.0.s8 %v592
      %v594 = vlaneseq
      %v595 = vshrl.u32 %v594, 7
      %v596 = vsub.s32 %v593, %v595
      %v597 = vrot.slane %v569, %v596
      %v598 = vcombine.high %v597, %v597
      %v600 = vunpack.c.l.s4 1983009808
      %v601 = vunpack.c.0.s8 %v600
      %v602 = vlaneseq
      %v603 = vshrl.u32 %v602, 7
      %v604 = vsub.s32 %v601, %v603
      %v605 = vrot.slane %v570, %v604
      %v606 = vcombine.high %v605, %v605
      %v607 = vrot.slane %v581, 7
      %v608 = vrot.slane %v607, 2
      %v609 = vrot.slane %v582, 7
      %v610 = vsel %vm385, %v608, %v609
      %v611 = vrot.slane %v589, 7
      %v612 = vrot.slane %v611, 2
      %v613 = vrot.slane %v590, 7
      %v614 = vsel %vm385, %v612, %v613
      %v615 = vrot.slane %v597, 7
      %v616 = vrot.slane %v615, 2
      %v617 = vrot.slane %v598, 7
      %v618 = vsel %vm385, %v616, %v617
      %v619 = vrot.slane %v605, 7
      %v620 = vrot.slane %v619, 2
      %v621 = vrot.slane %v606, 7
      %v622 = vsel %vm385, %v620, %v621
      %623 = vrot.lane.b32.xlu0 %v610, 64
      %v624 = vpop.permute.xlu0 %623
      %625 = vrot.lane.b32.xlu0 %v614, 64
      %v626 = vpop.permute.xlu0 %625
      %627 = vrot.lane.b32.xlu0 %v618, 64
      %v628 = vpop.permute.xlu0 %627
      %629 = vrot.lane.b32.xlu0 %v622, 64
      %v630 = vpop.permute.xlu0 %629
      %635 = vst.msk [vmem:[#allocation2 + $0x4] sm:$0x3] %vm334, %v624
      %636 = vst.msk [vmem:[#allocation2 + $0xe] sm:$0x3] %vm334, %v626
      %637 = vst.msk [vmem:[#allocation2 + $0x18] sm:$0x3] %vm334, %v628
      %638 = vst.msk [vmem:[#allocation2 + $0x22] sm:$0x3] %vm334, %v630
      %s639 = scalar_lea.vmem %s199, 8
      %v640 = vld [vmem:[%s639] sm:$0x3]
      %v641 = vld [vmem:[%s639 + $0x4] sm:$0x3]
      %v642 = vld [vmem:[%s639 + $0x8] sm:$0x3]
      %v643 = vld [vmem:[%s639 + $0xc] sm:$0x3]
      %644 = vst.msk [vmem:[#allocation2 + $0x6] sm:$0x3] %vm214, %v640
      %645 = vst.msk [vmem:[#allocation2 + $0x10] sm:$0x3] %vm214, %v641
      %646 = vst.msk [vmem:[#allocation2 + $0x1a] sm:$0x3] %vm214, %v642
      %647 = vst.msk [vmem:[#allocation2 + $0x24] sm:$0x3] %vm214, %v643
      %v648 = vld [vmem:[%s639] sm:$0x7]
      %v649 = vld [vmem:[%s639 + $0x4] sm:$0x7]
      %v650 = vld [vmem:[%s639 + $0x8] sm:$0x7]
      %v651 = vld [vmem:[%s639 + $0xc] sm:$0x7]
      %v657 = vunpack.c.l.s4 1983009808
      %v658 = vunpack.c.0.s8 %v657
      %v659 = vlaneseq
      %v660 = vshrl.u32 %v659, 7
      %v661 = vsub.s32 %v658, %v660
      %v662 = vrot.slane %v648, %v661
      %v663 = vcombine.high %v662, %v662
      %v665 = vunpack.c.l.s4 1983009808
      %v666 = vunpack.c.0.s8 %v665
      %v667 = vlaneseq
      %v668 = vshrl.u32 %v667, 7
      %v669 = vsub.s32 %v666, %v668
      %v670 = vrot.slane %v649, %v669
      %v671 = vcombine.high %v670, %v670
      %v673 = vunpack.c.l.s4 1983009808
      %v674 = vunpack.c.0.s8 %v673
      %v675 = vlaneseq
      %v676 = vshrl.u32 %v675, 7
      %v677 = vsub.s32 %v674, %v676
      %v678 = vrot.slane %v650, %v677
      %v679 = vcombine.high %v678, %v678
      %v681 = vunpack.c.l.s4 1983009808
      %v682 = vunpack.c.0.s8 %v681
      %v683 = vlaneseq
      %v684 = vshrl.u32 %v683, 7
      %v685 = vsub.s32 %v682, %v684
      %v686 = vrot.slane %v651, %v685
      %v687 = vcombine.high %v686, %v686
      %v689 = vshrl.u32 %v662, 16
      %v691 = vrot.slane %v689, 6
      %v692 = vshll.u32 %v662, 16
      %v694 = vrot.slane %v692, 7
      %v695 = vor.u32 %v691, %v694
      %v696 = vrot.slane %v695, 2
      %v698 = vshll.u32 %v663, 16
      %v700 = vrot.slane %v698, 7
      %v701 = vsel %vm265, %v696, %v700
      %v703 = vshrl.u32 %v670, 16
      %v705 = vrot.slane %v703, 6
      %v706 = vshll.u32 %v670, 16
      %v708 = vrot.slane %v706, 7
      %v709 = vor.u32 %v705, %v708
      %v710 = vrot.slane %v709, 2
      %v712 = vshll.u32 %v671, 16
      %v714 = vrot.slane %v712, 7
      %v715 = vsel %vm265, %v710, %v714
      %v717 = vshrl.u32 %v678, 16
      %v719 = vrot.slane %v717, 6
      %v720 = vshll.u32 %v678, 16
      %v722 = vrot.slane %v720, 7
      %v723 = vor.u32 %v719, %v722
      %v724 = vrot.slane %v723, 2
      %v726 = vshll.u32 %v679, 16
      %v728 = vrot.slane %v726, 7
      %v729 = vsel %vm265, %v724, %v728
      %v731 = vshrl.u32 %v686, 16
      %v733 = vrot.slane %v731, 6
      %v734 = vshll.u32 %v686, 16
      %v736 = vrot.slane %v734, 7
      %v737 = vor.u32 %v733, %v736
      %v738 = vrot.slane %v737, 2
      %v740 = vshll.u32 %v687, 16
      %v742 = vrot.slane %v740, 7
      %v743 = vsel %vm265, %v738, %v742
      %744 = vrot.lane.b32.xlu0 %v701, 64
      %v745 = vpop.permute.xlu0 %744
      %746 = vrot.lane.b32.xlu0 %v715, 64
      %v747 = vpop.permute.xlu0 %746
      %748 = vrot.lane.b32.xlu0 %v729, 64
      %v749 = vpop.permute.xlu0 %748
      %750 = vrot.lane.b32.xlu0 %v743, 64
      %v751 = vpop.permute.xlu0 %750
      %756 = vst.msk [vmem:[#allocation2 + $0x6] sm:$0x3] %vm334, %v745
      %757 = vst.msk [vmem:[#allocation2 + $0x10] sm:$0x3] %vm334, %v747
      %758 = vst.msk [vmem:[#allocation2 + $0x1a] sm:$0x3] %vm334, %v749
      %759 = vst.msk [vmem:[#allocation2 + $0x24] sm:$0x3] %vm334, %v751
      %v760 = vld [vmem:[%s639] sm:$0x6]
      %v761 = vld [vmem:[%s639 + $0x4] sm:$0x6]
      %v762 = vld [vmem:[%s639 + $0x8] sm:$0x6]
      %v763 = vld [vmem:[%s639 + $0xc] sm:$0x6]
      %v769 = vunpack.c.l.s4 1983009808
      %v770 = vunpack.c.0.s8 %v769
      %v771 = vlaneseq
      %v772 = vshrl.u32 %v771, 7
      %v773 = vsub.s32 %v770, %v772
      %v774 = vrot.slane %v760, %v773
      %v775 = vcombine.high %v774, %v774
      %v777 = vunpack.c.l.s4 1983009808
      %v778 = vunpack.c.0.s8 %v777
      %v779 = vlaneseq
      %v780 = vshrl.u32 %v779, 7
      %v781 = vsub.s32 %v778, %v780
      %v782 = vrot.slane %v761, %v781
      %v783 = vcombine.high %v782, %v782
      %v785 = vunpack.c.l.s4 1983009808
      %v786 = vunpack.c.0.s8 %v785
      %v787 = vlaneseq
      %v788 = vshrl.u32 %v787, 7
      %v789 = vsub.s32 %v786, %v788
      %v790 = vrot.slane %v762, %v789
      %v791 = vcombine.high %v790, %v790
      %v793 = vunpack.c.l.s4 1983009808
      %v794 = vunpack.c.0.s8 %v793
      %v795 = vlaneseq
      %v796 = vshrl.u32 %v795, 7
      %v797 = vsub.s32 %v794, %v796
      %v798 = vrot.slane %v763, %v797
      %v799 = vcombine.high %v798, %v798
      %v800 = vrot.slane %v774, 7
      %v801 = vrot.slane %v800, 2
      %v802 = vrot.slane %v775, 7
      %v803 = vsel %vm385, %v801, %v802
      %v804 = vrot.slane %v782, 7
      %v805 = vrot.slane %v804, 2
      %v806 = vrot.slane %v783, 7
      %v807 = vsel %vm385, %v805, %v806
      %v808 = vrot.slane %v790, 7
      %v809 = vrot.slane %v808, 2
      %v810 = vrot.slane %v791, 7
      %v811 = vsel %vm385, %v809, %v810
      %v812 = vrot.slane %v798, 7
      %v813 = vrot.slane %v812, 2
      %v814 = vrot.slane %v799, 7
      %v815 = vsel %vm385, %v813, %v814
      %820 = vst.msk [vmem:[#allocation2 + $0x8] sm:$0x3] %vm214, %v803
      %821 = vst.msk [vmem:[#allocation2 + $0x12] sm:$0x3] %vm214, %v807
      %822 = vst.msk [vmem:[#allocation2 + $0x1c] sm:$0x3] %vm214, %v811
      %823 = vst.msk [vmem:[#allocation2 + $0x26] sm:$0x3] %vm214, %v815
      %v824 = vld [vmem:[#allocation2] sm:$0xf]
      %v825 = vld [vmem:[#allocation2 + $0xa] sm:$0xf]
      %v826 = vld [vmem:[#allocation2 + $0x14] sm:$0xf]
      %v827 = vld [vmem:[#allocation2 + $0x1e] sm:$0xf]
      %v828 = vld [vmem:[%s1] sm:$0xf]
      %v829 = vld [vmem:[%s1 + $0x4] sm:$0xf]
      %v830 = vld [vmem:[%s1 + $0x8] sm:$0xf]
      %v831 = vld [vmem:[%s1 + $0xc] sm:$0xf]
      %v832 = vld [vmem:[%s1 + $0x10] sm:$0xf]
      %v833 = vld [vmem:[%s1 + $0x14] sm:$0xf]
      %v834 = vld [vmem:[%s1 + $0x18] sm:$0xf]
      %v835 = vld [vmem:[%s1 + $0x1c] sm:$0xf]
      %v836 = vld [vmem:[%s1 + $0x20] sm:$0xf]
      %v837 = vld [vmem:[%s1 + $0x24] sm:$0xf]
      %v838 = vld [vmem:[%s1 + $0x28] sm:$0xf]
      %v839 = vld [vmem:[%s1 + $0x2c] sm:$0xf]
      %v840 = vld [vmem:[%s1 + $0x30] sm:$0xf]
      %v841 = vld [vmem:[%s1 + $0x34] sm:$0xf]
      %v842 = vld [vmem:[%s1 + $0x38] sm:$0xf]
      %v843 = vld [vmem:[%s1 + $0x3c] sm:$0xf]
      %v844 = vld [vmem:[%s1 + $0x40] sm:$0xf]
      %v845 = vld [vmem:[%s1 + $0x44] sm:$0xf]
      %v846 = vld [vmem:[%s1 + $0x48] sm:$0xf]
      %v847 = vld [vmem:[%s1 + $0x4c] sm:$0xf]
      %v848 = vld [vmem:[%s1 + $0x50] sm:$0xf]
      %v849 = vld [vmem:[%s1 + $0x54] sm:$0xf]
      %v850 = vld [vmem:[%s1 + $0x58] sm:$0xf]
      %v851 = vld [vmem:[%s1 + $0x5c] sm:$0xf]
      %v852 = vld [vmem:[%s1 + $0x60] sm:$0xf]
      %v853 = vld [vmem:[%s1 + $0x64] sm:$0xf]
      %v854 = vld [vmem:[%s1 + $0x68] sm:$0xf]
      %v855 = vld [vmem:[%s1 + $0x6c] sm:$0xf]
      %v856 = vld [vmem:[%s1 + $0x70] sm:$0xf]
      %v857 = vld [vmem:[%s1 + $0x74] sm:$0xf]
      %v858 = vld [vmem:[%s1 + $0x78] sm:$0xf]
      %v859 = vld [vmem:[%s1 + $0x7c] sm:$0xf]
      %v860 = vld [vmem:[#allocation2 + $0x4] sm:$0xf]
      %v861 = vld [vmem:[#allocation2 + $0xe] sm:$0xf]
      %v862 = vld [vmem:[#allocation2 + $0x18] sm:$0xf]
      %v863 = vld [vmem:[#allocation2 + $0x22] sm:$0xf]
      %v864 = vld [vmem:[%s1 + $0x80] sm:$0xf]
      %v865 = vld [vmem:[%s1 + $0x84] sm:$0xf]
      %v866 = vld [vmem:[%s1 + $0x88] sm:$0xf]
      %v867 = vld [vmem:[%s1 + $0x8c] sm:$0xf]
      %v868 = vld [vmem:[%s1 + $0x90] sm:$0xf]
      %v869 = vld [vmem:[%s1 + $0x94] sm:$0xf]
      %v870 = vld [vmem:[%s1 + $0x98] sm:$0xf]
      %v871 = vld [vmem:[%s1 + $0x9c] sm:$0xf]
      %v872 = vld [vmem:[%s1 + $0xa0] sm:$0xf]
      %v873 = vld [vmem:[%s1 + $0xa4] sm:$0xf]
      %v874 = vld [vmem:[%s1 + $0xa8] sm:$0xf]
      %v875 = vld [vmem:[%s1 + $0xac] sm:$0xf]
      %v876 = vld [vmem:[%s1 + $0xb0] sm:$0xf]
      %v877 = vld [vmem:[%s1 + $0xb4] sm:$0xf]
      %v878 = vld [vmem:[%s1 + $0xb8] sm:$0xf]
      %v879 = vld [vmem:[%s1 + $0xbc] sm:$0xf]
      %v880 = vld [vmem:[%s1 + $0xc0] sm:$0xf]
      %v881 = vld [vmem:[%s1 + $0xc4] sm:$0xf]
      %v882 = vld [vmem:[%s1 + $0xc8] sm:$0xf]
      %v883 = vld [vmem:[%s1 + $0xcc] sm:$0xf]
      %v884 = vld [vmem:[%s1 + $0xd0] sm:$0xf]
      %v885 = vld [vmem:[%s1 + $0xd4] sm:$0xf]
      %v886 = vld [vmem:[%s1 + $0xd8] sm:$0xf]
      %v887 = vld [vmem:[%s1 + $0xdc] sm:$0xf]
      %v888 = vld [vmem:[%s1 + $0xe0] sm:$0xf]
      %v889 = vld [vmem:[%s1 + $0xe4] sm:$0xf]
      %v890 = vld [vmem:[%s1 + $0xe8] sm:$0xf]
      %v891 = vld [vmem:[%s1 + $0xec] sm:$0xf]
      %v892 = vld [vmem:[%s1 + $0xf0] sm:$0xf]
      %v893 = vld [vmem:[%s1 + $0xf4] sm:$0xf]
      %v894 = vld [vmem:[%s1 + $0xf8] sm:$0xf]
      %v895 = vld [vmem:[%s1 + $0xfc] sm:$0xf]
      %v900 = vcombine.low %v860, %v861
      %v901 = vcombine.low %v862, %v863
      %v903 = vunpack.c.l.s4 1983009808
      %v904 = vunpack.c.0.s8 %v903
      %v905 = vlaneseq
      %v906 = vshrl.u32 %v905, 7
      %v907 = vsub.s32 %v904, %v906
      %v908 = vrot.slane %v900, %v907
      %v910 = vunpack.c.l.s4 1983009808
      %v911 = vunpack.c.0.s8 %v910
      %v912 = vlaneseq
      %v913 = vshrl.u32 %v912, 7
      %v914 = vsub.s32 %v911, %v913
      %v915 = vrot.slane %v901, %v914
      %v916 = vcombine.low %v908, %v915
      %v917 = vcombine.high %v908, %v915
      %v952 = vunpack.c.l.b16 %v864
      %v953 = vunpack.c.l.b16 %v865
      %v954 = vunpack.c.l.b16 %v866
      %v955 = vunpack.c.l.b16 %v867
      %v956 = vunpack.c.l.b16 %v868
      %v957 = vunpack.c.l.b16 %v869
      %v958 = vunpack.c.l.b16 %v870
      %v959 = vunpack.c.l.b16 %v871
      %v960 = vunpack.c.l.b16 %v872
      %v961 = vunpack.c.l.b16 %v873
      %v962 = vunpack.c.l.b16 %v874
      %v963 = vunpack.c.l.b16 %v875
      %v964 = vunpack.c.l.b16 %v876
      %v965 = vunpack.c.l.b16 %v877
      %v966 = vunpack.c.l.b16 %v878
      %v967 = vunpack.c.l.b16 %v879
      %v968 = vunpack.c.l.b16 %v880
      %v969 = vunpack.c.l.b16 %v881
      %v970 = vunpack.c.l.b16 %v882
      %v971 = vunpack.c.l.b16 %v883
      %v972 = vunpack.c.l.b16 %v884
      %v973 = vunpack.c.l.b16 %v885
      %v974 = vunpack.c.l.b16 %v886
      %v975 = vunpack.c.l.b16 %v887
      %v976 = vunpack.c.l.b16 %v888
      %v977 = vunpack.c.l.b16 %v889
      %v978 = vunpack.c.l.b16 %v890
      %v979 = vunpack.c.l.b16 %v891
      %v980 = vunpack.c.l.b16 %v892
      %v981 = vunpack.c.l.b16 %v893
      %v982 = vunpack.c.l.b16 %v894
      %v983 = vunpack.c.l.b16 %v895
      %v984 = vpack.c.b16 %v953, %v952
      %v985 = vpack.c.b16 %v955, %v954
      %v986 = vpack.c.b16 %v957, %v956
      %v987 = vpack.c.b16 %v959, %v958
      %v988 = vpack.c.b16 %v961, %v960
      %v989 = vpack.c.b16 %v963, %v962
      %v990 = vpack.c.b16 %v965, %v964
      %v991 = vpack.c.b16 %v967, %v966
      %v992 = vpack.c.b16 %v969, %v968
      %v993 = vpack.c.b16 %v971, %v970
      %v994 = vpack.c.b16 %v973, %v972
      %v995 = vpack.c.b16 %v975, %v974
      %v996 = vpack.c.b16 %v977, %v976
      %v997 = vpack.c.b16 %v979, %v978
      %v998 = vpack.c.b16 %v981, %v980
      %v999 = vpack.c.b16 %v983, %v982
      %1016 = vmatprep.subr.bf16.mxu0 0
      %1017 = vmatpush1.bf16.msra.mxu0 %v991
      %1018 = vmatprep.subr.bf16.mxu0 0
      %1019 = vmatpush1.bf16.msra.mxu0 %v990
      %1020 = vmatprep.subr.bf16.mxu0 0
      %1021 = vmatpush1.bf16.msra.mxu0 %v989
      %1022 = vmatprep.subr.bf16.mxu0 0
      %1023 = vmatpush1.bf16.msra.mxu0 %v988
      %1024 = vmatprep.subr.bf16.mxu0 0
      %1025 = vmatpush1.bf16.msra.mxu0 %v987
      %1026 = vmatprep.subr.bf16.mxu0 0
      %1027 = vmatpush1.bf16.msra.mxu0 %v986
      %1028 = vmatprep.subr.bf16.mxu0 0
      %1029 = vmatpush1.bf16.msra.mxu0 %v985
      %1030 = vmatprep.subr.bf16.mxu0 0
      %1031 = vmatpush1.bf16.msra.mxu0 %v984
      %1032 = vmatprep.subr.bf16.mxu0 0
      %1033 = vmatpush2.bf16.msra.mxu0 %v999
      %1034 = vmatprep.subr.bf16.mxu0 0
      %1035 = vmatpush2.bf16.msra.mxu0 %v998
      %1036 = vmatprep.subr.bf16.mxu0 0
      %1037 = vmatpush2.bf16.msra.mxu0 %v997
      %1038 = vmatprep.subr.bf16.mxu0 0
      %1039 = vmatpush2.bf16.msra.mxu0 %v996
      %1040 = vmatprep.subr.bf16.mxu0 0
      %1041 = vmatpush2.bf16.msra.mxu0 %v995
      %1042 = vmatprep.subr.bf16.mxu0 0
      %1043 = vmatpush2.bf16.msra.mxu0 %v994
      %1044 = vmatprep.subr.bf16.mxu0 0
      %1045 = vmatpush2.bf16.msra.mxu0 %v993
      %1046 = vmatprep.subr.bf16.mxu0 0
      %1047 = vmatpush2.bf16.msra.mxu0 %v992
      %1048 = vmatprep.mubr.bf16.mxu0 %v917
      %1049 = vmatmul.mubr.bf16.gmra.mxu0 %v916
      %v1050 = vpop.f32.mrf.mxu0
      %v1051 = vadd.f32 0.0, %v1050
      %v1052 = vpop.f32.mrf.mxu0
      %v1053 = vpop.f32.mrf.mxu0
      %v1054 = vadd.f32 0.0, %v1053
      %v1055 = vpop.f32.mrf.mxu0
      %1056 = vdwg.mxu0
      %v1061 = vcombine.low %v824, %v825
      %v1062 = vcombine.low %v826, %v827
      %v1064 = vunpack.c.l.s4 1983009808
      %v1065 = vunpack.c.0.s8 %v1064
      %v1066 = vlaneseq
      %v1067 = vshrl.u32 %v1066, 7
      %v1068 = vsub.s32 %v1065, %v1067
      %v1069 = vrot.slane %v1061, %v1068
      %v1071 = vunpack.c.l.s4 1983009808
      %v1072 = vunpack.c.0.s8 %v1071
      %v1073 = vlaneseq
      %v1074 = vshrl.u32 %v1073, 7
      %v1075 = vsub.s32 %v1072, %v1074
      %v1076 = vrot.slane %v1062, %v1075
      %v1077 = vcombine.low %v1069, %v1076
      %v1078 = vcombine.high %v1069, %v1076
      %v1113 = vunpack.c.l.b16 %v828
      %v1114 = vunpack.c.l.b16 %v829
      %v1115 = vunpack.c.l.b16 %v830
      %v1116 = vunpack.c.l.b16 %v831
      %v1117 = vunpack.c.l.b16 %v832
      %v1118 = vunpack.c.l.b16 %v833
      %v1119 = vunpack.c.l.b16 %v834
      %v1120 = vunpack.c.l.b16 %v835
      %v1121 = vunpack.c.l.b16 %v836
      %v1122 = vunpack.c.l.b16 %v837
      %v1123 = vunpack.c.l.b16 %v838
      %v1124 = vunpack.c.l.b16 %v839
      %v1125 = vunpack.c.l.b16 %v840
      %v1126 = vunpack.c.l.b16 %v841
      %v1127 = vunpack.c.l.b16 %v842
      %v1128 = vunpack.c.l.b16 %v843
      %v1129 = vunpack.c.l.b16 %v844
      %v1130 = vunpack.c.l.b16 %v845
      %v1131 = vunpack.c.l.b16 %v846
      %v1132 = vunpack.c.l.b16 %v847
      %v1133 = vunpack.c.l.b16 %v848
      %v1134 = vunpack.c.l.b16 %v849
      %v1135 = vunpack.c.l.b16 %v850
      %v1136 = vunpack.c.l.b16 %v851
      %v1137 = vunpack.c.l.b16 %v852
      %v1138 = vunpack.c.l.b16 %v853
      %v1139 = vunpack.c.l.b16 %v854
      %v1140 = vunpack.c.l.b16 %v855
      %v1141 = vunpack.c.l.b16 %v856
      %v1142 = vunpack.c.l.b16 %v857
      %v1143 = vunpack.c.l.b16 %v858
      %v1144 = vunpack.c.l.b16 %v859
      %v1145 = vpack.c.b16 %v1114, %v1113
      %v1146 = vpack.c.b16 %v1116, %v1115
      %v1147 = vpack.c.b16 %v1118, %v1117
      %v1148 = vpack.c.b16 %v1120, %v1119
      %v1149 = vpack.c.b16 %v1122, %v1121
      %v1150 = vpack.c.b16 %v1124, %v1123
      %v1151 = vpack.c.b16 %v1126, %v1125
      %v1152 = vpack.c.b16 %v1128, %v1127
      %v1153 = vpack.c.b16 %v1130, %v1129
      %v1154 = vpack.c.b16 %v1132, %v1131
      %v1155 = vpack.c.b16 %v1134, %v1133
      %v1156 = vpack.c.b16 %v1136, %v1135
      %v1157 = vpack.c.b16 %v1138, %v1137
      %v1158 = vpack.c.b16 %v1140, %v1139
      %v1159 = vpack.c.b16 %v1142, %v1141
      %v1160 = vpack.c.b16 %v1144, %v1143
      %1177 = vmatprep.subr.bf16.mxu0 0
      %1178 = vmatpush1.bf16.msra.mxu0 %v1152
      %1179 = vmatprep.subr.bf16.mxu0 0
      %1180 = vmatpush1.bf16.msra.mxu0 %v1151
      %1181 = vmatprep.subr.bf16.mxu0 0
      %1182 = vmatpush1.bf16.msra.mxu0 %v1150
      %1183 = vmatprep.subr.bf16.mxu0 0
      %1184 = vmatpush1.bf16.msra.mxu0 %v1149
      %1185 = vmatprep.subr.bf16.mxu0 0
      %1186 = vmatpush1.bf16.msra.mxu0 %v1148
      %1187 = vmatprep.subr.bf16.mxu0 0
      %1188 = vmatpush1.bf16.msra.mxu0 %v1147
      %1189 = vmatprep.subr.bf16.mxu0 0
      %1190 = vmatpush1.bf16.msra.mxu0 %v1146
      %1191 = vmatprep.subr.bf16.mxu0 0
      %1192 = vmatpush1.bf16.msra.mxu0 %v1145
      %1193 = vmatprep.subr.bf16.mxu0 0
      %1194 = vmatpush2.bf16.msra.mxu0 %v1160
      %1195 = vmatprep.subr.bf16.mxu0 0
      %1196 = vmatpush2.bf16.msra.mxu0 %v1159
      %1197 = vmatprep.subr.bf16.mxu0 0
      %1198 = vmatpush2.bf16.msra.mxu0 %v1158
      %1199 = vmatprep.subr.bf16.mxu0 0
      %1200 = vmatpush2.bf16.msra.mxu0 %v1157
      %1201 = vmatprep.subr.bf16.mxu0 0
      %1202 = vmatpush2.bf16.msra.mxu0 %v1156
      %1203 = vmatprep.subr.bf16.mxu0 0
      %1204 = vmatpush2.bf16.msra.mxu0 %v1155
      %1205 = vmatprep.subr.bf16.mxu0 0
      %1206 = vmatpush2.bf16.msra.mxu0 %v1154
      %1207 = vmatprep.subr.bf16.mxu0 0
      %1208 = vmatpush2.bf16.msra.mxu0 %v1153
      %1209 = vmatprep.mubr.bf16.mxu0 %v1078
      %1210 = vmatmul.mubr.bf16.gmra.mxu0 %v1077
      %v1211 = vpop.f32.mrf.mxu0
      %v1212 = vadd.f32 %v1051, %v1211
      %v1213 = vpop.f32.mrf.mxu0
      %v1214 = vpop.f32.mrf.mxu0
      %v1215 = vadd.f32 %v1054, %v1214
      %v1216 = vpop.f32.mrf.mxu0
      %1217 = vdwg.mxu0
      %v1218 = vld [vmem:[#allocation2 + $0x8] sm:$0x3]
      %v1219 = vld [vmem:[#allocation2 + $0x12] sm:$0x3]
      %v1220 = vld [vmem:[#allocation2 + $0x1c] sm:$0x3]
      %v1221 = vld [vmem:[#allocation2 + $0x26] sm:$0x3]
      %v1222 = vld [vmem:[%s1 + $0x100] sm:$0xf]
      %v1223 = vld [vmem:[%s1 + $0x104] sm:$0xf]
      %v1224 = vld [vmem:[%s1 + $0x108] sm:$0xf]
      %v1225 = vld [vmem:[%s1 + $0x10c] sm:$0xf]
      %v1226 = vld [vmem:[%s1 + $0x110] sm:$0xf]
      %v1227 = vld [vmem:[%s1 + $0x114] sm:$0xf]
      %v1228 = vld [vmem:[%s1 + $0x118] sm:$0xf]
      %v1229 = vld [vmem:[%s1 + $0x11c] sm:$0xf]
      %v1234 = vcombine.low %v1218, %v1219
      %v1235 = vcombine.low %v1220, %v1221
      %v1237 = vunpack.c.l.s4 1983009808
      %v1238 = vunpack.c.0.s8 %v1237
      %v1239 = vlaneseq
      %v1240 = vshrl.u32 %v1239, 7
      %v1241 = vsub.s32 %v1238, %v1240
      %v1242 = vrot.slane %v1234, %v1241
      %v1244 = vunpack.c.l.s4 1983009808
      %v1245 = vunpack.c.0.s8 %v1244
      %v1246 = vlaneseq
      %v1247 = vshrl.u32 %v1246, 7
      %v1248 = vsub.s32 %v1245, %v1247
      %v1249 = vrot.slane %v1235, %v1248
      %v1250 = vcombine.low %v1242, %v1249
      %v1259 = vunpack.c.l.b16 %v1222
      %v1260 = vunpack.c.l.b16 %v1223
      %v1261 = vunpack.c.l.b16 %v1224
      %v1262 = vunpack.c.l.b16 %v1225
      %v1263 = vunpack.c.l.b16 %v1226
      %v1264 = vunpack.c.l.b16 %v1227
      %v1265 = vunpack.c.l.b16 %v1228
      %v1266 = vunpack.c.l.b16 %v1229
      %v1267 = vpack.c.b16 %v1260, %v1259
      %v1268 = vpack.c.b16 %v1262, %v1261
      %v1269 = vpack.c.b16 %v1264, %v1263
      %v1270 = vpack.c.b16 %v1266, %v1265
      %vm1275 = vcmask 523264
      %v1277 = vsel %vm1275, %v1250, 0
      %1279 = vmatprep.subr.bf16.mxu0 0
      %1280 = vmatpush1.bf16.msra.mxu0 0
      %1281 = vmatprep.subr.bf16.mxu0 0
      %1282 = vmatpush1.bf16.msra.mxu0 0
      %1283 = vmatprep.subr.bf16.mxu0 0
      %1284 = vmatpush1.bf16.msra.mxu0 0
      %1285 = vmatprep.subr.bf16.mxu0 0
      %1286 = vmatpush1.bf16.msra.mxu0 0
      %1287 = vmatprep.subr.bf16.mxu0 0
      %1288 = vmatpush1.bf16.msra.mxu0 %v1270
      %1289 = vmatprep.subr.bf16.mxu0 0
      %1290 = vmatpush1.bf16.msra.mxu0 %v1269
      %1291 = vmatprep.subr.bf16.mxu0 0
      %1292 = vmatpush1.bf16.msra.mxu0 %v1268
      %1293 = vmatprep.subr.bf16.mxu0 0
      %1294 = vmatpush1.bf16.msra.mxu0 %v1267
      %1295 = vmatprep.subr.bf16.mxu0 0
      %1296 = vmatpush2.bf16.msra.mxu0 0
      %1297 = vmatprep.subr.bf16.mxu0 0
      %1298 = vmatpush2.bf16.msra.mxu0 0
      %1299 = vmatprep.subr.bf16.mxu0 0
      %1300 = vmatpush2.bf16.msra.mxu0 0
      %1301 = vmatprep.subr.bf16.mxu0 0
      %1302 = vmatpush2.bf16.msra.mxu0 0
      %1303 = vmatprep.subr.bf16.mxu0 0
      %1304 = vmatpush2.bf16.msra.mxu0 0
      %1305 = vmatprep.subr.bf16.mxu0 0
      %1306 = vmatpush2.bf16.msra.mxu0 0
      %1307 = vmatprep.subr.bf16.mxu0 0
      %1308 = vmatpush2.bf16.msra.mxu0 0
      %1309 = vmatprep.subr.bf16.mxu0 0
      %1310 = vmatpush2.bf16.msra.mxu0 0
      %1311 = vmatprep.mubr.bf16.mxu0 0
      %1312 = vmatmul.mubr.bf16.gmra.mxu0 %v1277
      %v1313 = vpop.f32.mrf.mxu0
      %v1314 = vadd.f32 0.0, %v1313
      %v1315 = vpop.f32.mrf.mxu0
      %v1316 = vpop.f32.mrf.mxu0
      %v1317 = vadd.f32 0.0, %v1316
      %v1318 = vpop.f32.mrf.mxu0
      %1319 = vdwg.mxu0
      %v1320 = vadd.f32 %v1212, %v1314
      %v1321 = vadd.f32 %v1215, %v1317
      %v1322 = vld [vmem:[%s2] sm:$0x1]
      %v1324 = vlaneseq
      %v1325 = vshrl.u32 %v1324, 7
      %v1326 = vsub.s32 0, %v1325
      %v1327 = vrot.slane %v1322, %v1326
      %v1329 = vadd.f32 %v1320, %v1327
      %v1330 = vadd.f32 %v1321, %v1327
      %v1333 = vcombine.high %v1329, %v1329
      %v1334 = vcombine.high %v1330, %v1330
      %v1337 = vpack.c.bf16 %v1329, %v1329
      %v1338 = vpack.c.bf16 %v1333, %v1333
      %v1339 = vpack.c.bf16 %v1330, %v1330
      %v1340 = vpack.c.bf16 %v1334, %v1334
      %1341 = vst [vmem:[%s204] sm:$0x3] %v1337
      %1342 = vst [vmem:[%s204 + $0x2] sm:$0x3] %v1338
      %1343 = vst [vmem:[%s204 + $0x4] sm:$0x3] %v1339
      %1344 = vst [vmem:[%s204 + $0x6] sm:$0x3] %v1340
      %v1345 = vadd.f32 %v1329, %v1330
      %v1346 = vrot.slane %v1345, 4
      %v1347 = vadd.f32 %v1345, %v1346
      %v1348 = vrot.slane %v1347, 2
      %v1349 = vadd.f32 %v1347, %v1348
      %v1350 = vrot.slane %v1349, 1
      %v1351 = vadd.f32 %v1349, %v1350
      %v1352 = vmul.f32 %v1329, %v1329
      %v1353 = vmul.f32 %v1330, %v1330
      %v1354 = vadd.f32 %v1352, %v1353
      %v1355 = vrot.slane %v1354, 4
      %v1356 = vadd.f32 %v1354, %v1355
      %v1357 = vrot.slane %v1356, 2
      %v1358 = vadd.f32 %v1356, %v1357
      %v1359 = vrot.slane %v1358, 1
      %v1360 = vadd.f32 %v1358, %v1359
      %vm1361 = vcmask 1040384
      %v1362 = vsel %vm1361, %v1351, %v1360
      %1363 = vst [vmem:[%s208] sm:$0x3] %v1362
      %p1364 = scmp.lt.s32.totalorder %s16, 1
      %s1365 = scalar_select %p1364, %s16, 1
      %s1366 = smul.addr %s1365, 4
      %s1367 = smul.addr %s1366, 2
      %s1368 = scalar_lea.vmem %s3, %s1367
      %p1369 = scmp.lt.s32.totalorder %s16, 1
      %s1370 = scalar_select %p1369, %s16, 1
      %s1371 = smul.addr %s1370, 2
      %s1372 = scalar_lea.vmem %s4, %s1371
      // Predicated region
      $region33: #{resnet_forward.17} parent=31 // pred_check
        %p1373 = pneg %p102
      $region34: #{resnet_forward.17} parent=31 // pred_check_branch
        %1375 = sbr.rel (%p1373) target = $region36
      $region35: #{resnet_forward.17} parent=31 // pred_region
        _
      $region36: #{resnet_forward.17} parent=31 // pred_fallthru
        _
      // Predicated region
      $region37: #{resnet_forward.17} parent=31 // pred_check
        %p1376 = pneg %p128
      $region38: #{resnet_forward.17} parent=31 // pred_check_branch
        %1378 = sbr.rel (%p1376) target = $region40
      $region39: #{resnet_forward.17} parent=31 // pred_region
        _
      $region40: #{resnet_forward.17} parent=31 // pred_fallthru
        _
    $region32: #{resnet_forward.17} parent=5 // pred_fallthru
      _
    %p1379 = scmp.le.s32.totalorder 2, %s11
    // Predicated region
    $region41: #{resnet_forward.17} parent=5 // pred_check
      %p1380 = pneg %p1379
    $region42: #{resnet_forward.17} parent=5 // pred_check_branch
      %1382 = sbr.rel (%p1380) target = $region44
    $region43: #{resnet_forward.17} parent=5 // pred_region
      %s1383 = ssub.s32 %s11, 2
      // Predicated region
      $region45: #{resnet_forward.17} parent=43 // pred_check
        %p1384 = pneg %p108
      $region46: #{resnet_forward.17} parent=43 // pred_check_branch
        %1386 = sbr.rel (%p1384) target = $region48
      $region47: #{resnet_forward.17} parent=43 // pred_region
        %p1387 = scmp.lt.s32.totalorder %s17, 1
        %s1388 = scalar_select %p1387, %s17, 1
        %s1389 = smul.addr %s1388, 4
        %s1390 = smul.addr %s1389, 2
        %s1391 = scalar_lea.vmem %s3, %s1390
      $region48: #{resnet_forward.17} parent=43 // pred_fallthru
        _
      // Predicated region
      $region49: #{resnet_forward.17} parent=43 // pred_check
        %p1392 = pneg %p134
      $region50: #{resnet_forward.17} parent=43 // pred_check_branch
        %1394 = sbr.rel (%p1392) target = $region52
      $region51: #{resnet_forward.17} parent=43 // pred_region
        %p1395 = scmp.lt.s32.totalorder %s17, 1
        %s1396 = scalar_select %p1395, %s17, 1
        %s1397 = smul.addr %s1396, 2
        %s1398 = scalar_lea.vmem %s4, %s1397
      $region52: #{resnet_forward.17} parent=43 // pred_fallthru
        _
    $region44: #{resnet_forward.17} parent=5 // pred_fallthru
      _
  $region6: #{resnet_forward.17} parent=0 // loop_footer
    %s15 = sadd.s32 1, %s11
  $region7: #{resnet_forward.17} parent=0 // loop_footer_branch
    %10 = sbr.rel target = $region3
  $region8: #{resnet_forward.17} parent=0 // loop_exit
    _

// kernel: resnet_forward.24
$region0: #{resnet_forward.24}
  #allocation0 [shape = 'u32[]', space=smem, size = 0x4, offset = 0x4, fixed_abs, tag = 'smem constant byte address 0x4 - core index']
  #allocation1 [shape = 'u32[144,128]{1,0:T(1,128)}', space=vmem, size = 0x12000, scoped, tag = 'internal scratch']
  %s0 = inlined_call_operand.vmem [shape: bf16[2,4,4,128], index: 0, kind: input, shape index: {}]
  %s1 = inlined_call_operand.vmem [shape: f32[2,2,128], index: 1, kind: input, shape index: {}]
  %s2 = inlined_call_operand.vmem [shape: f32[1,128], index: 2, kind: input, shape index: {}]
  %s3 = inlined_call_operand.vmem [shape: f32[1,128], index: 3, kind: input, shape index: {}]
  %s4 = inlined_call_operand.vmem [shape: bf16[2,6,8,128], index: 4, kind: input, shape index: {}]
  %s5 = inlined_call_operand.vmem [shape: bf16[2,6,8,128], index: 5, kind: output, shape index: {}]
  %s6 = sld [smem:[#allocation0]]
  $region53: #{resnet_forward.24} parent=0
    _
  %s8 = ssub.s32 1, %s6
  %s9 = scalar_select 0, %s8, %s6
  loop: start=0, step=1, limit=4
  $region2: #{resnet_forward.24} parent=0 // loop_pre_header
    _
  $region3: #{resnet_forward.24} parent=0 // loop_header
    %s11 = sphi 0, %s15
    %p12 = scmp.ge.s32.totalorder %s11, 4
    %s21 = sphi 0, %s23
    %s24 = sphi 0, %s21
    %s25 = sphi 0, %s24
    %s41 = sphi 0, %s25
    %s45 = sphi 0, %s45
    %s47 = sphi 0, %s45
    %s48 = sphi 0, %s47
    %s62 = sphi 0, %s48
    %s66 = sphi 0, %s66
    %s68 = sphi 0, %s66
    %s69 = sphi 0, %s68
    %s83 = sphi 0, %s69
    %s87 = sphi 0, %s87
    %s89 = sphi 0, %s87
    %s90 = sphi 0, %s89
    %s104 = sphi 0, %s90
    %s110 = sphi 0, %s112
    %s113 = sphi 0, %s110
    %s114 = sphi 0, %s113
    %s130 = sphi 0, %s114
    %s136 = sphi 0, %s138
    %s139 = sphi 0, %s136
    %s140 = sphi 0, %s139
    %s156 = sphi 0, %s140
  $region4: #{resnet_forward.24} parent=0 // loop_header_branch
    %14 = sbr.rel (%p12) target = $region8
  $region5: #{resnet_forward.24} parent=0 // loop_body
    %s16 = ssub.s32 %s11, 1
    %s17 = ssub.s32 %s11, 2
    %s18 = sadd.s32 %s11, 1
    %s19 = ssub.s32 %s11, %s18
    %p20 = scmp.eq.s32.totalorder %s19, 0
    %s22 = sadd.s32 %s21, 1
    %s23 = scalar_select %p20, %s21, %s22
    %p26 = pneg %p20
    %p27 = scmp.eq.s32.totalorder %s11, 1
    %p28 = por %p26, %p27
    %p29 = scmp.ne.s32.totalorder %s21, %s24
    %p30 = scmp.eq.s32.totalorder %s11, 0
    %p31 = por %p29, %p30
    %p32 = scmp.ne.s32.totalorder %s21, %s24
    %p33 = scmp.eq.s32.totalorder %s16, 1
    %p34 = por %p32, %p33
    %p35 = scmp.ne.s32.totalorder %s24, %s25
    %p36 = scmp.eq.s32.totalorder %s16, 0
    %p37 = por %p35, %p36
    %p38 = scmp.ne.s32.totalorder %s24, %s25
    %p39 = scmp.eq.s32.totalorder %s17, 1
    %p40 = por %p38, %p39
    %p42 = scmp.ne.s32.totalorder %s25, %s41
    %p43 = scmp.eq.s32.totalorder %s17, 0
    %p44 = por %p42, %p43
    %s46 = sadd.s32 %s45, 1
    %p49 = scmp.eq.s32.totalorder %s11, 1
    %p50 = scmp.ne.s32.totalorder %s45, %s47
    %p51 = scmp.eq.s32.totalorder %s11, 0
    %p52 = por %p50, %p51
    %p53 = scmp.ne.s32.totalorder %s45, %s47
    %p54 = scmp.eq.s32.totalorder %s16, 1
    %p55 = por %p53, %p54
    %p56 = scmp.ne.s32.totalorder %s47, %s48
    %p57 = scmp.eq.s32.totalorder %s16, 0
    %p58 = por %p56, %p57
    %p59 = scmp.ne.s32.totalorder %s47, %s48
    %p60 = scmp.eq.s32.totalorder %s17, 1
    %p61 = por %p59, %p60
    %p63 = scmp.ne.s32.totalorder %s48, %s62
    %p64 = scmp.eq.s32.totalorder %s17, 0
    %p65 = por %p63, %p64
    %s67 = sadd.s32 %s66, 1
    %p70 = scmp.eq.s32.totalorder %s11, 1
    %p71 = scmp.ne.s32.totalorder %s66, %s68
    %p72 = scmp.eq.s32.totalorder %s11, 0
    %p73 = por %p71, %p72
    %p74 = scmp.ne.s32.totalorder %s66, %s68
    %p75 = scmp.eq.s32.totalorder %s16, 1
    %p76 = por %p74, %p75
    %p77 = scmp.ne.s32.totalorder %s68, %s69
    %p78 = scmp.eq.s32.totalorder %s16, 0
    %p79 = por %p77, %p78
    %p80 = scmp.ne.s32.totalorder %s68, %s69
    %p81 = scmp.eq.s32.totalorder %s17, 1
    %p82 = por %p80, %p81
    %p84 = scmp.ne.s32.totalorder %s69, %s83
    %p85 = scmp.eq.s32.totalorder %s17, 0
    %p86 = por %p84, %p85
    %s88 = sadd.s32 %s87, 1
    %p91 = scmp.eq.s32.totalorder %s11, 1
    %p92 = scmp.ne.s32.totalorder %s87, %s89
    %p93 = scmp.eq.s32.totalorder %s11, 0
    %p94 = por %p92, %p93
    %p95 = scmp.ne.s32.totalorder %s87, %s89
    %p96 = scmp.eq.s32.totalorder %s16, 1
    %p97 = por %p95, %p96
    %p98 = scmp.ne.s32.totalorder %s89, %s90
    %p99 = scmp.eq.s32.totalorder %s16, 0
    %p100 = por %p98, %p99
    %p101 = scmp.ne.s32.totalorder %s89, %s90
    %p102 = scmp.eq.s32.totalorder %s17, 1
    %p103 = por %p101, %p102
    %p105 = scmp.ne.s32.totalorder %s90, %s104
    %p106 = scmp.eq.s32.totalorder %s17, 0
    %p107 = por %p105, %p106
    %s108 = ssub.s32 %s11, %s18
    %p109 = scmp.eq.s32.totalorder %s108, 0
    %s111 = sadd.s32 %s110, 1
    %s112 = scalar_select %p109, %s110, %s111
    %p115 = pneg %p109
    %p116 = scmp.eq.s32.totalorder %s11, 1
    %p117 = por %p115, %p116
    %p118 = scmp.ne.s32.totalorder %s110, %s113
    %p119 = scmp.eq.s32.totalorder %s11, 0
    %p120 = por %p118, %p119
    %p121 = scmp.ne.s32.totalorder %s110, %s113
    %p122 = scmp.eq.s32.totalorder %s16, 1
    %p123 = por %p121, %p122
    %p124 = scmp.ne.s32.totalorder %s113, %s114
    %p125 = scmp.eq.s32.totalorder %s16, 0
    %p126 = por %p124, %p125
    %p127 = scmp.ne.s32.totalorder %s113, %s114
    %p128 = scmp.eq.s32.totalorder %s17, 1
    %p129 = por %p127, %p128
    %p131 = scmp.ne.s32.totalorder %s114, %s130
    %p132 = scmp.eq.s32.totalorder %s17, 0
    %p133 = por %p131, %p132
    %s134 = ssub.s32 %s11, %s18
    %p135 = scmp.eq.s32.totalorder %s134, 0
    %s137 = sadd.s32 %s136, 1
    %s138 = scalar_select %p135, %s136, %s137
    %p141 = pneg %p135
    %p142 = scmp.eq.s32.totalorder %s11, 1
    %p143 = por %p141, %p142
    %p144 = scmp.ne.s32.totalorder %s136, %s139
    %p145 = scmp.eq.s32.totalorder %s11, 0
    %p146 = por %p144, %p145
    %p147 = scmp.ne.s32.totalorder %s136, %s139
    %p148 = scmp.eq.s32.totalorder %s16, 1
    %p149 = por %p147, %p148
    %p150 = scmp.ne.s32.totalorder %s139, %s140
    %p151 = scmp.eq.s32.totalorder %s16, 0
    %p152 = por %p150, %p151
    %p153 = scmp.ne.s32.totalorder %s139, %s140
    %p154 = scmp.eq.s32.totalorder %s17, 1
    %p155 = por %p153, %p154
    %p157 = scmp.ne.s32.totalorder %s140, %s156
    %p158 = scmp.eq.s32.totalorder %s17, 0
    %p159 = por %p157, %p158
    %p160 = scmp.le.s32.totalorder 1, %s11
    %p161 = scmp.lt.s32.totalorder %s11, 3
    %p162 = pnand %p160, %p161
    %p163 = pneg %p162
    // Predicated region
    $region9: #{resnet_forward.24} parent=5 // pred_check
      _
    $region10: #{resnet_forward.24} parent=5 // pred_check_branch
      %165 = sbr.rel (%p162) target = $region12
    $region11: #{resnet_forward.24} parent=5 // pred_region
      %s166 = ssub.s32 %s11, 1
      // Predicated region
      $region13: #{resnet_forward.24} parent=11 // pred_check
        %p167 = pneg %p58
      $region14: #{resnet_forward.24} parent=11 // pred_check_branch
        %169 = sbr.rel (%p167) target = $region16
      $region15: #{resnet_forward.24} parent=11 // pred_region
        _
      $region16: #{resnet_forward.24} parent=11 // pred_fallthru
        _
      // Predicated region
      $region17: #{resnet_forward.24} parent=11 // pred_check
        %p170 = pneg %p79
      $region18: #{resnet_forward.24} parent=11 // pred_check_branch
        %172 = sbr.rel (%p170) target = $region20
      $region19: #{resnet_forward.24} parent=11 // pred_region
        _
      $region20: #{resnet_forward.24} parent=11 // pred_fallthru
        _
      // Predicated region
      $region21: #{resnet_forward.24} parent=11 // pred_check
        %p173 = pneg %p100
      $region22: #{resnet_forward.24} parent=11 // pred_check_branch
        %175 = sbr.rel (%p173) target = $region24
      $region23: #{resnet_forward.24} parent=11 // pred_region
        _
      $region24: #{resnet_forward.24} parent=11 // pred_fallthru
        _
    $region12: #{resnet_forward.24} parent=5 // pred_fallthru
      _
    %p176 = scmp.lt.s32.totalorder %s11, 2
    // Predicated region
    $region25: #{resnet_forward.24} parent=5 // pred_check
      %p177 = pneg %p176
    $region26: #{resnet_forward.24} parent=5 // pred_check_branch
      %179 = sbr.rel (%p177) target = $region28
    $region27: #{resnet_forward.24} parent=5 // pred_region
      // Predicated region
      $region29: #{resnet_forward.24} parent=27 // pred_check
        %p180 = pneg %p31
      $region30: #{resnet_forward.24} parent=27 // pred_check_branch
        %182 = sbr.rel (%p180) target = $region32
      $region31: #{resnet_forward.24} parent=27 // pred_region
        %p183 = scmp.lt.s32.totalorder %s11, 1
        %s184 = scalar_select %p183, %s11, 1
        %s185 = smul.addr %s184, 4
        %s186 = smul.addr %s185, 2
        %s187 = scalar_lea.vmem %s0, %s186
      $region32: #{resnet_forward.24} parent=27 // pred_fallthru
        _
      // Predicated region
      $region33: #{resnet_forward.24} parent=27 // pred_check
        %p188 = pneg %p120
      $region34: #{resnet_forward.24} parent=27 // pred_check_branch
        %190 = sbr.rel (%p188) target = $region36
      $region35: #{resnet_forward.24} parent=27 // pred_region
        %p191 = scmp.lt.s32.totalorder %s11, 1
        %s192 = scalar_select %p191, %s11, 1
        %s193 = smul.addr %s192, 6
        %s194 = smul.addr %s193, 4
        %s195 = scalar_lea.vmem %s4, %s194
      $region36: #{resnet_forward.24} parent=27 // pred_fallthru
        _
    $region28: #{resnet_forward.24} parent=5 // pred_fallthru
      _
    %p196 = scmp.le.s32.totalorder 1, %s11
    %p197 = scmp.lt.s32.totalorder %s11, 3
    %p198 = pnand %p196, %p197
    %p199 = pneg %p198
    // Predicated region
    $region37: #{resnet_forward.24} parent=5 // pred_check
      _
    $region38: #{resnet_forward.24} parent=5 // pred_check_branch
      %201 = sbr.rel (%p198) target = $region40
    $region39: #{resnet_forward.24} parent=5 // pred_region
      %s202 = ssub.s32 %s11, 1
      %p203 = scmp.lt.s32.totalorder %s16, 1
      %s204 = scalar_select %p203, %s16, 1
      %s205 = smul.addr %s204, 4
      %s206 = smul.addr %s205, 2
      %s207 = scalar_lea.vmem %s0, %s206
      %p208 = pneg %p37
      %p209 = pneg %p34
      %p210 = pneg %p58
      %p211 = pneg %p55
      %p212 = pneg %p79
      %p213 = pneg %p76
      %p214 = pneg %p100
      %p215 = pneg %p97
      %p216 = scmp.lt.s32.totalorder %s16, 1
      %s217 = scalar_select %p216, %s16, 1
      %s218 = smul.addr %s217, 6
      %s219 = smul.addr %s218, 4
      %s220 = scalar_lea.vmem %s4, %s219
      %p221 = pneg %p126
      %p222 = pneg %p123
      %p223 = pneg %p152
      %p224 = pneg %p149
      %p225 = scmp.lt.s32.totalorder %s16, 1
      %s226 = scalar_select %p225, %s16, 1
      %s227 = smul.addr %s226, 6
      %s228 = smul.addr %s227, 4
      %s229 = scalar_lea.vmem %s5, %s228
      %p230 = scmp.lt.s32.totalorder %s16, 1
      %s231 = scalar_select %p230, %s16, 1
      %s232 = smul.addr %s231, 4
      %s233 = smul.addr %s232, 2
      %s234 = scalar_lea.vmem %s0, %s233
      %p235 = scmp.lt.s32.totalorder %s16, 1
      %s236 = scalar_select %p235, %s16, 1
      %s237 = smul.addr %s236, 6
      %s238 = smul.addr %s237, 4
      %s239 = scalar_lea.vmem %s4, %s238
      %p240 = scmp.lt.s32.totalorder %s16, 1
      %s241 = scalar_select %p240, %s16, 1
      %s242 = smul.addr %s241, 6
      %s243 = smul.addr %s242, 4
      %s244 = scalar_lea.vmem %s5, %s243
      %v246 = vld [vmem:[%s1] sm:$0x3]
      %v247 = vld [vmem:[%s1 + $0x2] sm:$0x3]
      %vm248 = vcmask 1041408
      %v249 = vsel %vm248, %v246, 0.0
      %v250 = vsel %vm248, %v247, 0.0
      %v251 = vadd.f32 %v249, %v250
      %v252 = vmul.f32 %v251, 0.03125
      %v253 = vmul.f32 %v252, %v252
      %v255 = vrot.slane %v253, 7
      %v257 = vsub.f32 %v252, %v255
      %v258 = vld [vmem:[%s2] sm:$0x1]
      %v259 = vadd.f32 %v257, 1e-05
      %v260 = vrsqrt.pop %v259
      %v263 = vunpack.c.l.s4 1966171168
      %v264 = vunpack.c.0.s8 %v263
      %v265 = vlaneseq
      %v266 = vshrl.u32 %v265, 7
      %v267 = vsub.s32 %v264, %v266
      %v268 = vrot.slane %v260, %v267
      %v269 = vcombine.high %v268, %v268
      %v271 = vunpack.c.l.s4 1966171168
      %v272 = vunpack.c.0.s8 %v271
      %v273 = vlaneseq
      %v274 = vshrl.u32 %v273, 7
      %v275 = vsub.s32 %v272, %v274
      %v276 = vrot.slane %v269, %v275
      %v278 = vmul.f32 %v258, %v276
      %v279 = vld [vmem:[%s3] sm:$0x1]
      %v280 = vmul.f32 %v252, %v278
      %v281 = vsub.f32 %v279, %v280
      %v282 = vld [vmem:[%s234] sm:$0x3]
      %v283 = vld [vmem:[%s234 + $0x2] sm:$0x3]
      %v284 = vld [vmem:[%s234 + $0x4] sm:$0x3]
      %v285 = vld [vmem:[%s234 + $0x6] sm:$0x3]
      %v286 = vunpack.c.l.bf16 %v282
      %v287 = vunpack.c.l.bf16 %v283
      %v288 = vunpack.c.l.bf16 %v284
      %v289 = vunpack.c.l.bf16 %v285
      %v291 = vlaneseq
      %v292 = vshrl.u32 %v291, 7
      %v293 = vsub.s32 0, %v292
      %v294 = vrot.slane %v278, %v293
      %v296 = vmul.f32 %v286, %v294
      %v297 = vmul.f32 %v287, %v294
      %v298 = vmul.f32 %v288, %v294
      %v299 = vmul.f32 %v289, %v294
      %v301 = vlaneseq
      %v302 = vshrl.u32 %v301, 7
      %v303 = vsub.s32 0, %v302
      %v304 = vrot.slane %v281, %v303
      %v306 = vadd.f32 %v296, %v304
      %v307 = vadd.f32 %v297, %v304
      %v308 = vadd.f32 %v298, %v304
      %v309 = vadd.f32 %v299, %v304
      %s310 = scalar_lea.vmem %s239, 4
      %v311 = vld [vmem:[%s310] sm:$0x7]
      %v312 = vld [vmem:[%s310 + $0x4] sm:$0x7]
      %v313 = vld [vmem:[%s310 + $0x8] sm:$0x7]
      %v314 = vld [vmem:[%s310 + $0xc] sm:$0x7]
      %v315 = vunpack.c.l.bf16 %v311
      %v316 = vunpack.c.l.bf16 %v312
      %v317 = vunpack.c.l.bf16 %v313
      %v318 = vunpack.c.l.bf16 %v314
      %v323 = vcombine.high %v315, %v315
      %v324 = vcombine.high %v316, %v316
      %v325 = vcombine.high %v317, %v317
      %v326 = vcombine.high %v318, %v318
      %vm327 = vcmask 1042432
      %vm328 = vcmask 1046532
      %vm329 = vmor %vm327, %vm328
      %v330 = vrot.slane %v315, 5
      %v331 = vrot.slane %v330, 4
      %v332 = vrot.slane %v323, 5
      %v333 = vsel %vm329, %v331, %v332
      %v334 = vrot.slane %v316, 5
      %v335 = vrot.slane %v334, 4
      %v336 = vrot.slane %v324, 5
      %v337 = vsel %vm329, %v335, %v336
      %v338 = vrot.slane %v317, 5
      %v339 = vrot.slane %v338, 4
      %v340 = vrot.slane %v325, 5
      %v341 = vsel %vm329, %v339, %v340
      %v342 = vrot.slane %v318, 5
      %v343 = vrot.slane %v342, 4
      %v344 = vrot.slane %v326, 5
      %v345 = vsel %vm329, %v343, %v344
      %v350 = vadd.f32 %v306, %v333
      %v351 = vadd.f32 %v307, %v337
      %v352 = vadd.f32 %v308, %v341
      %v353 = vadd.f32 %v309, %v345
      %v354 = vmax.f32 %v350, 0.0
      %v355 = vmax.f32 %v351, 0.0
      %v356 = vmax.f32 %v352, 0.0
      %v357 = vmax.f32 %v353, 0.0
      %v358 = vpack.c.bf16 %v354, %v354
      %v359 = vpack.c.bf16 %v355, %v355
      %v360 = vpack.c.bf16 %v356, %v356
      %v361 = vpack.c.bf16 %v357, %v357
      %v363 = vshrl.u32 %v358, 16
      %v365 = vrot.slane %v363, 7
      %v366 = vshll.u32 %v358, 16
      %v368 = vor.u32 %v365, %v366
      %v370 = vshrl.u32 %v359, 16
      %v372 = vrot.slane %v370, 7
      %v373 = vshll.u32 %v359, 16
      %v375 = vor.u32 %v372, %v373
      %v377 = vshrl.u32 %v360, 16
      %v379 = vrot.slane %v377, 7
      %v380 = vshll.u32 %v360, 16
      %v382 = vor.u32 %v379, %v380
      %v384 = vshrl.u32 %v361, 16
      %v386 = vrot.slane %v384, 7
      %v387 = vshll.u32 %v361, 16
      %v389 = vor.u32 %v386, %v387
      %vm394 = vcmask 1040384
      %vm395 = vsmask.f32 256
      %vm396 = vmand %vm394, %vm395
      %v397 = vsel %vm396, 0, %v368
      %v398 = vsel %vm396, 0, %v375
      %v399 = vsel %vm396, 0, %v382
      %v400 = vsel %vm396, 0, %v389
      %vm401 = vcmask 1042432
      %vm402 = vsmask.f32 2304
      %vm403 = vmand %vm401, %vm402
      %v404 = vsel %vm403, %v397, 0
      %v405 = vsel %vm403, %v398, 0
      %v406 = vsel %vm403, %v399, 0
      %v407 = vsel %vm403, %v400, 0
      %408 = vst [vmem:[%s244] sm:$0xf] 0
      %409 = vst [vmem:[%s244 + $0x4] sm:$0xf] %v404
      %410 = vst [vmem:[%s244 + $0x8] sm:$0xf] %v405
      %411 = vst [vmem:[%s244 + $0xc] sm:$0xf] %v406
      %412 = vst [vmem:[%s244 + $0x10] sm:$0xf] %v407
      %413 = vst [vmem:[%s244 + $0x14] sm:$0xf] 0
      %p414 = scmp.lt.s32.totalorder %s16, 1
      %s415 = scalar_select %p414, %s16, 1
      %s416 = smul.addr %s415, 6
      %s417 = smul.addr %s416, 4
      %s418 = scalar_lea.vmem %s5, %s417
      // Predicated region
      $region41: #{resnet_forward.24} parent=39 // pred_check
        %p419 = pneg %p149
      $region42: #{resnet_forward.24} parent=39 // pred_check_branch
        %421 = sbr.rel (%p419) target = $region44
      $region43: #{resnet_forward.24} parent=39 // pred_region
        _
      $region44: #{resnet_forward.24} parent=39 // pred_fallthru
        _
    $region40: #{resnet_forward.24} parent=5 // pred_fallthru
      _
    %p422 = scmp.le.s32.totalorder 2, %s11
    // Predicated region
    $region45: #{resnet_forward.24} parent=5 // pred_check
      %p423 = pneg %p422
    $region46: #{resnet_forward.24} parent=5 // pred_check_branch
      %425 = sbr.rel (%p423) target = $region48
    $region47: #{resnet_forward.24} parent=5 // pred_region
      %s426 = ssub.s32 %s11, 2
      // Predicated region
      $region49: #{resnet_forward.24} parent=47 // pred_check
        %p427 = pneg %p155
      $region50: #{resnet_forward.24} parent=47 // pred_check_branch
        %429 = sbr.rel (%p427) target = $region52
      $region51: #{resnet_forward.24} parent=47 // pred_region
        %p430 = scmp.lt.s32.totalorder %s17, 1
        %s431 = scalar_select %p430, %s17, 1
        %s432 = smul.addr %s431, 6
        %s433 = smul.addr %s432, 4
        %s434 = scalar_lea.vmem %s5, %s433
      $region52: #{resnet_forward.24} parent=47 // pred_fallthru
        _
    $region48: #{resnet_forward.24} parent=5 // pred_fallthru
      _
  $region6: #{resnet_forward.24} parent=0 // loop_footer
    %s15 = sadd.s32 1, %s11
  $region7: #{resnet_forward.24} parent=0 // loop_footer_branch
    %10 = sbr.rel target = $region3
  $region8: #{resnet_forward.24} parent=0 // loop_exit
    _

// kernel: resnet_forward.19
$region0: #{resnet_forward.19}
  #allocation0 [shape = 'u32[]', space=smem, size = 0x4, offset = 0x4, fixed_abs, tag = 'smem constant byte address 0x4 - core index']
  #allocation1 [shape = 'u32[144,128]{1,0:T(1,128)}', space=vmem, size = 0x12000, scoped, tag = 'internal scratch']
  #allocation2 [shape = 'bf16[4,4,144]{2,1,0:T(4,128)(2,1)}', space=vmem, size = 0x2000, scoped, tag = 'scratch operand']
  %s0 = inlined_call_operand.vmem [shape: bf16[2,6,8,128], index: 0, kind: input, shape index: {}]
  %s1 = inlined_call_operand.vmem [shape: bf16[144,128], index: 1, kind: input, shape index: {}]
  %s2 = inlined_call_operand.vmem [shape: f32[1,128], index: 2, kind: input, shape index: {}]
  %s3 = inlined_call_operand.vmem [shape: bf16[2,4,4,128], index: 3, kind: output, shape index: {0}]
  %s4 = inlined_call_operand.vmem [shape: f32[2,2,128], index: 4, kind: output, shape index: {1}]
  %5 = xla_tuple %s3, %s4
  %s6 = sld [smem:[#allocation0]]
  $region53: #{resnet_forward.19} parent=0
    _
  %s8 = ssub.s32 1, %s6
  %s9 = scalar_select 0, %s8, %s6
  loop: start=0, step=1, limit=4
  $region2: #{resnet_forward.19} parent=0 // loop_pre_header
    _
  $region3: #{resnet_forward.19} parent=0 // loop_header
    %s11 = sphi 0, %s15
    %p12 = scmp.ge.s32.totalorder %s11, 4
    %s21 = sphi 0, %s23
    %s24 = sphi 0, %s21
    %s25 = sphi 0, %s24
    %s41 = sphi 0, %s25
    %s45 = sphi 0, %s45
    %s47 = sphi 0, %s45
    %s48 = sphi 0, %s47
    %s62 = sphi 0, %s48
    %s66 = sphi 0, %s66
    %s68 = sphi 0, %s66
    %s69 = sphi 0, %s68
    %s83 = sphi 0, %s69
    %s89 = sphi 0, %s91
    %s92 = sphi 0, %s89
    %s93 = sphi 0, %s92
    %s109 = sphi 0, %s93
    %s115 = sphi 0, %s117
    %s118 = sphi 0, %s115
    %s119 = sphi 0, %s118
    %s135 = sphi 0, %s119
  $region4: #{resnet_forward.19} parent=0 // loop_header_branch
    %14 = sbr.rel (%p12) target = $region8
  $region5: #{resnet_forward.19} parent=0 // loop_body
    %s16 = ssub.s32 %s11, 1
    %s17 = ssub.s32 %s11, 2
    %s18 = sadd.s32 %s11, 1
    %s19 = ssub.s32 %s11, %s18
    %p20 = scmp.eq.s32.totalorder %s19, 0
    %s22 = sadd.s32 %s21, 1
    %s23 = scalar_select %p20, %s21, %s22
    %p26 = pneg %p20
    %p27 = scmp.eq.s32.totalorder %s11, 1
    %p28 = por %p26, %p27
    %p29 = scmp.ne.s32.totalorder %s21, %s24
    %p30 = scmp.eq.s32.totalorder %s11, 0
    %p31 = por %p29, %p30
    %p32 = scmp.ne.s32.totalorder %s21, %s24
    %p33 = scmp.eq.s32.totalorder %s16, 1
    %p34 = por %p32, %p33
    %p35 = scmp.ne.s32.totalorder %s24, %s25
    %p36 = scmp.eq.s32.totalorder %s16, 0
    %p37 = por %p35, %p36
    %p38 = scmp.ne.s32.totalorder %s24, %s25
    %p39 = scmp.eq.s32.totalorder %s17, 1
    %p40 = por %p38, %p39
    %p42 = scmp.ne.s32.totalorder %s25, %s41
    %p43 = scmp.eq.s32.totalorder %s17, 0
    %p44 = por %p42, %p43
    %s46 = sadd.s32 %s45, 1
    %p49 = scmp.eq.s32.totalorder %s11, 1
    %p50 = scmp.ne.s32.totalorder %s45, %s47
    %p51 = scmp.eq.s32.totalorder %s11, 0
    %p52 = por %p50, %p51
    %p53 = scmp.ne.s32.totalorder %s45, %s47
    %p54 = scmp.eq.s32.totalorder %s16, 1
    %p55 = por %p53, %p54
    %p56 = scmp.ne.s32.totalorder %s47, %s48
    %p57 = scmp.eq.s32.totalorder %s16, 0
    %p58 = por %p56, %p57
    %p59 = scmp.ne.s32.totalorder %s47, %s48
    %p60 = scmp.eq.s32.totalorder %s17, 1
    %p61 = por %p59, %p60
    %p63 = scmp.ne.s32.totalorder %s48, %s62
    %p64 = scmp.eq.s32.totalorder %s17, 0
    %p65 = por %p63, %p64
    %s67 = sadd.s32 %s66, 1
    %p70 = scmp.eq.s32.totalorder %s11, 1
    %p71 = scmp.ne.s32.totalorder %s66, %s68
    %p72 = scmp.eq.s32.totalorder %s11, 0
    %p73 = por %p71, %p72
    %p74 = scmp.ne.s32.totalorder %s66, %s68
    %p75 = scmp.eq.s32.totalorder %s16, 1
    %p76 = por %p74, %p75
    %p77 = scmp.ne.s32.totalorder %s68, %s69
    %p78 = scmp.eq.s32.totalorder %s16, 0
    %p79 = por %p77, %p78
    %p80 = scmp.ne.s32.totalorder %s68, %s69
    %p81 = scmp.eq.s32.totalorder %s17, 1
    %p82 = por %p80, %p81
    %p84 = scmp.ne.s32.totalorder %s69, %s83
    %p85 = scmp.eq.s32.totalorder %s17, 0
    %p86 = por %p84, %p85
    %s87 = ssub.s32 %s11, %s18
    %p88 = scmp.eq.s32.totalorder %s87, 0
    %s90 = sadd.s32 %s89, 1
    %s91 = scalar_select %p88, %s89, %s90
    %p94 = pneg %p88
    %p95 = scmp.eq.s32.totalorder %s11, 1
    %p96 = por %p94, %p95
    %p97 = scmp.ne.s32.totalorder %s89, %s92
    %p98 = scmp.eq.s32.totalorder %s11, 0
    %p99 = por %p97, %p98
    %p100 = scmp.ne.s32.totalorder %s89, %s92
    %p101 = scmp.eq.s32.totalorder %s16, 1
    %p102 = por %p100, %p101
    %p103 = scmp.ne.s32.totalorder %s92, %s93
    %p104 = scmp.eq.s32.totalorder %s16, 0
    %p105 = por %p103, %p104
    %p106 = scmp.ne.s32.totalorder %s92, %s93
    %p107 = scmp.eq.s32.totalorder %s17, 1
    %p108 = por %p106, %p107
    %p110 = scmp.ne.s32.totalorder %s93, %s109
    %p111 = scmp.eq.s32.totalorder %s17, 0
    %p112 = por %p110, %p111
    %s113 = ssub.s32 %s11, %s18
    %p114 = scmp.eq.s32.totalorder %s113, 0
    %s116 = sadd.s32 %s115, 1
    %s117 = scalar_select %p114, %s115, %s116
    %p120 = pneg %p114
    %p121 = scmp.eq.s32.totalorder %s11, 1
    %p122 = por %p120, %p121
    %p123 = scmp.ne.s32.totalorder %s115, %s118
    %p124 = scmp.eq.s32.totalorder %s11, 0
    %p125 = por %p123, %p124
    %p126 = scmp.ne.s32.totalorder %s115, %s118
    %p127 = scmp.eq.s32.totalorder %s16, 1
    %p128 = por %p126, %p127
    %p129 = scmp.ne.s32.totalorder %s118, %s119
    %p130 = scmp.eq.s32.totalorder %s16, 0
    %p131 = por %p129, %p130
    %p132 = scmp.ne.s32.totalorder %s118, %s119
    %p133 = scmp.eq.s32.totalorder %s17, 1
    %p134 = por %p132, %p133
    %p136 = scmp.ne.s32.totalorder %s119, %s135
    %p137 = scmp.eq.s32.totalorder %s17, 0
    %p138 = por %p136, %p137
    %p139 = scmp.le.s32.totalorder 1, %s11
    %p140 = scmp.lt.s32.totalorder %s11, 3
    %p141 = pnand %p139, %p140
    %p142 = pneg %p141
    // Predicated region
    $region9: #{resnet_forward.19} parent=5 // pred_check
      _
    $region10: #{resnet_forward.19} parent=5 // pred_check_branch
      %144 = sbr.rel (%p141) target = $region12
    $region11: #{resnet_forward.19} parent=5 // pred_region
      %s145 = ssub.s32 %s11, 1
      // Predicated region
      $region13: #{resnet_forward.19} parent=11 // pred_check
        %p146 = pneg %p58
      $region14: #{resnet_forward.19} parent=11 // pred_check_branch
        %148 = sbr.rel (%p146) target = $region16
      $region15: #{resnet_forward.19} parent=11 // pred_region
        _
      $region16: #{resnet_forward.19} parent=11 // pred_fallthru
        _
      // Predicated region
      $region17: #{resnet_forward.19} parent=11 // pred_check
        %p149 = pneg %p79
      $region18: #{resnet_forward.19} parent=11 // pred_check_branch
        %151 = sbr.rel (%p149) target = $region20
      $region19: #{resnet_forward.19} parent=11 // pred_region
        _
      $region20: #{resnet_forward.19} parent=11 // pred_fallthru
        _
    $region12: #{resnet_forward.19} parent=5 // pred_fallthru
      _
    %p152 = scmp.lt.s32.totalorder %s11, 2
    // Predicated region
    $region21: #{resnet_forward.19} parent=5 // pred_check
      %p153 = pneg %p152
    $region22: #{resnet_forward.19} parent=5 // pred_check_branch
      %155 = sbr.rel (%p153) target = $region24
    $region23: #{resnet_forward.19} parent=5 // pred_region
      // Predicated region
      $region25: #{resnet_forward.19} parent=23 // pred_check
        %p156 = pneg %p31
      $region26: #{resnet_forward.19} parent=23 // pred_check_branch
        %158 = sbr.rel (%p156) target = $region28
      $region27: #{resnet_forward.19} parent=23 // pred_region
        %p159 = scmp.lt.s32.totalorder %s11, 1
        %s160 = scalar_select %p159, %s11, 1
        %s161 = smul.addr %s160, 6
        %s162 = smul.addr %s161, 4
        %s163 = scalar_lea.vmem %s0, %s162
      $region28: #{resnet_forward.19} parent=23 // pred_fallthru
        _
    $region24: #{resnet_forward.19} parent=5 // pred_fallthru
      _
    %p164 = scmp.le.s32.totalorder 1, %s11
    %p165 = scmp.lt.s32.totalorder %s11, 3
    %p166 = pnand %p164, %p165
    %p167 = pneg %p166
    // Predicated region
    $region29: #{resnet_forward.19} parent=5 // pred_check
      _
    $region30: #{resnet_forward.19} parent=5 // pred_check_branch
      %169 = sbr.rel (%p166) target = $region32
    $region31: #{resnet_forward.19} parent=5 // pred_region
      %s170 = ssub.s32 %s11, 1
      %p171 = scmp.lt.s32.totalorder %s16, 1
      %s172 = scalar_select %p171, %s16, 1
      %s173 = smul.addr %s172, 6
      %s174 = smul.addr %s173, 4
      %s175 = scalar_lea.vmem %s0, %s174
      %p176 = pneg %p37
      %p177 = pneg %p34
      %p178 = pneg %p58
      %p179 = pneg %p55
      %p180 = pneg %p79
      %p181 = pneg %p76
      %p182 = pneg %p105
      %p183 = pneg %p102
      %p184 = scmp.lt.s32.totalorder %s16, 1
      %s185 = scalar_select %p184, %s16, 1
      %s186 = smul.addr %s185, 4
      %s187 = smul.addr %s186, 2
      %s188 = scalar_lea.vmem %s3, %s187
      %p189 = pneg %p131
      %p190 = pneg %p128
      %p191 = scmp.lt.s32.totalorder %s16, 1
      %s192 = scalar_select %p191, %s16, 1
      %s193 = smul.addr %s192, 2
      %s194 = scalar_lea.vmem %s4, %s193
      %p195 = scmp.lt.s32.totalorder %s16, 1
      %s196 = scalar_select %p195, %s16, 1
      %s197 = smul.addr %s196, 6
      %s198 = smul.addr %s197, 4
      %s199 = scalar_lea.vmem %s0, %s198
      %p200 = scmp.lt.s32.totalorder %s16, 1
      %s201 = scalar_select %p200, %s16, 1
      %s202 = smul.addr %s201, 4
      %s203 = smul.addr %s202, 2
      %s204 = scalar_lea.vmem %s3, %s203
      %p205 = scmp.lt.s32.totalorder %s16, 1
      %s206 = scalar_select %p205, %s16, 1
      %s207 = smul.addr %s206, 2
      %s208 = scalar_lea.vmem %s4, %s207
      %v210 = vld [vmem:[%s199] sm:$0x3]
      %v211 = vld [vmem:[%s199 + $0x4] sm:$0x3]
      %v212 = vld [vmem:[%s199 + $0x8] sm:$0x3]
      %v213 = vld [vmem:[%s199 + $0xc] sm:$0x3]
      %vm214 = vcmask 123904
      %215 = vst.msk [vmem:[#allocation2] sm:$0x3] %vm214, %v210
      %216 = vst.msk [vmem:[#allocation2 + $0x4] sm:$0x3] %vm214, %v211
      %217 = vst.msk [vmem:[#allocation2 + $0x8] sm:$0x3] %vm214, %v212
      %218 = vst.msk [vmem:[#allocation2 + $0xc] sm:$0x3] %vm214, %v213
      %v219 = vld [vmem:[%s199] sm:$0x7]
      %v220 = vld [vmem:[%s199 + $0x4] sm:$0x7]
      %v221 = vld [vmem:[%s199 + $0x8] sm:$0x7]
      %v222 = vld [vmem:[%s199 + $0xc] sm:$0x7]
      %v228 = vunpack.c.l.s4 1983009808
      %v229 = vunpack.c.0.s8 %v228
      %v230 = vlaneseq
      %v231 = vshrl.u32 %v230, 7
      %v232 = vsub.s32 %v229, %v231
      %v233 = vrot.slane %v219, %v232
      %v234 = vcombine.high %v233, %v233
      %v236 = vunpack.c.l.s4 1983009808
      %v237 = vunpack.c.0.s8 %v236
      %v238 = vlaneseq
      %v239 = vshrl.u32 %v238, 7
      %v240 = vsub.s32 %v237, %v239
      %v241 = vrot.slane %v220, %v240
      %v242 = vcombine.high %v241, %v241
      %v244 = vunpack.c.l.s4 1983009808
      %v245 = vunpack.c.0.s8 %v244
      %v246 = vlaneseq
      %v247 = vshrl.u32 %v246, 7
      %v248 = vsub.s32 %v245, %v247
      %v249 = vrot.slane %v221, %v248
      %v250 = vcombine.high %v249, %v249
      %v252 = vunpack.c.l.s4 1983009808
      %v253 = vunpack.c.0.s8 %v252
      %v254 = vlaneseq
      %v255 = vshrl.u32 %v254, 7
      %v256 = vsub.s32 %v253, %v255
      %v257 = vrot.slane %v222, %v256
      %v258 = vcombine.high %v257, %v257
      %vm259 = vsmask.f32 1280
      %vm260 = vsmask.f32 3336
      %vm261 = vmor %vm259, %vm260
      %vm262 = vsmask.f32 5392
      %vm263 = vmor %vm261, %vm262
      %vm264 = vsmask.f32 7448
      %vm265 = vmor %vm263, %vm264
      %v267 = vshrl.u32 %v233, 16
      %v269 = vrot.slane %v267, 6
      %v270 = vshll.u32 %v233, 16
      %v272 = vrot.slane %v270, 7
      %v273 = vor.u32 %v269, %v272
      %v274 = vrot.slane %v273, 2
      %v276 = vshll.u32 %v234, 16
      %v278 = vrot.slane %v276, 7
      %v279 = vsel %vm265, %v274, %v278
      %v281 = vshrl.u32 %v241, 16
      %v283 = vrot.slane %v281, 6
      %v284 = vshll.u32 %v241, 16
      %v286 = vrot.slane %v284, 7
      %v287 = vor.u32 %v283, %v286
      %v288 = vrot.slane %v287, 2
      %v290 = vshll.u32 %v242, 16
      %v292 = vrot.slane %v290, 7
      %v293 = vsel %vm265, %v288, %v292
      %v295 = vshrl.u32 %v249, 16
      %v297 = vrot.slane %v295, 6
      %v298 = vshll.u32 %v249, 16
      %v300 = vrot.slane %v298, 7
      %v301 = vor.u32 %v297, %v300
      %v302 = vrot.slane %v301, 2
      %v304 = vshll.u32 %v250, 16
      %v306 = vrot.slane %v304, 7
      %v307 = vsel %vm265, %v302, %v306
      %v309 = vshrl.u32 %v257, 16
      %v311 = vrot.slane %v309, 6
      %v312 = vshll.u32 %v257, 16
      %v314 = vrot.slane %v312, 7
      %v315 = vor.u32 %v311, %v314
      %v316 = vrot.slane %v315, 2
      %v318 = vshll.u32 %v258, 16
      %v320 = vrot.slane %v318, 7
      %v321 = vsel %vm265, %v316, %v320
      %322 = vrot.lane.b32.xlu0 %v279, 16
      %v323 = vpop.permute.xlu0 %322
      %324 = vrot.lane.b32.xlu0 %v293, 16
      %v325 = vpop.permute.xlu0 %324
      %326 = vrot.lane.b32.xlu0 %v307, 16
      %v327 = vpop.permute.xlu0 %326
      %328 = vrot.lane.b32.xlu0 %v321, 16
      %v329 = vpop.permute.xlu0 %328
      %vm334 = vcmask 255104
      %335 = vst.msk [vmem:[#allocation2] sm:$0x3] %vm334, %v323
      %336 = vst.msk [vmem:[#allocation2 + $0x4] sm:$0x3] %vm334, %v325
      %337 = vst.msk [vmem:[#allocation2 + $0x8] sm:$0x3] %vm334, %v327
      %338 = vst.msk [vmem:[#allocation2 + $0xc] sm:$0x3] %vm334, %v329
      %v339 = vld [vmem:[%s199] sm:$0x6]
      %v340 = vld [vmem:[%s199 + $0x4] sm:$0x6]
      %v341 = vld [vmem:[%s199 + $0x8] sm:$0x6]
      %v342 = vld [vmem:[%s199 + $0xc] sm:$0x6]
      %v348 = vunpack.c.l.s4 1983009808
      %v349 = vunpack.c.0.s8 %v348
      %v350 = vlaneseq
      %v351 = vshrl.u32 %v350, 7
      %v352 = vsub.s32 %v349, %v351
      %v353 = vrot.slane %v339, %v352
      %v354 = vcombine.high %v353, %v353
      %v356 = vunpack.c.l.s4 1983009808
      %v357 = vunpack.c.0.s8 %v356
      %v358 = vlaneseq
      %v359 = vshrl.u32 %v358, 7
      %v360 = vsub.s32 %v357, %v359
      %v361 = vrot.slane %v340, %v360
      %v362 = vcombine.high %v361, %v361
      %v364 = vunpack.c.l.s4 1983009808
      %v365 = vunpack.c.0.s8 %v364
      %v366 = vlaneseq
      %v367 = vshrl.u32 %v366, 7
      %v368 = vsub.s32 %v365, %v367
      %v369 = vrot.slane %v341, %v368
      %v370 = vcombine.high %v369, %v369
      %v372 = vunpack.c.l.s4 1983009808
      %v373 = vunpack.c.0.s8 %v372
      %v374 = vlaneseq
      %v375 = vshrl.u32 %v374, 7
      %v376 = vsub.s32 %v373, %v375
      %v377 = vrot.slane %v342, %v376
      %v378 = vcombine.high %v377, %v377
      %vm379 = vcmask 1040384
      %vm380 = vcmask 1042434
      %vm381 = vmor %vm379, %vm380
      %vm382 = vcmask 1044484
      %vm383 = vmor %vm381, %vm382
      %vm384 = vcmask 1046534
      %vm385 = vmor %vm383, %vm384
      %v386 = vrot.slane %v353, 7
      %v387 = vrot.slane %v386, 2
      %v388 = vrot.slane %v354, 7
      %v389 = vsel %vm385, %v387, %v388
      %v390 = vrot.slane %v361, 7
      %v391 = vrot.slane %v390, 2
      %v392 = vrot.slane %v362, 7
      %v393 = vsel %vm385, %v391, %v392
      %v394 = vrot.slane %v369, 7
      %v395 = vrot.slane %v394, 2
      %v396 = vrot.slane %v370, 7
      %v397 = vsel %vm385, %v395, %v396
      %v398 = vrot.slane %v377, 7
      %v399 = vrot.slane %v398, 2
      %v400 = vrot.slane %v378, 7
      %v401 = vsel %vm385, %v399, %v400
      %402 = vrot.lane.b32.xlu0 %v389, 32
      %v403 = vpop.permute.xlu0 %402
      %404 = vrot.lane.b32.xlu0 %v393, 32
      %v405 = vpop.permute.xlu0 %404
      %406 = vrot.lane.b32.xlu0 %v397, 32
      %v407 = vpop.permute.xlu0 %406
      %408 = vrot.lane.b32.xlu0 %v401, 32
      %v409 = vpop.permute.xlu0 %408
      %vm414 = vcmask 386304
      %415 = vst.msk [vmem:[#allocation2] sm:$0x3] %vm414, %v403
      %416 = vst.msk [vmem:[#allocation2 + $0x4] sm:$0x3] %vm414, %v405
      %417 = vst.msk [vmem:[#allocation2 + $0x8] sm:$0x3] %vm414, %v407
      %418 = vst.msk [vmem:[#allocation2 + $0xc] sm:$0x3] %vm414, %v409
      %s419 = scalar_lea.vmem %s199, 4
      %v420 = vld [vmem:[%s419] sm:$0x3]
      %v421 = vld [vmem:[%s419 + $0x4] sm:$0x3]
      %v422 = vld [vmem:[%s419 + $0x8] sm:$0x3]
      %v423 = vld [vmem:[%s419 + $0xc] sm:$0x3]
      %v429 = vunpack.c.l.s4 1983009808
      %v430 = vunpack.c.0.s8 %v429
      %v431 = vlaneseq
      %v432 = vshrl.u32 %v431, 7
      %v433 = vsub.s32 %v430, %v432
      %v434 = vrot.slane %v420, %v433
      %v436 = vunpack.c.l.s4 1983009808
      %v437 = vunpack.c.0.s8 %v436
      %v438 = vlaneseq
      %v439 = vshrl.u32 %v438, 7
      %v440 = vsub.s32 %v437, %v439
      %v441 = vrot.slane %v421, %v440
      %v443 = vunpack.c.l.s4 1983009808
      %v444 = vunpack.c.0.s8 %v443
      %v445 = vlaneseq
      %v446 = vshrl.u32 %v445, 7
      %v447 = vsub.s32 %v444, %v446
      %v448 = vrot.slane %v422, %v447
      %v450 = vunpack.c.l.s4 1983009808
      %v451 = vunpack.c.0.s8 %v450
      %v452 = vlaneseq
      %v453 = vshrl.u32 %v452, 7
      %v454 = vsub.s32 %v451, %v453
      %v455 = vrot.slane %v423, %v454
      %456 = vrot.lane.b32.xlu0 %v434, 48
      %v457 = vpop.permute.xlu0 %456
      %458 = vrot.lane.b32.xlu0 %v441, 48
      %v459 = vpop.permute.xlu0 %458
      %460 = vrot.lane.b32.xlu0 %v448, 48
      %v461 = vpop.permute.xlu0 %460
      %462 = vrot.lane.b32.xlu0 %v455, 48
      %v463 = vpop.permute.xlu0 %462
      %vm468 = vcmask 517504
      %469 = vst.msk [vmem:[#allocation2] sm:$0x3] %vm468, %v457
      %470 = vst.msk [vmem:[#allocation2 + $0x4] sm:$0x3] %vm468, %v459
      %471 = vst.msk [vmem:[#allocation2 + $0x8] sm:$0x3] %vm468, %v461
      %472 = vst.msk [vmem:[#allocation2 + $0xc] sm:$0x3] %vm468, %v463
      %v473 = vld [vmem:[%s419] sm:$0x7]
      %v474 = vld [vmem:[%s419 + $0x4] sm:$0x7]
      %v475 = vld [vmem:[%s419 + $0x8] sm:$0x7]
      %v476 = vld [vmem:[%s419 + $0xc] sm:$0x7]
      %v482 = vunpack.c.l.s4 1983009808
      %v483 = vunpack.c.0.s8 %v482
      %v484 = vlaneseq
      %v485 = vshrl.u32 %v484, 7
      %v486 = vsub.s32 %v483, %v485
      %v487 = vrot.slane %v473, %v486
      %v488 = vcombine.high %v487, %v487
      %v490 = vunpack.c.l.s4 1983009808
      %v491 = vunpack.c.0.s8 %v490
      %v492 = vlaneseq
      %v493 = vshrl.u32 %v492, 7
      %v494 = vsub.s32 %v491, %v493
      %v495 = vrot.slane %v474, %v494
      %v496 = vcombine.high %v495, %v495
      %v498 = vunpack.c.l.s4 1983009808
      %v499 = vunpack.c.0.s8 %v498
      %v500 = vlaneseq
      %v501 = vshrl.u32 %v500, 7
      %v502 = vsub.s32 %v499, %v501
      %v503 = vrot.slane %v475, %v502
      %v504 = vcombine.high %v503, %v503
      %v506 = vunpack.c.l.s4 1983009808
      %v507 = vunpack.c.0.s8 %v506
      %v508 = vlaneseq
      %v509 = vshrl.u32 %v508, 7
      %v510 = vsub.s32 %v507, %v509
      %v511 = vrot.slane %v476, %v510
      %v512 = vcombine.high %v511, %v511
      %v514 = vshrl.u32 %v487, 16
      %v516 = vrot.slane %v514, 6
      %v517 = vshll.u32 %v487, 16
      %v519 = vrot.slane %v517, 7
      %v520 = vor.u32 %v516, %v519
      %v521 = vrot.slane %v520, 2
      %v523 = vshll.u32 %v488, 16
      %v525 = vrot.slane %v523, 7
      %v526 = vsel %vm265, %v521, %v525
      %v528 = vshrl.u32 %v495, 16
      %v530 = vrot.slane %v528, 6
      %v531 = vshll.u32 %v495, 16
      %v533 = vrot.slane %v531, 7
      %v534 = vor.u32 %v530, %v533
      %v535 = vrot.slane %v534, 2
      %v537 = vshll.u32 %v496, 16
      %v539 = vrot.slane %v537, 7
      %v540 = vsel %vm265, %v535, %v539
      %v542 = vshrl.u32 %v503, 16
      %v544 = vrot.slane %v542, 6
      %v545 = vshll.u32 %v503, 16
      %v547 = vrot.slane %v545, 7
      %v548 = vor.u32 %v544, %v547
      %v549 = vrot.slane %v548, 2
      %v551 = vshll.u32 %v504, 16
      %v553 = vrot.slane %v551, 7
      %v554 = vsel %vm265, %v549, %v553
      %v556 = vshrl.u32 %v511, 16
      %v558 = vrot.slane %v556, 6
      %v559 = vshll.u32 %v511, 16
      %v561 = vrot.slane %v559, 7
      %v562 = vor.u32 %v558, %v561
      %v563 = vrot.slane %v562, 2
      %v565 = vshll.u32 %v512, 16
      %v567 = vrot.slane %v565, 7
      %v568 = vsel %vm265, %v563, %v567
      %569 = vrot.lane.b32.xlu0 %v526, 64
      %v570 = vpop.permute.xlu0 %569
      %571 = vrot.lane.b32.xlu0 %v540, 64
      %v572 = vpop.permute.xlu0 %571
      %573 = vrot.lane.b32.xlu0 %v554, 64
      %v574 = vpop.permute.xlu0 %573
      %575 = vrot.lane.b32.xlu0 %v568, 64
      %v576 = vpop.permute.xlu0 %575
      %vm581 = vcmask 648704
      %582 = vst.msk [vmem:[#allocation2] sm:$0x3] %vm581, %v570
      %583 = vst.msk [vmem:[#allocation2 + $0x4] sm:$0x3] %vm581, %v572
      %584 = vst.msk [vmem:[#allocation2 + $0x8] sm:$0x3] %vm581, %v574
      %585 = vst.msk [vmem:[#allocation2 + $0xc] sm:$0x3] %vm581, %v576
      %v586 = vld [vmem:[%s419] sm:$0x6]
      %v587 = vld [vmem:[%s419 + $0x4] sm:$0x6]
      %v588 = vld [vmem:[%s419 + $0x8] sm:$0x6]
      %v589 = vld [vmem:[%s419 + $0xc] sm:$0x6]
      %v595 = vunpack.c.l.s4 1983009808
      %v596 = vunpack.c.0.s8 %v595
      %v597 = vlaneseq
      %v598 = vshrl.u32 %v597, 7
      %v599 = vsub.s32 %v596, %v598
      %v600 = vrot.slane %v586, %v599
      %v601 = vcombine.high %v600, %v600
      %v603 = vunpack.c.l.s4 1983009808
      %v604 = vunpack.c.0.s8 %v603
      %v605 = vlaneseq
      %v606 = vshrl.u32 %v605, 7
      %v607 = vsub.s32 %v604, %v606
      %v608 = vrot.slane %v587, %v607
      %v609 = vcombine.high %v608, %v608
      %v611 = vunpack.c.l.s4 1983009808
      %v612 = vunpack.c.0.s8 %v611
      %v613 = vlaneseq
      %v614 = vshrl.u32 %v613, 7
      %v615 = vsub.s32 %v612, %v614
      %v616 = vrot.slane %v588, %v615
      %v617 = vcombine.high %v616, %v616
      %v619 = vunpack.c.l.s4 1983009808
      %v620 = vunpack.c.0.s8 %v619
      %v621 = vlaneseq
      %v622 = vshrl.u32 %v621, 7
      %v623 = vsub.s32 %v620, %v622
      %v624 = vrot.slane %v589, %v623
      %v625 = vcombine.high %v624, %v624
      %v626 = vrot.slane %v600, 7
      %v627 = vrot.slane %v626, 2
      %v628 = vrot.slane %v601, 7
      %v629 = vsel %vm385, %v627, %v628
      %v630 = vrot.slane %v608, 7
      %v631 = vrot.slane %v630, 2
      %v632 = vrot.slane %v609, 7
      %v633 = vsel %vm385, %v631, %v632
      %v634 = vrot.slane %v616, 7
      %v635 = vrot.slane %v634, 2
      %v636 = vrot.slane %v617, 7
      %v637 = vsel %vm385, %v635, %v636
      %v638 = vrot.slane %v624, 7
      %v639 = vrot.slane %v638, 2
      %v640 = vrot.slane %v625, 7
      %v641 = vsel %vm385, %v639, %v640
      %642 = vrot.lane.b32.xlu0 %v629, 80
      %v643 = vpop.permute.xlu0 %642
      %644 = vrot.lane.b32.xlu0 %v633, 80
      %v645 = vpop.permute.xlu0 %644
      %646 = vrot.lane.b32.xlu0 %v637, 80
      %v647 = vpop.permute.xlu0 %646
      %648 = vrot.lane.b32.xlu0 %v641, 80
      %v649 = vpop.permute.xlu0 %648
      %vm654 = vcmask 779904
      %655 = vst.msk [vmem:[#allocation2] sm:$0x3] %vm654, %v643
      %656 = vst.msk [vmem:[#allocation2 + $0x4] sm:$0x3] %vm654, %v645
      %657 = vst.msk [vmem:[#allocation2 + $0x8] sm:$0x3] %vm654, %v647
      %658 = vst.msk [vmem:[#allocation2 + $0xc] sm:$0x3] %vm654, %v649
      %s659 = scalar_lea.vmem %s199, 8
      %v660 = vld [vmem:[%s659] sm:$0x3]
      %v661 = vld [vmem:[%s659 + $0x4] sm:$0x3]
      %v662 = vld [vmem:[%s659 + $0x8] sm:$0x3]
      %v663 = vld [vmem:[%s659 + $0xc] sm:$0x3]
      %v669 = vunpack.c.l.s4 1983009808
      %v670 = vunpack.c.0.s8 %v669
      %v671 = vlaneseq
      %v672 = vshrl.u32 %v671, 7
      %v673 = vsub.s32 %v670, %v672
      %v674 = vrot.slane %v660, %v673
      %v676 = vunpack.c.l.s4 1983009808
      %v677 = vunpack.c.0.s8 %v676
      %v678 = vlaneseq
      %v679 = vshrl.u32 %v678, 7
      %v680 = vsub.s32 %v677, %v679
      %v681 = vrot.slane %v661, %v680
      %v683 = vunpack.c.l.s4 1983009808
      %v684 = vunpack.c.0.s8 %v683
      %v685 = vlaneseq
      %v686 = vshrl.u32 %v685, 7
      %v687 = vsub.s32 %v684, %v686
      %v688 = vrot.slane %v662, %v687
      %v690 = vunpack.c.l.s4 1983009808
      %v691 = vunpack.c.0.s8 %v690
      %v692 = vlaneseq
      %v693 = vshrl.u32 %v692, 7
      %v694 = vsub.s32 %v691, %v693
      %v695 = vrot.slane %v663, %v694
      %696 = vrot.lane.b32.xlu0 %v674, 96
      %v697 = vpop.permute.xlu0 %696
      %698 = vrot.lane.b32.xlu0 %v681, 96
      %v699 = vpop.permute.xlu0 %698
      %700 = vrot.lane.b32.xlu0 %v688, 96
      %v701 = vpop.permute.xlu0 %700
      %702 = vrot.lane.b32.xlu0 %v695, 96
      %v703 = vpop.permute.xlu0 %702
      %vm708 = vcmask 911104
      %709 = vst.msk [vmem:[#allocation2] sm:$0x3] %vm708, %v697
      %710 = vst.msk [vmem:[#allocation2 + $0x4] sm:$0x3] %vm708, %v699
      %711 = vst.msk [vmem:[#allocation2 + $0x8] sm:$0x3] %vm708, %v701
      %712 = vst.msk [vmem:[#allocation2 + $0xc] sm:$0x3] %vm708, %v703
      %v713 = vld [vmem:[%s659] sm:$0x7]
      %v714 = vld [vmem:[%s659 + $0x4] sm:$0x7]
      %v715 = vld [vmem:[%s659 + $0x8] sm:$0x7]
      %v716 = vld [vmem:[%s659 + $0xc] sm:$0x7]
      %v722 = vunpack.c.l.s4 1983009808
      %v723 = vunpack.c.0.s8 %v722
      %v724 = vlaneseq
      %v725 = vshrl.u32 %v724, 7
      %v726 = vsub.s32 %v723, %v725
      %v727 = vrot.slane %v713, %v726
      %v728 = vcombine.high %v727, %v727
      %v730 = vunpack.c.l.s4 1983009808
      %v731 = vunpack.c.0.s8 %v730
      %v732 = vlaneseq
      %v733 = vshrl.u32 %v732, 7
      %v734 = vsub.s32 %v731, %v733
      %v735 = vrot.slane %v714, %v734
      %v736 = vcombine.high %v735, %v735
      %v738 = vunpack.c.l.s4 1983009808
      %v739 = vunpack.c.0.s8 %v738
      %v740 = vlaneseq
      %v741 = vshrl.u32 %v740, 7
      %v742 = vsub.s32 %v739, %v741
      %v743 = vrot.slane %v715, %v742
      %v744 = vcombine.high %v743, %v743
      %v746 = vunpack.c.l.s4 1983009808
      %v747 = vunpack.c.0.s8 %v746
      %v748 = vlaneseq
      %v749 = vshrl.u32 %v748, 7
      %v750 = vsub.s32 %v747, %v749
      %v751 = vrot.slane %v716, %v750
      %v752 = vcombine.high %v751, %v751
      %v754 = vshrl.u32 %v727, 16
      %v756 = vrot.slane %v754, 6
      %v757 = vshll.u32 %v727, 16
      %v759 = vrot.slane %v757, 7
      %v760 = vor.u32 %v756, %v759
      %v761 = vrot.slane %v760, 2
      %v763 = vshll.u32 %v728, 16
      %v765 = vrot.slane %v763, 7
      %v766 = vsel %vm265, %v761, %v765
      %v768 = vshrl.u32 %v735, 16
      %v770 = vrot.slane %v768, 6
      %v771 = vshll.u32 %v735, 16
      %v773 = vrot.slane %v771, 7
      %v774 = vor.u32 %v770, %v773
      %v775 = vrot.slane %v774, 2
      %v777 = vshll.u32 %v736, 16
      %v779 = vrot.slane %v777, 7
      %v780 = vsel %vm265, %v775, %v779
      %v782 = vshrl.u32 %v743, 16
      %v784 = vrot.slane %v782, 6
      %v785 = vshll.u32 %v743, 16
      %v787 = vrot.slane %v785, 7
      %v788 = vor.u32 %v784, %v787
      %v789 = vrot.slane %v788, 2
      %v791 = vshll.u32 %v744, 16
      %v793 = vrot.slane %v791, 7
      %v794 = vsel %vm265, %v789, %v793
      %v796 = vshrl.u32 %v751, 16
      %v798 = vrot.slane %v796, 6
      %v799 = vshll.u32 %v751, 16
      %v801 = vrot.slane %v799, 7
      %v802 = vor.u32 %v798, %v801
      %v803 = vrot.slane %v802, 2
      %v805 = vshll.u32 %v752, 16
      %v807 = vrot.slane %v805, 7
      %v808 = vsel %vm265, %v803, %v807
      %809 = vrot.lane.b32.xlu0 %v766, 112
      %v810 = vpop.permute.xlu0 %809
      %811 = vrot.lane.b32.xlu0 %v780, 112
      %v812 = vpop.permute.xlu0 %811
      %813 = vrot.lane.b32.xlu0 %v794, 112
      %v814 = vpop.permute.xlu0 %813
      %815 = vrot.lane.b32.xlu0 %v808, 112
      %v816 = vpop.permute.xlu0 %815
      %vm821 = vcmask 1042304
      %822 = vst.msk [vmem:[#allocation2] sm:$0x3] %vm821, %v810
      %823 = vst.msk [vmem:[#allocation2 + $0x4] sm:$0x3] %vm821, %v812
      %824 = vst.msk [vmem:[#allocation2 + $0x8] sm:$0x3] %vm821, %v814
      %825 = vst.msk [vmem:[#allocation2 + $0xc] sm:$0x3] %vm821, %v816
      %v826 = vld [vmem:[%s659] sm:$0x6]
      %v827 = vld [vmem:[%s659 + $0x4] sm:$0x6]
      %v828 = vld [vmem:[%s659 + $0x8] sm:$0x6]
      %v829 = vld [vmem:[%s659 + $0xc] sm:$0x6]
      %v835 = vunpack.c.l.s4 1983009808
      %v836 = vunpack.c.0.s8 %v835
      %v837 = vlaneseq
      %v838 = vshrl.u32 %v837, 7
      %v839 = vsub.s32 %v836, %v838
      %v840 = vrot.slane %v826, %v839
      %v841 = vcombine.high %v840, %v840
      %v843 = vunpack.c.l.s4 1983009808
      %v844 = vunpack.c.0.s8 %v843
      %v845 = vlaneseq
      %v846 = vshrl.u32 %v845, 7
      %v847 = vsub.s32 %v844, %v846
      %v848 = vrot.slane %v827, %v847
      %v849 = vcombine.high %v848, %v848
      %v851 = vunpack.c.l.s4 1983009808
      %v852 = vunpack.c.0.s8 %v851
      %v853 = vlaneseq
      %v854 = vshrl.u32 %v853, 7
      %v855 = vsub.s32 %v852, %v854
      %v856 = vrot.slane %v828, %v855
      %v857 = vcombine.high %v856, %v856
      %v859 = vunpack.c.l.s4 1983009808
      %v860 = vunpack.c.0.s8 %v859
      %v861 = vlaneseq
      %v862 = vshrl.u32 %v861, 7
      %v863 = vsub.s32 %v860, %v862
      %v864 = vrot.slane %v829, %v863
      %v865 = vcombine.high %v864, %v864
      %v866 = vrot.slane %v840, 7
      %v867 = vrot.slane %v866, 2
      %v868 = vrot.slane %v841, 7
      %v869 = vsel %vm385, %v867, %v868
      %v870 = vrot.slane %v848, 7
      %v871 = vrot.slane %v870, 2
      %v872 = vrot.slane %v849, 7
      %v873 = vsel %vm385, %v871, %v872
      %v874 = vrot.slane %v856, 7
      %v875 = vrot.slane %v874, 2
      %v876 = vrot.slane %v857, 7
      %v877 = vsel %vm385, %v875, %v876
      %v878 = vrot.slane %v864, 7
      %v879 = vrot.slane %v878, 2
      %v880 = vrot.slane %v865, 7
      %v881 = vsel %vm385, %v879, %v880
      %886 = vst.msk [vmem:[#allocation2 + $0x2] sm:$0x3] %vm214, %v869
      %887 = vst.msk [vmem:[#allocation2 + $0x6] sm:$0x3] %vm214, %v873
      %888 = vst.msk [vmem:[#allocation2 + $0xa] sm:$0x3] %vm214, %v877
      %889 = vst.msk [vmem:[#allocation2 + $0xe] sm:$0x3] %vm214, %v881
      %v890 = vld [vmem:[#allocation2] sm:$0xf]
      %v891 = vld [vmem:[#allocation2 + $0x4] sm:$0xf]
      %v892 = vld [vmem:[#allocation2 + $0x8] sm:$0xf]
      %v893 = vld [vmem:[#allocation2 + $0xc] sm:$0xf]
      %v894 = vld [vmem:[%s1] sm:$0xf]
      %v895 = vld [vmem:[%s1 + $0x4] sm:$0xf]
      %v896 = vld [vmem:[%s1 + $0x8] sm:$0xf]
      %v897 = vld [vmem:[%s1 + $0xc] sm:$0xf]
      %v898 = vld [vmem:[%s1 + $0x10] sm:$0xf]
      %v899 = vld [vmem:[%s1 + $0x14] sm:$0xf]
      %v900 = vld [vmem:[%s1 + $0x18] sm:$0xf]
      %v901 = vld [vmem:[%s1 + $0x1c] sm:$0xf]
      %v902 = vld [vmem:[%s1 + $0x20] sm:$0xf]
      %v903 = vld [vmem:[%s1 + $0x24] sm:$0xf]
      %v904 = vld [vmem:[%s1 + $0x28] sm:$0xf]
      %v905 = vld [vmem:[%s1 + $0x2c] sm:$0xf]
      %v906 = vld [vmem:[%s1 + $0x30] sm:$0xf]
      %v907 = vld [vmem:[%s1 + $0x34] sm:$0xf]
      %v908 = vld [vmem:[%s1 + $0x38] sm:$0xf]
      %v909 = vld [vmem:[%s1 + $0x3c] sm:$0xf]
      %v910 = vld [vmem:[%s1 + $0x40] sm:$0xf]
      %v911 = vld [vmem:[%s1 + $0x44] sm:$0xf]
      %v912 = vld [vmem:[%s2] sm:$0x1]
      %v914 = vlaneseq
      %v915 = vshrl.u32 %v914, 7
      %v916 = vsub.s32 0, %v915
      %v917 = vrot.slane %v912, %v916
      %v923 = vcombine.low %v890, %v891
      %v924 = vcombine.low %v892, %v893
      %v926 = vunpack.c.l.s4 1983009808
      %v927 = vunpack.c.0.s8 %v926
      %v928 = vlaneseq
      %v929 = vshrl.u32 %v928, 7
      %v930 = vsub.s32 %v927, %v929
      %v931 = vrot.slane %v923, %v930
      %v933 = vunpack.c.l.s4 1983009808
      %v934 = vunpack.c.0.s8 %v933
      %v935 = vlaneseq
      %v936 = vshrl.u32 %v935, 7
      %v937 = vsub.s32 %v934, %v936
      %v938 = vrot.slane %v924, %v937
      %v939 = vcombine.low %v931, %v938
      %v940 = vcombine.high %v931, %v938
      %v960 = vunpack.c.l.b16 %v894
      %v961 = vunpack.c.l.b16 %v895
      %v962 = vunpack.c.l.b16 %v896
      %v963 = vunpack.c.l.b16 %v897
      %v964 = vunpack.c.l.b16 %v898
      %v965 = vunpack.c.l.b16 %v899
      %v966 = vunpack.c.l.b16 %v900
      %v967 = vunpack.c.l.b16 %v901
      %v968 = vunpack.c.l.b16 %v902
      %v969 = vunpack.c.l.b16 %v903
      %v970 = vunpack.c.l.b16 %v904
      %v971 = vunpack.c.l.b16 %v905
      %v972 = vunpack.c.l.b16 %v906
      %v973 = vunpack.c.l.b16 %v907
      %v974 = vunpack.c.l.b16 %v908
      %v975 = vunpack.c.l.b16 %v909
      %v976 = vunpack.c.l.b16 %v910
      %v977 = vunpack.c.l.b16 %v911
      %v978 = vpack.c.b16 %v961, %v960
      %v979 = vpack.c.b16 %v963, %v962
      %v980 = vpack.c.b16 %v965, %v964
      %v981 = vpack.c.b16 %v967, %v966
      %v982 = vpack.c.b16 %v969, %v968
      %v983 = vpack.c.b16 %v971, %v970
      %v984 = vpack.c.b16 %v973, %v972
      %v985 = vpack.c.b16 %v975, %v974
      %v986 = vpack.c.b16 %v977, %v976
      %vm996 = vcmask 130048
      %v998 = vsel %vm996, %v940, 0
      %1000 = vmatprep.subr.bf16.mxu0 0
      %1001 = vmatpush1.bf16.msra.mxu0 %v985
      %1002 = vmatprep.subr.bf16.mxu0 0
      %1003 = vmatpush1.bf16.msra.mxu0 %v984
      %1004 = vmatprep.subr.bf16.mxu0 0
      %1005 = vmatpush1.bf16.msra.mxu0 %v983
      %1006 = vmatprep.subr.bf16.mxu0 0
      %1007 = vmatpush1.bf16.msra.mxu0 %v982
      %1008 = vmatprep.subr.bf16.mxu0 0
      %1009 = vmatpush1.bf16.msra.mxu0 %v981
      %1010 = vmatprep.subr.bf16.mxu0 0
      %1011 = vmatpush1.bf16.msra.mxu0 %v980
      %1012 = vmatprep.subr.bf16.mxu0 0
      %1013 = vmatpush1.bf16.msra.mxu0 %v979
      %1014 = vmatprep.subr.bf16.mxu0 0
      %1015 = vmatpush1.bf16.msra.mxu0 %v978
      %1016 = vmatprep.subr.bf16.mxu0 0
      %1017 = vmatpush2.bf16.msra.mxu0 0
      %1018 = vmatprep.subr.bf16.mxu0 0
      %1019 = vmatpush2.bf16.msra.mxu0 0
      %1020 = vmatprep.subr.bf16.mxu0 0
      %1021 = vmatpush2.bf16.msra.mxu0 0
      %1022 = vmatprep.subr.bf16.mxu0 0
      %1023 = vmatpush2.bf16.msra.mxu0 0
      %1024 = vmatprep.subr.bf16.mxu0 0
      %1025 = vmatpush2.bf16.msra.mxu0 0
      %1026 = vmatprep.subr.bf16.mxu0 0
      %1027 = vmatpush2.bf16.msra.mxu0 0
      %1028 = vmatprep.subr.bf16.mxu0 0
      %1029 = vmatpush2.bf16.msra.mxu0 0
      %1030 = vmatprep.subr.bf16.mxu0 0
      %1031 = vmatpush2.bf16.msra.mxu0 %v986
      %1032 = vmatprep.mubr.bf16.mxu0 %v998
      %1033 = vmatmul.mubr.bf16.gmra.mxu0 %v939
      %v1034 = vpop.f32.mrf.mxu0
      %v1035 = vadd.f32 %v917, %v1034
      %v1036 = vpop.f32.mrf.mxu0
      %v1037 = vpop.f32.mrf.mxu0
      %v1038 = vadd.f32 %v917, %v1037
      %v1039 = vpop.f32.mrf.mxu0
      %1040 = vdwg.mxu0
      %v1043 = vcombine.high %v1035, %v1035
      %v1044 = vcombine.high %v1038, %v1038
      %v1047 = vpack.c.bf16 %v1035, %v1035
      %v1048 = vpack.c.bf16 %v1043, %v1043
      %v1049 = vpack.c.bf16 %v1038, %v1038
      %v1050 = vpack.c.bf16 %v1044, %v1044
      %1051 = vst [vmem:[%s204] sm:$0x3] %v1047
      %1052 = vst [vmem:[%s204 + $0x2] sm:$0x3] %v1048
      %1053 = vst [vmem:[%s204 + $0x4] sm:$0x3] %v1049
      %1054 = vst [vmem:[%s204 + $0x6] sm:$0x3] %v1050
      %v1055 = vadd.f32 %v1035, %v1038
      %v1056 = vrot.slane %v1055, 4
      %v1057 = vadd.f32 %v1055, %v1056
      %v1058 = vrot.slane %v1057, 2
      %v1059 = vadd.f32 %v1057, %v1058
      %v1060 = vrot.slane %v1059, 1
      %v1061 = vadd.f32 %v1059, %v1060
      %v1062 = vmul.f32 %v1035, %v1035
      %v1063 = vmul.f32 %v1038, %v1038
      %v1064 = vadd.f32 %v1062, %v1063
      %v1065 = vrot.slane %v1064, 4
      %v1066 = vadd.f32 %v1064, %v1065
      %v1067 = vrot.slane %v1066, 2
      %v1068 = vadd.f32 %v1066, %v1067
      %v1069 = vrot.slane %v1068, 1
      %v1070 = vadd.f32 %v1068, %v1069
      %vm1071 = vcmask 1040384
      %v1072 = vsel %vm1071, %v1061, %v1070
      %1073 = vst [vmem:[%s208] sm:$0x3] %v1072
      %p1074 = scmp.lt.s32.totalorder %s16, 1
      %s1075 = scalar_select %p1074, %s16, 1
      %s1076 = smul.addr %s1075, 4
      %s1077 = smul.addr %s1076, 2
      %s1078 = scalar_lea.vmem %s3, %s1077
      %p1079 = scmp.lt.s32.totalorder %s16, 1
      %s1080 = scalar_select %p1079, %s16, 1
      %s1081 = smul.addr %s1080, 2
      %s1082 = scalar_lea.vmem %s4, %s1081
      // Predicated region
      $region33: #{resnet_forward.19} parent=31 // pred_check
        %p1083 = pneg %p102
      $region34: #{resnet_forward.19} parent=31 // pred_check_branch
        %1085 = sbr.rel (%p1083) target = $region36
      $region35: #{resnet_forward.19} parent=31 // pred_region
        _
      $region36: #{resnet_forward.19} parent=31 // pred_fallthru
        _
      // Predicated region
      $region37: #{resnet_forward.19} parent=31 // pred_check
        %p1086 = pneg %p128
      $region38: #{resnet_forward.19} parent=31 // pred_check_branch
        %1088 = sbr.rel (%p1086) target = $region40
      $region39: #{resnet_forward.19} parent=31 // pred_region
        _
      $region40: #{resnet_forward.19} parent=31 // pred_fallthru
        _
    $region32: #{resnet_forward.19} parent=5 // pred_fallthru
      _
    %p1089 = scmp.le.s32.totalorder 2, %s11
    // Predicated region
    $region41: #{resnet_forward.19} parent=5 // pred_check
      %p1090 = pneg %p1089
    $region42: #{resnet_forward.19} parent=5 // pred_check_branch
      %1092 = sbr.rel (%p1090) target = $region44
    $region43: #{resnet_forward.19} parent=5 // pred_region
      %s1093 = ssub.s32 %s11, 2
      // Predicated region
      $region45: #{resnet_forward.19} parent=43 // pred_check
        %p1094 = pneg %p108
      $region46: #{resnet_forward.19} parent=43 // pred_check_branch
        %1096 = sbr.rel (%p1094) target = $region48
      $region47: #{resnet_forward.19} parent=43 // pred_region
        %p1097 = scmp.lt.s32.totalorder %s17, 1
        %s1098 = scalar_select %p1097, %s17, 1
        %s1099 = smul.addr %s1098, 4
        %s1100 = smul.addr %s1099, 2
        %s1101 = scalar_lea.vmem %s3, %s1100
      $region48: #{resnet_forward.19} parent=43 // pred_fallthru
        _
      // Predicated region
      $region49: #{resnet_forward.19} parent=43 // pred_check
        %p1102 = pneg %p134
      $region50: #{resnet_forward.19} parent=43 // pred_check_branch
        %1104 = sbr.rel (%p1102) target = $region52
      $region51: #{resnet_forward.19} parent=43 // pred_region
        %p1105 = scmp.lt.s32.totalorder %s17, 1
        %s1106 = scalar_select %p1105, %s17, 1
        %s1107 = smul.addr %s1106, 2
        %s1108 = scalar_lea.vmem %s4, %s1107
      $region52: #{resnet_forward.19} parent=43 // pred_fallthru
        _
    $region44: #{resnet_forward.19} parent=5 // pred_fallthru
      _
  $region6: #{resnet_forward.19} parent=0 // loop_footer
    %s15 = sadd.s32 1, %s11
  $region7: #{resnet_forward.19} parent=0 // loop_footer_branch
    %10 = sbr.rel target = $region3
  $region8: #{resnet_forward.19} parent=0 // loop_exit
    _

// kernel: resnet_forward.20
$region0: #{resnet_forward.20}
  #allocation0 [shape = 'u32[]', space=smem, size = 0x4, offset = 0x4, fixed_abs, tag = 'smem constant byte address 0x4 - core index']
  #allocation1 [shape = 'u32[144,128]{1,0:T(1,128)}', space=vmem, size = 0x12000, scoped, tag = 'internal scratch']
  %s0 = inlined_call_operand.vmem [shape: bf16[2,4,4,128], index: 0, kind: input, shape index: {}]
  %s1 = inlined_call_operand.vmem [shape: f32[2,2,128], index: 1, kind: input, shape index: {}]
  %s2 = inlined_call_operand.vmem [shape: f32[1,128], index: 2, kind: input, shape index: {}]
  %s3 = inlined_call_operand.vmem [shape: f32[1,128], index: 3, kind: input, shape index: {}]
  %s4 = inlined_call_operand.vmem [shape: bf16[2,6,8,128], index: 4, kind: input, shape index: {}]
  %s5 = inlined_call_operand.vmem [shape: bf16[64,128], index: 5, kind: input, shape index: {}]
  %s6 = inlined_call_operand.vmem [shape: f32[1,128], index: 6, kind: input, shape index: {}]
  %s7 = inlined_call_operand.vmem [shape: bf16[2,6,8,128], index: 7, kind: output, shape index: {}]
  %s8 = sld [smem:[#allocation0]]
  $region61: #{resnet_forward.20} parent=0
    _
  %s10 = ssub.s32 1, %s8
  %s11 = scalar_select 0, %s10, %s8
  loop: start=0, step=1, limit=4
  $region2: #{resnet_forward.20} parent=0 // loop_pre_header
    _
  $region3: #{resnet_forward.20} parent=0 // loop_header
    %s13 = sphi 0, %s17
    %p14 = scmp.ge.s32.totalorder %s13, 4
    %s23 = sphi 0, %s25
    %s26 = sphi 0, %s23
    %s27 = sphi 0, %s26
    %s43 = sphi 0, %s27
    %s47 = sphi 0, %s47
    %s49 = sphi 0, %s47
    %s50 = sphi 0, %s49
    %s64 = sphi 0, %s50
    %s68 = sphi 0, %s68
    %s70 = sphi 0, %s68
    %s71 = sphi 0, %s70
    %s85 = sphi 0, %s71
    %s89 = sphi 0, %s89
    %s91 = sphi 0, %s89
    %s92 = sphi 0, %s91
    %s106 = sphi 0, %s92
    %s112 = sphi 0, %s114
    %s115 = sphi 0, %s112
    %s116 = sphi 0, %s115
    %s132 = sphi 0, %s116
    %s136 = sphi 0, %s136
    %s138 = sphi 0, %s136
    %s139 = sphi 0, %s138
    %s153 = sphi 0, %s139
    %s157 = sphi 0, %s157
    %s159 = sphi 0, %s157
    %s160 = sphi 0, %s159
    %s174 = sphi 0, %s160
    %s180 = sphi 0, %s182
    %s183 = sphi 0, %s180
    %s184 = sphi 0, %s183
    %s200 = sphi 0, %s184
  $region4: #{resnet_forward.20} parent=0 // loop_header_branch
    %16 = sbr.rel (%p14) target = $region8
  $region5: #{resnet_forward.20} parent=0 // loop_body
    %s18 = ssub.s32 %s13, 1
    %s19 = ssub.s32 %s13, 2
    %s20 = sadd.s32 %s13, 1
    %s21 = ssub.s32 %s13, %s20
    %p22 = scmp.eq.s32.totalorder %s21, 0
    %s24 = sadd.s32 %s23, 1
    %s25 = scalar_select %p22, %s23, %s24
    %p28 = pneg %p22
    %p29 = scmp.eq.s32.totalorder %s13, 1
    %p30 = por %p28, %p29
    %p31 = scmp.ne.s32.totalorder %s23, %s26
    %p32 = scmp.eq.s32.totalorder %s13, 0
    %p33 = por %p31, %p32
    %p34 = scmp.ne.s32.totalorder %s23, %s26
    %p35 = scmp.eq.s32.totalorder %s18, 1
    %p36 = por %p34, %p35
    %p37 = scmp.ne.s32.totalorder %s26, %s27
    %p38 = scmp.eq.s32.totalorder %s18, 0
    %p39 = por %p37, %p38
    %p40 = scmp.ne.s32.totalorder %s26, %s27
    %p41 = scmp.eq.s32.totalorder %s19, 1
    %p42 = por %p40, %p41
    %p44 = scmp.ne.s32.totalorder %s27, %s43
    %p45 = scmp.eq.s32.totalorder %s19, 0
    %p46 = por %p44, %p45
    %s48 = sadd.s32 %s47, 1
    %p51 = scmp.eq.s32.totalorder %s13, 1
    %p52 = scmp.ne.s32.totalorder %s47, %s49
    %p53 = scmp.eq.s32.totalorder %s13, 0
    %p54 = por %p52, %p53
    %p55 = scmp.ne.s32.totalorder %s47, %s49
    %p56 = scmp.eq.s32.totalorder %s18, 1
    %p57 = por %p55, %p56
    %p58 = scmp.ne.s32.totalorder %s49, %s50
    %p59 = scmp.eq.s32.totalorder %s18, 0
    %p60 = por %p58, %p59
    %p61 = scmp.ne.s32.totalorder %s49, %s50
    %p62 = scmp.eq.s32.totalorder %s19, 1
    %p63 = por %p61, %p62
    %p65 = scmp.ne.s32.totalorder %s50, %s64
    %p66 = scmp.eq.s32.totalorder %s19, 0
    %p67 = por %p65, %p66
    %s69 = sadd.s32 %s68, 1
    %p72 = scmp.eq.s32.totalorder %s13, 1
    %p73 = scmp.ne.s32.totalorder %s68, %s70
    %p74 = scmp.eq.s32.totalorder %s13, 0
    %p75 = por %p73, %p74
    %p76 = scmp.ne.s32.totalorder %s68, %s70
    %p77 = scmp.eq.s32.totalorder %s18, 1
    %p78 = por %p76, %p77
    %p79 = scmp.ne.s32.totalorder %s70, %s71
    %p80 = scmp.eq.s32.totalorder %s18, 0
    %p81 = por %p79, %p80
    %p82 = scmp.ne.s32.totalorder %s70, %s71
    %p83 = scmp.eq.s32.totalorder %s19, 1
    %p84 = por %p82, %p83
    %p86 = scmp.ne.s32.totalorder %s71, %s85
    %p87 = scmp.eq.s32.totalorder %s19, 0
    %p88 = por %p86, %p87
    %s90 = sadd.s32 %s89, 1
    %p93 = scmp.eq.s32.totalorder %s13, 1
    %p94 = scmp.ne.s32.totalorder %s89, %s91
    %p95 = scmp.eq.s32.totalorder %s13, 0
    %p96 = por %p94, %p95
    %p97 = scmp.ne.s32.totalorder %s89, %s91
    %p98 = scmp.eq.s32.totalorder %s18, 1
    %p99 = por %p97, %p98
    %p100 = scmp.ne.s32.totalorder %s91, %s92
    %p101 = scmp.eq.s32.totalorder %s18, 0
    %p102 = por %p100, %p101
    %p103 = scmp.ne.s32.totalorder %s91, %s92
    %p104 = scmp.eq.s32.totalorder %s19, 1
    %p105 = por %p103, %p104
    %p107 = scmp.ne.s32.totalorder %s92, %s106
    %p108 = scmp.eq.s32.totalorder %s19, 0
    %p109 = por %p107, %p108
    %s110 = ssub.s32 %s13, %s20
    %p111 = scmp.eq.s32.totalorder %s110, 0
    %s113 = sadd.s32 %s112, 1
    %s114 = scalar_select %p111, %s112, %s113
    %p117 = pneg %p111
    %p118 = scmp.eq.s32.totalorder %s13, 1
    %p119 = por %p117, %p118
    %p120 = scmp.ne.s32.totalorder %s112, %s115
    %p121 = scmp.eq.s32.totalorder %s13, 0
    %p122 = por %p120, %p121
    %p123 = scmp.ne.s32.totalorder %s112, %s115
    %p124 = scmp.eq.s32.totalorder %s18, 1
    %p125 = por %p123, %p124
    %p126 = scmp.ne.s32.totalorder %s115, %s116
    %p127 = scmp.eq.s32.totalorder %s18, 0
    %p128 = por %p126, %p127
    %p129 = scmp.ne.s32.totalorder %s115, %s116
    %p130 = scmp.eq.s32.totalorder %s19, 1
    %p131 = por %p129, %p130
    %p133 = scmp.ne.s32.totalorder %s116, %s132
    %p134 = scmp.eq.s32.totalorder %s19, 0
    %p135 = por %p133, %p134
    %s137 = sadd.s32 %s136, 1
    %p140 = scmp.eq.s32.totalorder %s13, 1
    %p141 = scmp.ne.s32.totalorder %s136, %s138
    %p142 = scmp.eq.s32.totalorder %s13, 0
    %p143 = por %p141, %p142
    %p144 = scmp.ne.s32.totalorder %s136, %s138
    %p145 = scmp.eq.s32.totalorder %s18, 1
    %p146 = por %p144, %p145
    %p147 = scmp.ne.s32.totalorder %s138, %s139
    %p148 = scmp.eq.s32.totalorder %s18, 0
    %p149 = por %p147, %p148
    %p150 = scmp.ne.s32.totalorder %s138, %s139
    %p151 = scmp.eq.s32.totalorder %s19, 1
    %p152 = por %p150, %p151
    %p154 = scmp.ne.s32.totalorder %s139, %s153
    %p155 = scmp.eq.s32.totalorder %s19, 0
    %p156 = por %p154, %p155
    %s158 = sadd.s32 %s157, 1
    %p161 = scmp.eq.s32.totalorder %s13, 1
    %p162 = scmp.ne.s32.totalorder %s157, %s159
    %p163 = scmp.eq.s32.totalorder %s13, 0
    %p164 = por %p162, %p163
    %p165 = scmp.ne.s32.totalorder %s157, %s159
    %p166 = scmp.eq.s32.totalorder %s18, 1
    %p167 = por %p165, %p166
    %p168 = scmp.ne.s32.totalorder %s159, %s160
    %p169 = scmp.eq.s32.totalorder %s18, 0
    %p170 = por %p168, %p169
    %p171 = scmp.ne.s32.totalorder %s159, %s160
    %p172 = scmp.eq.s32.totalorder %s19, 1
    %p173 = por %p171, %p172
    %p175 = scmp.ne.s32.totalorder %s160, %s174
    %p176 = scmp.eq.s32.totalorder %s19, 0
    %p177 = por %p175, %p176
    %s178 = ssub.s32 %s13, %s20
    %p179 = scmp.eq.s32.totalorder %s178, 0
    %s181 = sadd.s32 %s180, 1
    %s182 = scalar_select %p179, %s180, %s181
    %p185 = pneg %p179
    %p186 = scmp.eq.s32.totalorder %s13, 1
    %p187 = por %p185, %p186
    %p188 = scmp.ne.s32.totalorder %s180, %s183
    %p189 = scmp.eq.s32.totalorder %s13, 0
    %p190 = por %p188, %p189
    %p191 = scmp.ne.s32.totalorder %s180, %s183
    %p192 = scmp.eq.s32.totalorder %s18, 1
    %p193 = por %p191, %p192
    %p194 = scmp.ne.s32.totalorder %s183, %s184
    %p195 = scmp.eq.s32.totalorder %s18, 0
    %p196 = por %p194, %p195
    %p197 = scmp.ne.s32.totalorder %s183, %s184
    %p198 = scmp.eq.s32.totalorder %s19, 1
    %p199 = por %p197, %p198
    %p201 = scmp.ne.s32.totalorder %s184, %s200
    %p202 = scmp.eq.s32.totalorder %s19, 0
    %p203 = por %p201, %p202
    %p204 = scmp.le.s32.totalorder 1, %s13
    %p205 = scmp.lt.s32.totalorder %s13, 3
    %p206 = pnand %p204, %p205
    %p207 = pneg %p206
    // Predicated region
    $region9: #{resnet_forward.20} parent=5 // pred_check
      _
    $region10: #{resnet_forward.20} parent=5 // pred_check_branch
      %209 = sbr.rel (%p206) target = $region12
    $region11: #{resnet_forward.20} parent=5 // pred_region
      %s210 = ssub.s32 %s13, 1
      // Predicated region
      $region13: #{resnet_forward.20} parent=11 // pred_check
        %p211 = pneg %p60
      $region14: #{resnet_forward.20} parent=11 // pred_check_branch
        %213 = sbr.rel (%p211) target = $region16
      $region15: #{resnet_forward.20} parent=11 // pred_region
        _
      $region16: #{resnet_forward.20} parent=11 // pred_fallthru
        _
      // Predicated region
      $region17: #{resnet_forward.20} parent=11 // pred_check
        %p214 = pneg %p81
      $region18: #{resnet_forward.20} parent=11 // pred_check_branch
        %216 = sbr.rel (%p214) target = $region20
      $region19: #{resnet_forward.20} parent=11 // pred_region
        _
      $region20: #{resnet_forward.20} parent=11 // pred_fallthru
        _
      // Predicated region
      $region21: #{resnet_forward.20} parent=11 // pred_check
        %p217 = pneg %p102
      $region22: #{resnet_forward.20} parent=11 // pred_check_branch
        %219 = sbr.rel (%p217) target = $region24
      $region23: #{resnet_forward.20} parent=11 // pred_region
        _
      $region24: #{resnet_forward.20} parent=11 // pred_fallthru
        _
      // Predicated region
      $region25: #{resnet_forward.20} parent=11 // pred_check
        %p220 = pneg %p149
      $region26: #{resnet_forward.20} parent=11 // pred_check_branch
        %222 = sbr.rel (%p220) target = $region28
      $region27: #{resnet_forward.20} parent=11 // pred_region
        _
      $region28: #{resnet_forward.20} parent=11 // pred_fallthru
        _
      // Predicated region
      $region29: #{resnet_forward.20} parent=11 // pred_check
        %p223 = pneg %p170
      $region30: #{resnet_forward.20} parent=11 // pred_check_branch
        %225 = sbr.rel (%p223) target = $region32
      $region31: #{resnet_forward.20} parent=11 // pred_region
        _
      $region32: #{resnet_forward.20} parent=11 // pred_fallthru
        _
    $region12: #{resnet_forward.20} parent=5 // pred_fallthru
      _
    %p226 = scmp.lt.s32.totalorder %s13, 2
    // Predicated region
    $region33: #{resnet_forward.20} parent=5 // pred_check
      %p227 = pneg %p226
    $region34: #{resnet_forward.20} parent=5 // pred_check_branch
      %229 = sbr.rel (%p227) target = $region36
    $region35: #{resnet_forward.20} parent=5 // pred_region
      // Predicated region
      $region37: #{resnet_forward.20} parent=35 // pred_check
        %p230 = pneg %p33
      $region38: #{resnet_forward.20} parent=35 // pred_check_branch
        %232 = sbr.rel (%p230) target = $region40
      $region39: #{resnet_forward.20} parent=35 // pred_region
        %p233 = scmp.lt.s32.totalorder %s13, 1
        %s234 = scalar_select %p233, %s13, 1
        %s235 = smul.addr %s234, 4
        %s236 = smul.addr %s235, 2
        %s237 = scalar_lea.vmem %s0, %s236
      $region40: #{resnet_forward.20} parent=35 // pred_fallthru
        _
      // Predicated region
      $region41: #{resnet_forward.20} parent=35 // pred_check
        %p238 = pneg %p122
      $region42: #{resnet_forward.20} parent=35 // pred_check_branch
        %240 = sbr.rel (%p238) target = $region44
      $region43: #{resnet_forward.20} parent=35 // pred_region
        %p241 = scmp.lt.s32.totalorder %s13, 1
        %s242 = scalar_select %p241, %s13, 1
        %s243 = smul.addr %s242, 6
        %s244 = smul.addr %s243, 4
        %s245 = scalar_lea.vmem %s4, %s244
      $region44: #{resnet_forward.20} parent=35 // pred_fallthru
        _
    $region36: #{resnet_forward.20} parent=5 // pred_fallthru
      _
    %p246 = scmp.le.s32.totalorder 1, %s13
    %p247 = scmp.lt.s32.totalorder %s13, 3
    %p248 = pnand %p246, %p247
    %p249 = pneg %p248
    // Predicated region
    $region45: #{resnet_forward.20} parent=5 // pred_check
      _
    $region46: #{resnet_forward.20} parent=5 // pred_check_branch
      %251 = sbr.rel (%p248) target = $region48
    $region47: #{resnet_forward.20} parent=5 // pred_region
      %s252 = ssub.s32 %s13, 1
      %p253 = scmp.lt.s32.totalorder %s18, 1
      %s254 = scalar_select %p253, %s18, 1
      %s255 = smul.addr %s254, 4
      %s256 = smul.addr %s255, 2
      %s257 = scalar_lea.vmem %s0, %s256
      %p258 = pneg %p39
      %p259 = pneg %p36
      %p260 = pneg %p60
      %p261 = pneg %p57
      %p262 = pneg %p81
      %p263 = pneg %p78
      %p264 = pneg %p102
      %p265 = pneg %p99
      %p266 = scmp.lt.s32.totalorder %s18, 1
      %s267 = scalar_select %p266, %s18, 1
      %s268 = smul.addr %s267, 6
      %s269 = smul.addr %s268, 4
      %s270 = scalar_lea.vmem %s4, %s269
      %p271 = pneg %p128
      %p272 = pneg %p125
      %p273 = pneg %p149
      %p274 = pneg %p146
      %p275 = pneg %p170
      %p276 = pneg %p167
      %p277 = pneg %p196
      %p278 = pneg %p193
      %p279 = scmp.lt.s32.totalorder %s18, 1
      %s280 = scalar_select %p279, %s18, 1
      %s281 = smul.addr %s280, 6
      %s282 = smul.addr %s281, 4
      %s283 = scalar_lea.vmem %s7, %s282
      %p284 = scmp.lt.s32.totalorder %s18, 1
      %s285 = scalar_select %p284, %s18, 1
      %s286 = smul.addr %s285, 4
      %s287 = smul.addr %s286, 2
      %s288 = scalar_lea.vmem %s0, %s287
      %p289 = scmp.lt.s32.totalorder %s18, 1
      %s290 = scalar_select %p289, %s18, 1
      %s291 = smul.addr %s290, 6
      %s292 = smul.addr %s291, 4
      %s293 = scalar_lea.vmem %s4, %s292
      %p294 = scmp.lt.s32.totalorder %s18, 1
      %s295 = scalar_select %p294, %s18, 1
      %s296 = smul.addr %s295, 6
      %s297 = smul.addr %s296, 4
      %s298 = scalar_lea.vmem %s7, %s297
      %v300 = vld [vmem:[%s1] sm:$0x3]
      %v301 = vld [vmem:[%s1 + $0x2] sm:$0x3]
      %vm302 = vcmask 1041408
      %v303 = vsel %vm302, %v300, 0.0
      %v304 = vsel %vm302, %v301, 0.0
      %v305 = vadd.f32 %v303, %v304
      %v306 = vmul.f32 %v305, 0.03125
      %v307 = vmul.f32 %v306, %v306
      %v309 = vrot.slane %v307, 7
      %v311 = vsub.f32 %v306, %v309
      %v312 = vld [vmem:[%s2] sm:$0x1]
      %v313 = vadd.f32 %v311, 1e-05
      %v314 = vrsqrt.pop %v313
      %v317 = vunpack.c.l.s4 1966171168
      %v318 = vunpack.c.0.s8 %v317
      %v319 = vlaneseq
      %v320 = vshrl.u32 %v319, 7
      %v321 = vsub.s32 %v318, %v320
      %v322 = vrot.slane %v314, %v321
      %v323 = vcombine.high %v322, %v322
      %v325 = vunpack.c.l.s4 1966171168
      %v326 = vunpack.c.0.s8 %v325
      %v327 = vlaneseq
      %v328 = vshrl.u32 %v327, 7
      %v329 = vsub.s32 %v326, %v328
      %v330 = vrot.slane %v323, %v329
      %v332 = vmul.f32 %v312, %v330
      %v333 = vld [vmem:[%s3] sm:$0x1]
      %v334 = vmul.f32 %v306, %v332
      %v335 = vsub.f32 %v333, %v334
      %v336 = vld [vmem:[%s288] sm:$0x3]
      %v337 = vld [vmem:[%s288 + $0x2] sm:$0x3]
      %v338 = vld [vmem:[%s288 + $0x4] sm:$0x3]
      %v339 = vld [vmem:[%s288 + $0x6] sm:$0x3]
      %v340 = vunpack.c.l.bf16 %v336
      %v341 = vunpack.c.l.bf16 %v337
      %v342 = vunpack.c.l.bf16 %v338
      %v343 = vunpack.c.l.bf16 %v339
      %v345 = vlaneseq
      %v346 = vshrl.u32 %v345, 7
      %v347 = vsub.s32 0, %v346
      %v348 = vrot.slane %v332, %v347
      %v350 = vmul.f32 %v340, %v348
      %v351 = vmul.f32 %v341, %v348
      %v352 = vmul.f32 %v342, %v348
      %v353 = vmul.f32 %v343, %v348
      %v355 = vlaneseq
      %v356 = vshrl.u32 %v355, 7
      %v357 = vsub.s32 0, %v356
      %v358 = vrot.slane %v335, %v357
      %v360 = vadd.f32 %v350, %v358
      %v361 = vadd.f32 %v351, %v358
      %v362 = vadd.f32 %v352, %v358
      %v363 = vadd.f32 %v353, %v358
      %s364 = scalar_lea.vmem %s293, 4
      %v365 = vld [vmem:[%s364] sm:$0x7]
      %v366 = vld [vmem:[%s364 + $0x4] sm:$0x7]
      %v367 = vld [vmem:[%s364 + $0x8] sm:$0x7]
      %v368 = vld [vmem:[%s364 + $0xc] sm:$0x7]
      %v374 = vunpack.c.l.s4 1983009808
      %v375 = vunpack.c.0.s8 %v374
      %v376 = vlaneseq
      %v377 = vshrl.u32 %v376, 7
      %v378 = vsub.s32 %v375, %v377
      %v379 = vrot.slane %v365, %v378
      %v380 = vcombine.high %v379, %v379
      %v382 = vunpack.c.l.s4 1983009808
      %v383 = vunpack.c.0.s8 %v382
      %v384 = vlaneseq
      %v385 = vshrl.u32 %v384, 7
      %v386 = vsub.s32 %v383, %v385
      %v387 = vrot.slane %v366, %v386
      %v388 = vcombine.high %v387, %v387
      %v390 = vunpack.c.l.s4 1983009808
      %v391 = vunpack.c.0.s8 %v390
      %v392 = vlaneseq
      %v393 = vshrl.u32 %v392, 7
      %v394 = vsub.s32 %v391, %v393
      %v395 = vrot.slane %v367, %v394
      %v396 = vcombine.high %v395, %v395
      %v398 = vunpack.c.l.s4 1983009808
      %v399 = vunpack.c.0.s8 %v398
      %v400 = vlaneseq
      %v401 = vshrl.u32 %v400, 7
      %v402 = vsub.s32 %v399, %v401
      %v403 = vrot.slane %v368, %v402
      %v404 = vcombine.high %v403, %v403
      %vm405 = vsmask.f32 1280
      %vm406 = vsmask.f32 3336
      %vm407 = vmor %vm405, %vm406
      %vm408 = vsmask.f32 5392
      %vm409 = vmor %vm407, %vm408
      %vm410 = vsmask.f32 7448
      %vm411 = vmor %vm409, %vm410
      %v413 = vshrl.u32 %v379, 16
      %v415 = vrot.slane %v413, 6
      %v416 = vshll.u32 %v379, 16
      %v418 = vrot.slane %v416, 7
      %v419 = vor.u32 %v415, %v418
      %v420 = vrot.slane %v419, 2
      %v422 = vshll.u32 %v380, 16
      %v424 = vrot.slane %v422, 7
      %v425 = vsel %vm411, %v420, %v424
      %v427 = vshrl.u32 %v387, 16
      %v429 = vrot.slane %v427, 6
      %v430 = vshll.u32 %v387, 16
      %v432 = vrot.slane %v430, 7
      %v433 = vor.u32 %v429, %v432
      %v434 = vrot.slane %v433, 2
      %v436 = vshll.u32 %v388, 16
      %v438 = vrot.slane %v436, 7
      %v439 = vsel %vm411, %v434, %v438
      %v441 = vshrl.u32 %v395, 16
      %v443 = vrot.slane %v441, 6
      %v444 = vshll.u32 %v395, 16
      %v446 = vrot.slane %v444, 7
      %v447 = vor.u32 %v443, %v446
      %v448 = vrot.slane %v447, 2
      %v450 = vshll.u32 %v396, 16
      %v452 = vrot.slane %v450, 7
      %v453 = vsel %vm411, %v448, %v452
      %v455 = vshrl.u32 %v403, 16
      %v457 = vrot.slane %v455, 6
      %v458 = vshll.u32 %v403, 16
      %v460 = vrot.slane %v458, 7
      %v461 = vor.u32 %v457, %v460
      %v462 = vrot.slane %v461, 2
      %v464 = vshll.u32 %v404, 16
      %v466 = vrot.slane %v464, 7
      %v467 = vsel %vm411, %v462, %v466
      %v468 = vld [vmem:[%s5] sm:$0xf]
      %v469 = vld [vmem:[%s5 + $0x4] sm:$0xf]
      %v470 = vld [vmem:[%s5 + $0x8] sm:$0xf]
      %v471 = vld [vmem:[%s5 + $0xc] sm:$0xf]
      %v472 = vld [vmem:[%s5 + $0x10] sm:$0xf]
      %v473 = vld [vmem:[%s5 + $0x14] sm:$0xf]
      %v474 = vld [vmem:[%s5 + $0x18] sm:$0xf]
      %v475 = vld [vmem:[%s5 + $0x1c] sm:$0xf]
      %v476 = vld [vmem:[%s6] sm:$0x1]
      %v478 = vlaneseq
      %v479 = vshrl.u32 %v478, 7
      %v480 = vsub.s32 0, %v479
      %v481 = vrot.slane %v476, %v480
      %v483 = vcombine.low %v425, %v439
      %v484 = vcombine.low %v453, %v467
      %v486 = vunpack.c.l.s4 1983009808
      %v487 = vunpack.c.0.s8 %v486
      %v488 = vlaneseq
      %v489 = vshrl.u32 %v488, 7
      %v490 = vsub.s32 %v487, %v489
      %v491 = vrot.slane %v483, %v490
      %v493 = vunpack.c.l.s4 1983009808
      %v494 = vunpack.c.0.s8 %v493
      %v495 = vlaneseq
      %v496 = vshrl.u32 %v495, 7
      %v497 = vsub.s32 %v494, %v496
      %v498 = vrot.slane %v484, %v497
      %v499 = vcombine.low %v491, %v498
      %v508 = vunpack.c.l.b16 %v468
      %v509 = vunpack.c.l.b16 %v469
      %v510 = vunpack.c.l.b16 %v470
      %v511 = vunpack.c.l.b16 %v471
      %v512 = vunpack.c.l.b16 %v472
      %v513 = vunpack.c.l.b16 %v473
      %v514 = vunpack.c.l.b16 %v474
      %v515 = vunpack.c.l.b16 %v475
      %v516 = vpack.c.b16 %v509, %v508
      %v517 = vpack.c.b16 %v511, %v510
      %v518 = vpack.c.b16 %v513, %v512
      %v519 = vpack.c.b16 %v515, %v514
      %vm524 = vcmask 523264
      %v526 = vsel %vm524, %v499, 0
      %528 = vmatprep.subr.bf16.mxu0 0
      %529 = vmatpush1.bf16.msra.mxu0 0
      %530 = vmatprep.subr.bf16.mxu0 0
      %531 = vmatpush1.bf16.msra.mxu0 0
      %532 = vmatprep.subr.bf16.mxu0 0
      %533 = vmatpush1.bf16.msra.mxu0 0
      %534 = vmatprep.subr.bf16.mxu0 0
      %535 = vmatpush1.bf16.msra.mxu0 0
      %536 = vmatprep.subr.bf16.mxu0 0
      %537 = vmatpush1.bf16.msra.mxu0 %v519
      %538 = vmatprep.subr.bf16.mxu0 0
      %539 = vmatpush1.bf16.msra.mxu0 %v518
      %540 = vmatprep.subr.bf16.mxu0 0
      %541 = vmatpush1.bf16.msra.mxu0 %v517
      %542 = vmatprep.subr.bf16.mxu0 0
      %543 = vmatpush1.bf16.msra.mxu0 %v516
      %544 = vmatprep.subr.bf16.mxu0 0
      %545 = vmatpush2.bf16.msra.mxu0 0
      %546 = vmatprep.subr.bf16.mxu0 0
      %547 = vmatpush2.bf16.msra.mxu0 0
      %548 = vmatprep.subr.bf16.mxu0 0
      %549 = vmatpush2.bf16.msra.mxu0 0
      %550 = vmatprep.subr.bf16.mxu0 0
      %551 = vmatpush2.bf16.msra.mxu0 0
      %552 = vmatprep.subr.bf16.mxu0 0
      %553 = vmatpush2.bf16.msra.mxu0 0
      %554 = vmatprep.subr.bf16.mxu0 0
      %555 = vmatpush2.bf16.msra.mxu0 0
      %556 = vmatprep.subr.bf16.mxu0 0
      %557 = vmatpush2.bf16.msra.mxu0 0
      %558 = vmatprep.subr.bf16.mxu0 0
      %559 = vmatpush2.bf16.msra.mxu0 0
      %560 = vmatprep.mubr.bf16.mxu0 0
      %561 = vmatmul.mubr.bf16.gmra.mxu0 %v526
      %v562 = vpop.f32.mrf.mxu0
      %v563 = vadd.f32 %v481, %v562
      %v564 = vpop.f32.mrf.mxu0
      %v565 = vpop.f32.mrf.mxu0
      %v566 = vadd.f32 %v481, %v565
      %v567 = vpop.f32.mrf.mxu0
      %568 = vdwg.mxu0
      %v571 = vcombine.high %v563, %v563
      %v572 = vcombine.high %v566, %v566
      %v575 = vadd.f32 %v360, %v563
      %v576 = vadd.f32 %v361, %v571
      %v577 = vadd.f32 %v362, %v566
      %v578 = vadd.f32 %v363, %v572
      %v579 = vmax.f32 %v575, 0.0
      %v580 = vmax.f32 %v576, 0.0
      %v581 = vmax.f32 %v577, 0.0
      %v582 = vmax.f32 %v578, 0.0
      %v583 = vpack.c.bf16 %v579, %v579
      %v584 = vpack.c.bf16 %v580, %v580
      %v585 = vpack.c.bf16 %v581, %v581
      %v586 = vpack.c.bf16 %v582, %v582
      %v588 = vshrl.u32 %v583, 16
      %v590 = vrot.slane %v588, 7
      %v591 = vshll.u32 %v583, 16
      %v593 = vor.u32 %v590, %v591
      %v595 = vshrl.u32 %v584, 16
      %v597 = vrot.slane %v595, 7
      %v598 = vshll.u32 %v584, 16
      %v600 = vor.u32 %v597, %v598
      %v602 = vshrl.u32 %v585, 16
      %v604 = vrot.slane %v602, 7
      %v605 = vshll.u32 %v585, 16
      %v607 = vor.u32 %v604, %v605
      %v609 = vshrl.u32 %v586, 16
      %v611 = vrot.slane %v609, 7
      %v612 = vshll.u32 %v586, 16
      %v614 = vor.u32 %v611, %v612
      %vm619 = vcmask 1040384
      %vm620 = vsmask.f32 256
      %vm621 = vmand %vm619, %vm620
      %v622 = vsel %vm621, 0, %v593
      %v623 = vsel %vm621, 0, %v600
      %v624 = vsel %vm621, 0, %v607
      %v625 = vsel %vm621, 0, %v614
      %vm626 = vcmask 1042432
      %vm627 = vsmask.f32 2304
      %vm628 = vmand %vm626, %vm627
      %v629 = vsel %vm628, %v622, 0
      %v630 = vsel %vm628, %v623, 0
      %v631 = vsel %vm628, %v624, 0
      %v632 = vsel %vm628, %v625, 0
      %633 = vst [vmem:[%s298] sm:$0xf] 0
      %634 = vst [vmem:[%s298 + $0x4] sm:$0xf] %v629
      %635 = vst [vmem:[%s298 + $0x8] sm:$0xf] %v630
      %636 = vst [vmem:[%s298 + $0xc] sm:$0xf] %v631
      %637 = vst [vmem:[%s298 + $0x10] sm:$0xf] %v632
      %638 = vst [vmem:[%s298 + $0x14] sm:$0xf] 0
      %p639 = scmp.lt.s32.totalorder %s18, 1
      %s640 = scalar_select %p639, %s18, 1
      %s641 = smul.addr %s640, 6
      %s642 = smul.addr %s641, 4
      %s643 = scalar_lea.vmem %s7, %s642
      // Predicated region
      $region49: #{resnet_forward.20} parent=47 // pred_check
        %p644 = pneg %p193
      $region50: #{resnet_forward.20} parent=47 // pred_check_branch
        %646 = sbr.rel (%p644) target = $region52
      $region51: #{resnet_forward.20} parent=47 // pred_region
        _
      $region52: #{resnet_forward.20} parent=47 // pred_fallthru
        _
    $region48: #{resnet_forward.20} parent=5 // pred_fallthru
      _
    %p647 = scmp.le.s32.totalorder 2, %s13
    // Predicated region
    $region53: #{resnet_forward.20} parent=5 // pred_check
      %p648 = pneg %p647
    $region54: #{resnet_forward.20} parent=5 // pred_check_branch
      %650 = sbr.rel (%p648) target = $region56
    $region55: #{resnet_forward.20} parent=5 // pred_region
      %s651 = ssub.s32 %s13, 2
      // Predicated region
      $region57: #{resnet_forward.20} parent=55 // pred_check
        %p652 = pneg %p199
      $region58: #{resnet_forward.20} parent=55 // pred_check_branch
        %654 = sbr.rel (%p652) target = $region60
      $region59: #{resnet_forward.20} parent=55 // pred_region
        %p655 = scmp.lt.s32.totalorder %s19, 1
        %s656 = scalar_select %p655, %s19, 1
        %s657 = smul.addr %s656, 6
        %s658 = smul.addr %s657, 4
        %s659 = scalar_lea.vmem %s7, %s658
      $region60: #{resnet_forward.20} parent=55 // pred_fallthru
        _
    $region56: #{resnet_forward.20} parent=5 // pred_fallthru
      _
  $region6: #{resnet_forward.20} parent=0 // loop_footer
    %s17 = sadd.s32 1, %s13
  $region7: #{resnet_forward.20} parent=0 // loop_footer_branch
    %12 = sbr.rel target = $region3
  $region8: #{resnet_forward.20} parent=0 // loop_exit
    _

// kernel: resnet_forward.29
$region0: #{resnet_forward.29}
  #allocation0 [shape = 'u32[]', space=smem, size = 0x4, offset = 0x4, fixed_abs, tag = 'smem constant byte address 0x4 - core index']
  #allocation1 [shape = 'u32[144,128]{1,0:T(1,128)}', space=vmem, size = 0x12000, scoped, tag = 'internal scratch']
  %s0 = inlined_call_operand.vmem [shape: bf16[2,6,8,128], index: 0, kind: input, shape index: {}]
  %s1 = inlined_call_operand.vmem [shape: bf16[128,128], index: 1, kind: input, shape index: {}]
  %s2 = inlined_call_operand.vmem [shape: f32[1,128], index: 2, kind: input, shape index: {}]
  %s3 = inlined_call_operand.hbm [shape: f32[2,128], index: 3, kind: output, shape index: {}]
  %s4 = sld [smem:[#allocation0]]
  $region22: #{resnet_forward.29} parent=0
    _
  %s6 = ssub.s32 1, %s4
  %s7 = scalar_select 0, %s6, %s4
  $region1: #{resnet_forward.29} parent=0
    #allocation2 [shape = 'u8[1024]{0}', space=vmem, size = 0x400, scoped, tag = 'output window, operand 0, single buffered']
    #allocation3 [shape = 's32[1]{0}', space=sflag, size = 0x4, scoped, tag = 'scoped memory for resnet_forward.29']
    %8 = vsyncpa [#allocation3], 0
    // Predicated region
    $region2: #{resnet_forward.29} parent=1 // pred_check
      _
    $region3: #{resnet_forward.29} parent=1 // pred_check_branch
      %10 = sbr.rel (0) target = $region5
    $region4: #{resnet_forward.29} parent=1 // pred_region
      _
    $region5: #{resnet_forward.29} parent=1 // pred_fallthru
      _
    // Predicated region
    $region6: #{resnet_forward.29} parent=1 // pred_check
      _
    $region7: #{resnet_forward.29} parent=1 // pred_check_branch
      %12 = sbr.rel (0) target = $region9
    $region8: #{resnet_forward.29} parent=1 // pred_region
      _
    $region9: #{resnet_forward.29} parent=1 // pred_fallthru
      _
    // Predicated region
    $region10: #{resnet_forward.29} parent=1 // pred_check
      _
    $region11: #{resnet_forward.29} parent=1 // pred_check_branch
      %14 = sbr.rel (0) target = $region13
    $region12: #{resnet_forward.29} parent=1 // pred_region
      _
    $region13: #{resnet_forward.29} parent=1 // pred_fallthru
      _
    %s16 = scalar_lea.vmem %s0, 4
    %v17 = vld [vmem:[%s16] sm:$0x7]
    %v18 = vld [vmem:[%s16 + $0x4] sm:$0x7]
    %v19 = vld [vmem:[%s16 + $0x8] sm:$0x7]
    %v20 = vld [vmem:[%s16 + $0xc] sm:$0x7]
    %v21 = vld [vmem:[%s16 + $0x18] sm:$0x7]
    %v22 = vld [vmem:[%s16 + $0x1c] sm:$0x7]
    %v23 = vld [vmem:[%s16 + $0x20] sm:$0x7]
    %v24 = vld [vmem:[%s16 + $0x24] sm:$0x7]
    %v25 = vunpack.c.l.bf16 %v17
    %v26 = vunpack.c.l.bf16 %v18
    %v27 = vunpack.c.l.bf16 %v19
    %v28 = vunpack.c.l.bf16 %v20
    %v29 = vunpack.c.l.bf16 %v21
    %v30 = vunpack.c.l.bf16 %v22
    %v31 = vunpack.c.l.bf16 %v23
    %v32 = vunpack.c.l.bf16 %v24
    %v41 = vcombine.high %v25, %v25
    %v42 = vcombine.high %v26, %v26
    %v43 = vcombine.high %v27, %v27
    %v44 = vcombine.high %v28, %v28
    %v45 = vcombine.high %v29, %v29
    %v46 = vcombine.high %v30, %v30
    %v47 = vcombine.high %v31, %v31
    %v48 = vcombine.high %v32, %v32
    %vm49 = vcmask 1042432
    %vm50 = vcmask 1046532
    %vm51 = vmor %vm49, %vm50
    %v52 = vrot.slane %v25, 5
    %v53 = vrot.slane %v52, 4
    %v54 = vrot.slane %v41, 5
    %v55 = vsel %vm51, %v53, %v54
    %v56 = vrot.slane %v26, 5
    %v57 = vrot.slane %v56, 4
    %v58 = vrot.slane %v42, 5
    %v59 = vsel %vm51, %v57, %v58
    %v60 = vrot.slane %v27, 5
    %v61 = vrot.slane %v60, 4
    %v62 = vrot.slane %v43, 5
    %v63 = vsel %vm51, %v61, %v62
    %v64 = vrot.slane %v28, 5
    %v65 = vrot.slane %v64, 4
    %v66 = vrot.slane %v44, 5
    %v67 = vsel %vm51, %v65, %v66
    %v68 = vrot.slane %v29, 5
    %v69 = vrot.slane %v68, 4
    %v70 = vrot.slane %v45, 5
    %v71 = vsel %vm51, %v69, %v70
    %v72 = vrot.slane %v30, 5
    %v73 = vrot.slane %v72, 4
    %v74 = vrot.slane %v46, 5
    %v75 = vsel %vm51, %v73, %v74
    %v76 = vrot.slane %v31, 5
    %v77 = vrot.slane %v76, 4
    %v78 = vrot.slane %v47, 5
    %v79 = vsel %vm51, %v77, %v78
    %v80 = vrot.slane %v32, 5
    %v81 = vrot.slane %v80, 4
    %v82 = vrot.slane %v48, 5
    %v83 = vsel %vm51, %v81, %v82
    %v84 = vcombine.low %v55, %v59
    %v85 = vcombine.low %v63, %v67
    %v86 = vcombine.low %v71, %v75
    %v87 = vcombine.low %v79, %v83
    %v92 = vadd.f32 %v84, %v85
    %v93 = vrot.slane %v92, 4
    %v94 = vadd.f32 %v92, %v93
    %v95 = vrot.slane %v94, 2
    %v96 = vadd.f32 %v94, %v95
    %v97 = vrot.slane %v96, 1
    %v98 = vadd.f32 %v96, %v97
    %v99 = vadd.f32 %v86, %v87
    %v100 = vrot.slane %v99, 4
    %v101 = vadd.f32 %v99, %v100
    %v102 = vrot.slane %v101, 2
    %v103 = vadd.f32 %v101, %v102
    %v104 = vrot.slane %v103, 1
    %v105 = vadd.f32 %v103, %v104
    %v106 = vrcp.pop 16.0
    %v107 = vmul.f32 %v98, %v106
    %v108 = vmul.f32 %v105, %v106
    %v109 = vpack.c.bf16 %v107, %v107
    %v110 = vpack.c.bf16 %v108, %v108
    %v111 = vld [vmem:[%s1] sm:$0xf]
    %v112 = vld [vmem:[%s1 + $0x4] sm:$0xf]
    %v113 = vld [vmem:[%s1 + $0x8] sm:$0xf]
    %v114 = vld [vmem:[%s1 + $0xc] sm:$0xf]
    %v115 = vld [vmem:[%s1 + $0x10] sm:$0xf]
    %v116 = vld [vmem:[%s1 + $0x14] sm:$0xf]
    %v117 = vld [vmem:[%s1 + $0x18] sm:$0xf]
    %v118 = vld [vmem:[%s1 + $0x1c] sm:$0xf]
    %v119 = vld [vmem:[%s1 + $0x20] sm:$0xf]
    %v120 = vld [vmem:[%s1 + $0x24] sm:$0xf]
    %v121 = vld [vmem:[%s1 + $0x28] sm:$0xf]
    %v122 = vld [vmem:[%s1 + $0x2c] sm:$0xf]
    %v123 = vld [vmem:[%s1 + $0x30] sm:$0xf]
    %v124 = vld [vmem:[%s1 + $0x34] sm:$0xf]
    %v125 = vld [vmem:[%s1 + $0x38] sm:$0xf]
    %v126 = vld [vmem:[%s1 + $0x3c] sm:$0xf]
    %v127 = vld [vmem:[%s2] sm:$0x1]
    %v129 = vlaneseq
    %v130 = vshrl.u32 %v129, 7
    %v131 = vsub.s32 0, %v130
    %v132 = vrot.slane %v127, %v131
    %v136 = vunpack.c.l.b16 %v109
    %v137 = vunpack.c.l.b16 %v110
    %vm138 = vcmask 1041409
    %v139 = vsel %vm138, %v137, %v136
    %v140 = vpack.c.b16 %v139, %v139
    %v158 = vunpack.c.l.b16 %v111
    %v159 = vunpack.c.l.b16 %v112
    %v160 = vunpack.c.l.b16 %v113
    %v161 = vunpack.c.l.b16 %v114
    %v162 = vunpack.c.l.b16 %v115
    %v163 = vunpack.c.l.b16 %v116
    %v164 = vunpack.c.l.b16 %v117
    %v165 = vunpack.c.l.b16 %v118
    %v166 = vunpack.c.l.b16 %v119
    %v167 = vunpack.c.l.b16 %v120
    %v168 = vunpack.c.l.b16 %v121
    %v169 = vunpack.c.l.b16 %v122
    %v170 = vunpack.c.l.b16 %v123
    %v171 = vunpack.c.l.b16 %v124
    %v172 = vunpack.c.l.b16 %v125
    %v173 = vunpack.c.l.b16 %v126
    %v174 = vpack.c.b16 %v159, %v158
    %v175 = vpack.c.b16 %v161, %v160
    %v176 = vpack.c.b16 %v163, %v162
    %v177 = vpack.c.b16 %v165, %v164
    %v178 = vpack.c.b16 %v167, %v166
    %v179 = vpack.c.b16 %v169, %v168
    %v180 = vpack.c.b16 %v171, %v170
    %v181 = vpack.c.b16 %v173, %v172
    %190 = vmatprep.subr.bf16.mxu0 0
    %191 = vmatpush1.bf16.msra.mxu0 %v181
    %192 = vmatprep.subr.bf16.mxu0 0
    %193 = vmatpush1.bf16.msra.mxu0 %v180
    %194 = vmatprep.subr.bf16.mxu0 0
    %195 = vmatpush1.bf16.msra.mxu0 %v179
    %196 = vmatprep.subr.bf16.mxu0 0
    %197 = vmatpush1.bf16.msra.mxu0 %v178
    %198 = vmatprep.subr.bf16.mxu0 0
    %199 = vmatpush1.bf16.msra.mxu0 %v177
    %200 = vmatprep.subr.bf16.mxu0 0
    %201 = vmatpush1.bf16.msra.mxu0 %v176
    %202 = vmatprep.subr.bf16.mxu0 0
    %203 = vmatpush1.bf16.msra.mxu0 %v175
    %204 = vmatprep.subr.bf16.mxu0 0
    %205 = vmatpush1.bf16.msra.mxu0 %v174
    %206 = vmatprep.subr.bf16.mxu0 0
    %207 = vmatpush2.bf16.msra.mxu0 0
    %208 = vmatprep.subr.bf16.mxu0 0
    %209 = vmatpush2.bf16.msra.mxu0 0
    %210 = vmatprep.subr.bf16.mxu0 0
    %211 = vmatpush2.bf16.msra.mxu0 0
    %212 = vmatprep.subr.bf16.mxu0 0
    %213 = vmatpush2.bf16.msra.mxu0 0
    %214 = vmatprep.subr.bf16.mxu0 0
    %215 = vmatpush2.bf16.msra.mxu0 0
    %216 = vmatprep.subr.bf16.mxu0 0
    %217 = vmatpush2.bf16.msra.mxu0 0
    %218 = vmatprep.subr.bf16.mxu0 0
    %219 = vmatpush2.bf16.msra.mxu0 0
    %220 = vmatprep.subr.bf16.mxu0 0
    %221 = vmatpush2.bf16.msra.mxu0 0
    %222 = vmatprep.mubr.bf16.mxu0 0
    %223 = vmatmul.mubr.bf16.gmra.mxu0 %v140
    %v224 = vpop.f32.mrf.mxu0
    %v225 = vadd.f32 %v132, %v224
    %v226 = vpop.f32.mrf.mxu0
    %v227 = vpop.f32.mrf.mxu0
    %v228 = vpop.f32.mrf.mxu0
    %229 = vdwg.mxu0
    %230 = vst [vmem:[#allocation2] sm:$0x3] %v225
    // Predicated region
    $region14: #{resnet_forward.29} parent=1 // pred_check
      _
    $region15: #{resnet_forward.29} parent=1 // pred_check_branch
      %232 = sbr.rel (0) target = $region17
    $region16: #{resnet_forward.29} parent=1 // pred_region
      %s234 = ssub.s32 32, 32
      %235 = vsyncadd [#allocation3], %s234
      %s237 = sshll.u32 [#allocation2], 4
      %s238 = int_to_ptr.vmem [resolvable:$true] %s237
      %240 = dma.vmem_to_hbm [thread:$0]  %s238, 32, %s3, [#allocation3]
    $region17: #{resnet_forward.29} parent=1 // pred_fallthru
      _
    // Predicated region
    $region18: #{resnet_forward.29} parent=1 // pred_check
      _
    $region19: #{resnet_forward.29} parent=1 // pred_check_branch
      %242 = sbr.rel (0) target = $region21
    $region20: #{resnet_forward.29} parent=1 // pred_region
      %243 = dma.done [#allocation3], 32
    $region21: #{resnet_forward.29} parent=1 // pred_fallthru
      _
    %244 = vsyncpa [#allocation3], 1

// kernel: resnet_forward.28
$region0: #{resnet_forward.28}
  #allocation0 [shape = 'u32[]', space=smem, size = 0x4, offset = 0x4, fixed_abs, tag = 'smem constant byte address 0x4 - core index']
  #allocation1 [shape = 'u32[144,128]{1,0:T(1,128)}', space=vmem, size = 0x12000, scoped, tag = 'internal scratch']
  %s0 = inlined_call_operand.vmem [shape: bf16[2,4,4,128], index: 0, kind: input, shape index: {}]
  %s1 = inlined_call_operand.vmem [shape: f32[2,2,128], index: 1, kind: input, shape index: {}]
  %s2 = inlined_call_operand.vmem [shape: f32[1,128], index: 2, kind: input, shape index: {}]
  %s3 = inlined_call_operand.vmem [shape: f32[1,128], index: 3, kind: input, shape index: {}]
  %s4 = inlined_call_operand.vmem [shape: bf16[2,6,8,128], index: 4, kind: input, shape index: {}]
  %s5 = inlined_call_operand.vmem [shape: bf16[16,128], index: 5, kind: input, shape index: {}]
  %s6 = inlined_call_operand.vmem [shape: f32[1,128], index: 6, kind: input, shape index: {}]
  %s7 = inlined_call_operand.vmem [shape: bf16[2,6,8,128], index: 7, kind: output, shape index: {}]
  %s8 = sld [smem:[#allocation0]]
  $region61: #{resnet_forward.28} parent=0
    _
  %s10 = ssub.s32 1, %s8
  %s11 = scalar_select 0, %s10, %s8
  loop: start=0, step=1, limit=4
  $region2: #{resnet_forward.28} parent=0 // loop_pre_header
    _
  $region3: #{resnet_forward.28} parent=0 // loop_header
    %s13 = sphi 0, %s17
    %p14 = scmp.ge.s32.totalorder %s13, 4
    %s23 = sphi 0, %s25
    %s26 = sphi 0, %s23
    %s27 = sphi 0, %s26
    %s43 = sphi 0, %s27
    %s47 = sphi 0, %s47
    %s49 = sphi 0, %s47
    %s50 = sphi 0, %s49
    %s64 = sphi 0, %s50
    %s68 = sphi 0, %s68
    %s70 = sphi 0, %s68
    %s71 = sphi 0, %s70
    %s85 = sphi 0, %s71
    %s89 = sphi 0, %s89
    %s91 = sphi 0, %s89
    %s92 = sphi 0, %s91
    %s106 = sphi 0, %s92
    %s112 = sphi 0, %s114
    %s115 = sphi 0, %s112
    %s116 = sphi 0, %s115
    %s132 = sphi 0, %s116
    %s136 = sphi 0, %s136
    %s138 = sphi 0, %s136
    %s139 = sphi 0, %s138
    %s153 = sphi 0, %s139
    %s157 = sphi 0, %s157
    %s159 = sphi 0, %s157
    %s160 = sphi 0, %s159
    %s174 = sphi 0, %s160
    %s180 = sphi 0, %s182
    %s183 = sphi 0, %s180
    %s184 = sphi 0, %s183
    %s200 = sphi 0, %s184
  $region4: #{resnet_forward.28} parent=0 // loop_header_branch
    %16 = sbr.rel (%p14) target = $region8
  $region5: #{resnet_forward.28} parent=0 // loop_body
    %s18 = ssub.s32 %s13, 1
    %s19 = ssub.s32 %s13, 2
    %s20 = sadd.s32 %s13, 1
    %s21 = ssub.s32 %s13, %s20
    %p22 = scmp.eq.s32.totalorder %s21, 0
    %s24 = sadd.s32 %s23, 1
    %s25 = scalar_select %p22, %s23, %s24
    %p28 = pneg %p22
    %p29 = scmp.eq.s32.totalorder %s13, 1
    %p30 = por %p28, %p29
    %p31 = scmp.ne.s32.totalorder %s23, %s26
    %p32 = scmp.eq.s32.totalorder %s13, 0
    %p33 = por %p31, %p32
    %p34 = scmp.ne.s32.totalorder %s23, %s26
    %p35 = scmp.eq.s32.totalorder %s18, 1
    %p36 = por %p34, %p35
    %p37 = scmp.ne.s32.totalorder %s26, %s27
    %p38 = scmp.eq.s32.totalorder %s18, 0
    %p39 = por %p37, %p38
    %p40 = scmp.ne.s32.totalorder %s26, %s27
    %p41 = scmp.eq.s32.totalorder %s19, 1
    %p42 = por %p40, %p41
    %p44 = scmp.ne.s32.totalorder %s27, %s43
    %p45 = scmp.eq.s32.totalorder %s19, 0
    %p46 = por %p44, %p45
    %s48 = sadd.s32 %s47, 1
    %p51 = scmp.eq.s32.totalorder %s13, 1
    %p52 = scmp.ne.s32.totalorder %s47, %s49
    %p53 = scmp.eq.s32.totalorder %s13, 0
    %p54 = por %p52, %p53
    %p55 = scmp.ne.s32.totalorder %s47, %s49
    %p56 = scmp.eq.s32.totalorder %s18, 1
    %p57 = por %p55, %p56
    %p58 = scmp.ne.s32.totalorder %s49, %s50
    %p59 = scmp.eq.s32.totalorder %s18, 0
    %p60 = por %p58, %p59
    %p61 = scmp.ne.s32.totalorder %s49, %s50
    %p62 = scmp.eq.s32.totalorder %s19, 1
    %p63 = por %p61, %p62
    %p65 = scmp.ne.s32.totalorder %s50, %s64
    %p66 = scmp.eq.s32.totalorder %s19, 0
    %p67 = por %p65, %p66
    %s69 = sadd.s32 %s68, 1
    %p72 = scmp.eq.s32.totalorder %s13, 1
    %p73 = scmp.ne.s32.totalorder %s68, %s70
    %p74 = scmp.eq.s32.totalorder %s13, 0
    %p75 = por %p73, %p74
    %p76 = scmp.ne.s32.totalorder %s68, %s70
    %p77 = scmp.eq.s32.totalorder %s18, 1
    %p78 = por %p76, %p77
    %p79 = scmp.ne.s32.totalorder %s70, %s71
    %p80 = scmp.eq.s32.totalorder %s18, 0
    %p81 = por %p79, %p80
    %p82 = scmp.ne.s32.totalorder %s70, %s71
    %p83 = scmp.eq.s32.totalorder %s19, 1
    %p84 = por %p82, %p83
    %p86 = scmp.ne.s32.totalorder %s71, %s85
    %p87 = scmp.eq.s32.totalorder %s19, 0
    %p88 = por %p86, %p87
    %s90 = sadd.s32 %s89, 1
    %p93 = scmp.eq.s32.totalorder %s13, 1
    %p94 = scmp.ne.s32.totalorder %s89, %s91
    %p95 = scmp.eq.s32.totalorder %s13, 0
    %p96 = por %p94, %p95
    %p97 = scmp.ne.s32.totalorder %s89, %s91
    %p98 = scmp.eq.s32.totalorder %s18, 1
    %p99 = por %p97, %p98
    %p100 = scmp.ne.s32.totalorder %s91, %s92
    %p101 = scmp.eq.s32.totalorder %s18, 0
    %p102 = por %p100, %p101
    %p103 = scmp.ne.s32.totalorder %s91, %s92
    %p104 = scmp.eq.s32.totalorder %s19, 1
    %p105 = por %p103, %p104
    %p107 = scmp.ne.s32.totalorder %s92, %s106
    %p108 = scmp.eq.s32.totalorder %s19, 0
    %p109 = por %p107, %p108
    %s110 = ssub.s32 %s13, %s20
    %p111 = scmp.eq.s32.totalorder %s110, 0
    %s113 = sadd.s32 %s112, 1
    %s114 = scalar_select %p111, %s112, %s113
    %p117 = pneg %p111
    %p118 = scmp.eq.s32.totalorder %s13, 1
    %p119 = por %p117, %p118
    %p120 = scmp.ne.s32.totalorder %s112, %s115
    %p121 = scmp.eq.s32.totalorder %s13, 0
    %p122 = por %p120, %p121
    %p123 = scmp.ne.s32.totalorder %s112, %s115
    %p124 = scmp.eq.s32.totalorder %s18, 1
    %p125 = por %p123, %p124
    %p126 = scmp.ne.s32.totalorder %s115, %s116
    %p127 = scmp.eq.s32.totalorder %s18, 0
    %p128 = por %p126, %p127
    %p129 = scmp.ne.s32.totalorder %s115, %s116
    %p130 = scmp.eq.s32.totalorder %s19, 1
    %p131 = por %p129, %p130
    %p133 = scmp.ne.s32.totalorder %s116, %s132
    %p134 = scmp.eq.s32.totalorder %s19, 0
    %p135 = por %p133, %p134
    %s137 = sadd.s32 %s136, 1
    %p140 = scmp.eq.s32.totalorder %s13, 1
    %p141 = scmp.ne.s32.totalorder %s136, %s138
    %p142 = scmp.eq.s32.totalorder %s13, 0
    %p143 = por %p141, %p142
    %p144 = scmp.ne.s32.totalorder %s136, %s138
    %p145 = scmp.eq.s32.totalorder %s18, 1
    %p146 = por %p144, %p145
    %p147 = scmp.ne.s32.totalorder %s138, %s139
    %p148 = scmp.eq.s32.totalorder %s18, 0
    %p149 = por %p147, %p148
    %p150 = scmp.ne.s32.totalorder %s138, %s139
    %p151 = scmp.eq.s32.totalorder %s19, 1
    %p152 = por %p150, %p151
    %p154 = scmp.ne.s32.totalorder %s139, %s153
    %p155 = scmp.eq.s32.totalorder %s19, 0
    %p156 = por %p154, %p155
    %s158 = sadd.s32 %s157, 1
    %p161 = scmp.eq.s32.totalorder %s13, 1
    %p162 = scmp.ne.s32.totalorder %s157, %s159
    %p163 = scmp.eq.s32.totalorder %s13, 0
    %p164 = por %p162, %p163
    %p165 = scmp.ne.s32.totalorder %s157, %s159
    %p166 = scmp.eq.s32.totalorder %s18, 1
    %p167 = por %p165, %p166
    %p168 = scmp.ne.s32.totalorder %s159, %s160
    %p169 = scmp.eq.s32.totalorder %s18, 0
    %p170 = por %p168, %p169
    %p171 = scmp.ne.s32.totalorder %s159, %s160
    %p172 = scmp.eq.s32.totalorder %s19, 1
    %p173 = por %p171, %p172
    %p175 = scmp.ne.s32.totalorder %s160, %s174
    %p176 = scmp.eq.s32.totalorder %s19, 0
    %p177 = por %p175, %p176
    %s178 = ssub.s32 %s13, %s20
    %p179 = scmp.eq.s32.totalorder %s178, 0
    %s181 = sadd.s32 %s180, 1
    %s182 = scalar_select %p179, %s180, %s181
    %p185 = pneg %p179
    %p186 = scmp.eq.s32.totalorder %s13, 1
    %p187 = por %p185, %p186
    %p188 = scmp.ne.s32.totalorder %s180, %s183
    %p189 = scmp.eq.s32.totalorder %s13, 0
    %p190 = por %p188, %p189
    %p191 = scmp.ne.s32.totalorder %s180, %s183
    %p192 = scmp.eq.s32.totalorder %s18, 1
    %p193 = por %p191, %p192
    %p194 = scmp.ne.s32.totalorder %s183, %s184
    %p195 = scmp.eq.s32.totalorder %s18, 0
    %p196 = por %p194, %p195
    %p197 = scmp.ne.s32.totalorder %s183, %s184
    %p198 = scmp.eq.s32.totalorder %s19, 1
    %p199 = por %p197, %p198
    %p201 = scmp.ne.s32.totalorder %s184, %s200
    %p202 = scmp.eq.s32.totalorder %s19, 0
    %p203 = por %p201, %p202
    %p204 = scmp.le.s32.totalorder 1, %s13
    %p205 = scmp.lt.s32.totalorder %s13, 3
    %p206 = pnand %p204, %p205
    %p207 = pneg %p206
    // Predicated region
    $region9: #{resnet_forward.28} parent=5 // pred_check
      _
    $region10: #{resnet_forward.28} parent=5 // pred_check_branch
      %209 = sbr.rel (%p206) target = $region12
    $region11: #{resnet_forward.28} parent=5 // pred_region
      %s210 = ssub.s32 %s13, 1
      // Predicated region
      $region13: #{resnet_forward.28} parent=11 // pred_check
        %p211 = pneg %p60
      $region14: #{resnet_forward.28} parent=11 // pred_check_branch
        %213 = sbr.rel (%p211) target = $region16
      $region15: #{resnet_forward.28} parent=11 // pred_region
        _
      $region16: #{resnet_forward.28} parent=11 // pred_fallthru
        _
      // Predicated region
      $region17: #{resnet_forward.28} parent=11 // pred_check
        %p214 = pneg %p81
      $region18: #{resnet_forward.28} parent=11 // pred_check_branch
        %216 = sbr.rel (%p214) target = $region20
      $region19: #{resnet_forward.28} parent=11 // pred_region
        _
      $region20: #{resnet_forward.28} parent=11 // pred_fallthru
        _
      // Predicated region
      $region21: #{resnet_forward.28} parent=11 // pred_check
        %p217 = pneg %p102
      $region22: #{resnet_forward.28} parent=11 // pred_check_branch
        %219 = sbr.rel (%p217) target = $region24
      $region23: #{resnet_forward.28} parent=11 // pred_region
        _
      $region24: #{resnet_forward.28} parent=11 // pred_fallthru
        _
      // Predicated region
      $region25: #{resnet_forward.28} parent=11 // pred_check
        %p220 = pneg %p149
      $region26: #{resnet_forward.28} parent=11 // pred_check_branch
        %222 = sbr.rel (%p220) target = $region28
      $region27: #{resnet_forward.28} parent=11 // pred_region
        _
      $region28: #{resnet_forward.28} parent=11 // pred_fallthru
        _
      // Predicated region
      $region29: #{resnet_forward.28} parent=11 // pred_check
        %p223 = pneg %p170
      $region30: #{resnet_forward.28} parent=11 // pred_check_branch
        %225 = sbr.rel (%p223) target = $region32
      $region31: #{resnet_forward.28} parent=11 // pred_region
        _
      $region32: #{resnet_forward.28} parent=11 // pred_fallthru
        _
    $region12: #{resnet_forward.28} parent=5 // pred_fallthru
      _
    %p226 = scmp.lt.s32.totalorder %s13, 2
    // Predicated region
    $region33: #{resnet_forward.28} parent=5 // pred_check
      %p227 = pneg %p226
    $region34: #{resnet_forward.28} parent=5 // pred_check_branch
      %229 = sbr.rel (%p227) target = $region36
    $region35: #{resnet_forward.28} parent=5 // pred_region
      // Predicated region
      $region37: #{resnet_forward.28} parent=35 // pred_check
        %p230 = pneg %p33
      $region38: #{resnet_forward.28} parent=35 // pred_check_branch
        %232 = sbr.rel (%p230) target = $region40
      $region39: #{resnet_forward.28} parent=35 // pred_region
        %p233 = scmp.lt.s32.totalorder %s13, 1
        %s234 = scalar_select %p233, %s13, 1
        %s235 = smul.addr %s234, 4
        %s236 = smul.addr %s235, 2
        %s237 = scalar_lea.vmem %s0, %s236
      $region40: #{resnet_forward.28} parent=35 // pred_fallthru
        _
      // Predicated region
      $region41: #{resnet_forward.28} parent=35 // pred_check
        %p238 = pneg %p122
      $region42: #{resnet_forward.28} parent=35 // pred_check_branch
        %240 = sbr.rel (%p238) target = $region44
      $region43: #{resnet_forward.28} parent=35 // pred_region
        %p241 = scmp.lt.s32.totalorder %s13, 1
        %s242 = scalar_select %p241, %s13, 1
        %s243 = smul.addr %s242, 6
        %s244 = smul.addr %s243, 4
        %s245 = scalar_lea.vmem %s4, %s244
      $region44: #{resnet_forward.28} parent=35 // pred_fallthru
        _
    $region36: #{resnet_forward.28} parent=5 // pred_fallthru
      _
    %p246 = scmp.le.s32.totalorder 1, %s13
    %p247 = scmp.lt.s32.totalorder %s13, 3
    %p248 = pnand %p246, %p247
    %p249 = pneg %p248
    // Predicated region
    $region45: #{resnet_forward.28} parent=5 // pred_check
      _
    $region46: #{resnet_forward.28} parent=5 // pred_check_branch
      %251 = sbr.rel (%p248) target = $region48
    $region47: #{resnet_forward.28} parent=5 // pred_region
      %s252 = ssub.s32 %s13, 1
      %p253 = scmp.lt.s32.totalorder %s18, 1
      %s254 = scalar_select %p253, %s18, 1
      %s255 = smul.addr %s254, 4
      %s256 = smul.addr %s255, 2
      %s257 = scalar_lea.vmem %s0, %s256
      %p258 = pneg %p39
      %p259 = pneg %p36
      %p260 = pneg %p60
      %p261 = pneg %p57
      %p262 = pneg %p81
      %p263 = pneg %p78
      %p264 = pneg %p102
      %p265 = pneg %p99
      %p266 = scmp.lt.s32.totalorder %s18, 1
      %s267 = scalar_select %p266, %s18, 1
      %s268 = smul.addr %s267, 6
      %s269 = smul.addr %s268, 4
      %s270 = scalar_lea.vmem %s4, %s269
      %p271 = pneg %p128
      %p272 = pneg %p125
      %p273 = pneg %p149
      %p274 = pneg %p146
      %p275 = pneg %p170
      %p276 = pneg %p167
      %p277 = pneg %p196
      %p278 = pneg %p193
      %p279 = scmp.lt.s32.totalorder %s18, 1
      %s280 = scalar_select %p279, %s18, 1
      %s281 = smul.addr %s280, 6
      %s282 = smul.addr %s281, 4
      %s283 = scalar_lea.vmem %s7, %s282
      %p284 = scmp.lt.s32.totalorder %s18, 1
      %s285 = scalar_select %p284, %s18, 1
      %s286 = smul.addr %s285, 4
      %s287 = smul.addr %s286, 2
      %s288 = scalar_lea.vmem %s0, %s287
      %p289 = scmp.lt.s32.totalorder %s18, 1
      %s290 = scalar_select %p289, %s18, 1
      %s291 = smul.addr %s290, 6
      %s292 = smul.addr %s291, 4
      %s293 = scalar_lea.vmem %s4, %s292
      %p294 = scmp.lt.s32.totalorder %s18, 1
      %s295 = scalar_select %p294, %s18, 1
      %s296 = smul.addr %s295, 6
      %s297 = smul.addr %s296, 4
      %s298 = scalar_lea.vmem %s7, %s297
      %v300 = vld [vmem:[%s1] sm:$0x3]
      %v301 = vld [vmem:[%s1 + $0x2] sm:$0x3]
      %vm302 = vcmask 1041408
      %v303 = vsel %vm302, %v300, 0.0
      %v304 = vsel %vm302, %v301, 0.0
      %v305 = vadd.f32 %v303, %v304
      %v306 = vmul.f32 %v305, 0.03125
      %v307 = vmul.f32 %v306, %v306
      %v309 = vrot.slane %v307, 7
      %v311 = vsub.f32 %v306, %v309
      %v312 = vld [vmem:[%s2] sm:$0x1]
      %v313 = vadd.f32 %v311, 1e-05
      %v314 = vrsqrt.pop %v313
      %v317 = vunpack.c.l.s4 1966171168
      %v318 = vunpack.c.0.s8 %v317
      %v319 = vlaneseq
      %v320 = vshrl.u32 %v319, 7
      %v321 = vsub.s32 %v318, %v320
      %v322 = vrot.slane %v314, %v321
      %v323 = vcombine.high %v322, %v322
      %v325 = vunpack.c.l.s4 1966171168
      %v326 = vunpack.c.0.s8 %v325
      %v327 = vlaneseq
      %v328 = vshrl.u32 %v327, 7
      %v329 = vsub.s32 %v326, %v328
      %v330 = vrot.slane %v323, %v329
      %v332 = vmul.f32 %v312, %v330
      %v333 = vld [vmem:[%s3] sm:$0x1]
      %v334 = vmul.f32 %v306, %v332
      %v335 = vsub.f32 %v333, %v334
      %v336 = vld [vmem:[%s288] sm:$0x3]
      %v337 = vld [vmem:[%s288 + $0x2] sm:$0x3]
      %v338 = vld [vmem:[%s288 + $0x4] sm:$0x3]
      %v339 = vld [vmem:[%s288 + $0x6] sm:$0x3]
      %v340 = vunpack.c.l.bf16 %v336
      %v341 = vunpack.c.l.bf16 %v337
      %v342 = vunpack.c.l.bf16 %v338
      %v343 = vunpack.c.l.bf16 %v339
      %v345 = vlaneseq
      %v346 = vshrl.u32 %v345, 7
      %v347 = vsub.s32 0, %v346
      %v348 = vrot.slane %v332, %v347
      %v350 = vmul.f32 %v340, %v348
      %v351 = vmul.f32 %v341, %v348
      %v352 = vmul.f32 %v342, %v348
      %v353 = vmul.f32 %v343, %v348
      %v355 = vlaneseq
      %v356 = vshrl.u32 %v355, 7
      %v357 = vsub.s32 0, %v356
      %v358 = vrot.slane %v335, %v357
      %v360 = vadd.f32 %v350, %v358
      %v361 = vadd.f32 %v351, %v358
      %v362 = vadd.f32 %v352, %v358
      %v363 = vadd.f32 %v353, %v358
      %s364 = scalar_lea.vmem %s293, 4
      %v365 = vld [vmem:[%s364] sm:$0x7]
      %v366 = vld [vmem:[%s364 + $0x4] sm:$0x7]
      %v367 = vld [vmem:[%s364 + $0x8] sm:$0x7]
      %v368 = vld [vmem:[%s364 + $0xc] sm:$0x7]
      %v374 = vunpack.c.l.s4 1983009808
      %v375 = vunpack.c.0.s8 %v374
      %v376 = vlaneseq
      %v377 = vshrl.u32 %v376, 7
      %v378 = vsub.s32 %v375, %v377
      %v379 = vrot.slane %v365, %v378
      %v380 = vcombine.high %v379, %v379
      %v382 = vunpack.c.l.s4 1983009808
      %v383 = vunpack.c.0.s8 %v382
      %v384 = vlaneseq
      %v385 = vshrl.u32 %v384, 7
      %v386 = vsub.s32 %v383, %v385
      %v387 = vrot.slane %v366, %v386
      %v388 = vcombine.high %v387, %v387
      %v390 = vunpack.c.l.s4 1983009808
      %v391 = vunpack.c.0.s8 %v390
      %v392 = vlaneseq
      %v393 = vshrl.u32 %v392, 7
      %v394 = vsub.s32 %v391, %v393
      %v395 = vrot.slane %v367, %v394
      %v396 = vcombine.high %v395, %v395
      %v398 = vunpack.c.l.s4 1983009808
      %v399 = vunpack.c.0.s8 %v398
      %v400 = vlaneseq
      %v401 = vshrl.u32 %v400, 7
      %v402 = vsub.s32 %v399, %v401
      %v403 = vrot.slane %v368, %v402
      %v404 = vcombine.high %v403, %v403
      %vm405 = vsmask.f32 1280
      %vm406 = vsmask.f32 3336
      %vm407 = vmor %vm405, %vm406
      %vm408 = vsmask.f32 5392
      %vm409 = vmor %vm407, %vm408
      %vm410 = vsmask.f32 7448
      %vm411 = vmor %vm409, %vm410
      %v413 = vshrl.u32 %v379, 16
      %v415 = vrot.slane %v413, 6
      %v416 = vshll.u32 %v379, 16
      %v418 = vrot.slane %v416, 7
      %v419 = vor.u32 %v415, %v418
      %v420 = vrot.slane %v419, 2
      %v422 = vshll.u32 %v380, 16
      %v424 = vrot.slane %v422, 7
      %v425 = vsel %vm411, %v420, %v424
      %v427 = vshrl.u32 %v387, 16
      %v429 = vrot.slane %v427, 6
      %v430 = vshll.u32 %v387, 16
      %v432 = vrot.slane %v430, 7
      %v433 = vor.u32 %v429, %v432
      %v434 = vrot.slane %v433, 2
      %v436 = vshll.u32 %v388, 16
      %v438 = vrot.slane %v436, 7
      %v439 = vsel %vm411, %v434, %v438
      %v441 = vshrl.u32 %v395, 16
      %v443 = vrot.slane %v441, 6
      %v444 = vshll.u32 %v395, 16
      %v446 = vrot.slane %v444, 7
      %v447 = vor.u32 %v443, %v446
      %v448 = vrot.slane %v447, 2
      %v450 = vshll.u32 %v396, 16
      %v452 = vrot.slane %v450, 7
      %v453 = vsel %vm411, %v448, %v452
      %v455 = vshrl.u32 %v403, 16
      %v457 = vrot.slane %v455, 6
      %v458 = vshll.u32 %v403, 16
      %v460 = vrot.slane %v458, 7
      %v461 = vor.u32 %v457, %v460
      %v462 = vrot.slane %v461, 2
      %v464 = vshll.u32 %v404, 16
      %v466 = vrot.slane %v464, 7
      %v467 = vsel %vm411, %v462, %v466
      %v468 = vld [vmem:[%s5] sm:$0xf]
      %v469 = vld [vmem:[%s5 + $0x4] sm:$0xf]
      %v470 = vld [vmem:[%s6] sm:$0x1]
      %v472 = vlaneseq
      %v473 = vshrl.u32 %v472, 7
      %v474 = vsub.s32 0, %v473
      %v475 = vrot.slane %v470, %v474
      %v477 = vcombine.low %v425, %v439
      %v478 = vcombine.low %v453, %v467
      %v480 = vunpack.c.l.s4 1983009808
      %v481 = vunpack.c.0.s8 %v480
      %v482 = vlaneseq
      %v483 = vshrl.u32 %v482, 7
      %v484 = vsub.s32 %v481, %v483
      %v485 = vrot.slane %v477, %v484
      %v487 = vunpack.c.l.s4 1983009808
      %v488 = vunpack.c.0.s8 %v487
      %v489 = vlaneseq
      %v490 = vshrl.u32 %v489, 7
      %v491 = vsub.s32 %v488, %v490
      %v492 = vrot.slane %v478, %v491
      %v493 = vcombine.low %v485, %v492
      %v496 = vunpack.c.l.b16 %v468
      %v497 = vunpack.c.l.b16 %v469
      %v498 = vpack.c.b16 %v497, %v496
      %vm500 = vcmask 130048
      %v502 = vsel %vm500, %v493, 0
      %504 = vmatprep.subr.bf16.mxu0 0
      %505 = vmatpush1.bf16.msra.mxu0 0
      %506 = vmatprep.subr.bf16.mxu0 0
      %507 = vmatpush1.bf16.msra.mxu0 0
      %508 = vmatprep.subr.bf16.mxu0 0
      %509 = vmatpush1.bf16.msra.mxu0 0
      %510 = vmatprep.subr.bf16.mxu0 0
      %511 = vmatpush1.bf16.msra.mxu0 0
      %512 = vmatprep.subr.bf16.mxu0 0
      %513 = vmatpush1.bf16.msra.mxu0 0
      %514 = vmatprep.subr.bf16.mxu0 0
      %515 = vmatpush1.bf16.msra.mxu0 0
      %516 = vmatprep.subr.bf16.mxu0 0
      %517 = vmatpush1.bf16.msra.mxu0 0
      %518 = vmatprep.subr.bf16.mxu0 0
      %519 = vmatpush1.bf16.msra.mxu0 %v498
      %520 = vmatprep.subr.bf16.mxu0 0
      %521 = vmatpush2.bf16.msra.mxu0 0
      %522 = vmatprep.subr.bf16.mxu0 0
      %523 = vmatpush2.bf16.msra.mxu0 0
      %524 = vmatprep.subr.bf16.mxu0 0
      %525 = vmatpush2.bf16.msra.mxu0 0
      %526 = vmatprep.subr.bf16.mxu0 0
      %527 = vmatpush2.bf16.msra.mxu0 0
      %528 = vmatprep.subr.bf16.mxu0 0
      %529 = vmatpush2.bf16.msra.mxu0 0
      %530 = vmatprep.subr.bf16.mxu0 0
      %531 = vmatpush2.bf16.msra.mxu0 0
      %532 = vmatprep.subr.bf16.mxu0 0
      %533 = vmatpush2.bf16.msra.mxu0 0
      %534 = vmatprep.subr.bf16.mxu0 0
      %535 = vmatpush2.bf16.msra.mxu0 0
      %536 = vmatprep.mubr.bf16.mxu0 0
      %537 = vmatmul.mubr.bf16.gmra.mxu0 %v502
      %v538 = vpop.f32.mrf.mxu0
      %v539 = vadd.f32 %v475, %v538
      %v540 = vpop.f32.mrf.mxu0
      %v541 = vpop.f32.mrf.mxu0
      %v542 = vadd.f32 %v475, %v541
      %v543 = vpop.f32.mrf.mxu0
      %544 = vdwg.mxu0
      %v547 = vcombine.high %v539, %v539
      %v548 = vcombine.high %v542, %v542
      %v551 = vadd.f32 %v360, %v539
      %v552 = vadd.f32 %v361, %v547
      %v553 = vadd.f32 %v362, %v542
      %v554 = vadd.f32 %v363, %v548
      %v555 = vmax.f32 %v551, 0.0
      %v556 = vmax.f32 %v552, 0.0
      %v557 = vmax.f32 %v553, 0.0
      %v558 = vmax.f32 %v554, 0.0
      %v559 = vpack.c.bf16 %v555, %v555
      %v560 = vpack.c.bf16 %v556, %v556
      %v561 = vpack.c.bf16 %v557, %v557
      %v562 = vpack.c.bf16 %v558, %v558
      %v564 = vshrl.u32 %v559, 16
      %v566 = vrot.slane %v564, 7
      %v567 = vshll.u32 %v559, 16
      %v569 = vor.u32 %v566, %v567
      %v571 = vshrl.u32 %v560, 16
      %v573 = vrot.slane %v571, 7
      %v574 = vshll.u32 %v560, 16
      %v576 = vor.u32 %v573, %v574
      %v578 = vshrl.u32 %v561, 16
      %v580 = vrot.slane %v578, 7
      %v581 = vshll.u32 %v561, 16
      %v583 = vor.u32 %v580, %v581
      %v585 = vshrl.u32 %v562, 16
      %v587 = vrot.slane %v585, 7
      %v588 = vshll.u32 %v562, 16
      %v590 = vor.u32 %v587, %v588
      %vm595 = vcmask 1040384
      %vm596 = vsmask.f32 256
      %vm597 = vmand %vm595, %vm596
      %v598 = vsel %vm597, 0, %v569
      %v599 = vsel %vm597, 0, %v576
      %v600 = vsel %vm597, 0, %v583
      %v601 = vsel %vm597, 0, %v590
      %vm602 = vcmask 1042432
      %vm603 = vsmask.f32 2304
      %vm604 = vmand %vm602, %vm603
      %v605 = vsel %vm604, %v598, 0
      %v606 = vsel %vm604, %v599, 0
      %v607 = vsel %vm604, %v600, 0
      %v608 = vsel %vm604, %v601, 0
      %609 = vst [vmem:[%s298] sm:$0xf] 0
      %610 = vst [vmem:[%s298 + $0x4] sm:$0xf] %v605
      %611 = vst [vmem:[%s298 + $0x8] sm:$0xf] %v606
      %612 = vst [vmem:[%s298 + $0xc] sm:$0xf] %v607
      %613 = vst [vmem:[%s298 + $0x10] sm:$0xf] %v608
      %614 = vst [vmem:[%s298 + $0x14] sm:$0xf] 0
      %p615 = scmp.lt.s32.totalorder %s18, 1
      %s616 = scalar_select %p615, %s18, 1
      %s617 = smul.addr %s616, 6
      %s618 = smul.addr %s617, 4
      %s619 = scalar_lea.vmem %s7, %s618
      // Predicated region
      $region49: #{resnet_forward.28} parent=47 // pred_check
        %p620 = pneg %p193
      $region50: #{resnet_forward.28} parent=47 // pred_check_branch
        %622 = sbr.rel (%p620) target = $region52
      $region51: #{resnet_forward.28} parent=47 // pred_region
        _
      $region52: #{resnet_forward.28} parent=47 // pred_fallthru
        _
    $region48: #{resnet_forward.28} parent=5 // pred_fallthru
      _
    %p623 = scmp.le.s32.totalorder 2, %s13
    // Predicated region
    $region53: #{resnet_forward.28} parent=5 // pred_check
      %p624 = pneg %p623
    $region54: #{resnet_forward.28} parent=5 // pred_check_branch
      %626 = sbr.rel (%p624) target = $region56
    $region55: #{resnet_forward.28} parent=5 // pred_region
      %s627 = ssub.s32 %s13, 2
      // Predicated region
      $region57: #{resnet_forward.28} parent=55 // pred_check
        %p628 = pneg %p199
      $region58: #{resnet_forward.28} parent=55 // pred_check_branch
        %630 = sbr.rel (%p628) target = $region60
      $region59: #{resnet_forward.28} parent=55 // pred_region
        %p631 = scmp.lt.s32.totalorder %s19, 1
        %s632 = scalar_select %p631, %s19, 1
        %s633 = smul.addr %s632, 6
        %s634 = smul.addr %s633, 4
        %s635 = scalar_lea.vmem %s7, %s634
      $region60: #{resnet_forward.28} parent=55 // pred_fallthru
        _
    $region56: #{resnet_forward.28} parent=5 // pred_fallthru
      _
  $region6: #{resnet_forward.28} parent=0 // loop_footer
    %s17 = sadd.s32 1, %s13
  $region7: #{resnet_forward.28} parent=0 // loop_footer_branch
    %12 = sbr.rel target = $region3
  $region8: #{resnet_forward.28} parent=0 // loop_exit
    _

// kernel: resnet_forward.27
$region0: #{resnet_forward.27}
  #allocation0 [shape = 'u32[]', space=smem, size = 0x4, offset = 0x4, fixed_abs, tag = 'smem constant byte address 0x4 - core index']
  #allocation1 [shape = 'u32[144,128]{1,0:T(1,128)}', space=vmem, size = 0x12000, scoped, tag = 'internal scratch']
  #allocation2 [shape = 'bf16[4,4,288]{2,1,0:T(4,128)(2,1)}', space=vmem, size = 0x3000, scoped, tag = 'scratch operand']
  %s0 = inlined_call_operand.vmem [shape: bf16[2,6,8,128], index: 0, kind: input, shape index: {}]
  %s1 = inlined_call_operand.vmem [shape: bf16[288,128], index: 1, kind: input, shape index: {}]
  %s2 = inlined_call_operand.vmem [shape: f32[1,128], index: 2, kind: input, shape index: {}]
  %s3 = inlined_call_operand.vmem [shape: bf16[2,4,4,128], index: 3, kind: output, shape index: {0}]
  %s4 = inlined_call_operand.vmem [shape: f32[2,2,128], index: 4, kind: output, shape index: {1}]
  %5 = xla_tuple %s3, %s4
  %s6 = sld [smem:[#allocation0]]
  $region53: #{resnet_forward.27} parent=0
    _
  %s8 = ssub.s32 1, %s6
  %s9 = scalar_select 0, %s8, %s6
  loop: start=0, step=1, limit=4
  $region2: #{resnet_forward.27} parent=0 // loop_pre_header
    _
  $region3: #{resnet_forward.27} parent=0 // loop_header
    %s11 = sphi 0, %s15
    %p12 = scmp.ge.s32.totalorder %s11, 4
    %s21 = sphi 0, %s23
    %s24 = sphi 0, %s21
    %s25 = sphi 0, %s24
    %s41 = sphi 0, %s25
    %s45 = sphi 0, %s45
    %s47 = sphi 0, %s45
    %s48 = sphi 0, %s47
    %s62 = sphi 0, %s48
    %s66 = sphi 0, %s66
    %s68 = sphi 0, %s66
    %s69 = sphi 0, %s68
    %s83 = sphi 0, %s69
    %s89 = sphi 0, %s91
    %s92 = sphi 0, %s89
    %s93 = sphi 0, %s92
    %s109 = sphi 0, %s93
    %s115 = sphi 0, %s117
    %s118 = sphi 0, %s115
    %s119 = sphi 0, %s118
    %s135 = sphi 0, %s119
  $region4: #{resnet_forward.27} parent=0 // loop_header_branch
    %14 = sbr.rel (%p12) target = $region8
  $region5: #{resnet_forward.27} parent=0 // loop_body
    %s16 = ssub.s32 %s11, 1
    %s17 = ssub.s32 %s11, 2
    %s18 = sadd.s32 %s11, 1
    %s19 = ssub.s32 %s11, %s18
    %p20 = scmp.eq.s32.totalorder %s19, 0
    %s22 = sadd.s32 %s21, 1
    %s23 = scalar_select %p20, %s21, %s22
    %p26 = pneg %p20
    %p27 = scmp.eq.s32.totalorder %s11, 1
    %p28 = por %p26, %p27
    %p29 = scmp.ne.s32.totalorder %s21, %s24
    %p30 = scmp.eq.s32.totalorder %s11, 0
    %p31 = por %p29, %p30
    %p32 = scmp.ne.s32.totalorder %s21, %s24
    %p33 = scmp.eq.s32.totalorder %s16, 1
    %p34 = por %p32, %p33
    %p35 = scmp.ne.s32.totalorder %s24, %s25
    %p36 = scmp.eq.s32.totalorder %s16, 0
    %p37 = por %p35, %p36
    %p38 = scmp.ne.s32.totalorder %s24, %s25
    %p39 = scmp.eq.s32.totalorder %s17, 1
    %p40 = por %p38, %p39
    %p42 = scmp.ne.s32.totalorder %s25, %s41
    %p43 = scmp.eq.s32.totalorder %s17, 0
    %p44 = por %p42, %p43
    %s46 = sadd.s32 %s45, 1
    %p49 = scmp.eq.s32.totalorder %s11, 1
    %p50 = scmp.ne.s32.totalorder %s45, %s47
    %p51 = scmp.eq.s32.totalorder %s11, 0
    %p52 = por %p50, %p51
    %p53 = scmp.ne.s32.totalorder %s45, %s47
    %p54 = scmp.eq.s32.totalorder %s16, 1
    %p55 = por %p53, %p54
    %p56 = scmp.ne.s32.totalorder %s47, %s48
    %p57 = scmp.eq.s32.totalorder %s16, 0
    %p58 = por %p56, %p57
    %p59 = scmp.ne.s32.totalorder %s47, %s48
    %p60 = scmp.eq.s32.totalorder %s17, 1
    %p61 = por %p59, %p60
    %p63 = scmp.ne.s32.totalorder %s48, %s62
    %p64 = scmp.eq.s32.totalorder %s17, 0
    %p65 = por %p63, %p64
    %s67 = sadd.s32 %s66, 1
    %p70 = scmp.eq.s32.totalorder %s11, 1
    %p71 = scmp.ne.s32.totalorder %s66, %s68
    %p72 = scmp.eq.s32.totalorder %s11, 0
    %p73 = por %p71, %p72
    %p74 = scmp.ne.s32.totalorder %s66, %s68
    %p75 = scmp.eq.s32.totalorder %s16, 1
    %p76 = por %p74, %p75
    %p77 = scmp.ne.s32.totalorder %s68, %s69
    %p78 = scmp.eq.s32.totalorder %s16, 0
    %p79 = por %p77, %p78
    %p80 = scmp.ne.s32.totalorder %s68, %s69
    %p81 = scmp.eq.s32.totalorder %s17, 1
    %p82 = por %p80, %p81
    %p84 = scmp.ne.s32.totalorder %s69, %s83
    %p85 = scmp.eq.s32.totalorder %s17, 0
    %p86 = por %p84, %p85
    %s87 = ssub.s32 %s11, %s18
    %p88 = scmp.eq.s32.totalorder %s87, 0
    %s90 = sadd.s32 %s89, 1
    %s91 = scalar_select %p88, %s89, %s90
    %p94 = pneg %p88
    %p95 = scmp.eq.s32.totalorder %s11, 1
    %p96 = por %p94, %p95
    %p97 = scmp.ne.s32.totalorder %s89, %s92
    %p98 = scmp.eq.s32.totalorder %s11, 0
    %p99 = por %p97, %p98
    %p100 = scmp.ne.s32.totalorder %s89, %s92
    %p101 = scmp.eq.s32.totalorder %s16, 1
    %p102 = por %p100, %p101
    %p103 = scmp.ne.s32.totalorder %s92, %s93
    %p104 = scmp.eq.s32.totalorder %s16, 0
    %p105 = por %p103, %p104
    %p106 = scmp.ne.s32.totalorder %s92, %s93
    %p107 = scmp.eq.s32.totalorder %s17, 1
    %p108 = por %p106, %p107
    %p110 = scmp.ne.s32.totalorder %s93, %s109
    %p111 = scmp.eq.s32.totalorder %s17, 0
    %p112 = por %p110, %p111
    %s113 = ssub.s32 %s11, %s18
    %p114 = scmp.eq.s32.totalorder %s113, 0
    %s116 = sadd.s32 %s115, 1
    %s117 = scalar_select %p114, %s115, %s116
    %p120 = pneg %p114
    %p121 = scmp.eq.s32.totalorder %s11, 1
    %p122 = por %p120, %p121
    %p123 = scmp.ne.s32.totalorder %s115, %s118
    %p124 = scmp.eq.s32.totalorder %s11, 0
    %p125 = por %p123, %p124
    %p126 = scmp.ne.s32.totalorder %s115, %s118
    %p127 = scmp.eq.s32.totalorder %s16, 1
    %p128 = por %p126, %p127
    %p129 = scmp.ne.s32.totalorder %s118, %s119
    %p130 = scmp.eq.s32.totalorder %s16, 0
    %p131 = por %p129, %p130
    %p132 = scmp.ne.s32.totalorder %s118, %s119
    %p133 = scmp.eq.s32.totalorder %s17, 1
    %p134 = por %p132, %p133
    %p136 = scmp.ne.s32.totalorder %s119, %s135
    %p137 = scmp.eq.s32.totalorder %s17, 0
    %p138 = por %p136, %p137
    %p139 = scmp.le.s32.totalorder 1, %s11
    %p140 = scmp.lt.s32.totalorder %s11, 3
    %p141 = pnand %p139, %p140
    %p142 = pneg %p141
    // Predicated region
    $region9: #{resnet_forward.27} parent=5 // pred_check
      _
    $region10: #{resnet_forward.27} parent=5 // pred_check_branch
      %144 = sbr.rel (%p141) target = $region12
    $region11: #{resnet_forward.27} parent=5 // pred_region
      %s145 = ssub.s32 %s11, 1
      // Predicated region
      $region13: #{resnet_forward.27} parent=11 // pred_check
        %p146 = pneg %p58
      $region14: #{resnet_forward.27} parent=11 // pred_check_branch
        %148 = sbr.rel (%p146) target = $region16
      $region15: #{resnet_forward.27} parent=11 // pred_region
        _
      $region16: #{resnet_forward.27} parent=11 // pred_fallthru
        _
      // Predicated region
      $region17: #{resnet_forward.27} parent=11 // pred_check
        %p149 = pneg %p79
      $region18: #{resnet_forward.27} parent=11 // pred_check_branch
        %151 = sbr.rel (%p149) target = $region20
      $region19: #{resnet_forward.27} parent=11 // pred_region
        _
      $region20: #{resnet_forward.27} parent=11 // pred_fallthru
        _
    $region12: #{resnet_forward.27} parent=5 // pred_fallthru
      _
    %p152 = scmp.lt.s32.totalorder %s11, 2
    // Predicated region
    $region21: #{resnet_forward.27} parent=5 // pred_check
      %p153 = pneg %p152
    $region22: #{resnet_forward.27} parent=5 // pred_check_branch
      %155 = sbr.rel (%p153) target = $region24
    $region23: #{resnet_forward.27} parent=5 // pred_region
      // Predicated region
      $region25: #{resnet_forward.27} parent=23 // pred_check
        %p156 = pneg %p31
      $region26: #{resnet_forward.27} parent=23 // pred_check_branch
        %158 = sbr.rel (%p156) target = $region28
      $region27: #{resnet_forward.27} parent=23 // pred_region
        %p159 = scmp.lt.s32.totalorder %s11, 1
        %s160 = scalar_select %p159, %s11, 1
        %s161 = smul.addr %s160, 6
        %s162 = smul.addr %s161, 4
        %s163 = scalar_lea.vmem %s0, %s162
      $region28: #{resnet_forward.27} parent=23 // pred_fallthru
        _
    $region24: #{resnet_forward.27} parent=5 // pred_fallthru
      _
    %p164 = scmp.le.s32.totalorder 1, %s11
    %p165 = scmp.lt.s32.totalorder %s11, 3
    %p166 = pnand %p164, %p165
    %p167 = pneg %p166
    // Predicated region
    $region29: #{resnet_forward.27} parent=5 // pred_check
      _
    $region30: #{resnet_forward.27} parent=5 // pred_check_branch
      %169 = sbr.rel (%p166) target = $region32
    $region31: #{resnet_forward.27} parent=5 // pred_region
      %s170 = ssub.s32 %s11, 1
      %p171 = scmp.lt.s32.totalorder %s16, 1
      %s172 = scalar_select %p171, %s16, 1
      %s173 = smul.addr %s172, 6
      %s174 = smul.addr %s173, 4
      %s175 = scalar_lea.vmem %s0, %s174
      %p176 = pneg %p37
      %p177 = pneg %p34
      %p178 = pneg %p58
      %p179 = pneg %p55
      %p180 = pneg %p79
      %p181 = pneg %p76
      %p182 = pneg %p105
      %p183 = pneg %p102
      %p184 = scmp.lt.s32.totalorder %s16, 1
      %s185 = scalar_select %p184, %s16, 1
      %s186 = smul.addr %s185, 4
      %s187 = smul.addr %s186, 2
      %s188 = scalar_lea.vmem %s3, %s187
      %p189 = pneg %p131
      %p190 = pneg %p128
      %p191 = scmp.lt.s32.totalorder %s16, 1
      %s192 = scalar_select %p191, %s16, 1
      %s193 = smul.addr %s192, 2
      %s194 = scalar_lea.vmem %s4, %s193
      %p195 = scmp.lt.s32.totalorder %s16, 1
      %s196 = scalar_select %p195, %s16, 1
      %s197 = smul.addr %s196, 6
      %s198 = smul.addr %s197, 4
      %s199 = scalar_lea.vmem %s0, %s198
      %p200 = scmp.lt.s32.totalorder %s16, 1
      %s201 = scalar_select %p200, %s16, 1
      %s202 = smul.addr %s201, 4
      %s203 = smul.addr %s202, 2
      %s204 = scalar_lea.vmem %s3, %s203
      %p205 = scmp.lt.s32.totalorder %s16, 1
      %s206 = scalar_select %p205, %s16, 1
      %s207 = smul.addr %s206, 2
      %s208 = scalar_lea.vmem %s4, %s207
      %v210 = vld [vmem:[%s199] sm:$0x3]
      %v211 = vld [vmem:[%s199 + $0x4] sm:$0x3]
      %v212 = vld [vmem:[%s199 + $0x8] sm:$0x3]
      %v213 = vld [vmem:[%s199 + $0xc] sm:$0x3]
      %vm214 = vcmask 254976
      %215 = vst.msk [vmem:[#allocation2] sm:$0x3] %vm214, %v210
      %216 = vst.msk [vmem:[#allocation2 + $0x6] sm:$0x3] %vm214, %v211
      %217 = vst.msk [vmem:[#allocation2 + $0xc] sm:$0x3] %vm214, %v212
      %218 = vst.msk [vmem:[#allocation2 + $0x12] sm:$0x3] %vm214, %v213
      %v219 = vld [vmem:[%s199] sm:$0x7]
      %v220 = vld [vmem:[%s199 + $0x4] sm:$0x7]
      %v221 = vld [vmem:[%s199 + $0x8] sm:$0x7]
      %v222 = vld [vmem:[%s199 + $0xc] sm:$0x7]
      %v228 = vunpack.c.l.s4 1983009808
      %v229 = vunpack.c.0.s8 %v228
      %v230 = vlaneseq
      %v231 = vshrl.u32 %v230, 7
      %v232 = vsub.s32 %v229, %v231
      %v233 = vrot.slane %v219, %v232
      %v234 = vcombine.high %v233, %v233
      %v236 = vunpack.c.l.s4 1983009808
      %v237 = vunpack.c.0.s8 %v236
      %v238 = vlaneseq
      %v239 = vshrl.u32 %v238, 7
      %v240 = vsub.s32 %v237, %v239
      %v241 = vrot.slane %v220, %v240
      %v242 = vcombine.high %v241, %v241
      %v244 = vunpack.c.l.s4 1983009808
      %v245 = vunpack.c.0.s8 %v244
      %v246 = vlaneseq
      %v247 = vshrl.u32 %v246, 7
      %v248 = vsub.s32 %v245, %v247
      %v249 = vrot.slane %v221, %v248
      %v250 = vcombine.high %v249, %v249
      %v252 = vunpack.c.l.s4 1983009808
      %v253 = vunpack.c.0.s8 %v252
      %v254 = vlaneseq
      %v255 = vshrl.u32 %v254, 7
      %v256 = vsub.s32 %v253, %v255
      %v257 = vrot.slane %v222, %v256
      %v258 = vcombine.high %v257, %v257
      %vm259 = vsmask.f32 1280
      %vm260 = vsmask.f32 3336
      %vm261 = vmor %vm259, %vm260
      %vm262 = vsmask.f32 5392
      %vm263 = vmor %vm261, %vm262
      %vm264 = vsmask.f32 7448
      %vm265 = vmor %vm263, %vm264
      %v267 = vshrl.u32 %v233, 16
      %v269 = vrot.slane %v267, 6
      %v270 = vshll.u32 %v233, 16
      %v272 = vrot.slane %v270, 7
      %v273 = vor.u32 %v269, %v272
      %v274 = vrot.slane %v273, 2
      %v276 = vshll.u32 %v234, 16
      %v278 = vrot.slane %v276, 7
      %v279 = vsel %vm265, %v274, %v278
      %v281 = vshrl.u32 %v241, 16
      %v283 = vrot.slane %v281, 6
      %v284 = vshll.u32 %v241, 16
      %v286 = vrot.slane %v284, 7
      %v287 = vor.u32 %v283, %v286
      %v288 = vrot.slane %v287, 2
      %v290 = vshll.u32 %v242, 16
      %v292 = vrot.slane %v290, 7
      %v293 = vsel %vm265, %v288, %v292
      %v295 = vshrl.u32 %v249, 16
      %v297 = vrot.slane %v295, 6
      %v298 = vshll.u32 %v249, 16
      %v300 = vrot.slane %v298, 7
      %v301 = vor.u32 %v297, %v300
      %v302 = vrot.slane %v301, 2
      %v304 = vshll.u32 %v250, 16
      %v306 = vrot.slane %v304, 7
      %v307 = vsel %vm265, %v302, %v306
      %v309 = vshrl.u32 %v257, 16
      %v311 = vrot.slane %v309, 6
      %v312 = vshll.u32 %v257, 16
      %v314 = vrot.slane %v312, 7
      %v315 = vor.u32 %v311, %v314
      %v316 = vrot.slane %v315, 2
      %v318 = vshll.u32 %v258, 16
      %v320 = vrot.slane %v318, 7
      %v321 = vsel %vm265, %v316, %v320
      %322 = vrot.lane.b32.xlu0 %v279, 32
      %v323 = vpop.permute.xlu0 %322
      %324 = vrot.lane.b32.xlu0 %v293, 32
      %v325 = vpop.permute.xlu0 %324
      %326 = vrot.lane.b32.xlu0 %v307, 32
      %v327 = vpop.permute.xlu0 %326
      %328 = vrot.lane.b32.xlu0 %v321, 32
      %v329 = vpop.permute.xlu0 %328
      %vm334 = vcmask 517376
      %335 = vst.msk [vmem:[#allocation2] sm:$0x3] %vm334, %v323
      %336 = vst.msk [vmem:[#allocation2 + $0x6] sm:$0x3] %vm334, %v325
      %337 = vst.msk [vmem:[#allocation2 + $0xc] sm:$0x3] %vm334, %v327
      %338 = vst.msk [vmem:[#allocation2 + $0x12] sm:$0x3] %vm334, %v329
      %v339 = vld [vmem:[%s199] sm:$0x6]
      %v340 = vld [vmem:[%s199 + $0x4] sm:$0x6]
      %v341 = vld [vmem:[%s199 + $0x8] sm:$0x6]
      %v342 = vld [vmem:[%s199 + $0xc] sm:$0x6]
      %v348 = vunpack.c.l.s4 1983009808
      %v349 = vunpack.c.0.s8 %v348
      %v350 = vlaneseq
      %v351 = vshrl.u32 %v350, 7
      %v352 = vsub.s32 %v349, %v351
      %v353 = vrot.slane %v339, %v352
      %v354 = vcombine.high %v353, %v353
      %v356 = vunpack.c.l.s4 1983009808
      %v357 = vunpack.c.0.s8 %v356
      %v358 = vlaneseq
      %v359 = vshrl.u32 %v358, 7
      %v360 = vsub.s32 %v357, %v359
      %v361 = vrot.slane %v340, %v360
      %v362 = vcombine.high %v361, %v361
      %v364 = vunpack.c.l.s4 1983009808
      %v365 = vunpack.c.0.s8 %v364
      %v366 = vlaneseq
      %v367 = vshrl.u32 %v366, 7
      %v368 = vsub.s32 %v365, %v367
      %v369 = vrot.slane %v341, %v368
      %v370 = vcombine.high %v369, %v369
      %v372 = vunpack.c.l.s4 1983009808
      %v373 = vunpack.c.0.s8 %v372
      %v374 = vlaneseq
      %v375 = vshrl.u32 %v374, 7
      %v376 = vsub.s32 %v373, %v375
      %v377 = vrot.slane %v342, %v376
      %v378 = vcombine.high %v377, %v377
      %vm379 = vcmask 1040384
      %vm380 = vcmask 1042434
      %vm381 = vmor %vm379, %vm380
      %vm382 = vcmask 1044484
      %vm383 = vmor %vm381, %vm382
      %vm384 = vcmask 1046534
      %vm385 = vmor %vm383, %vm384
      %v386 = vrot.slane %v353, 7
      %v387 = vrot.slane %v386, 2
      %v388 = vrot.slane %v354, 7
      %v389 = vsel %vm385, %v387, %v388
      %v390 = vrot.slane %v361, 7
      %v391 = vrot.slane %v390, 2
      %v392 = vrot.slane %v362, 7
      %v393 = vsel %vm385, %v391, %v392
      %v394 = vrot.slane %v369, 7
      %v395 = vrot.slane %v394, 2
      %v396 = vrot.slane %v370, 7
      %v397 = vsel %vm385, %v395, %v396
      %v398 = vrot.slane %v377, 7
      %v399 = vrot.slane %v398, 2
      %v400 = vrot.slane %v378, 7
      %v401 = vsel %vm385, %v399, %v400
      %402 = vrot.lane.b32.xlu0 %v389, 64
      %v403 = vpop.permute.xlu0 %402
      %404 = vrot.lane.b32.xlu0 %v393, 64
      %v405 = vpop.permute.xlu0 %404
      %406 = vrot.lane.b32.xlu0 %v397, 64
      %v407 = vpop.permute.xlu0 %406
      %408 = vrot.lane.b32.xlu0 %v401, 64
      %v409 = vpop.permute.xlu0 %408
      %vm414 = vcmask 779776
      %415 = vst.msk [vmem:[#allocation2] sm:$0x3] %vm414, %v403
      %416 = vst.msk [vmem:[#allocation2 + $0x6] sm:$0x3] %vm414, %v405
      %417 = vst.msk [vmem:[#allocation2 + $0xc] sm:$0x3] %vm414, %v407
      %418 = vst.msk [vmem:[#allocation2 + $0x12] sm:$0x3] %vm414, %v409
      %s419 = scalar_lea.vmem %s199, 4
      %v420 = vld [vmem:[%s419] sm:$0x3]
      %v421 = vld [vmem:[%s419 + $0x4] sm:$0x3]
      %v422 = vld [vmem:[%s419 + $0x8] sm:$0x3]
      %v423 = vld [vmem:[%s419 + $0xc] sm:$0x3]
      %v429 = vunpack.c.l.s4 1983009808
      %v430 = vunpack.c.0.s8 %v429
      %v431 = vlaneseq
      %v432 = vshrl.u32 %v431, 7
      %v433 = vsub.s32 %v430, %v432
      %v434 = vrot.slane %v420, %v433
      %v436 = vunpack.c.l.s4 1983009808
      %v437 = vunpack.c.0.s8 %v436
      %v438 = vlaneseq
      %v439 = vshrl.u32 %v438, 7
      %v440 = vsub.s32 %v437, %v439
      %v441 = vrot.slane %v421, %v440
      %v443 = vunpack.c.l.s4 1983009808
      %v444 = vunpack.c.0.s8 %v443
      %v445 = vlaneseq
      %v446 = vshrl.u32 %v445, 7
      %v447 = vsub.s32 %v444, %v446
      %v448 = vrot.slane %v422, %v447
      %v450 = vunpack.c.l.s4 1983009808
      %v451 = vunpack.c.0.s8 %v450
      %v452 = vlaneseq
      %v453 = vshrl.u32 %v452, 7
      %v454 = vsub.s32 %v451, %v453
      %v455 = vrot.slane %v423, %v454
      %456 = vrot.lane.b32.xlu0 %v434, 96
      %v457 = vpop.permute.xlu0 %456
      %458 = vrot.lane.b32.xlu0 %v441, 96
      %v459 = vpop.permute.xlu0 %458
      %460 = vrot.lane.b32.xlu0 %v448, 96
      %v461 = vpop.permute.xlu0 %460
      %462 = vrot.lane.b32.xlu0 %v455, 96
      %v463 = vpop.permute.xlu0 %462
      %vm468 = vcmask 1042176
      %469 = vst.msk [vmem:[#allocation2] sm:$0x3] %vm468, %v457
      %470 = vst.msk [vmem:[#allocation2 + $0x6] sm:$0x3] %vm468, %v459
      %471 = vst.msk [vmem:[#allocation2 + $0xc] sm:$0x3] %vm468, %v461
      %472 = vst.msk [vmem:[#allocation2 + $0x12] sm:$0x3] %vm468, %v463
      %v473 = vld [vmem:[%s419] sm:$0x7]
      %v474 = vld [vmem:[%s419 + $0x4] sm:$0x7]
      %v475 = vld [vmem:[%s419 + $0x8] sm:$0x7]
      %v476 = vld [vmem:[%s419 + $0xc] sm:$0x7]
      %v482 = vunpack.c.l.s4 1983009808
      %v483 = vunpack.c.0.s8 %v482
      %v484 = vlaneseq
      %v485 = vshrl.u32 %v484, 7
      %v486 = vsub.s32 %v483, %v485
      %v487 = vrot.slane %v473, %v486
      %v488 = vcombine.high %v487, %v487
      %v490 = vunpack.c.l.s4 1983009808
      %v491 = vunpack.c.0.s8 %v490
      %v492 = vlaneseq
      %v493 = vshrl.u32 %v492, 7
      %v494 = vsub.s32 %v491, %v493
      %v495 = vrot.slane %v474, %v494
      %v496 = vcombine.high %v495, %v495
      %v498 = vunpack.c.l.s4 1983009808
      %v499 = vunpack.c.0.s8 %v498
      %v500 = vlaneseq
      %v501 = vshrl.u32 %v500, 7
      %v502 = vsub.s32 %v499, %v501
      %v503 = vrot.slane %v475, %v502
      %v504 = vcombine.high %v503, %v503
      %v506 = vunpack.c.l.s4 1983009808
      %v507 = vunpack.c.0.s8 %v506
      %v508 = vlaneseq
      %v509 = vshrl.u32 %v508, 7
      %v510 = vsub.s32 %v507, %v509
      %v511 = vrot.slane %v476, %v510
      %v512 = vcombine.high %v511, %v511
      %v514 = vshrl.u32 %v487, 16
      %v516 = vrot.slane %v514, 6
      %v517 = vshll.u32 %v487, 16
      %v519 = vrot.slane %v517, 7
      %v520 = vor.u32 %v516, %v519
      %v521 = vrot.slane %v520, 2
      %v523 = vshll.u32 %v488, 16
      %v525 = vrot.slane %v523, 7
      %v526 = vsel %vm265, %v521, %v525
      %v528 = vshrl.u32 %v495, 16
      %v530 = vrot.slane %v528, 6
      %v531 = vshll.u32 %v495, 16
      %v533 = vrot.slane %v531, 7
      %v534 = vor.u32 %v530, %v533
      %v535 = vrot.slane %v534, 2
      %v537 = vshll.u32 %v496, 16
      %v539 = vrot.slane %v537, 7
      %v540 = vsel %vm265, %v535, %v539
      %v542 = vshrl.u32 %v503, 16
      %v544 = vrot.slane %v542, 6
      %v545 = vshll.u32 %v503, 16
      %v547 = vrot.slane %v545, 7
      %v548 = vor.u32 %v544, %v547
      %v549 = vrot.slane %v548, 2
      %v551 = vshll.u32 %v504, 16
      %v553 = vrot.slane %v551, 7
      %v554 = vsel %vm265, %v549, %v553
      %v556 = vshrl.u32 %v511, 16
      %v558 = vrot.slane %v556, 6
      %v559 = vshll.u32 %v511, 16
      %v561 = vrot.slane %v559, 7
      %v562 = vor.u32 %v558, %v561
      %v563 = vrot.slane %v562, 2
      %v565 = vshll.u32 %v512, 16
      %v567 = vrot.slane %v565, 7
      %v568 = vsel %vm265, %v563, %v567
      %573 = vst.msk [vmem:[#allocation2 + $0x2] sm:$0x3] %vm214, %v526
      %574 = vst.msk [vmem:[#allocation2 + $0x8] sm:$0x3] %vm214, %v540
      %575 = vst.msk [vmem:[#allocation2 + $0xe] sm:$0x3] %vm214, %v554
      %576 = vst.msk [vmem:[#allocation2 + $0x14] sm:$0x3] %vm214, %v568
      %v577 = vld [vmem:[%s419] sm:$0x6]
      %v578 = vld [vmem:[%s419 + $0x4] sm:$0x6]
      %v579 = vld [vmem:[%s419 + $0x8] sm:$0x6]
      %v580 = vld [vmem:[%s419 + $0xc] sm:$0x6]
      %v586 = vunpack.c.l.s4 1983009808
      %v587 = vunpack.c.0.s8 %v586
      %v588 = vlaneseq
      %v589 = vshrl.u32 %v588, 7
      %v590 = vsub.s32 %v587, %v589
      %v591 = vrot.slane %v577, %v590
      %v592 = vcombine.high %v591, %v591
      %v594 = vunpack.c.l.s4 1983009808
      %v595 = vunpack.c.0.s8 %v594
      %v596 = vlaneseq
      %v597 = vshrl.u32 %v596, 7
      %v598 = vsub.s32 %v595, %v597
      %v599 = vrot.slane %v578, %v598
      %v600 = vcombine.high %v599, %v599
      %v602 = vunpack.c.l.s4 1983009808
      %v603 = vunpack.c.0.s8 %v602
      %v604 = vlaneseq
      %v605 = vshrl.u32 %v604, 7
      %v606 = vsub.s32 %v603, %v605
      %v607 = vrot.slane %v579, %v606
      %v608 = vcombine.high %v607, %v607
      %v610 = vunpack.c.l.s4 1983009808
      %v611 = vunpack.c.0.s8 %v610
      %v612 = vlaneseq
      %v613 = vshrl.u32 %v612, 7
      %v614 = vsub.s32 %v611, %v613
      %v615 = vrot.slane %v580, %v614
      %v616 = vcombine.high %v615, %v615
      %v617 = vrot.slane %v591, 7
      %v618 = vrot.slane %v617, 2
      %v619 = vrot.slane %v592, 7
      %v620 = vsel %vm385, %v618, %v619
      %v621 = vrot.slane %v599, 7
      %v622 = vrot.slane %v621, 2
      %v623 = vrot.slane %v600, 7
      %v624 = vsel %vm385, %v622, %v623
      %v625 = vrot.slane %v607, 7
      %v626 = vrot.slane %v625, 2
      %v627 = vrot.slane %v608, 7
      %v628 = vsel %vm385, %v626, %v627
      %v629 = vrot.slane %v615, 7
      %v630 = vrot.slane %v629, 2
      %v631 = vrot.slane %v616, 7
      %v632 = vsel %vm385, %v630, %v631
      %633 = vrot.lane.b32.xlu0 %v620, 32
      %v634 = vpop.permute.xlu0 %633
      %635 = vrot.lane.b32.xlu0 %v624, 32
      %v636 = vpop.permute.xlu0 %635
      %637 = vrot.lane.b32.xlu0 %v628, 32
      %v638 = vpop.permute.xlu0 %637
      %639 = vrot.lane.b32.xlu0 %v632, 32
      %v640 = vpop.permute.xlu0 %639
      %645 = vst.msk [vmem:[#allocation2 + $0x2] sm:$0x3] %vm334, %v634
      %646 = vst.msk [vmem:[#allocation2 + $0x8] sm:$0x3] %vm334, %v636
      %647 = vst.msk [vmem:[#allocation2 + $0xe] sm:$0x3] %vm334, %v638
      %648 = vst.msk [vmem:[#allocation2 + $0x14] sm:$0x3] %vm334, %v640
      %s649 = scalar_lea.vmem %s199, 8
      %v650 = vld [vmem:[%s649] sm:$0x3]
      %v651 = vld [vmem:[%s649 + $0x4] sm:$0x3]
      %v652 = vld [vmem:[%s649 + $0x8] sm:$0x3]
      %v653 = vld [vmem:[%s649 + $0xc] sm:$0x3]
      %v659 = vunpack.c.l.s4 1983009808
      %v660 = vunpack.c.0.s8 %v659
      %v661 = vlaneseq
      %v662 = vshrl.u32 %v661, 7
      %v663 = vsub.s32 %v660, %v662
      %v664 = vrot.slane %v650, %v663
      %v666 = vunpack.c.l.s4 1983009808
      %v667 = vunpack.c.0.s8 %v666
      %v668 = vlaneseq
      %v669 = vshrl.u32 %v668, 7
      %v670 = vsub.s32 %v667, %v669
      %v671 = vrot.slane %v651, %v670
      %v673 = vunpack.c.l.s4 1983009808
      %v674 = vunpack.c.0.s8 %v673
      %v675 = vlaneseq
      %v676 = vshrl.u32 %v675, 7
      %v677 = vsub.s32 %v674, %v676
      %v678 = vrot.slane %v652, %v677
      %v680 = vunpack.c.l.s4 1983009808
      %v681 = vunpack.c.0.s8 %v680
      %v682 = vlaneseq
      %v683 = vshrl.u32 %v682, 7
      %v684 = vsub.s32 %v681, %v683
      %v685 = vrot.slane %v653, %v684
      %686 = vrot.lane.b32.xlu0 %v664, 64
      %v687 = vpop.permute.xlu0 %686
      %688 = vrot.lane.b32.xlu0 %v671, 64
      %v689 = vpop.permute.xlu0 %688
      %690 = vrot.lane.b32.xlu0 %v678, 64
      %v691 = vpop.permute.xlu0 %690
      %692 = vrot.lane.b32.xlu0 %v685, 64
      %v693 = vpop.permute.xlu0 %692
      %698 = vst.msk [vmem:[#allocation2 + $0x2] sm:$0x3] %vm414, %v687
      %699 = vst.msk [vmem:[#allocation2 + $0x8] sm:$0x3] %vm414, %v689
      %700 = vst.msk [vmem:[#allocation2 + $0xe] sm:$0x3] %vm414, %v691
      %701 = vst.msk [vmem:[#allocation2 + $0x14] sm:$0x3] %vm414, %v693
      %v702 = vld [vmem:[%s649] sm:$0x7]
      %v703 = vld [vmem:[%s649 + $0x4] sm:$0x7]
      %v704 = vld [vmem:[%s649 + $0x8] sm:$0x7]
      %v705 = vld [vmem:[%s649 + $0xc] sm:$0x7]
      %v711 = vunpack.c.l.s4 1983009808
      %v712 = vunpack.c.0.s8 %v711
      %v713 = vlaneseq
      %v714 = vshrl.u32 %v713, 7
      %v715 = vsub.s32 %v712, %v714
      %v716 = vrot.slane %v702, %v715
      %v717 = vcombine.high %v716, %v716
      %v719 = vunpack.c.l.s4 1983009808
      %v720 = vunpack.c.0.s8 %v719
      %v721 = vlaneseq
      %v722 = vshrl.u32 %v721, 7
      %v723 = vsub.s32 %v720, %v722
      %v724 = vrot.slane %v703, %v723
      %v725 = vcombine.high %v724, %v724
      %v727 = vunpack.c.l.s4 1983009808
      %v728 = vunpack.c.0.s8 %v727
      %v729 = vlaneseq
      %v730 = vshrl.u32 %v729, 7
      %v731 = vsub.s32 %v728, %v730
      %v732 = vrot.slane %v704, %v731
      %v733 = vcombine.high %v732, %v732
      %v735 = vunpack.c.l.s4 1983009808
      %v736 = vunpack.c.0.s8 %v735
      %v737 = vlaneseq
      %v738 = vshrl.u32 %v737, 7
      %v739 = vsub.s32 %v736, %v738
      %v740 = vrot.slane %v705, %v739
      %v741 = vcombine.high %v740, %v740
      %v743 = vshrl.u32 %v716, 16
      %v745 = vrot.slane %v743, 6
      %v746 = vshll.u32 %v716, 16
      %v748 = vrot.slane %v746, 7
      %v749 = vor.u32 %v745, %v748
      %v750 = vrot.slane %v749, 2
      %v752 = vshll.u32 %v717, 16
      %v754 = vrot.slane %v752, 7
      %v755 = vsel %vm265, %v750, %v754
      %v757 = vshrl.u32 %v724, 16
      %v759 = vrot.slane %v757, 6
      %v760 = vshll.u32 %v724, 16
      %v762 = vrot.slane %v760, 7
      %v763 = vor.u32 %v759, %v762
      %v764 = vrot.slane %v763, 2
      %v766 = vshll.u32 %v725, 16
      %v768 = vrot.slane %v766, 7
      %v769 = vsel %vm265, %v764, %v768
      %v771 = vshrl.u32 %v732, 16
      %v773 = vrot.slane %v771, 6
      %v774 = vshll.u32 %v732, 16
      %v776 = vrot.slane %v774, 7
      %v777 = vor.u32 %v773, %v776
      %v778 = vrot.slane %v777, 2
      %v780 = vshll.u32 %v733, 16
      %v782 = vrot.slane %v780, 7
      %v783 = vsel %vm265, %v778, %v782
      %v785 = vshrl.u32 %v740, 16
      %v787 = vrot.slane %v785, 6
      %v788 = vshll.u32 %v740, 16
      %v790 = vrot.slane %v788, 7
      %v791 = vor.u32 %v787, %v790
      %v792 = vrot.slane %v791, 2
      %v794 = vshll.u32 %v741, 16
      %v796 = vrot.slane %v794, 7
      %v797 = vsel %vm265, %v792, %v796
      %798 = vrot.lane.b32.xlu0 %v755, 96
      %v799 = vpop.permute.xlu0 %798
      %800 = vrot.lane.b32.xlu0 %v769, 96
      %v801 = vpop.permute.xlu0 %800
      %802 = vrot.lane.b32.xlu0 %v783, 96
      %v803 = vpop.permute.xlu0 %802
      %804 = vrot.lane.b32.xlu0 %v797, 96
      %v805 = vpop.permute.xlu0 %804
      %810 = vst.msk [vmem:[#allocation2 + $0x2] sm:$0x3] %vm468, %v799
      %811 = vst.msk [vmem:[#allocation2 + $0x8] sm:$0x3] %vm468, %v801
      %812 = vst.msk [vmem:[#allocation2 + $0xe] sm:$0x3] %vm468, %v803
      %813 = vst.msk [vmem:[#allocation2 + $0x14] sm:$0x3] %vm468, %v805
      %v814 = vld [vmem:[%s649] sm:$0x6]
      %v815 = vld [vmem:[%s649 + $0x4] sm:$0x6]
      %v816 = vld [vmem:[%s649 + $0x8] sm:$0x6]
      %v817 = vld [vmem:[%s649 + $0xc] sm:$0x6]
      %v823 = vunpack.c.l.s4 1983009808
      %v824 = vunpack.c.0.s8 %v823
      %v825 = vlaneseq
      %v826 = vshrl.u32 %v825, 7
      %v827 = vsub.s32 %v824, %v826
      %v828 = vrot.slane %v814, %v827
      %v829 = vcombine.high %v828, %v828
      %v831 = vunpack.c.l.s4 1983009808
      %v832 = vunpack.c.0.s8 %v831
      %v833 = vlaneseq
      %v834 = vshrl.u32 %v833, 7
      %v835 = vsub.s32 %v832, %v834
      %v836 = vrot.slane %v815, %v835
      %v837 = vcombine.high %v836, %v836
      %v839 = vunpack.c.l.s4 1983009808
      %v840 = vunpack.c.0.s8 %v839
      %v841 = vlaneseq
      %v842 = vshrl.u32 %v841, 7
      %v843 = vsub.s32 %v840, %v842
      %v844 = vrot.slane %v816, %v843
      %v845 = vcombine.high %v844, %v844
      %v847 = vunpack.c.l.s4 1983009808
      %v848 = vunpack.c.0.s8 %v847
      %v849 = vlaneseq
      %v850 = vshrl.u32 %v849, 7
      %v851 = vsub.s32 %v848, %v850
      %v852 = vrot.slane %v817, %v851
      %v853 = vcombine.high %v852, %v852
      %v854 = vrot.slane %v828, 7
      %v855 = vrot.slane %v854, 2
      %v856 = vrot.slane %v829, 7
      %v857 = vsel %vm385, %v855, %v856
      %v858 = vrot.slane %v836, 7
      %v859 = vrot.slane %v858, 2
      %v860 = vrot.slane %v837, 7
      %v861 = vsel %vm385, %v859, %v860
      %v862 = vrot.slane %v844, 7
      %v863 = vrot.slane %v862, 2
      %v864 = vrot.slane %v845, 7
      %v865 = vsel %vm385, %v863, %v864
      %v866 = vrot.slane %v852, 7
      %v867 = vrot.slane %v866, 2
      %v868 = vrot.slane %v853, 7
      %v869 = vsel %vm385, %v867, %v868
      %874 = vst.msk [vmem:[#allocation2 + $0x4] sm:$0x3] %vm214, %v857
      %875 = vst.msk [vmem:[#allocation2 + $0xa] sm:$0x3] %vm214, %v861
      %876 = vst.msk [vmem:[#allocation2 + $0x10] sm:$0x3] %vm214, %v865
      %877 = vst.msk [vmem:[#allocation2 + $0x16] sm:$0x3] %vm214, %v869
      %v878 = vld [vmem:[#allocation2] sm:$0xf]
      %v879 = vld [vmem:[#allocation2 + $0x6] sm:$0xf]
      %v880 = vld [vmem:[#allocation2 + $0xc] sm:$0xf]
      %v881 = vld [vmem:[#allocation2 + $0x12] sm:$0xf]
      %v882 = vld [vmem:[%s1] sm:$0xf]
      %v883 = vld [vmem:[%s1 + $0x4] sm:$0xf]
      %v884 = vld [vmem:[%s1 + $0x8] sm:$0xf]
      %v885 = vld [vmem:[%s1 + $0xc] sm:$0xf]
      %v886 = vld [vmem:[%s1 + $0x10] sm:$0xf]
      %v887 = vld [vmem:[%s1 + $0x14] sm:$0xf]
      %v888 = vld [vmem:[%s1 + $0x18] sm:$0xf]
      %v889 = vld [vmem:[%s1 + $0x1c] sm:$0xf]
      %v890 = vld [vmem:[%s1 + $0x20] sm:$0xf]
      %v891 = vld [vmem:[%s1 + $0x24] sm:$0xf]
      %v892 = vld [vmem:[%s1 + $0x28] sm:$0xf]
      %v893 = vld [vmem:[%s1 + $0x2c] sm:$0xf]
      %v894 = vld [vmem:[%s1 + $0x30] sm:$0xf]
      %v895 = vld [vmem:[%s1 + $0x34] sm:$0xf]
      %v896 = vld [vmem:[%s1 + $0x38] sm:$0xf]
      %v897 = vld [vmem:[%s1 + $0x3c] sm:$0xf]
      %v898 = vld [vmem:[%s1 + $0x40] sm:$0xf]
      %v899 = vld [vmem:[%s1 + $0x44] sm:$0xf]
      %v900 = vld [vmem:[%s1 + $0x48] sm:$0xf]
      %v901 = vld [vmem:[%s1 + $0x4c] sm:$0xf]
      %v902 = vld [vmem:[%s1 + $0x50] sm:$0xf]
      %v903 = vld [vmem:[%s1 + $0x54] sm:$0xf]
      %v904 = vld [vmem:[%s1 + $0x58] sm:$0xf]
      %v905 = vld [vmem:[%s1 + $0x5c] sm:$0xf]
      %v906 = vld [vmem:[%s1 + $0x60] sm:$0xf]
      %v907 = vld [vmem:[%s1 + $0x64] sm:$0xf]
      %v908 = vld [vmem:[%s1 + $0x68] sm:$0xf]
      %v909 = vld [vmem:[%s1 + $0x6c] sm:$0xf]
      %v910 = vld [vmem:[%s1 + $0x70] sm:$0xf]
      %v911 = vld [vmem:[%s1 + $0x74] sm:$0xf]
      %v912 = vld [vmem:[%s1 + $0x78] sm:$0xf]
      %v913 = vld [vmem:[%s1 + $0x7c] sm:$0xf]
      %v914 = vld [vmem:[#allocation2 + $0x4] sm:$0x3]
      %v915 = vld [vmem:[#allocation2 + $0xa] sm:$0x3]
      %v916 = vld [vmem:[#allocation2 + $0x10] sm:$0x3]
      %v917 = vld [vmem:[#allocation2 + $0x16] sm:$0x3]
      %v918 = vld [vmem:[%s1 + $0x80] sm:$0xf]
      %v919 = vld [vmem:[%s1 + $0x84] sm:$0xf]
      %v920 = vld [vmem:[%s1 + $0x88] sm:$0xf]
      %v921 = vld [vmem:[%s1 + $0x8c] sm:$0xf]
      %v926 = vcombine.low %v914, %v915
      %v927 = vcombine.low %v916, %v917
      %v929 = vunpack.c.l.s4 1983009808
      %v930 = vunpack.c.0.s8 %v929
      %v931 = vlaneseq
      %v932 = vshrl.u32 %v931, 7
      %v933 = vsub.s32 %v930, %v932
      %v934 = vrot.slane %v926, %v933
      %v936 = vunpack.c.l.s4 1983009808
      %v937 = vunpack.c.0.s8 %v936
      %v938 = vlaneseq
      %v939 = vshrl.u32 %v938, 7
      %v940 = vsub.s32 %v937, %v939
      %v941 = vrot.slane %v927, %v940
      %v942 = vcombine.low %v934, %v941
      %v947 = vunpack.c.l.b16 %v918
      %v948 = vunpack.c.l.b16 %v919
      %v949 = vunpack.c.l.b16 %v920
      %v950 = vunpack.c.l.b16 %v921
      %v951 = vpack.c.b16 %v948, %v947
      %v952 = vpack.c.b16 %v950, %v949
      %vm955 = vcmask 261120
      %v957 = vsel %vm955, %v942, 0
      %959 = vmatprep.subr.bf16.mxu0 0
      %960 = vmatpush1.bf16.msra.mxu0 0
      %961 = vmatprep.subr.bf16.mxu0 0
      %962 = vmatpush1.bf16.msra.mxu0 0
      %963 = vmatprep.subr.bf16.mxu0 0
      %964 = vmatpush1.bf16.msra.mxu0 0
      %965 = vmatprep.subr.bf16.mxu0 0
      %966 = vmatpush1.bf16.msra.mxu0 0
      %967 = vmatprep.subr.bf16.mxu0 0
      %968 = vmatpush1.bf16.msra.mxu0 0
      %969 = vmatprep.subr.bf16.mxu0 0
      %970 = vmatpush1.bf16.msra.mxu0 0
      %971 = vmatprep.subr.bf16.mxu0 0
      %972 = vmatpush1.bf16.msra.mxu0 %v952
      %973 = vmatprep.subr.bf16.mxu0 0
      %974 = vmatpush1.bf16.msra.mxu0 %v951
      %975 = vmatprep.subr.bf16.mxu0 0
      %976 = vmatpush2.bf16.msra.mxu0 0
      %977 = vmatprep.subr.bf16.mxu0 0
      %978 = vmatpush2.bf16.msra.mxu0 0
      %979 = vmatprep.subr.bf16.mxu0 0
      %980 = vmatpush2.bf16.msra.mxu0 0
      %981 = vmatprep.subr.bf16.mxu0 0
      %982 = vmatpush2.bf16.msra.mxu0 0
      %983 = vmatprep.subr.bf16.mxu0 0
      %984 = vmatpush2.bf16.msra.mxu0 0
      %985 = vmatprep.subr.bf16.mxu0 0
      %986 = vmatpush2.bf16.msra.mxu0 0
      %987 = vmatprep.subr.bf16.mxu0 0
      %988 = vmatpush2.bf16.msra.mxu0 0
      %989 = vmatprep.subr.bf16.mxu0 0
      %990 = vmatpush2.bf16.msra.mxu0 0
      %991 = vmatprep.mubr.bf16.mxu0 0
      %992 = vmatmul.mubr.bf16.gmra.mxu0 %v957
      %v993 = vpop.f32.mrf.mxu0
      %v994 = vadd.f32 0.0, %v993
      %v995 = vpop.f32.mrf.mxu0
      %v996 = vpop.f32.mrf.mxu0
      %v997 = vadd.f32 0.0, %v996
      %v998 = vpop.f32.mrf.mxu0
      %999 = vdwg.mxu0
      %v1004 = vcombine.low %v878, %v879
      %v1005 = vcombine.low %v880, %v881
      %v1007 = vunpack.c.l.s4 1983009808
      %v1008 = vunpack.c.0.s8 %v1007
      %v1009 = vlaneseq
      %v1010 = vshrl.u32 %v1009, 7
      %v1011 = vsub.s32 %v1008, %v1010
      %v1012 = vrot.slane %v1004, %v1011
      %v1014 = vunpack.c.l.s4 1983009808
      %v1015 = vunpack.c.0.s8 %v1014
      %v1016 = vlaneseq
      %v1017 = vshrl.u32 %v1016, 7
      %v1018 = vsub.s32 %v1015, %v1017
      %v1019 = vrot.slane %v1005, %v1018
      %v1020 = vcombine.low %v1012, %v1019
      %v1021 = vcombine.high %v1012, %v1019
      %v1056 = vunpack.c.l.b16 %v882
      %v1057 = vunpack.c.l.b16 %v883
      %v1058 = vunpack.c.l.b16 %v884
      %v1059 = vunpack.c.l.b16 %v885
      %v1060 = vunpack.c.l.b16 %v886
      %v1061 = vunpack.c.l.b16 %v887
      %v1062 = vunpack.c.l.b16 %v888
      %v1063 = vunpack.c.l.b16 %v889
      %v1064 = vunpack.c.l.b16 %v890
      %v1065 = vunpack.c.l.b16 %v891
      %v1066 = vunpack.c.l.b16 %v892
      %v1067 = vunpack.c.l.b16 %v893
      %v1068 = vunpack.c.l.b16 %v894
      %v1069 = vunpack.c.l.b16 %v895
      %v1070 = vunpack.c.l.b16 %v896
      %v1071 = vunpack.c.l.b16 %v897
      %v1072 = vunpack.c.l.b16 %v898
      %v1073 = vunpack.c.l.b16 %v899
      %v1074 = vunpack.c.l.b16 %v900
      %v1075 = vunpack.c.l.b16 %v901
      %v1076 = vunpack.c.l.b16 %v902
      %v1077 = vunpack.c.l.b16 %v903
      %v1078 = vunpack.c.l.b16 %v904
      %v1079 = vunpack.c.l.b16 %v905
      %v1080 = vunpack.c.l.b16 %v906
      %v1081 = vunpack.c.l.b16 %v907
      %v1082 = vunpack.c.l.b16 %v908
      %v1083 = vunpack.c.l.b16 %v909
      %v1084 = vunpack.c.l.b16 %v910
      %v1085 = vunpack.c.l.b16 %v911
      %v1086 = vunpack.c.l.b16 %v912
      %v1087 = vunpack.c.l.b16 %v913
      %v1088 = vpack.c.b16 %v1057, %v1056
      %v1089 = vpack.c.b16 %v1059, %v1058
      %v1090 = vpack.c.b16 %v1061, %v1060
      %v1091 = vpack.c.b16 %v1063, %v1062
      %v1092 = vpack.c.b16 %v1065, %v1064
      %v1093 = vpack.c.b16 %v1067, %v1066
      %v1094 = vpack.c.b16 %v1069, %v1068
      %v1095 = vpack.c.b16 %v1071, %v1070
      %v1096 = vpack.c.b16 %v1073, %v1072
      %v1097 = vpack.c.b16 %v1075, %v1074
      %v1098 = vpack.c.b16 %v1077, %v1076
      %v1099 = vpack.c.b16 %v1079, %v1078
      %v1100 = vpack.c.b16 %v1081, %v1080
      %v1101 = vpack.c.b16 %v1083, %v1082
      %v1102 = vpack.c.b16 %v1085, %v1084
      %v1103 = vpack.c.b16 %v1087, %v1086
      %1120 = vmatprep.subr.bf16.mxu0 0
      %1121 = vmatpush1.bf16.msra.mxu0 %v1095
      %1122 = vmatprep.subr.bf16.mxu0 0
      %1123 = vmatpush1.bf16.msra.mxu0 %v1094
      %1124 = vmatprep.subr.bf16.mxu0 0
      %1125 = vmatpush1.bf16.msra.mxu0 %v1093
      %1126 = vmatprep.subr.bf16.mxu0 0
      %1127 = vmatpush1.bf16.msra.mxu0 %v1092
      %1128 = vmatprep.subr.bf16.mxu0 0
      %1129 = vmatpush1.bf16.msra.mxu0 %v1091
      %1130 = vmatprep.subr.bf16.mxu0 0
      %1131 = vmatpush1.bf16.msra.mxu0 %v1090
      %1132 = vmatprep.subr.bf16.mxu0 0
      %1133 = vmatpush1.bf16.msra.mxu0 %v1089
      %1134 = vmatprep.subr.bf16.mxu0 0
      %1135 = vmatpush1.bf16.msra.mxu0 %v1088
      %1136 = vmatprep.subr.bf16.mxu0 0
      %1137 = vmatpush2.bf16.msra.mxu0 %v1103
      %1138 = vmatprep.subr.bf16.mxu0 0
      %1139 = vmatpush2.bf16.msra.mxu0 %v1102
      %1140 = vmatprep.subr.bf16.mxu0 0
      %1141 = vmatpush2.bf16.msra.mxu0 %v1101
      %1142 = vmatprep.subr.bf16.mxu0 0
      %1143 = vmatpush2.bf16.msra.mxu0 %v1100
      %1144 = vmatprep.subr.bf16.mxu0 0
      %1145 = vmatpush2.bf16.msra.mxu0 %v1099
      %1146 = vmatprep.subr.bf16.mxu0 0
      %1147 = vmatpush2.bf16.msra.mxu0 %v1098
      %1148 = vmatprep.subr.bf16.mxu0 0
      %1149 = vmatpush2.bf16.msra.mxu0 %v1097
      %1150 = vmatprep.subr.bf16.mxu0 0
      %1151 = vmatpush2.bf16.msra.mxu0 %v1096
      %1152 = vmatprep.mubr.bf16.mxu0 %v1021
      %1153 = vmatmul.mubr.bf16.gmra.mxu0 %v1020
      %v1154 = vpop.f32.mrf.mxu0
      %v1155 = vadd.f32 %v994, %v1154
      %v1156 = vpop.f32.mrf.mxu0
      %v1157 = vpop.f32.mrf.mxu0
      %v1158 = vadd.f32 %v997, %v1157
      %v1159 = vpop.f32.mrf.mxu0
      %1160 = vdwg.mxu0
      %v1161 = vld [vmem:[%s2] sm:$0x1]
      %v1163 = vlaneseq
      %v1164 = vshrl.u32 %v1163, 7
      %v1165 = vsub.s32 0, %v1164
      %v1166 = vrot.slane %v1161, %v1165
      %v1168 = vadd.f32 %v1155, %v1166
      %v1169 = vadd.f32 %v1158, %v1166
      %v1172 = vcombine.high %v1168, %v1168
      %v1173 = vcombine.high %v1169, %v1169
      %v1176 = vpack.c.bf16 %v1168, %v1168
      %v1177 = vpack.c.bf16 %v1172, %v1172
      %v1178 = vpack.c.bf16 %v1169, %v1169
      %v1179 = vpack.c.bf16 %v1173, %v1173
      %1180 = vst [vmem:[%s204] sm:$0x3] %v1176
      %1181 = vst [vmem:[%s204 + $0x2] sm:$0x3] %v1177
      %1182 = vst [vmem:[%s204 + $0x4] sm:$0x3] %v1178
      %1183 = vst [vmem:[%s204 + $0x6] sm:$0x3] %v1179
      %v1184 = vadd.f32 %v1168, %v1169
      %v1185 = vrot.slane %v1184, 4
      %v1186 = vadd.f32 %v1184, %v1185
      %v1187 = vrot.slane %v1186, 2
      %v1188 = vadd.f32 %v1186, %v1187
      %v1189 = vrot.slane %v1188, 1
      %v1190 = vadd.f32 %v1188, %v1189
      %v1191 = vmul.f32 %v1168, %v1168
      %v1192 = vmul.f32 %v1169, %v1169
      %v1193 = vadd.f32 %v1191, %v1192
      %v1194 = vrot.slane %v1193, 4
      %v1195 = vadd.f32 %v1193, %v1194
      %v1196 = vrot.slane %v1195, 2
      %v1197 = vadd.f32 %v1195, %v1196
      %v1198 = vrot.slane %v1197, 1
      %v1199 = vadd.f32 %v1197, %v1198
      %vm1200 = vcmask 1040384
      %v1201 = vsel %vm1200, %v1190, %v1199
      %1202 = vst [vmem:[%s208] sm:$0x3] %v1201
      %p1203 = scmp.lt.s32.totalorder %s16, 1
      %s1204 = scalar_select %p1203, %s16, 1
      %s1205 = smul.addr %s1204, 4
      %s1206 = smul.addr %s1205, 2
      %s1207 = scalar_lea.vmem %s3, %s1206
      %p1208 = scmp.lt.s32.totalorder %s16, 1
      %s1209 = scalar_select %p1208, %s16, 1
      %s1210 = smul.addr %s1209, 2
      %s1211 = scalar_lea.vmem %s4, %s1210
      // Predicated region
      $region33: #{resnet_forward.27} parent=31 // pred_check
        %p1212 = pneg %p102
      $region34: #{resnet_forward.27} parent=31 // pred_check_branch
        %1214 = sbr.rel (%p1212) target = $region36
      $region35: #{resnet_forward.27} parent=31 // pred_region
        _
      $region36: #{resnet_forward.27} parent=31 // pred_fallthru
        _
      // Predicated region
      $region37: #{resnet_forward.27} parent=31 // pred_check
        %p1215 = pneg %p128
      $region38: #{resnet_forward.27} parent=31 // pred_check_branch
        %1217 = sbr.rel (%p1215) target = $region40
      $region39: #{resnet_forward.27} parent=31 // pred_region
        _
      $region40: #{resnet_forward.27} parent=31 // pred_fallthru
        _
    $region32: #{resnet_forward.27} parent=5 // pred_fallthru
      _
    %p1218 = scmp.le.s32.totalorder 2, %s11
    // Predicated region
    $region41: #{resnet_forward.27} parent=5 // pred_check
      %p1219 = pneg %p1218
    $region42: #{resnet_forward.27} parent=5 // pred_check_branch
      %1221 = sbr.rel (%p1219) target = $region44
    $region43: #{resnet_forward.27} parent=5 // pred_region
      %s1222 = ssub.s32 %s11, 2
      // Predicated region
      $region45: #{resnet_forward.27} parent=43 // pred_check
        %p1223 = pneg %p108
      $region46: #{resnet_forward.27} parent=43 // pred_check_branch
        %1225 = sbr.rel (%p1223) target = $region48
      $region47: #{resnet_forward.27} parent=43 // pred_region
        %p1226 = scmp.lt.s32.totalorder %s17, 1
        %s1227 = scalar_select %p1226, %s17, 1
        %s1228 = smul.addr %s1227, 4
        %s1229 = smul.addr %s1228, 2
        %s1230 = scalar_lea.vmem %s3, %s1229
      $region48: #{resnet_forward.27} parent=43 // pred_fallthru
        _
      // Predicated region
      $region49: #{resnet_forward.27} parent=43 // pred_check
        %p1231 = pneg %p134
      $region50: #{resnet_forward.27} parent=43 // pred_check_branch
        %1233 = sbr.rel (%p1231) target = $region52
      $region51: #{resnet_forward.27} parent=43 // pred_region
        %p1234 = scmp.lt.s32.totalorder %s17, 1
        %s1235 = scalar_select %p1234, %s17, 1
        %s1236 = smul.addr %s1235, 2
        %s1237 = scalar_lea.vmem %s4, %s1236
      $region52: #{resnet_forward.27} parent=43 // pred_fallthru
        _
    $region44: #{resnet_forward.27} parent=5 // pred_fallthru
      _
  $region6: #{resnet_forward.27} parent=0 // loop_footer
    %s15 = sadd.s32 1, %s11
  $region7: #{resnet_forward.27} parent=0 // loop_footer_branch
    %10 = sbr.rel target = $region3
  $region8: #{resnet_forward.27} parent=0 // loop_exit
    _

</llo_original>
